<compile_context>
chip_gen: v7x
topology: tpu7x:2x2x1
jax: 0.10.0
libtpu: 0.0.40
codegen_flags: <defaults>
</compile_context>

<pallas_src>
import jax
import jax.numpy as jnp
from jax import lax
from jax.experimental import pallas as pl
from jax.experimental.pallas import tpu as pltpu

# ----- small synthetic decoder config -----
VOCAB = 64
HIDDEN = 32
HEADS = 4
HEAD_DIM = HIDDEN // HEADS
FFN = 64
LAYERS = 2
MAX_POS = 64
POS_OFFSET = 2            # BartLearnedPositionalEmbedding offset
LN_EPS = 1e-5
NEG_BIG = -1e9            # large-but-safe additive mask value (no NaN for fully-masked rows)

_WEIGHT_ORDER = (
    "self_qkv_w", "self_qkv_b", "self_o_w", "self_o_b", "self_ln_g", "self_ln_b",
    "cross_q_w", "cross_q_b", "cross_kv_w", "cross_kv_b", "cross_o_w", "cross_o_b",
    "cross_ln_g", "cross_ln_b",
    "fc1_w", "fc1_b", "fc2_w", "fc2_b", "final_ln_g", "final_ln_b",
)


# ---------------- fused whole-decoder Pallas kernel ----------------

def _build_decoder_kernel(T, S, P, has_past):
    """Kernel body for one batch element (grid axis = batch)."""
    Ptot = P + T
    H, DH, NH, L = HIDDEN, HEAD_DIM, HEADS, LAYERS

    def layer_norm(x, g, b):                       # x (M,H), g/b (1,H)
        mu = jnp.mean(x, axis=-1, keepdims=True)
        var = jnp.mean(jnp.square(x - mu), axis=-1, keepdims=True)
        return (x - mu) * lax.rsqrt(var + LN_EPS) * g + b

    def dense(x, w_bf16, b):                       # x f32 (M,K), w bf16 (K,N), b f32 (1,N)
        return jnp.dot(x.astype(jnp.bfloat16), w_bf16,
                       preferred_element_type=jnp.float32) + b

    def attend(q, k, v, mask_add):                 # q (T,DH); k,v (Skv,DH); mask -> (T,Skv)
        s = lax.dot_general(q.astype(jnp.bfloat16), k.astype(jnp.bfloat16),
                            (((1,), (1,)), ((), ())),          # contract last dims (no k.T)
                            preferred_element_type=jnp.float32)
        s = s + mask_add
        s = s - jnp.max(s, axis=-1, keepdims=True)
        p = jnp.exp(s)
        inv = pl.reciprocal(jnp.sum(p, axis=-1, keepdims=True), approx=True)
        return jnp.dot((p * inv).astype(jnp.bfloat16), v.astype(jnp.bfloat16),
                       preferred_element_type=jnp.float32)     # (T, DH)

    def kernel(*refs):
        it = iter(refs)
        emb_ref = next(it)                         # (1, T, H)
        enc_ref = next(it)                         # (1, S, H)   (unused in decode step)
        encmask_ref = next(it)                     # (1, 1, S) additive
        emb_ln_g = next(it)
        emb_ln_b = next(it)                        # (1, H)
        w = {name: next(it) for name in _WEIGHT_ORDER}          # stacked (L, ...)
        past = None
        if has_past:
            past = [tuple(next(it) for _ in range(4)) for _ in range(L)]
        hid_out = next(it)                         # (1, T, H)
        cache_out = []
        for _ in range(L):
            sk = next(it)
            sv = next(it)                          # (1, NH, Ptot, DH)
            ck = cv = None
            if not has_past:
                ck = next(it)
                cv = next(it)                      # (1, NH, S, DH)
            cache_out.append((sk, sv, ck, cv))

        hidden = layer_norm(emb_ref[0], emb_ln_g[...], emb_ln_b[...])       # (T, H)
        enc_mask = encmask_ref[0]                                           # (1, S)

        # causal additive mask built in-kernel (never touches HBM)
        rows = lax.broadcasted_iota(jnp.int32, (T, Ptot), 0)
        cols = lax.broadcasted_iota(jnp.int32, (T, Ptot), 1)
        causal = jnp.where(cols <= rows + P, 0.0, NEG_BIG).astype(jnp.float32)

        for li in range(L):
            sk_out, sv_out, ck_out, cv_out = cache_out[li]

            # ---- self-attention (fused QKV; cache concat done via output refs) ----
            residual = hidden
            qkv = dense(hidden, w["self_qkv_w"][li], w["self_qkv_b"][li])   # (T, 3H)
            attn = jnp.zeros((T, H), jnp.float32)
            for h in range(NH):
                q_h = qkv[:, h * DH:(h + 1) * DH]
                new_k = qkv[:, H + h * DH: H + (h + 1) * DH]
                new_v = qkv[:, 2 * H + h * DH: 2 * H + (h + 1) * DH]
                if has_past:
                    p_sk, p_sv, _, _ = past[li]
                    sk_out[0, h, 0:P, :] = p_sk[0, h]          # copy past block
                    sv_out[0, h, 0:P, :] = p_sv[0, h]
                    sk_out[0, h, P:Ptot, :] = new_k            # append new tokens
                    sv_out[0, h, P:Ptot, :] = new_v
                else:
                    sk_out[0, h] = new_k
                    sv_out[0, h] = new_v
                k_h = sk_out[0, h]                             # (Ptot, DH) full cache
                v_h = sv_out[0, h]
                o_h = attend(q_h, k_h, v_h, causal)            # (T, DH)
                # per-head row block of W_o, summed == concat(heads) @ W_o
                attn = attn + jnp.dot(o_h.astype(jnp.bfloat16), w["self_o_w"][li, h],
                                      preferred_element_type=jnp.float32)
            attn = attn + w["self_o_b"][li]
            hidden = layer_norm(residual + attn, w["self_ln_g"][li], w["self_ln_b"][li])

            # ---- cross-attention (K/V from encoder states, cached after prefill) ----
            residual = hidden
            q = dense(hidden, w["cross_q_w"][li], w["cross_q_b"][li])       # (T, H)
            if not has_past:
                ckv = dense(enc_ref[0], w["cross_kv_w"][li], w["cross_kv_b"][li])   # (S, 2H)
            attn = jnp.zeros((T, H), jnp.float32)
            for h in range(NH):
                q_h = q[:, h * DH:(h + 1) * DH]
                if has_past:
                    _, _, p_ck, p_cv = past[li]
                    k_h = p_ck[0, h]
                    v_h = p_cv[0, h]
                else:
                    k_h = ckv[:, h * DH:(h + 1) * DH]
                    v_h = ckv[:, H + h * DH: H + (h + 1) * DH]
                    ck_out[0, h] = k_h
                    cv_out[0, h] = v_h
                o_h = attend(q_h, k_h, v_h, enc_mask)
                attn = attn + jnp.dot(o_h.astype(jnp.bfloat16), w["cross_o_w"][li, h],
                                      preferred_element_type=jnp.float32)
            attn = attn + w["cross_o_b"][li]
            hidden = layer_norm(residual + attn, w["cross_ln_g"][li], w["cross_ln_b"][li])

            # ---- feed-forward ----
            residual = hidden
            hff = dense(hidden, w["fc1_w"][li], w["fc1_b"][li])
            # TODO(synk): PyTorch BART uses exact erf-GELU; tanh approximation used in-kernel.
            c = 0.7978845608028654  # sqrt(2/pi)
            hff = 0.5 * hff * (1.0 + jnp.tanh(c * (hff + 0.044715 * hff * hff * hff)))
            hff = dense(hff, w["fc2_w"][li], w["fc2_b"][li])
            hidden = layer_norm(residual + hff, w["final_ln_g"][li], w["final_ln_b"][li])

        hid_out[0] = hidden

    return kernel


# ---------------- BlockSpec helpers ----------------

def _const_spec(arr):
    nd = arr.ndim
    return pl.BlockSpec(arr.shape, lambda b, _nd=nd: (0,) * _nd)


def _batched_spec(shape, batch_axis=0):
    block = tuple(1 if i == batch_axis else d for i, d in enumerate(shape))
    nd = len(shape)

    def index_map(b, _axis=batch_axis, _nd=nd):
        return tuple(b if i == _axis else 0 for i in range(_nd))

    return pl.BlockSpec(block, index_map)


# ---------------- parameters (deterministic synthetic init, kernel-ready layout) ----------------

def init_params(key):
    def dense_init(k, fan_in, fan_out):
        return jax.random.normal(k, (fan_in, fan_out), jnp.float32) * 0.02

    keys = jax.random.split(key, 2 + LAYERS)
    params = {
        "embed_tokens": jax.random.normal(keys[0], (VOCAB, HIDDEN), jnp.float32) * 0.02,
        "embed_positions": jax.random.normal(keys[1], (MAX_POS + POS_OFFSET, HIDDEN), jnp.float32) * 0.02,
        "emb_ln_g": jnp.ones((1, HIDDEN), jnp.float32),
        "emb_ln_b": jnp.zeros((1, HIDDEN), jnp.float32),
    }
    scaling = HEAD_DIM ** -0.5
    per_layer = {name: [] for name in _WEIGHT_ORDER}
    for li in range(LAYERS):
        lk = jax.random.split(keys[2 + li], 10)
        q_w = dense_init(lk[0], HIDDEN, HIDDEN) * scaling      # attention scaling folded into W_q
        k_w = dense_init(lk[1], HIDDEN, HIDDEN)
        v_w = dense_init(lk[2], HIDDEN, HIDDEN)
        o_w = dense_init(lk[3], HIDDEN, HIDDEN)
        cq_w = dense_init(lk[4], HIDDEN, HIDDEN) * scaling
        ck_w = dense_init(lk[5], HIDDEN, HIDDEN)
        cv_w = dense_init(lk[6], HIDDEN, HIDDEN)
        co_w = dense_init(lk[7], HIDDEN, HIDDEN)
        fc1_w = dense_init(lk[8], HIDDEN, FFN)
        fc2_w = dense_init(lk[9], FFN, HIDDEN)

        per_layer["self_qkv_w"].append(jnp.concatenate([q_w, k_w, v_w], axis=1).astype(jnp.bfloat16))
        per_layer["self_qkv_b"].append(jnp.zeros((1, 3 * HIDDEN), jnp.float32))
        per_layer["self_o_w"].append(o_w.reshape(HEADS, HEAD_DIM, HIDDEN).astype(jnp.bfloat16))
        per_layer["self_o_b"].append(jnp.zeros((1, HIDDEN), jnp.float32))
        per_layer["self_ln_g"].append(jnp.ones((1, HIDDEN), jnp.float32))
        per_layer["self_ln_b"].append(jnp.zeros((1, HIDDEN), jnp.float32))
        per_layer["cross_q_w"].append(cq_w.astype(jnp.bfloat16))
        per_layer["cross_q_b"].append(jnp.zeros((1, HIDDEN), jnp.float32))
        per_layer["cross_kv_w"].append(jnp.concatenate([ck_w, cv_w], axis=1).astype(jnp.bfloat16))
        per_layer["cross_kv_b"].append(jnp.zeros((1, 2 * HIDDEN), jnp.float32))
        per_layer["cross_o_w"].append(co_w.reshape(HEADS, HEAD_DIM, HIDDEN).astype(jnp.bfloat16))
        per_layer["cross_o_b"].append(jnp.zeros((1, HIDDEN), jnp.float32))
        per_layer["cross_ln_g"].append(jnp.ones((1, HIDDEN), jnp.float32))
        per_layer["cross_ln_b"].append(jnp.zeros((1, HIDDEN), jnp.float32))
        per_layer["fc1_w"].append(fc1_w.astype(jnp.bfloat16))
        per_layer["fc1_b"].append(jnp.zeros((1, FFN), jnp.float32))
        per_layer["fc2_w"].append(fc2_w.astype(jnp.bfloat16))
        per_layer["fc2_b"].append(jnp.zeros((1, HIDDEN), jnp.float32))
        per_layer["final_ln_g"].append(jnp.ones((1, HIDDEN), jnp.float32))
        per_layer["final_ln_b"].append(jnp.zeros((1, HIDDEN), jnp.float32))
    for name, vals in per_layer.items():
        params[name] = jnp.stack(vals, axis=0)     # (LAYERS, ...)
    return params


# ---------------- decoder forward (glue in plain JAX, all compute in ONE Pallas kernel) ----------------

def bart_decoder_forward(params, input_ids, encoder_hidden_states, encoder_attention_mask,
                         past_key_values=None):
    B, T = input_ids.shape
    S = encoder_hidden_states.shape[1]
    has_past = past_key_values is not None
    P = past_key_values[0][0].shape[2] if has_past else 0
    Ptot = P + T

    # embeddings (gathers stay in XLA; LN runs inside the fused kernel; embed_scale = 1.0)
    tok = jnp.take(params["embed_tokens"], input_ids, axis=0)              # (B, T, H)
    positions = jnp.arange(P, P + T) + POS_OFFSET
    pos = jnp.take(params["embed_positions"], positions, axis=0)           # (T, H)
    emb = tok + pos[None, :, :]

    enc = encoder_hidden_states.astype(jnp.float32)
    enc_add = ((1.0 - encoder_attention_mask.astype(jnp.float32)) * NEG_BIG)[:, None, :]   # (B, 1, S)

    inputs = [emb, enc, enc_add, params["emb_ln_g"], params["emb_ln_b"]]
    in_specs = [_batched_spec((B, T, HIDDEN)),
                _batched_spec((B, S, HIDDEN)),
                _batched_spec((B, 1, S)),
                _const_spec(params["emb_ln_g"]),
                _const_spec(params["emb_ln_b"])]
    for name in _WEIGHT_ORDER:
        inputs.append(params[name])
        in_specs.append(_const_spec(params[name]))
    if has_past:
        for li in range(LAYERS):
            for t in past_key_values[li]:          # (self_k, self_v, cross_k, cross_v)
                inputs.append(t)
                in_specs.append(_batched_spec(t.shape))

    out_shapes = [jax.ShapeDtypeStruct((B, T, HIDDEN), jnp.float32)]
    out_specs = [_batched_spec((B, T, HIDDEN))]
    self_cache_shape = (B, HEADS, Ptot, HEAD_DIM)
    cross_cache_shape = (B, HEADS, S, HEAD_DIM)
    for _ in range(LAYERS):
        out_shapes += [jax.ShapeDtypeStruct(self_cache_shape, jnp.float32)] * 2
        out_specs += [_batched_spec(self_cache_shape)] * 2
        if not has_past:
            out_shapes += [jax.ShapeDtypeStruct(cross_cache_shape, jnp.float32)] * 2
            out_specs += [_batched_spec(cross_cache_shape)] * 2

    kernel = _build_decoder_kernel(T=T, S=S, P=P, has_past=has_past)
    outs = pl.pallas_call(
        kernel,
        out_shape=tuple(out_shapes),
        grid=(B,),
        in_specs=in_specs,
        out_specs=tuple(out_specs),
        compiler_params=pltpu.CompilerParams(dimension_semantics=("parallel",)),
    )(*inputs)

    hidden = outs[0]
    presents = []
    idx = 1
    for li in range(LAYERS):
        if has_past:
            sk, sv = outs[idx], outs[idx + 1]
            idx += 2
            ck, cv = past_key_values[li][2], past_key_values[li][3]     # reuse cross-attn cache
        else:
            sk, sv, ck, cv = outs[idx], outs[idx + 1], outs[idx + 2], outs[idx + 3]
            idx += 4
        presents.append((sk, sv, ck, cv))
    return hidden, tuple(presents)


def _convert_past_list_to_tuple(past_key_values):
    count_of_each_inner_tuple = 4
    results = ()
    count_n = len(past_key_values) // count_of_each_inner_tuple
    for idx in range(count_n):
        real_idx = idx * count_of_each_inner_tuple
        results += (tuple(past_key_values[real_idx:real_idx + count_of_each_inner_tuple]),)
    return results


def decoder_for_onnx_forward(params, input_ids, encoder_state, attention_mask, past=None):
    all_results = None
    if past is not None:
        all_results = _convert_past_list_to_tuple(past)
        input_ids = input_ids[:, -1:]
    last_hidden_state, past_key_values = bart_decoder_forward(
        params, input_ids, encoder_state, attention_mask, all_results)
    past_values = []
    for p in past_key_values:
        past_values = past_values + list(p)
    return last_hidden_state, past_values


# ---------------- main ----------------

if __name__ == "__main__":
    key = jax.random.PRNGKey(0)
    pk, ik, ek = jax.random.split(key, 3)
    params = init_params(pk)

    B, DEC_LEN, ENC_LEN = 2, 8, 8
    input_ids = jax.random.randint(ik, (B, DEC_LEN), 0, VOCAB, dtype=jnp.int32)
    encoder_state = jax.random.normal(ek, (B, ENC_LEN, HIDDEN), jnp.float32)
    attention_mask = jnp.ones((B, ENC_LEN), jnp.int32).at[1, ENC_LEN - 2:].set(0)

    forward = jax.jit(decoder_for_onnx_forward)

    # prefill pass (past=None)
    last_hidden, past_values = forward(params, input_ids, encoder_state, attention_mask)
    jax.block_until_ready(last_hidden)
    jax.block_until_ready(past_values)

    # one incremental decode step through the `past` branch of DecoderForONNX.forward
    next_ids = jnp.concatenate([input_ids, jnp.full((B, 1), 5, jnp.int32)], axis=1)
    last_hidden2, past_values2 = forward(params, next_ids, encoder_state, attention_mask, past_values)
    jax.block_until_ready(last_hidden2)
    jax.block_until_ready(past_values2)

    assert last_hidden.shape == (B, DEC_LEN, HIDDEN)
    assert last_hidden2.shape == (B, 1, HIDDEN)
    assert len(past_values) == 4 * LAYERS
    assert past_values2[0].shape == (B, HEADS, DEC_LEN + 1, HEAD_DIM)   # grown self-attn cache
    assert past_values2[2].shape == (B, HEADS, ENC_LEN, HEAD_DIM)       # reused cross-attn cache
    assert bool(jnp.all(jnp.isfinite(last_hidden))) and bool(jnp.all(jnp.isfinite(last_hidden2)))

    print("KERNEL_OK")
</pallas_src>

<mosaic_0001>
module attributes {stable_mosaic.version = 11 : i64} {
  func.func @kernel(%arg0: i32, %arg1: memref<1x8x32xf32, #tpu.memory_space<vmem>>, %arg2: memref<1x8x32xf32, #tpu.memory_space<vmem>>, %arg3: memref<1x1x8xf32, #tpu.memory_space<vmem>>, %arg4: memref<1x32xf32, #tpu.memory_space<vmem>>, %arg5: memref<1x32xf32, #tpu.memory_space<vmem>>, %arg6: memref<2x32x96xbf16, #tpu.memory_space<vmem>>, %arg7: memref<2x1x96xf32, #tpu.memory_space<vmem>>, %arg8: memref<2x4x8x32xbf16, #tpu.memory_space<vmem>>, %arg9: memref<2x1x32xf32, #tpu.memory_space<vmem>>, %arg10: memref<2x1x32xf32, #tpu.memory_space<vmem>>, %arg11: memref<2x1x32xf32, #tpu.memory_space<vmem>>, %arg12: memref<2x32x32xbf16, #tpu.memory_space<vmem>>, %arg13: memref<2x1x32xf32, #tpu.memory_space<vmem>>, %arg14: memref<2x32x64xbf16, #tpu.memory_space<vmem>>, %arg15: memref<2x1x64xf32, #tpu.memory_space<vmem>>, %arg16: memref<2x4x8x32xbf16, #tpu.memory_space<vmem>>, %arg17: memref<2x1x32xf32, #tpu.memory_space<vmem>>, %arg18: memref<2x1x32xf32, #tpu.memory_space<vmem>>, %arg19: memref<2x1x32xf32, #tpu.memory_space<vmem>>, %arg20: memref<2x32x64xbf16, #tpu.memory_space<vmem>>, %arg21: memref<2x1x64xf32, #tpu.memory_space<vmem>>, %arg22: memref<2x64x32xbf16, #tpu.memory_space<vmem>>, %arg23: memref<2x1x32xf32, #tpu.memory_space<vmem>>, %arg24: memref<2x1x32xf32, #tpu.memory_space<vmem>>, %arg25: memref<2x1x32xf32, #tpu.memory_space<vmem>>, %arg26: memref<1x8x32xf32, #tpu.memory_space<vmem>>, %arg27: memref<1x4x8x8xf32, #tpu.memory_space<vmem>>, %arg28: memref<1x4x8x8xf32, #tpu.memory_space<vmem>>, %arg29: memref<1x4x8x8xf32, #tpu.memory_space<vmem>>, %arg30: memref<1x4x8x8xf32, #tpu.memory_space<vmem>>, %arg31: memref<1x4x8x8xf32, #tpu.memory_space<vmem>>, %arg32: memref<1x4x8x8xf32, #tpu.memory_space<vmem>>, %arg33: memref<1x4x8x8xf32, #tpu.memory_space<vmem>>, %arg34: memref<1x4x8x8xf32, #tpu.memory_space<vmem>>) attributes {dimension_semantics = [#tpu.dimension_semantics<parallel>], iteration_bounds = array<i64: 2>, scalar_prefetch = 0 : i64, scratch_operands = 0 : i64, tpu.core_type = #tpu.core_type<tc>, window_params = [{transform_indices = @transform_0, window_bounds = array<i64: 1, 8, 32>}, {transform_indices = @transform_1, window_bounds = array<i64: 1, 8, 32>}, {transform_indices = @transform_2, window_bounds = array<i64: 1, 1, 8>}, {pipeline_mode = #tpu.pipeline_mode<synchronous>, transform_indices = @transform_3, window_bounds = array<i64: 1, 32>}, {pipeline_mode = #tpu.pipeline_mode<synchronous>, transform_indices = @transform_4, window_bounds = array<i64: 1, 32>}, {pipeline_mode = #tpu.pipeline_mode<synchronous>, transform_indices = @transform_5, window_bounds = array<i64: 2, 32, 96>}, {pipeline_mode = #tpu.pipeline_mode<synchronous>, transform_indices = @transform_6, window_bounds = array<i64: 2, 1, 96>}, {pipeline_mode = #tpu.pipeline_mode<synchronous>, transform_indices = @transform_7, window_bounds = array<i64: 2, 4, 8, 32>}, {pipeline_mode = #tpu.pipeline_mode<synchronous>, transform_indices = @transform_8, window_bounds = array<i64: 2, 1, 32>}, {pipeline_mode = #tpu.pipeline_mode<synchronous>, transform_indices = @transform_9, window_bounds = array<i64: 2, 1, 32>}, {pipeline_mode = #tpu.pipeline_mode<synchronous>, transform_indices = @transform_10, window_bounds = array<i64: 2, 1, 32>}, {pipeline_mode = #tpu.pipeline_mode<synchronous>, transform_indices = @transform_11, window_bounds = array<i64: 2, 32, 32>}, {pipeline_mode = #tpu.pipeline_mode<synchronous>, transform_indices = @transform_12, window_bounds = array<i64: 2, 1, 32>}, {pipeline_mode = #tpu.pipeline_mode<synchronous>, transform_indices = @transform_13, window_bounds = array<i64: 2, 32, 64>}, {pipeline_mode = #tpu.pipeline_mode<synchronous>, transform_indices = @transform_14, window_bounds = array<i64: 2, 1, 64>}, {pipeline_mode = #tpu.pipeline_mode<synchronous>, transform_indices = @transform_15, window_bounds = array<i64: 2, 4, 8, 32>}, {pipeline_mode = #tpu.pipeline_mode<synchronous>, transform_indices = @transform_16, window_bounds = array<i64: 2, 1, 32>}, {pipeline_mode = #tpu.pipeline_mode<synchronous>, transform_indices = @transform_17, window_bounds = array<i64: 2, 1, 32>}, {pipeline_mode = #tpu.pipeline_mode<synchronous>, transform_indices = @transform_18, window_bounds = array<i64: 2, 1, 32>}, {pipeline_mode = #tpu.pipeline_mode<synchronous>, transform_indices = @transform_19, window_bounds = array<i64: 2, 32, 64>}, {pipeline_mode = #tpu.pipeline_mode<synchronous>, transform_indices = @transform_20, window_bounds = array<i64: 2, 1, 64>}, {pipeline_mode = #tpu.pipeline_mode<synchronous>, transform_indices = @transform_21, window_bounds = array<i64: 2, 64, 32>}, {pipeline_mode = #tpu.pipeline_mode<synchronous>, transform_indices = @transform_22, window_bounds = array<i64: 2, 1, 32>}, {pipeline_mode = #tpu.pipeline_mode<synchronous>, transform_indices = @transform_23, window_bounds = array<i64: 2, 1, 32>}, {pipeline_mode = #tpu.pipeline_mode<synchronous>, transform_indices = @transform_24, window_bounds = array<i64: 2, 1, 32>}, {transform_indices = @transform_25, window_bounds = array<i64: 1, 8, 32>}, {transform_indices = @transform_26, window_bounds = array<i64: 1, 4, 8, 8>}, {transform_indices = @transform_27, window_bounds = array<i64: 1, 4, 8, 8>}, {transform_indices = @transform_28, window_bounds = array<i64: 1, 4, 8, 8>}, {transform_indices = @transform_29, window_bounds = array<i64: 1, 4, 8, 8>}, {transform_indices = @transform_30, window_bounds = array<i64: 1, 4, 8, 8>}, {transform_indices = @transform_31, window_bounds = array<i64: 1, 4, 8, 8>}, {transform_indices = @transform_32, window_bounds = array<i64: 1, 4, 8, 8>}, {transform_indices = @transform_33, window_bounds = array<i64: 1, 4, 8, 8>}]} {
    %c0 = arith.constant 0 : index
    %c0_0 = arith.constant 0 : index
    %c0_1 = arith.constant 0 : index
    %0 = vector.load %arg1[%c0, %c0_0, %c0_1] : memref<1x8x32xf32, #tpu.memory_space<vmem>>, vector<1x8x32xf32>
    %1 = vector.shape_cast %0 : vector<1x8x32xf32> to vector<8x32xf32>
    %c0_2 = arith.constant 0 : index
    %c0_3 = arith.constant 0 : index
    %2 = vector.load %arg4[%c0_2, %c0_3] : memref<1x32xf32, #tpu.memory_space<vmem>>, vector<1x32xf32>
    %c0_4 = arith.constant 0 : index
    %c0_5 = arith.constant 0 : index
    %3 = vector.load %arg5[%c0_4, %c0_5] : memref<1x32xf32, #tpu.memory_space<vmem>>, vector<1x32xf32>
    %cst = arith.constant dense<0.000000e+00> : vector<8xf32>
    %4 = vector.multi_reduction <add>, %1, %cst [1] : vector<8x32xf32> to vector<8xf32>
    %5 = vector.shape_cast %4 : vector<8xf32> to vector<8x1xf32>
    %cst_6 = arith.constant 3.200000e+01 : f32
    %6 = vector.broadcast %cst_6 : f32 to vector<8x1xf32>
    %7 = arith.divf %5, %6 : vector<8x1xf32>
    %8 = vector.broadcast %7 : vector<8x1xf32> to vector<8x32xf32>
    %9 = arith.subf %1, %8 : vector<8x32xf32>
    %10 = arith.mulf %9, %9 : vector<8x32xf32>
    %cst_7 = arith.constant dense<0.000000e+00> : vector<8xf32>
    %11 = vector.multi_reduction <add>, %10, %cst_7 [1] : vector<8x32xf32> to vector<8xf32>
    %12 = vector.shape_cast %11 : vector<8xf32> to vector<8x1xf32>
    %cst_8 = arith.constant 3.200000e+01 : f32
    %13 = vector.broadcast %cst_8 : f32 to vector<8x1xf32>
    %14 = arith.divf %12, %13 : vector<8x1xf32>
    %15 = vector.broadcast %7 : vector<8x1xf32> to vector<8x32xf32>
    %16 = arith.subf %1, %15 : vector<8x32xf32>
    %cst_9 = arith.constant 9.99999974E-6 : f32
    %17 = vector.broadcast %cst_9 : f32 to vector<8x1xf32>
    %18 = arith.addf %14, %17 : vector<8x1xf32>
    %19 = math.rsqrt %18 : vector<8x1xf32>
    %20 = vector.broadcast %19 : vector<8x1xf32> to vector<8x32xf32>
    %21 = arith.mulf %16, %20 : vector<8x32xf32>
    %22 = vector.broadcast %2 : vector<1x32xf32> to vector<8x32xf32>
    %23 = arith.mulf %21, %22 : vector<8x32xf32>
    %24 = vector.broadcast %3 : vector<1x32xf32> to vector<8x32xf32>
    %25 = arith.addf %23, %24 : vector<8x32xf32>
    %c0_10 = arith.constant 0 : index
    %c0_11 = arith.constant 0 : index
    %c0_12 = arith.constant 0 : index
    %26 = vector.load %arg3[%c0_10, %c0_11, %c0_12] : memref<1x1x8xf32, #tpu.memory_space<vmem>>, vector<1x1x8xf32>
    %27 = vector.shape_cast %26 : vector<1x1x8xf32> to vector<1x8xf32>
    %28 = tpu.iota {dimensions = array<i32: 0>} : vector<8x8xi32>
    %29 = tpu.iota {dimensions = array<i32: 1>} : vector<8x8xi32>
    %c0_i32 = arith.constant 0 : i32
    %30 = vector.broadcast %c0_i32 : i32 to vector<8x8xi32>
    %31 = arith.addi %28, %30 : vector<8x8xi32>
    %32 = arith.cmpi sle, %29, %31 : vector<8x8xi32>
    %cst_13 = arith.constant 0.000000e+00 : f32
    %cst_14 = arith.constant -1.000000e+09 : f32
    %33 = vector.broadcast %cst_13 : f32 to vector<8x8xf32>
    %34 = vector.broadcast %cst_14 : f32 to vector<8x8xf32>
    %35 = arith.select %32, %33, %34 : vector<8x8xi1>, vector<8x8xf32>
    %c0_15 = arith.constant 0 : index
    %c0_16 = arith.constant 0 : index
    %c0_17 = arith.constant 0 : index
    %36 = vector.load %arg6[%c0_15, %c0_16, %c0_17] : memref<2x32x96xbf16, #tpu.memory_space<vmem>>, vector<1x32x96xbf16>
    %37 = vector.shape_cast %36 : vector<1x32x96xbf16> to vector<32x96xbf16>
    %c0_18 = arith.constant 0 : index
    %c0_19 = arith.constant 0 : index
    %c0_20 = arith.constant 0 : index
    %38 = vector.load %arg7[%c0_18, %c0_19, %c0_20] : memref<2x1x96xf32, #tpu.memory_space<vmem>>, vector<1x1x96xf32>
    %39 = vector.shape_cast %38 : vector<1x1x96xf32> to vector<1x96xf32>
    %40 = arith.truncf %25 : vector<8x32xf32> to vector<8x32xbf16>
    %cst_21 = arith.constant dense<0.000000e+00> : vector<8x96xf32>
    %41 = tpu.matmul %40, %37, %cst_21 {dimension_numbers = #tpu.dot_dimension_numbers<[1], [0], [0], [1], [0, 0, 1, 1], [], []>} : vector<8x32xbf16>, vector<32x96xbf16>, vector<8x96xf32> -> vector<8x96xf32>
    %42 = vector.broadcast %39 : vector<1x96xf32> to vector<8x96xf32>
    %43 = arith.addf %41, %42 : vector<8x96xf32>
    %cst_22 = arith.constant 0.000000e+00 : f32
    %44 = vector.broadcast %cst_22 : f32 to vector<8x32xf32>
    %45 = vector.extract_strided_slice %43 {offsets = [0, 0], sizes = [8, 8], strides = [1, 1]} : vector<8x96xf32> to vector<8x8xf32>
    %46 = vector.extract_strided_slice %43 {offsets = [0, 32], sizes = [8, 8], strides = [1, 1]} : vector<8x96xf32> to vector<8x8xf32>
    %47 = vector.extract_strided_slice %43 {offsets = [0, 64], sizes = [8, 8], strides = [1, 1]} : vector<8x96xf32> to vector<8x8xf32>
    %c0_23 = arith.constant 0 : index
    %c0_24 = arith.constant 0 : index
    %c0_25 = arith.constant 0 : index
    %c0_26 = arith.constant 0 : index
    %48 = vector.load %arg27[%c0_23, %c0_24, %c0_25, %c0_26] : memref<1x4x8x8xf32, #tpu.memory_space<vmem>>, vector<1x1x8x8xf32>
    %49 = vector.shape_cast %48 : vector<1x1x8x8xf32> to vector<8x8xf32>
    %50 = vector.shape_cast %46 : vector<8x8xf32> to vector<1x1x8x8xf32>
    tpu.vector_store %arg27[%c0_23, %c0_24, %c0_25, %c0_26], %50 {strides = array<i32>} : memref<1x4x8x8xf32, #tpu.memory_space<vmem>>, vector<1x1x8x8xf32>,
    %c0_27 = arith.constant 0 : index
    %c0_28 = arith.constant 0 : index
    %c0_29 = arith.constant 0 : index
    %c0_30 = arith.constant 0 : index
    %51 = vector.load %arg28[%c0_27, %c0_28, %c0_29, %c0_30] : memref<1x4x8x8xf32, #tpu.memory_space<vmem>>, vector<1x1x8x8xf32>
    %52 = vector.shape_cast %51 : vector<1x1x8x8xf32> to vector<8x8xf32>
    %53 = vector.shape_cast %47 : vector<8x8xf32> to vector<1x1x8x8xf32>
    tpu.vector_store %arg28[%c0_27, %c0_28, %c0_29, %c0_30], %53 {strides = array<i32>} : memref<1x4x8x8xf32, #tpu.memory_space<vmem>>, vector<1x1x8x8xf32>,
    %c0_31 = arith.constant 0 : index
    %c0_32 = arith.constant 0 : index
    %c0_33 = arith.constant 0 : index
    %c0_34 = arith.constant 0 : index
    %54 = vector.load %arg27[%c0_31, %c0_32, %c0_33, %c0_34] : memref<1x4x8x8xf32, #tpu.memory_space<vmem>>, vector<1x1x8x8xf32>
    %55 = vector.shape_cast %54 : vector<1x1x8x8xf32> to vector<8x8xf32>
    %c0_35 = arith.constant 0 : index
    %c0_36 = arith.constant 0 : index
    %c0_37 = arith.constant 0 : index
    %c0_38 = arith.constant 0 : index
    %56 = vector.load %arg28[%c0_35, %c0_36, %c0_37, %c0_38] : memref<1x4x8x8xf32, #tpu.memory_space<vmem>>, vector<1x1x8x8xf32>
    %57 = vector.shape_cast %56 : vector<1x1x8x8xf32> to vector<8x8xf32>
    %58 = arith.truncf %45 : vector<8x8xf32> to vector<8x8xbf16>
    %59 = arith.truncf %55 : vector<8x8xf32> to vector<8x8xbf16>
    %cst_39 = arith.constant dense<0.000000e+00> : vector<8x8xf32>
    %60 = tpu.matmul %58, %59, %cst_39 {dimension_numbers = #tpu.dot_dimension_numbers<[1], [1], [0], [0], [0, 0, 1, 0], [], []>} : vector<8x8xbf16>, vector<8x8xbf16>, vector<8x8xf32> -> vector<8x8xf32>
    %61 = arith.addf %60, %35 : vector<8x8xf32>
    %cst_40 = arith.constant dense<0xFF800000> : vector<8xf32>
    %62 = vector.multi_reduction <maximumf>, %61, %cst_40 [1] : vector<8x8xf32> to vector<8xf32>
    %63 = vector.shape_cast %62 : vector<8xf32> to vector<8x1xf32>
    %64 = vector.broadcast %63 : vector<8x1xf32> to vector<8x8xf32>
    %65 = arith.subf %61, %64 : vector<8x8xf32>
    %66 = math.exp %65 : vector<8x8xf32>
    %cst_41 = arith.constant dense<0.000000e+00> : vector<8xf32>
    %67 = vector.multi_reduction <add>, %66, %cst_41 [1] : vector<8x8xf32> to vector<8xf32>
    %68 = vector.shape_cast %67 : vector<8xf32> to vector<8x1xf32>
    %69 = tpu.reciprocal %68 {approx = true} : vector<8x1xf32> -> vector<8x1xf32>
    %70 = vector.broadcast %69 : vector<8x1xf32> to vector<8x8xf32>
    %71 = arith.mulf %66, %70 : vector<8x8xf32>
    %72 = arith.truncf %71 : vector<8x8xf32> to vector<8x8xbf16>
    %73 = arith.truncf %57 : vector<8x8xf32> to vector<8x8xbf16>
    %cst_42 = arith.constant dense<0.000000e+00> : vector<8x8xf32>
    %74 = tpu.matmul %72, %73, %cst_42 {dimension_numbers = #tpu.dot_dimension_numbers<[1], [0], [0], [1], [0, 0, 1, 1], [], []>} : vector<8x8xbf16>, vector<8x8xbf16>, vector<8x8xf32> -> vector<8x8xf32>
    %75 = arith.truncf %74 : vector<8x8xf32> to vector<8x8xbf16>
    %c0_43 = arith.constant 0 : index
    %c0_44 = arith.constant 0 : index
    %c0_45 = arith.constant 0 : index
    %c0_46 = arith.constant 0 : index
    %76 = vector.load %arg8[%c0_43, %c0_44, %c0_45, %c0_46] : memref<2x4x8x32xbf16, #tpu.memory_space<vmem>>, vector<1x1x8x32xbf16>
    %77 = vector.shape_cast %76 : vector<1x1x8x32xbf16> to vector<8x32xbf16>
    %cst_47 = arith.constant dense<0.000000e+00> : vector<8x32xf32>
    %78 = tpu.matmul %75, %77, %cst_47 {dimension_numbers = #tpu.dot_dimension_numbers<[1], [0], [0], [1], [0, 0, 1, 1], [], []>} : vector<8x8xbf16>, vector<8x32xbf16>, vector<8x32xf32> -> vector<8x32xf32>
    %79 = arith.addf %44, %78 : vector<8x32xf32>
    %80 = vector.extract_strided_slice %43 {offsets = [0, 8], sizes = [8, 8], strides = [1, 1]} : vector<8x96xf32> to vector<8x8xf32>
    %81 = vector.extract_strided_slice %43 {offsets = [0, 40], sizes = [8, 8], strides = [1, 1]} : vector<8x96xf32> to vector<8x8xf32>
    %82 = vector.extract_strided_slice %43 {offsets = [0, 72], sizes = [8, 8], strides = [1, 1]} : vector<8x96xf32> to vector<8x8xf32>
    %c0_48 = arith.constant 0 : index
    %c1 = arith.constant 1 : index
    %c0_49 = arith.constant 0 : index
    %c0_50 = arith.constant 0 : index
    %83 = vector.load %arg27[%c0_48, %c1, %c0_49, %c0_50] : memref<1x4x8x8xf32, #tpu.memory_space<vmem>>, vector<1x1x8x8xf32>
    %84 = vector.shape_cast %83 : vector<1x1x8x8xf32> to vector<8x8xf32>
    %85 = vector.shape_cast %81 : vector<8x8xf32> to vector<1x1x8x8xf32>
    tpu.vector_store %arg27[%c0_48, %c1, %c0_49, %c0_50], %85 {strides = array<i32>} : memref<1x4x8x8xf32, #tpu.memory_space<vmem>>, vector<1x1x8x8xf32>,
    %c0_51 = arith.constant 0 : index
    %c1_52 = arith.constant 1 : index
    %c0_53 = arith.constant 0 : index
    %c0_54 = arith.constant 0 : index
    %86 = vector.load %arg28[%c0_51, %c1_52, %c0_53, %c0_54] : memref<1x4x8x8xf32, #tpu.memory_space<vmem>>, vector<1x1x8x8xf32>
    %87 = vector.shape_cast %86 : vector<1x1x8x8xf32> to vector<8x8xf32>
    %88 = vector.shape_cast %82 : vector<8x8xf32> to vector<1x1x8x8xf32>
    tpu.vector_store %arg28[%c0_51, %c1_52, %c0_53, %c0_54], %88 {strides = array<i32>} : memref<1x4x8x8xf32, #tpu.memory_space<vmem>>, vector<1x1x8x8xf32>,
    %c0_55 = arith.constant 0 : index
    %c1_56 = arith.constant 1 : index
    %c0_57 = arith.constant 0 : index
    %c0_58 = arith.constant 0 : index
    %89 = vector.load %arg27[%c0_55, %c1_56, %c0_57, %c0_58] : memref<1x4x8x8xf32, #tpu.memory_space<vmem>>, vector<1x1x8x8xf32>
    %90 = vector.shape_cast %89 : vector<1x1x8x8xf32> to vector<8x8xf32>
    %c0_59 = arith.constant 0 : index
    %c1_60 = arith.constant 1 : index
    %c0_61 = arith.constant 0 : index
    %c0_62 = arith.constant 0 : index
    %91 = vector.load %arg28[%c0_59, %c1_60, %c0_61, %c0_62] : memref<1x4x8x8xf32, #tpu.memory_space<vmem>>, vector<1x1x8x8xf32>
    %92 = vector.shape_cast %91 : vector<1x1x8x8xf32> to vector<8x8xf32>
    %93 = arith.truncf %80 : vector<8x8xf32> to vector<8x8xbf16>
    %94 = arith.truncf %90 : vector<8x8xf32> to vector<8x8xbf16>
    %cst_63 = arith.constant dense<0.000000e+00> : vector<8x8xf32>
    %95 = tpu.matmul %93, %94, %cst_63 {dimension_numbers = #tpu.dot_dimension_numbers<[1], [1], [0], [0], [0, 0, 1, 0], [], []>} : vector<8x8xbf16>, vector<8x8xbf16>, vector<8x8xf32> -> vector<8x8xf32>
    %96 = arith.addf %95, %35 : vector<8x8xf32>
    %cst_64 = arith.constant dense<0xFF800000> : vector<8xf32>
    %97 = vector.multi_reduction <maximumf>, %96, %cst_64 [1] : vector<8x8xf32> to vector<8xf32>
    %98 = vector.shape_cast %97 : vector<8xf32> to vector<8x1xf32>
    %99 = vector.broadcast %98 : vector<8x1xf32> to vector<8x8xf32>
    %100 = arith.subf %96, %99 : vector<8x8xf32>
    %101 = math.exp %100 : vector<8x8xf32>
    %cst_65 = arith.constant dense<0.000000e+00> : vector<8xf32>
    %102 = vector.multi_reduction <add>, %101, %cst_65 [1] : vector<8x8xf32> to vector<8xf32>
    %103 = vector.shape_cast %102 : vector<8xf32> to vector<8x1xf32>
    %104 = tpu.reciprocal %103 {approx = true} : vector<8x1xf32> -> vector<8x1xf32>
    %105 = vector.broadcast %104 : vector<8x1xf32> to vector<8x8xf32>
    %106 = arith.mulf %101, %105 : vector<8x8xf32>
    %107 = arith.truncf %106 : vector<8x8xf32> to vector<8x8xbf16>
    %108 = arith.truncf %92 : vector<8x8xf32> to vector<8x8xbf16>
    %cst_66 = arith.constant dense<0.000000e+00> : vector<8x8xf32>
    %109 = tpu.matmul %107, %108, %cst_66 {dimension_numbers = #tpu.dot_dimension_numbers<[1], [0], [0], [1], [0, 0, 1, 1], [], []>} : vector<8x8xbf16>, vector<8x8xbf16>, vector<8x8xf32> -> vector<8x8xf32>
    %110 = arith.truncf %109 : vector<8x8xf32> to vector<8x8xbf16>
    %c0_67 = arith.constant 0 : index
    %c1_68 = arith.constant 1 : index
    %c0_69 = arith.constant 0 : index
    %c0_70 = arith.constant 0 : index
    %111 = vector.load %arg8[%c0_67, %c1_68, %c0_69, %c0_70] : memref<2x4x8x32xbf16, #tpu.memory_space<vmem>>, vector<1x1x8x32xbf16>
    %112 = vector.shape_cast %111 : vector<1x1x8x32xbf16> to vector<8x32xbf16>
    %cst_71 = arith.constant dense<0.000000e+00> : vector<8x32xf32>
    %113 = tpu.matmul %110, %112, %cst_71 {dimension_numbers = #tpu.dot_dimension_numbers<[1], [0], [0], [1], [0, 0, 1, 1], [], []>} : vector<8x8xbf16>, vector<8x32xbf16>, vector<8x32xf32> -> vector<8x32xf32>
    %114 = arith.addf %79, %113 : vector<8x32xf32>
    %115 = vector.extract_strided_slice %43 {offsets = [0, 16], sizes = [8, 8], strides = [1, 1]} : vector<8x96xf32> to vector<8x8xf32>
    %116 = vector.extract_strided_slice %43 {offsets = [0, 48], sizes = [8, 8], strides = [1, 1]} : vector<8x96xf32> to vector<8x8xf32>
    %117 = vector.extract_strided_slice %43 {offsets = [0, 80], sizes = [8, 8], strides = [1, 1]} : vector<8x96xf32> to vector<8x8xf32>
    %c0_72 = arith.constant 0 : index
    %c2 = arith.constant 2 : index
    %c0_73 = arith.constant 0 : index
    %c0_74 = arith.constant 0 : index
    %118 = vector.load %arg27[%c0_72, %c2, %c0_73, %c0_74] : memref<1x4x8x8xf32, #tpu.memory_space<vmem>>, vector<1x1x8x8xf32>
    %119 = vector.shape_cast %118 : vector<1x1x8x8xf32> to vector<8x8xf32>
    %120 = vector.shape_cast %116 : vector<8x8xf32> to vector<1x1x8x8xf32>
    tpu.vector_store %arg27[%c0_72, %c2, %c0_73, %c0_74], %120 {strides = array<i32>} : memref<1x4x8x8xf32, #tpu.memory_space<vmem>>, vector<1x1x8x8xf32>,
    %c0_75 = arith.constant 0 : index
    %c2_76 = arith.constant 2 : index
    %c0_77 = arith.constant 0 : index
    %c0_78 = arith.constant 0 : index
    %121 = vector.load %arg28[%c0_75, %c2_76, %c0_77, %c0_78] : memref<1x4x8x8xf32, #tpu.memory_space<vmem>>, vector<1x1x8x8xf32>
    %122 = vector.shape_cast %121 : vector<1x1x8x8xf32> to vector<8x8xf32>
    %123 = vector.shape_cast %117 : vector<8x8xf32> to vector<1x1x8x8xf32>
    tpu.vector_store %arg28[%c0_75, %c2_76, %c0_77, %c0_78], %123 {strides = array<i32>} : memref<1x4x8x8xf32, #tpu.memory_space<vmem>>, vector<1x1x8x8xf32>,
    %c0_79 = arith.constant 0 : index
    %c2_80 = arith.constant 2 : index
    %c0_81 = arith.constant 0 : index
    %c0_82 = arith.constant 0 : index
    %124 = vector.load %arg27[%c0_79, %c2_80, %c0_81, %c0_82] : memref<1x4x8x8xf32, #tpu.memory_space<vmem>>, vector<1x1x8x8xf32>
    %125 = vector.shape_cast %124 : vector<1x1x8x8xf32> to vector<8x8xf32>
    %c0_83 = arith.constant 0 : index
    %c2_84 = arith.constant 2 : index
    %c0_85 = arith.constant 0 : index
    %c0_86 = arith.constant 0 : index
    %126 = vector.load %arg28[%c0_83, %c2_84, %c0_85, %c0_86] : memref<1x4x8x8xf32, #tpu.memory_space<vmem>>, vector<1x1x8x8xf32>
    %127 = vector.shape_cast %126 : vector<1x1x8x8xf32> to vector<8x8xf32>
    %128 = arith.truncf %115 : vector<8x8xf32> to vector<8x8xbf16>
    %129 = arith.truncf %125 : vector<8x8xf32> to vector<8x8xbf16>
    %cst_87 = arith.constant dense<0.000000e+00> : vector<8x8xf32>
    %130 = tpu.matmul %128, %129, %cst_87 {dimension_numbers = #tpu.dot_dimension_numbers<[1], [1], [0], [0], [0, 0, 1, 0], [], []>} : vector<8x8xbf16>, vector<8x8xbf16>, vector<8x8xf32> -> vector<8x8xf32>
    %131 = arith.addf %130, %35 : vector<8x8xf32>
    %cst_88 = arith.constant dense<0xFF800000> : vector<8xf32>
    %132 = vector.multi_reduction <maximumf>, %131, %cst_88 [1] : vector<8x8xf32> to vector<8xf32>
    %133 = vector.shape_cast %132 : vector<8xf32> to vector<8x1xf32>
    %134 = vector.broadcast %133 : vector<8x1xf32> to vector<8x8xf32>
    %135 = arith.subf %131, %134 : vector<8x8xf32>
    %136 = math.exp %135 : vector<8x8xf32>
    %cst_89 = arith.constant dense<0.000000e+00> : vector<8xf32>
    %137 = vector.multi_reduction <add>, %136, %cst_89 [1] : vector<8x8xf32> to vector<8xf32>
    %138 = vector.shape_cast %137 : vector<8xf32> to vector<8x1xf32>
    %139 = tpu.reciprocal %138 {approx = true} : vector<8x1xf32> -> vector<8x1xf32>
    %140 = vector.broadcast %139 : vector<8x1xf32> to vector<8x8xf32>
    %141 = arith.mulf %136, %140 : vector<8x8xf32>
    %142 = arith.truncf %141 : vector<8x8xf32> to vector<8x8xbf16>
    %143 = arith.truncf %127 : vector<8x8xf32> to vector<8x8xbf16>
    %cst_90 = arith.constant dense<0.000000e+00> : vector<8x8xf32>
    %144 = tpu.matmul %142, %143, %cst_90 {dimension_numbers = #tpu.dot_dimension_numbers<[1], [0], [0], [1], [0, 0, 1, 1], [], []>} : vector<8x8xbf16>, vector<8x8xbf16>, vector<8x8xf32> -> vector<8x8xf32>
    %145 = arith.truncf %144 : vector<8x8xf32> to vector<8x8xbf16>
    %c0_91 = arith.constant 0 : index
    %c2_92 = arith.constant 2 : index
    %c0_93 = arith.constant 0 : index
    %c0_94 = arith.constant 0 : index
    %146 = vector.load %arg8[%c0_91, %c2_92, %c0_93, %c0_94] : memref<2x4x8x32xbf16, #tpu.memory_space<vmem>>, vector<1x1x8x32xbf16>
    %147 = vector.shape_cast %146 : vector<1x1x8x32xbf16> to vector<8x32xbf16>
    %cst_95 = arith.constant dense<0.000000e+00> : vector<8x32xf32>
    %148 = tpu.matmul %145, %147, %cst_95 {dimension_numbers = #tpu.dot_dimension_numbers<[1], [0], [0], [1], [0, 0, 1, 1], [], []>} : vector<8x8xbf16>, vector<8x32xbf16>, vector<8x32xf32> -> vector<8x32xf32>
    %149 = arith.addf %114, %148 : vector<8x32xf32>
    %150 = vector.extract_strided_slice %43 {offsets = [0, 24], sizes = [8, 8], strides = [1, 1]} : vector<8x96xf32> to vector<8x8xf32>
    %151 = vector.extract_strided_slice %43 {offsets = [0, 56], sizes = [8, 8], strides = [1, 1]} : vector<8x96xf32> to vector<8x8xf32>
    %152 = vector.extract_strided_slice %43 {offsets = [0, 88], sizes = [8, 8], strides = [1, 1]} : vector<8x96xf32> to vector<8x8xf32>
    %c0_96 = arith.constant 0 : index
    %c3 = arith.constant 3 : index
    %c0_97 = arith.constant 0 : index
    %c0_98 = arith.constant 0 : index
    %153 = vector.load %arg27[%c0_96, %c3, %c0_97, %c0_98] : memref<1x4x8x8xf32, #tpu.memory_space<vmem>>, vector<1x1x8x8xf32>
    %154 = vector.shape_cast %153 : vector<1x1x8x8xf32> to vector<8x8xf32>
    %155 = vector.shape_cast %151 : vector<8x8xf32> to vector<1x1x8x8xf32>
    tpu.vector_store %arg27[%c0_96, %c3, %c0_97, %c0_98], %155 {strides = array<i32>} : memref<1x4x8x8xf32, #tpu.memory_space<vmem>>, vector<1x1x8x8xf32>,
    %c0_99 = arith.constant 0 : index
    %c3_100 = arith.constant 3 : index
    %c0_101 = arith.constant 0 : index
    %c0_102 = arith.constant 0 : index
    %156 = vector.load %arg28[%c0_99, %c3_100, %c0_101, %c0_102] : memref<1x4x8x8xf32, #tpu.memory_space<vmem>>, vector<1x1x8x8xf32>
    %157 = vector.shape_cast %156 : vector<1x1x8x8xf32> to vector<8x8xf32>
    %158 = vector.shape_cast %152 : vector<8x8xf32> to vector<1x1x8x8xf32>
    tpu.vector_store %arg28[%c0_99, %c3_100, %c0_101, %c0_102], %158 {strides = array<i32>} : memref<1x4x8x8xf32, #tpu.memory_space<vmem>>, vector<1x1x8x8xf32>,
    %c0_103 = arith.constant 0 : index
    %c3_104 = arith.constant 3 : index
    %c0_105 = arith.constant 0 : index
    %c0_106 = arith.constant 0 : index
    %159 = vector.load %arg27[%c0_103, %c3_104, %c0_105, %c0_106] : memref<1x4x8x8xf32, #tpu.memory_space<vmem>>, vector<1x1x8x8xf32>
    %160 = vector.shape_cast %159 : vector<1x1x8x8xf32> to vector<8x8xf32>
    %c0_107 = arith.constant 0 : index
    %c3_108 = arith.constant 3 : index
    %c0_109 = arith.constant 0 : index
    %c0_110 = arith.constant 0 : index
    %161 = vector.load %arg28[%c0_107, %c3_108, %c0_109, %c0_110] : memref<1x4x8x8xf32, #tpu.memory_space<vmem>>, vector<1x1x8x8xf32>
    %162 = vector.shape_cast %161 : vector<1x1x8x8xf32> to vector<8x8xf32>
    %163 = arith.truncf %150 : vector<8x8xf32> to vector<8x8xbf16>
    %164 = arith.truncf %160 : vector<8x8xf32> to vector<8x8xbf16>
    %cst_111 = arith.constant dense<0.000000e+00> : vector<8x8xf32>
    %165 = tpu.matmul %163, %164, %cst_111 {dimension_numbers = #tpu.dot_dimension_numbers<[1], [1], [0], [0], [0, 0, 1, 0], [], []>} : vector<8x8xbf16>, vector<8x8xbf16>, vector<8x8xf32> -> vector<8x8xf32>
    %166 = arith.addf %165, %35 : vector<8x8xf32>
    %cst_112 = arith.constant dense<0xFF800000> : vector<8xf32>
    %167 = vector.multi_reduction <maximumf>, %166, %cst_112 [1] : vector<8x8xf32> to vector<8xf32>
    %168 = vector.shape_cast %167 : vector<8xf32> to vector<8x1xf32>
    %169 = vector.broadcast %168 : vector<8x1xf32> to vector<8x8xf32>
    %170 = arith.subf %166, %169 : vector<8x8xf32>
    %171 = math.exp %170 : vector<8x8xf32>
    %cst_113 = arith.constant dense<0.000000e+00> : vector<8xf32>
    %172 = vector.multi_reduction <add>, %171, %cst_113 [1] : vector<8x8xf32> to vector<8xf32>
    %173 = vector.shape_cast %172 : vector<8xf32> to vector<8x1xf32>
    %174 = tpu.reciprocal %173 {approx = true} : vector<8x1xf32> -> vector<8x1xf32>
    %175 = vector.broadcast %174 : vector<8x1xf32> to vector<8x8xf32>
    %176 = arith.mulf %171, %175 : vector<8x8xf32>
    %177 = arith.truncf %176 : vector<8x8xf32> to vector<8x8xbf16>
    %178 = arith.truncf %162 : vector<8x8xf32> to vector<8x8xbf16>
    %cst_114 = arith.constant dense<0.000000e+00> : vector<8x8xf32>
    %179 = tpu.matmul %177, %178, %cst_114 {dimension_numbers = #tpu.dot_dimension_numbers<[1], [0], [0], [1], [0, 0, 1, 1], [], []>} : vector<8x8xbf16>, vector<8x8xbf16>, vector<8x8xf32> -> vector<8x8xf32>
    %180 = arith.truncf %179 : vector<8x8xf32> to vector<8x8xbf16>
    %c0_115 = arith.constant 0 : index
    %c3_116 = arith.constant 3 : index
    %c0_117 = arith.constant 0 : index
    %c0_118 = arith.constant 0 : index
    %181 = vector.load %arg8[%c0_115, %c3_116, %c0_117, %c0_118] : memref<2x4x8x32xbf16, #tpu.memory_space<vmem>>, vector<1x1x8x32xbf16>
    %182 = vector.shape_cast %181 : vector<1x1x8x32xbf16> to vector<8x32xbf16>
    %cst_119 = arith.constant dense<0.000000e+00> : vector<8x32xf32>
    %183 = tpu.matmul %180, %182, %cst_119 {dimension_numbers = #tpu.dot_dimension_numbers<[1], [0], [0], [1], [0, 0, 1, 1], [], []>} : vector<8x8xbf16>, vector<8x32xbf16>, vector<8x32xf32> -> vector<8x32xf32>
    %184 = arith.addf %149, %183 : vector<8x32xf32>
    %c0_120 = arith.constant 0 : index
    %c0_121 = arith.constant 0 : index
    %c0_122 = arith.constant 0 : index
    %185 = vector.load %arg9[%c0_120, %c0_121, %c0_122] : memref<2x1x32xf32, #tpu.memory_space<vmem>>, vector<1x1x32xf32>
    %186 = vector.shape_cast %185 : vector<1x1x32xf32> to vector<1x32xf32>
    %187 = vector.broadcast %186 : vector<1x32xf32> to vector<8x32xf32>
    %188 = arith.addf %184, %187 : vector<8x32xf32>
    %189 = arith.addf %25, %188 : vector<8x32xf32>
    %c0_123 = arith.constant 0 : index
    %c0_124 = arith.constant 0 : index
    %c0_125 = arith.constant 0 : index
    %190 = vector.load %arg10[%c0_123, %c0_124, %c0_125] : memref<2x1x32xf32, #tpu.memory_space<vmem>>, vector<1x1x32xf32>
    %191 = vector.shape_cast %190 : vector<1x1x32xf32> to vector<1x32xf32>
    %c0_126 = arith.constant 0 : index
    %c0_127 = arith.constant 0 : index
    %c0_128 = arith.constant 0 : index
    %192 = vector.load %arg11[%c0_126, %c0_127, %c0_128] : memref<2x1x32xf32, #tpu.memory_space<vmem>>, vector<1x1x32xf32>
    %193 = vector.shape_cast %192 : vector<1x1x32xf32> to vector<1x32xf32>
    %cst_129 = arith.constant dense<0.000000e+00> : vector<8xf32>
    %194 = vector.multi_reduction <add>, %189, %cst_129 [1] : vector<8x32xf32> to vector<8xf32>
    %195 = vector.shape_cast %194 : vector<8xf32> to vector<8x1xf32>
    %cst_130 = arith.constant 3.200000e+01 : f32
    %196 = vector.broadcast %cst_130 : f32 to vector<8x1xf32>
    %197 = arith.divf %195, %196 : vector<8x1xf32>
    %198 = vector.broadcast %197 : vector<8x1xf32> to vector<8x32xf32>
    %199 = arith.subf %189, %198 : vector<8x32xf32>
    %200 = arith.mulf %199, %199 : vector<8x32xf32>
    %cst_131 = arith.constant dense<0.000000e+00> : vector<8xf32>
    %201 = vector.multi_reduction <add>, %200, %cst_131 [1] : vector<8x32xf32> to vector<8xf32>
    %202 = vector.shape_cast %201 : vector<8xf32> to vector<8x1xf32>
    %cst_132 = arith.constant 3.200000e+01 : f32
    %203 = vector.broadcast %cst_132 : f32 to vector<8x1xf32>
    %204 = arith.divf %202, %203 : vector<8x1xf32>
    %205 = vector.broadcast %197 : vector<8x1xf32> to vector<8x32xf32>
    %206 = arith.subf %189, %205 : vector<8x32xf32>
    %cst_133 = arith.constant 9.99999974E-6 : f32
    %207 = vector.broadcast %cst_133 : f32 to vector<8x1xf32>
    %208 = arith.addf %204, %207 : vector<8x1xf32>
    %209 = math.rsqrt %208 : vector<8x1xf32>
    %210 = vector.broadcast %209 : vector<8x1xf32> to vector<8x32xf32>
    %211 = arith.mulf %206, %210 : vector<8x32xf32>
    %212 = vector.broadcast %191 : vector<1x32xf32> to vector<8x32xf32>
    %213 = arith.mulf %211, %212 : vector<8x32xf32>
    %214 = vector.broadcast %193 : vector<1x32xf32> to vector<8x32xf32>
    %215 = arith.addf %213, %214 : vector<8x32xf32>
    %c0_134 = arith.constant 0 : index
    %c0_135 = arith.constant 0 : index
    %c0_136 = arith.constant 0 : index
    %216 = vector.load %arg12[%c0_134, %c0_135, %c0_136] : memref<2x32x32xbf16, #tpu.memory_space<vmem>>, vector<1x32x32xbf16>
    %217 = vector.shape_cast %216 : vector<1x32x32xbf16> to vector<32x32xbf16>
    %c0_137 = arith.constant 0 : index
    %c0_138 = arith.constant 0 : index
    %c0_139 = arith.constant 0 : index
    %218 = vector.load %arg13[%c0_137, %c0_138, %c0_139] : memref<2x1x32xf32, #tpu.memory_space<vmem>>, vector<1x1x32xf32>
    %219 = vector.shape_cast %218 : vector<1x1x32xf32> to vector<1x32xf32>
    %220 = arith.truncf %215 : vector<8x32xf32> to vector<8x32xbf16>
    %cst_140 = arith.constant dense<0.000000e+00> : vector<8x32xf32>
    %221 = tpu.matmul %220, %217, %cst_140 {dimension_numbers = #tpu.dot_dimension_numbers<[1], [0], [0], [1], [0, 0, 1, 1], [], []>} : vector<8x32xbf16>, vector<32x32xbf16>, vector<8x32xf32> -> vector<8x32xf32>
    %222 = vector.broadcast %219 : vector<1x32xf32> to vector<8x32xf32>
    %223 = arith.addf %221, %222 : vector<8x32xf32>
    %c0_141 = arith.constant 0 : index
    %c0_142 = arith.constant 0 : index
    %c0_143 = arith.constant 0 : index
    %224 = vector.load %arg2[%c0_141, %c0_142, %c0_143] : memref<1x8x32xf32, #tpu.memory_space<vmem>>, vector<1x8x32xf32>
    %225 = vector.shape_cast %224 : vector<1x8x32xf32> to vector<8x32xf32>
    %c0_144 = arith.constant 0 : index
    %c0_145 = arith.constant 0 : index
    %c0_146 = arith.constant 0 : index
    %226 = vector.load %arg14[%c0_144, %c0_145, %c0_146] : memref<2x32x64xbf16, #tpu.memory_space<vmem>>, vector<1x32x64xbf16>
    %227 = vector.shape_cast %226 : vector<1x32x64xbf16> to vector<32x64xbf16>
    %c0_147 = arith.constant 0 : index
    %c0_148 = arith.constant 0 : index
    %c0_149 = arith.constant 0 : index
    %228 = vector.load %arg15[%c0_147, %c0_148, %c0_149] : memref<2x1x64xf32, #tpu.memory_space<vmem>>, vector<1x1x64xf32>
    %229 = vector.shape_cast %228 : vector<1x1x64xf32> to vector<1x64xf32>
    %230 = arith.truncf %225 : vector<8x32xf32> to vector<8x32xbf16>
    %cst_150 = arith.constant dense<0.000000e+00> : vector<8x64xf32>
    %231 = tpu.matmul %230, %227, %cst_150 {dimension_numbers = #tpu.dot_dimension_numbers<[1], [0], [0], [1], [0, 0, 1, 1], [], []>} : vector<8x32xbf16>, vector<32x64xbf16>, vector<8x64xf32> -> vector<8x64xf32>
    %232 = vector.broadcast %229 : vector<1x64xf32> to vector<8x64xf32>
    %233 = arith.addf %231, %232 : vector<8x64xf32>
    %cst_151 = arith.constant 0.000000e+00 : f32
    %234 = vector.broadcast %cst_151 : f32 to vector<8x32xf32>
    %235 = vector.extract_strided_slice %223 {offsets = [0, 0], sizes = [8, 8], strides = [1, 1]} : vector<8x32xf32> to vector<8x8xf32>
    %236 = vector.extract_strided_slice %233 {offsets = [0, 0], sizes = [8, 8], strides = [1, 1]} : vector<8x64xf32> to vector<8x8xf32>
    %237 = vector.extract_strided_slice %233 {offsets = [0, 32], sizes = [8, 8], strides = [1, 1]} : vector<8x64xf32> to vector<8x8xf32>
    %c0_152 = arith.constant 0 : index
    %c0_153 = arith.constant 0 : index
    %c0_154 = arith.constant 0 : index
    %c0_155 = arith.constant 0 : index
    %238 = vector.load %arg29[%c0_152, %c0_153, %c0_154, %c0_155] : memref<1x4x8x8xf32, #tpu.memory_space<vmem>>, vector<1x1x8x8xf32>
    %239 = vector.shape_cast %238 : vector<1x1x8x8xf32> to vector<8x8xf32>
    %240 = vector.shape_cast %236 : vector<8x8xf32> to vector<1x1x8x8xf32>
    tpu.vector_store %arg29[%c0_152, %c0_153, %c0_154, %c0_155], %240 {strides = array<i32>} : memref<1x4x8x8xf32, #tpu.memory_space<vmem>>, vector<1x1x8x8xf32>,
    %c0_156 = arith.constant 0 : index
    %c0_157 = arith.constant 0 : index
    %c0_158 = arith.constant 0 : index
    %c0_159 = arith.constant 0 : index
    %241 = vector.load %arg30[%c0_156, %c0_157, %c0_158, %c0_159] : memref<1x4x8x8xf32, #tpu.memory_space<vmem>>, vector<1x1x8x8xf32>
    %242 = vector.shape_cast %241 : vector<1x1x8x8xf32> to vector<8x8xf32>
    %243 = vector.shape_cast %237 : vector<8x8xf32> to vector<1x1x8x8xf32>
    tpu.vector_store %arg30[%c0_156, %c0_157, %c0_158, %c0_159], %243 {strides = array<i32>} : memref<1x4x8x8xf32, #tpu.memory_space<vmem>>, vector<1x1x8x8xf32>,
    %244 = arith.truncf %235 : vector<8x8xf32> to vector<8x8xbf16>
    %245 = arith.truncf %236 : vector<8x8xf32> to vector<8x8xbf16>
    %cst_160 = arith.constant dense<0.000000e+00> : vector<8x8xf32>
    %246 = tpu.matmul %244, %245, %cst_160 {dimension_numbers = #tpu.dot_dimension_numbers<[1], [1], [0], [0], [0, 0, 1, 0], [], []>} : vector<8x8xbf16>, vector<8x8xbf16>, vector<8x8xf32> -> vector<8x8xf32>
    %247 = vector.broadcast %27 : vector<1x8xf32> to vector<8x8xf32>
    %248 = arith.addf %246, %247 : vector<8x8xf32>
    %cst_161 = arith.constant dense<0xFF800000> : vector<8xf32>
    %249 = vector.multi_reduction <maximumf>, %248, %cst_161 [1] : vector<8x8xf32> to vector<8xf32>
    %250 = vector.shape_cast %249 : vector<8xf32> to vector<8x1xf32>
    %251 = vector.broadcast %250 : vector<8x1xf32> to vector<8x8xf32>
    %252 = arith.subf %248, %251 : vector<8x8xf32>
    %253 = math.exp %252 : vector<8x8xf32>
    %cst_162 = arith.constant dense<0.000000e+00> : vector<8xf32>
    %254 = vector.multi_reduction <add>, %253, %cst_162 [1] : vector<8x8xf32> to vector<8xf32>
    %255 = vector.shape_cast %254 : vector<8xf32> to vector<8x1xf32>
    %256 = tpu.reciprocal %255 {approx = true} : vector<8x1xf32> -> vector<8x1xf32>
    %257 = vector.broadcast %256 : vector<8x1xf32> to vector<8x8xf32>
    %258 = arith.mulf %253, %257 : vector<8x8xf32>
    %259 = arith.truncf %258 : vector<8x8xf32> to vector<8x8xbf16>
    %260 = arith.truncf %237 : vector<8x8xf32> to vector<8x8xbf16>
    %cst_163 = arith.constant dense<0.000000e+00> : vector<8x8xf32>
    %261 = tpu.matmul %259, %260, %cst_163 {dimension_numbers = #tpu.dot_dimension_numbers<[1], [0], [0], [1], [0, 0, 1, 1], [], []>} : vector<8x8xbf16>, vector<8x8xbf16>, vector<8x8xf32> -> vector<8x8xf32>
    %262 = arith.truncf %261 : vector<8x8xf32> to vector<8x8xbf16>
    %c0_164 = arith.constant 0 : index
    %c0_165 = arith.constant 0 : index
    %c0_166 = arith.constant 0 : index
    %c0_167 = arith.constant 0 : index
    %263 = vector.load %arg16[%c0_164, %c0_165, %c0_166, %c0_167] : memref<2x4x8x32xbf16, #tpu.memory_space<vmem>>, vector<1x1x8x32xbf16>
    %264 = vector.shape_cast %263 : vector<1x1x8x32xbf16> to vector<8x32xbf16>
    %cst_168 = arith.constant dense<0.000000e+00> : vector<8x32xf32>
    %265 = tpu.matmul %262, %264, %cst_168 {dimension_numbers = #tpu.dot_dimension_numbers<[1], [0], [0], [1], [0, 0, 1, 1], [], []>} : vector<8x8xbf16>, vector<8x32xbf16>, vector<8x32xf32> -> vector<8x32xf32>
    %266 = arith.addf %234, %265 : vector<8x32xf32>
    %267 = vector.extract_strided_slice %223 {offsets = [0, 8], sizes = [8, 8], strides = [1, 1]} : vector<8x32xf32> to vector<8x8xf32>
    %268 = vector.extract_strided_slice %233 {offsets = [0, 8], sizes = [8, 8], strides = [1, 1]} : vector<8x64xf32> to vector<8x8xf32>
    %269 = vector.extract_strided_slice %233 {offsets = [0, 40], sizes = [8, 8], strides = [1, 1]} : vector<8x64xf32> to vector<8x8xf32>
    %c0_169 = arith.constant 0 : index
    %c1_170 = arith.constant 1 : index
    %c0_171 = arith.constant 0 : index
    %c0_172 = arith.constant 0 : index
    %270 = vector.load %arg29[%c0_169, %c1_170, %c0_171, %c0_172] : memref<1x4x8x8xf32, #tpu.memory_space<vmem>>, vector<1x1x8x8xf32>
    %271 = vector.shape_cast %270 : vector<1x1x8x8xf32> to vector<8x8xf32>
    %272 = vector.shape_cast %268 : vector<8x8xf32> to vector<1x1x8x8xf32>
    tpu.vector_store %arg29[%c0_169, %c1_170, %c0_171, %c0_172], %272 {strides = array<i32>} : memref<1x4x8x8xf32, #tpu.memory_space<vmem>>, vector<1x1x8x8xf32>,
    %c0_173 = arith.constant 0 : index
    %c1_174 = arith.constant 1 : index
    %c0_175 = arith.constant 0 : index
    %c0_176 = arith.constant 0 : index
    %273 = vector.load %arg30[%c0_173, %c1_174, %c0_175, %c0_176] : memref<1x4x8x8xf32, #tpu.memory_space<vmem>>, vector<1x1x8x8xf32>
    %274 = vector.shape_cast %273 : vector<1x1x8x8xf32> to vector<8x8xf32>
    %275 = vector.shape_cast %269 : vector<8x8xf32> to vector<1x1x8x8xf32>
    tpu.vector_store %arg30[%c0_173, %c1_174, %c0_175, %c0_176], %275 {strides = array<i32>} : memref<1x4x8x8xf32, #tpu.memory_space<vmem>>, vector<1x1x8x8xf32>,
    %276 = arith.truncf %267 : vector<8x8xf32> to vector<8x8xbf16>
    %277 = arith.truncf %268 : vector<8x8xf32> to vector<8x8xbf16>
    %cst_177 = arith.constant dense<0.000000e+00> : vector<8x8xf32>
    %278 = tpu.matmul %276, %277, %cst_177 {dimension_numbers = #tpu.dot_dimension_numbers<[1], [1], [0], [0], [0, 0, 1, 0], [], []>} : vector<8x8xbf16>, vector<8x8xbf16>, vector<8x8xf32> -> vector<8x8xf32>
    %279 = vector.broadcast %27 : vector<1x8xf32> to vector<8x8xf32>
    %280 = arith.addf %278, %279 : vector<8x8xf32>
    %cst_178 = arith.constant dense<0xFF800000> : vector<8xf32>
    %281 = vector.multi_reduction <maximumf>, %280, %cst_178 [1] : vector<8x8xf32> to vector<8xf32>
    %282 = vector.shape_cast %281 : vector<8xf32> to vector<8x1xf32>
    %283 = vector.broadcast %282 : vector<8x1xf32> to vector<8x8xf32>
    %284 = arith.subf %280, %283 : vector<8x8xf32>
    %285 = math.exp %284 : vector<8x8xf32>
    %cst_179 = arith.constant dense<0.000000e+00> : vector<8xf32>
    %286 = vector.multi_reduction <add>, %285, %cst_179 [1] : vector<8x8xf32> to vector<8xf32>
    %287 = vector.shape_cast %286 : vector<8xf32> to vector<8x1xf32>
    %288 = tpu.reciprocal %287 {approx = true} : vector<8x1xf32> -> vector<8x1xf32>
    %289 = vector.broadcast %288 : vector<8x1xf32> to vector<8x8xf32>
    %290 = arith.mulf %285, %289 : vector<8x8xf32>
    %291 = arith.truncf %290 : vector<8x8xf32> to vector<8x8xbf16>
    %292 = arith.truncf %269 : vector<8x8xf32> to vector<8x8xbf16>
    %cst_180 = arith.constant dense<0.000000e+00> : vector<8x8xf32>
    %293 = tpu.matmul %291, %292, %cst_180 {dimension_numbers = #tpu.dot_dimension_numbers<[1], [0], [0], [1], [0, 0, 1, 1], [], []>} : vector<8x8xbf16>, vector<8x8xbf16>, vector<8x8xf32> -> vector<8x8xf32>
    %294 = arith.truncf %293 : vector<8x8xf32> to vector<8x8xbf16>
    %c0_181 = arith.constant 0 : index
    %c1_182 = arith.constant 1 : index
    %c0_183 = arith.constant 0 : index
    %c0_184 = arith.constant 0 : index
    %295 = vector.load %arg16[%c0_181, %c1_182, %c0_183, %c0_184] : memref<2x4x8x32xbf16, #tpu.memory_space<vmem>>, vector<1x1x8x32xbf16>
    %296 = vector.shape_cast %295 : vector<1x1x8x32xbf16> to vector<8x32xbf16>
    %cst_185 = arith.constant dense<0.000000e+00> : vector<8x32xf32>
    %297 = tpu.matmul %294, %296, %cst_185 {dimension_numbers = #tpu.dot_dimension_numbers<[1], [0], [0], [1], [0, 0, 1, 1], [], []>} : vector<8x8xbf16>, vector<8x32xbf16>, vector<8x32xf32> -> vector<8x32xf32>
    %298 = arith.addf %266, %297 : vector<8x32xf32>
    %299 = vector.extract_strided_slice %223 {offsets = [0, 16], sizes = [8, 8], strides = [1, 1]} : vector<8x32xf32> to vector<8x8xf32>
    %300 = vector.extract_strided_slice %233 {offsets = [0, 16], sizes = [8, 8], strides = [1, 1]} : vector<8x64xf32> to vector<8x8xf32>
    %301 = vector.extract_strided_slice %233 {offsets = [0, 48], sizes = [8, 8], strides = [1, 1]} : vector<8x64xf32> to vector<8x8xf32>
    %c0_186 = arith.constant 0 : index
    %c2_187 = arith.constant 2 : index
    %c0_188 = arith.constant 0 : index
    %c0_189 = arith.constant 0 : index
    %302 = vector.load %arg29[%c0_186, %c2_187, %c0_188, %c0_189] : memref<1x4x8x8xf32, #tpu.memory_space<vmem>>, vector<1x1x8x8xf32>
    %303 = vector.shape_cast %302 : vector<1x1x8x8xf32> to vector<8x8xf32>
    %304 = vector.shape_cast %300 : vector<8x8xf32> to vector<1x1x8x8xf32>
    tpu.vector_store %arg29[%c0_186, %c2_187, %c0_188, %c0_189], %304 {strides = array<i32>} : memref<1x4x8x8xf32, #tpu.memory_space<vmem>>, vector<1x1x8x8xf32>,
    %c0_190 = arith.constant 0 : index
    %c2_191 = arith.constant 2 : index
    %c0_192 = arith.constant 0 : index
    %c0_193 = arith.constant 0 : index
    %305 = vector.load %arg30[%c0_190, %c2_191, %c0_192, %c0_193] : memref<1x4x8x8xf32, #tpu.memory_space<vmem>>, vector<1x1x8x8xf32>
    %306 = vector.shape_cast %305 : vector<1x1x8x8xf32> to vector<8x8xf32>
    %307 = vector.shape_cast %301 : vector<8x8xf32> to vector<1x1x8x8xf32>
    tpu.vector_store %arg30[%c0_190, %c2_191, %c0_192, %c0_193], %307 {strides = array<i32>} : memref<1x4x8x8xf32, #tpu.memory_space<vmem>>, vector<1x1x8x8xf32>,
    %308 = arith.truncf %299 : vector<8x8xf32> to vector<8x8xbf16>
    %309 = arith.truncf %300 : vector<8x8xf32> to vector<8x8xbf16>
    %cst_194 = arith.constant dense<0.000000e+00> : vector<8x8xf32>
    %310 = tpu.matmul %308, %309, %cst_194 {dimension_numbers = #tpu.dot_dimension_numbers<[1], [1], [0], [0], [0, 0, 1, 0], [], []>} : vector<8x8xbf16>, vector<8x8xbf16>, vector<8x8xf32> -> vector<8x8xf32>
    %311 = vector.broadcast %27 : vector<1x8xf32> to vector<8x8xf32>
    %312 = arith.addf %310, %311 : vector<8x8xf32>
    %cst_195 = arith.constant dense<0xFF800000> : vector<8xf32>
    %313 = vector.multi_reduction <maximumf>, %312, %cst_195 [1] : vector<8x8xf32> to vector<8xf32>
    %314 = vector.shape_cast %313 : vector<8xf32> to vector<8x1xf32>
    %315 = vector.broadcast %314 : vector<8x1xf32> to vector<8x8xf32>
    %316 = arith.subf %312, %315 : vector<8x8xf32>
    %317 = math.exp %316 : vector<8x8xf32>
    %cst_196 = arith.constant dense<0.000000e+00> : vector<8xf32>
    %318 = vector.multi_reduction <add>, %317, %cst_196 [1] : vector<8x8xf32> to vector<8xf32>
    %319 = vector.shape_cast %318 : vector<8xf32> to vector<8x1xf32>
    %320 = tpu.reciprocal %319 {approx = true} : vector<8x1xf32> -> vector<8x1xf32>
    %321 = vector.broadcast %320 : vector<8x1xf32> to vector<8x8xf32>
    %322 = arith.mulf %317, %321 : vector<8x8xf32>
    %323 = arith.truncf %322 : vector<8x8xf32> to vector<8x8xbf16>
    %324 = arith.truncf %301 : vector<8x8xf32> to vector<8x8xbf16>
    %cst_197 = arith.constant dense<0.000000e+00> : vector<8x8xf32>
    %325 = tpu.matmul %323, %324, %cst_197 {dimension_numbers = #tpu.dot_dimension_numbers<[1], [0], [0], [1], [0, 0, 1, 1], [], []>} : vector<8x8xbf16>, vector<8x8xbf16>, vector<8x8xf32> -> vector<8x8xf32>
    %326 = arith.truncf %325 : vector<8x8xf32> to vector<8x8xbf16>
    %c0_198 = arith.constant 0 : index
    %c2_199 = arith.constant 2 : index
    %c0_200 = arith.constant 0 : index
    %c0_201 = arith.constant 0 : index
    %327 = vector.load %arg16[%c0_198, %c2_199, %c0_200, %c0_201] : memref<2x4x8x32xbf16, #tpu.memory_space<vmem>>, vector<1x1x8x32xbf16>
    %328 = vector.shape_cast %327 : vector<1x1x8x32xbf16> to vector<8x32xbf16>
    %cst_202 = arith.constant dense<0.000000e+00> : vector<8x32xf32>
    %329 = tpu.matmul %326, %328, %cst_202 {dimension_numbers = #tpu.dot_dimension_numbers<[1], [0], [0], [1], [0, 0, 1, 1], [], []>} : vector<8x8xbf16>, vector<8x32xbf16>, vector<8x32xf32> -> vector<8x32xf32>
    %330 = arith.addf %298, %329 : vector<8x32xf32>
    %331 = vector.extract_strided_slice %223 {offsets = [0, 24], sizes = [8, 8], strides = [1, 1]} : vector<8x32xf32> to vector<8x8xf32>
    %332 = vector.extract_strided_slice %233 {offsets = [0, 24], sizes = [8, 8], strides = [1, 1]} : vector<8x64xf32> to vector<8x8xf32>
    %333 = vector.extract_strided_slice %233 {offsets = [0, 56], sizes = [8, 8], strides = [1, 1]} : vector<8x64xf32> to vector<8x8xf32>
    %c0_203 = arith.constant 0 : index
    %c3_204 = arith.constant 3 : index
    %c0_205 = arith.constant 0 : index
    %c0_206 = arith.constant 0 : index
    %334 = vector.load %arg29[%c0_203, %c3_204, %c0_205, %c0_206] : memref<1x4x8x8xf32, #tpu.memory_space<vmem>>, vector<1x1x8x8xf32>
    %335 = vector.shape_cast %334 : vector<1x1x8x8xf32> to vector<8x8xf32>
    %336 = vector.shape_cast %332 : vector<8x8xf32> to vector<1x1x8x8xf32>
    tpu.vector_store %arg29[%c0_203, %c3_204, %c0_205, %c0_206], %336 {strides = array<i32>} : memref<1x4x8x8xf32, #tpu.memory_space<vmem>>, vector<1x1x8x8xf32>,
    %c0_207 = arith.constant 0 : index
    %c3_208 = arith.constant 3 : index
    %c0_209 = arith.constant 0 : index
    %c0_210 = arith.constant 0 : index
    %337 = vector.load %arg30[%c0_207, %c3_208, %c0_209, %c0_210] : memref<1x4x8x8xf32, #tpu.memory_space<vmem>>, vector<1x1x8x8xf32>
    %338 = vector.shape_cast %337 : vector<1x1x8x8xf32> to vector<8x8xf32>
    %339 = vector.shape_cast %333 : vector<8x8xf32> to vector<1x1x8x8xf32>
    tpu.vector_store %arg30[%c0_207, %c3_208, %c0_209, %c0_210], %339 {strides = array<i32>} : memref<1x4x8x8xf32, #tpu.memory_space<vmem>>, vector<1x1x8x8xf32>,
    %340 = arith.truncf %331 : vector<8x8xf32> to vector<8x8xbf16>
    %341 = arith.truncf %332 : vector<8x8xf32> to vector<8x8xbf16>
    %cst_211 = arith.constant dense<0.000000e+00> : vector<8x8xf32>
    %342 = tpu.matmul %340, %341, %cst_211 {dimension_numbers = #tpu.dot_dimension_numbers<[1], [1], [0], [0], [0, 0, 1, 0], [], []>} : vector<8x8xbf16>, vector<8x8xbf16>, vector<8x8xf32> -> vector<8x8xf32>
    %343 = vector.broadcast %27 : vector<1x8xf32> to vector<8x8xf32>
    %344 = arith.addf %342, %343 : vector<8x8xf32>
    %cst_212 = arith.constant dense<0xFF800000> : vector<8xf32>
    %345 = vector.multi_reduction <maximumf>, %344, %cst_212 [1] : vector<8x8xf32> to vector<8xf32>
    %346 = vector.shape_cast %345 : vector<8xf32> to vector<8x1xf32>
    %347 = vector.broadcast %346 : vector<8x1xf32> to vector<8x8xf32>
    %348 = arith.subf %344, %347 : vector<8x8xf32>
    %349 = math.exp %348 : vector<8x8xf32>
    %cst_213 = arith.constant dense<0.000000e+00> : vector<8xf32>
    %350 = vector.multi_reduction <add>, %349, %cst_213 [1] : vector<8x8xf32> to vector<8xf32>
    %351 = vector.shape_cast %350 : vector<8xf32> to vector<8x1xf32>
    %352 = tpu.reciprocal %351 {approx = true} : vector<8x1xf32> -> vector<8x1xf32>
    %353 = vector.broadcast %352 : vector<8x1xf32> to vector<8x8xf32>
    %354 = arith.mulf %349, %353 : vector<8x8xf32>
    %355 = arith.truncf %354 : vector<8x8xf32> to vector<8x8xbf16>
    %356 = arith.truncf %333 : vector<8x8xf32> to vector<8x8xbf16>
    %cst_214 = arith.constant dense<0.000000e+00> : vector<8x8xf32>
    %357 = tpu.matmul %355, %356, %cst_214 {dimension_numbers = #tpu.dot_dimension_numbers<[1], [0], [0], [1], [0, 0, 1, 1], [], []>} : vector<8x8xbf16>, vector<8x8xbf16>, vector<8x8xf32> -> vector<8x8xf32>
    %358 = arith.truncf %357 : vector<8x8xf32> to vector<8x8xbf16>
    %c0_215 = arith.constant 0 : index
    %c3_216 = arith.constant 3 : index
    %c0_217 = arith.constant 0 : index
    %c0_218 = arith.constant 0 : index
    %359 = vector.load %arg16[%c0_215, %c3_216, %c0_217, %c0_218] : memref<2x4x8x32xbf16, #tpu.memory_space<vmem>>, vector<1x1x8x32xbf16>
    %360 = vector.shape_cast %359 : vector<1x1x8x32xbf16> to vector<8x32xbf16>
    %cst_219 = arith.constant dense<0.000000e+00> : vector<8x32xf32>
    %361 = tpu.matmul %358, %360, %cst_219 {dimension_numbers = #tpu.dot_dimension_numbers<[1], [0], [0], [1], [0, 0, 1, 1], [], []>} : vector<8x8xbf16>, vector<8x32xbf16>, vector<8x32xf32> -> vector<8x32xf32>
    %362 = arith.addf %330, %361 : vector<8x32xf32>
    %c0_220 = arith.constant 0 : index
    %c0_221 = arith.constant 0 : index
    %c0_222 = arith.constant 0 : index
    %363 = vector.load %arg17[%c0_220, %c0_221, %c0_222] : memref<2x1x32xf32, #tpu.memory_space<vmem>>, vector<1x1x32xf32>
    %364 = vector.shape_cast %363 : vector<1x1x32xf32> to vector<1x32xf32>
    %365 = vector.broadcast %364 : vector<1x32xf32> to vector<8x32xf32>
    %366 = arith.addf %362, %365 : vector<8x32xf32>
    %367 = arith.addf %215, %366 : vector<8x32xf32>
    %c0_223 = arith.constant 0 : index
    %c0_224 = arith.constant 0 : index
    %c0_225 = arith.constant 0 : index
    %368 = vector.load %arg18[%c0_223, %c0_224, %c0_225] : memref<2x1x32xf32, #tpu.memory_space<vmem>>, vector<1x1x32xf32>
    %369 = vector.shape_cast %368 : vector<1x1x32xf32> to vector<1x32xf32>
    %c0_226 = arith.constant 0 : index
    %c0_227 = arith.constant 0 : index
    %c0_228 = arith.constant 0 : index
    %370 = vector.load %arg19[%c0_226, %c0_227, %c0_228] : memref<2x1x32xf32, #tpu.memory_space<vmem>>, vector<1x1x32xf32>
    %371 = vector.shape_cast %370 : vector<1x1x32xf32> to vector<1x32xf32>
    %cst_229 = arith.constant dense<0.000000e+00> : vector<8xf32>
    %372 = vector.multi_reduction <add>, %367, %cst_229 [1] : vector<8x32xf32> to vector<8xf32>
    %373 = vector.shape_cast %372 : vector<8xf32> to vector<8x1xf32>
    %cst_230 = arith.constant 3.200000e+01 : f32
    %374 = vector.broadcast %cst_230 : f32 to vector<8x1xf32>
    %375 = arith.divf %373, %374 : vector<8x1xf32>
    %376 = vector.broadcast %375 : vector<8x1xf32> to vector<8x32xf32>
    %377 = arith.subf %367, %376 : vector<8x32xf32>
    %378 = arith.mulf %377, %377 : vector<8x32xf32>
    %cst_231 = arith.constant dense<0.000000e+00> : vector<8xf32>
    %379 = vector.multi_reduction <add>, %378, %cst_231 [1] : vector<8x32xf32> to vector<8xf32>
    %380 = vector.shape_cast %379 : vector<8xf32> to vector<8x1xf32>
    %cst_232 = arith.constant 3.200000e+01 : f32
    %381 = vector.broadcast %cst_232 : f32 to vector<8x1xf32>
    %382 = arith.divf %380, %381 : vector<8x1xf32>
    %383 = vector.broadcast %375 : vector<8x1xf32> to vector<8x32xf32>
    %384 = arith.subf %367, %383 : vector<8x32xf32>
    %cst_233 = arith.constant 9.99999974E-6 : f32
    %385 = vector.broadcast %cst_233 : f32 to vector<8x1xf32>
    %386 = arith.addf %382, %385 : vector<8x1xf32>
    %387 = math.rsqrt %386 : vector<8x1xf32>
    %388 = vector.broadcast %387 : vector<8x1xf32> to vector<8x32xf32>
    %389 = arith.mulf %384, %388 : vector<8x32xf32>
    %390 = vector.broadcast %369 : vector<1x32xf32> to vector<8x32xf32>
    %391 = arith.mulf %389, %390 : vector<8x32xf32>
    %392 = vector.broadcast %371 : vector<1x32xf32> to vector<8x32xf32>
    %393 = arith.addf %391, %392 : vector<8x32xf32>
    %c0_234 = arith.constant 0 : index
    %c0_235 = arith.constant 0 : index
    %c0_236 = arith.constant 0 : index
    %394 = vector.load %arg20[%c0_234, %c0_235, %c0_236] : memref<2x32x64xbf16, #tpu.memory_space<vmem>>, vector<1x32x64xbf16>
    %395 = vector.shape_cast %394 : vector<1x32x64xbf16> to vector<32x64xbf16>
    %c0_237 = arith.constant 0 : index
    %c0_238 = arith.constant 0 : index
    %c0_239 = arith.constant 0 : index
    %396 = vector.load %arg21[%c0_237, %c0_238, %c0_239] : memref<2x1x64xf32, #tpu.memory_space<vmem>>, vector<1x1x64xf32>
    %397 = vector.shape_cast %396 : vector<1x1x64xf32> to vector<1x64xf32>
    %398 = arith.truncf %393 : vector<8x32xf32> to vector<8x32xbf16>
    %cst_240 = arith.constant dense<0.000000e+00> : vector<8x64xf32>
    %399 = tpu.matmul %398, %395, %cst_240 {dimension_numbers = #tpu.dot_dimension_numbers<[1], [0], [0], [1], [0, 0, 1, 1], [], []>} : vector<8x32xbf16>, vector<32x64xbf16>, vector<8x64xf32> -> vector<8x64xf32>
    %400 = vector.broadcast %397 : vector<1x64xf32> to vector<8x64xf32>
    %401 = arith.addf %399, %400 : vector<8x64xf32>
    %cst_241 = arith.constant 5.000000e-01 : f32
    %402 = vector.broadcast %cst_241 : f32 to vector<8x64xf32>
    %403 = arith.mulf %402, %401 : vector<8x64xf32>
    %cst_242 = arith.constant 4.471500e-02 : f32
    %404 = vector.broadcast %cst_242 : f32 to vector<8x64xf32>
    %405 = arith.mulf %404, %401 : vector<8x64xf32>
    %406 = arith.mulf %405, %401 : vector<8x64xf32>
    %407 = arith.mulf %406, %401 : vector<8x64xf32>
    %408 = arith.addf %401, %407 : vector<8x64xf32>
    %cst_243 = arith.constant 0.797884583 : f32
    %409 = vector.broadcast %cst_243 : f32 to vector<8x64xf32>
    %410 = arith.mulf %409, %408 : vector<8x64xf32>
    %411 = math.tanh %410 : vector<8x64xf32>
    %cst_244 = arith.constant 1.000000e+00 : f32
    %412 = vector.broadcast %cst_244 : f32 to vector<8x64xf32>
    %413 = arith.addf %412, %411 : vector<8x64xf32>
    %414 = arith.mulf %403, %413 : vector<8x64xf32>
    %c0_245 = arith.constant 0 : index
    %c0_246 = arith.constant 0 : index
    %c0_247 = arith.constant 0 : index
    %415 = vector.load %arg22[%c0_245, %c0_246, %c0_247] : memref<2x64x32xbf16, #tpu.memory_space<vmem>>, vector<1x64x32xbf16>
    %416 = vector.shape_cast %415 : vector<1x64x32xbf16> to vector<64x32xbf16>
    %c0_248 = arith.constant 0 : index
    %c0_249 = arith.constant 0 : index
    %c0_250 = arith.constant 0 : index
    %417 = vector.load %arg23[%c0_248, %c0_249, %c0_250] : memref<2x1x32xf32, #tpu.memory_space<vmem>>, vector<1x1x32xf32>
    %418 = vector.shape_cast %417 : vector<1x1x32xf32> to vector<1x32xf32>
    %419 = arith.truncf %414 : vector<8x64xf32> to vector<8x64xbf16>
    %cst_251 = arith.constant dense<0.000000e+00> : vector<8x32xf32>
    %420 = tpu.matmul %419, %416, %cst_251 {dimension_numbers = #tpu.dot_dimension_numbers<[1], [0], [0], [1], [0, 0, 1, 1], [], []>} : vector<8x64xbf16>, vector<64x32xbf16>, vector<8x32xf32> -> vector<8x32xf32>
    %421 = vector.broadcast %418 : vector<1x32xf32> to vector<8x32xf32>
    %422 = arith.addf %420, %421 : vector<8x32xf32>
    %423 = arith.addf %393, %422 : vector<8x32xf32>
    %c0_252 = arith.constant 0 : index
    %c0_253 = arith.constant 0 : index
    %c0_254 = arith.constant 0 : index
    %424 = vector.load %arg24[%c0_252, %c0_253, %c0_254] : memref<2x1x32xf32, #tpu.memory_space<vmem>>, vector<1x1x32xf32>
    %425 = vector.shape_cast %424 : vector<1x1x32xf32> to vector<1x32xf32>
    %c0_255 = arith.constant 0 : index
    %c0_256 = arith.constant 0 : index
    %c0_257 = arith.constant 0 : index
    %426 = vector.load %arg25[%c0_255, %c0_256, %c0_257] : memref<2x1x32xf32, #tpu.memory_space<vmem>>, vector<1x1x32xf32>
    %427 = vector.shape_cast %426 : vector<1x1x32xf32> to vector<1x32xf32>
    %cst_258 = arith.constant dense<0.000000e+00> : vector<8xf32>
    %428 = vector.multi_reduction <add>, %423, %cst_258 [1] : vector<8x32xf32> to vector<8xf32>
    %429 = vector.shape_cast %428 : vector<8xf32> to vector<8x1xf32>
    %cst_259 = arith.constant 3.200000e+01 : f32
    %430 = vector.broadcast %cst_259 : f32 to vector<8x1xf32>
    %431 = arith.divf %429, %430 : vector<8x1xf32>
    %432 = vector.broadcast %431 : vector<8x1xf32> to vector<8x32xf32>
    %433 = arith.subf %423, %432 : vector<8x32xf32>
    %434 = arith.mulf %433, %433 : vector<8x32xf32>
    %cst_260 = arith.constant dense<0.000000e+00> : vector<8xf32>
    %435 = vector.multi_reduction <add>, %434, %cst_260 [1] : vector<8x32xf32> to vector<8xf32>
    %436 = vector.shape_cast %435 : vector<8xf32> to vector<8x1xf32>
    %cst_261 = arith.constant 3.200000e+01 : f32
    %437 = vector.broadcast %cst_261 : f32 to vector<8x1xf32>
    %438 = arith.divf %436, %437 : vector<8x1xf32>
    %439 = vector.broadcast %431 : vector<8x1xf32> to vector<8x32xf32>
    %440 = arith.subf %423, %439 : vector<8x32xf32>
    %cst_262 = arith.constant 9.99999974E-6 : f32
    %441 = vector.broadcast %cst_262 : f32 to vector<8x1xf32>
    %442 = arith.addf %438, %441 : vector<8x1xf32>
    %443 = math.rsqrt %442 : vector<8x1xf32>
    %444 = vector.broadcast %443 : vector<8x1xf32> to vector<8x32xf32>
    %445 = arith.mulf %440, %444 : vector<8x32xf32>
    %446 = vector.broadcast %425 : vector<1x32xf32> to vector<8x32xf32>
    %447 = arith.mulf %445, %446 : vector<8x32xf32>
    %448 = vector.broadcast %427 : vector<1x32xf32> to vector<8x32xf32>
    %449 = arith.addf %447, %448 : vector<8x32xf32>
    %c1_263 = arith.constant 1 : index
    %c0_264 = arith.constant 0 : index
    %c0_265 = arith.constant 0 : index
    %450 = vector.load %arg6[%c1_263, %c0_264, %c0_265] : memref<2x32x96xbf16, #tpu.memory_space<vmem>>, vector<1x32x96xbf16>
    %451 = vector.shape_cast %450 : vector<1x32x96xbf16> to vector<32x96xbf16>
    %c1_266 = arith.constant 1 : index
    %c0_267 = arith.constant 0 : index
    %c0_268 = arith.constant 0 : index
    %452 = vector.load %arg7[%c1_266, %c0_267, %c0_268] : memref<2x1x96xf32, #tpu.memory_space<vmem>>, vector<1x1x96xf32>
    %453 = vector.shape_cast %452 : vector<1x1x96xf32> to vector<1x96xf32>
    %454 = arith.truncf %449 : vector<8x32xf32> to vector<8x32xbf16>
    %cst_269 = arith.constant dense<0.000000e+00> : vector<8x96xf32>
    %455 = tpu.matmul %454, %451, %cst_269 {dimension_numbers = #tpu.dot_dimension_numbers<[1], [0], [0], [1], [0, 0, 1, 1], [], []>} : vector<8x32xbf16>, vector<32x96xbf16>, vector<8x96xf32> -> vector<8x96xf32>
    %456 = vector.broadcast %453 : vector<1x96xf32> to vector<8x96xf32>
    %457 = arith.addf %455, %456 : vector<8x96xf32>
    %cst_270 = arith.constant 0.000000e+00 : f32
    %458 = vector.broadcast %cst_270 : f32 to vector<8x32xf32>
    %459 = vector.extract_strided_slice %457 {offsets = [0, 0], sizes = [8, 8], strides = [1, 1]} : vector<8x96xf32> to vector<8x8xf32>
    %460 = vector.extract_strided_slice %457 {offsets = [0, 32], sizes = [8, 8], strides = [1, 1]} : vector<8x96xf32> to vector<8x8xf32>
    %461 = vector.extract_strided_slice %457 {offsets = [0, 64], sizes = [8, 8], strides = [1, 1]} : vector<8x96xf32> to vector<8x8xf32>
    %c0_271 = arith.constant 0 : index
    %c0_272 = arith.constant 0 : index
    %c0_273 = arith.constant 0 : index
    %c0_274 = arith.constant 0 : index
    %462 = vector.load %arg31[%c0_271, %c0_272, %c0_273, %c0_274] : memref<1x4x8x8xf32, #tpu.memory_space<vmem>>, vector<1x1x8x8xf32>
    %463 = vector.shape_cast %462 : vector<1x1x8x8xf32> to vector<8x8xf32>
    %464 = vector.shape_cast %460 : vector<8x8xf32> to vector<1x1x8x8xf32>
    tpu.vector_store %arg31[%c0_271, %c0_272, %c0_273, %c0_274], %464 {strides = array<i32>} : memref<1x4x8x8xf32, #tpu.memory_space<vmem>>, vector<1x1x8x8xf32>,
    %c0_275 = arith.constant 0 : index
    %c0_276 = arith.constant 0 : index
    %c0_277 = arith.constant 0 : index
    %c0_278 = arith.constant 0 : index
    %465 = vector.load %arg32[%c0_275, %c0_276, %c0_277, %c0_278] : memref<1x4x8x8xf32, #tpu.memory_space<vmem>>, vector<1x1x8x8xf32>
    %466 = vector.shape_cast %465 : vector<1x1x8x8xf32> to vector<8x8xf32>
    %467 = vector.shape_cast %461 : vector<8x8xf32> to vector<1x1x8x8xf32>
    tpu.vector_store %arg32[%c0_275, %c0_276, %c0_277, %c0_278], %467 {strides = array<i32>} : memref<1x4x8x8xf32, #tpu.memory_space<vmem>>, vector<1x1x8x8xf32>,
    %c0_279 = arith.constant 0 : index
    %c0_280 = arith.constant 0 : index
    %c0_281 = arith.constant 0 : index
    %c0_282 = arith.constant 0 : index
    %468 = vector.load %arg31[%c0_279, %c0_280, %c0_281, %c0_282] : memref<1x4x8x8xf32, #tpu.memory_space<vmem>>, vector<1x1x8x8xf32>
    %469 = vector.shape_cast %468 : vector<1x1x8x8xf32> to vector<8x8xf32>
    %c0_283 = arith.constant 0 : index
    %c0_284 = arith.constant 0 : index
    %c0_285 = arith.constant 0 : index
    %c0_286 = arith.constant 0 : index
    %470 = vector.load %arg32[%c0_283, %c0_284, %c0_285, %c0_286] : memref<1x4x8x8xf32, #tpu.memory_space<vmem>>, vector<1x1x8x8xf32>
    %471 = vector.shape_cast %470 : vector<1x1x8x8xf32> to vector<8x8xf32>
    %472 = arith.truncf %459 : vector<8x8xf32> to vector<8x8xbf16>
    %473 = arith.truncf %469 : vector<8x8xf32> to vector<8x8xbf16>
    %cst_287 = arith.constant dense<0.000000e+00> : vector<8x8xf32>
    %474 = tpu.matmul %472, %473, %cst_287 {dimension_numbers = #tpu.dot_dimension_numbers<[1], [1], [0], [0], [0, 0, 1, 0], [], []>} : vector<8x8xbf16>, vector<8x8xbf16>, vector<8x8xf32> -> vector<8x8xf32>
    %475 = arith.addf %474, %35 : vector<8x8xf32>
    %cst_288 = arith.constant dense<0xFF800000> : vector<8xf32>
    %476 = vector.multi_reduction <maximumf>, %475, %cst_288 [1] : vector<8x8xf32> to vector<8xf32>
    %477 = vector.shape_cast %476 : vector<8xf32> to vector<8x1xf32>
    %478 = vector.broadcast %477 : vector<8x1xf32> to vector<8x8xf32>
    %479 = arith.subf %475, %478 : vector<8x8xf32>
    %480 = math.exp %479 : vector<8x8xf32>
    %cst_289 = arith.constant dense<0.000000e+00> : vector<8xf32>
    %481 = vector.multi_reduction <add>, %480, %cst_289 [1] : vector<8x8xf32> to vector<8xf32>
    %482 = vector.shape_cast %481 : vector<8xf32> to vector<8x1xf32>
    %483 = tpu.reciprocal %482 {approx = true} : vector<8x1xf32> -> vector<8x1xf32>
    %484 = vector.broadcast %483 : vector<8x1xf32> to vector<8x8xf32>
    %485 = arith.mulf %480, %484 : vector<8x8xf32>
    %486 = arith.truncf %485 : vector<8x8xf32> to vector<8x8xbf16>
    %487 = arith.truncf %471 : vector<8x8xf32> to vector<8x8xbf16>
    %cst_290 = arith.constant dense<0.000000e+00> : vector<8x8xf32>
    %488 = tpu.matmul %486, %487, %cst_290 {dimension_numbers = #tpu.dot_dimension_numbers<[1], [0], [0], [1], [0, 0, 1, 1], [], []>} : vector<8x8xbf16>, vector<8x8xbf16>, vector<8x8xf32> -> vector<8x8xf32>
    %489 = arith.truncf %488 : vector<8x8xf32> to vector<8x8xbf16>
    %c1_291 = arith.constant 1 : index
    %c0_292 = arith.constant 0 : index
    %c0_293 = arith.constant 0 : index
    %c0_294 = arith.constant 0 : index
    %490 = vector.load %arg8[%c1_291, %c0_292, %c0_293, %c0_294] : memref<2x4x8x32xbf16, #tpu.memory_space<vmem>>, vector<1x1x8x32xbf16>
    %491 = vector.shape_cast %490 : vector<1x1x8x32xbf16> to vector<8x32xbf16>
    %cst_295 = arith.constant dense<0.000000e+00> : vector<8x32xf32>
    %492 = tpu.matmul %489, %491, %cst_295 {dimension_numbers = #tpu.dot_dimension_numbers<[1], [0], [0], [1], [0, 0, 1, 1], [], []>} : vector<8x8xbf16>, vector<8x32xbf16>, vector<8x32xf32> -> vector<8x32xf32>
    %493 = arith.addf %458, %492 : vector<8x32xf32>
    %494 = vector.extract_strided_slice %457 {offsets = [0, 8], sizes = [8, 8], strides = [1, 1]} : vector<8x96xf32> to vector<8x8xf32>
    %495 = vector.extract_strided_slice %457 {offsets = [0, 40], sizes = [8, 8], strides = [1, 1]} : vector<8x96xf32> to vector<8x8xf32>
    %496 = vector.extract_strided_slice %457 {offsets = [0, 72], sizes = [8, 8], strides = [1, 1]} : vector<8x96xf32> to vector<8x8xf32>
    %c0_296 = arith.constant 0 : index
    %c1_297 = arith.constant 1 : index
    %c0_298 = arith.constant 0 : index
    %c0_299 = arith.constant 0 : index
    %497 = vector.load %arg31[%c0_296, %c1_297, %c0_298, %c0_299] : memref<1x4x8x8xf32, #tpu.memory_space<vmem>>, vector<1x1x8x8xf32>
    %498 = vector.shape_cast %497 : vector<1x1x8x8xf32> to vector<8x8xf32>
    %499 = vector.shape_cast %495 : vector<8x8xf32> to vector<1x1x8x8xf32>
    tpu.vector_store %arg31[%c0_296, %c1_297, %c0_298, %c0_299], %499 {strides = array<i32>} : memref<1x4x8x8xf32, #tpu.memory_space<vmem>>, vector<1x1x8x8xf32>,
    %c0_300 = arith.constant 0 : index
    %c1_301 = arith.constant 1 : index
    %c0_302 = arith.constant 0 : index
    %c0_303 = arith.constant 0 : index
    %500 = vector.load %arg32[%c0_300, %c1_301, %c0_302, %c0_303] : memref<1x4x8x8xf32, #tpu.memory_space<vmem>>, vector<1x1x8x8xf32>
    %501 = vector.shape_cast %500 : vector<1x1x8x8xf32> to vector<8x8xf32>
    %502 = vector.shape_cast %496 : vector<8x8xf32> to vector<1x1x8x8xf32>
    tpu.vector_store %arg32[%c0_300, %c1_301, %c0_302, %c0_303], %502 {strides = array<i32>} : memref<1x4x8x8xf32, #tpu.memory_space<vmem>>, vector<1x1x8x8xf32>,
    %c0_304 = arith.constant 0 : index
    %c1_305 = arith.constant 1 : index
    %c0_306 = arith.constant 0 : index
    %c0_307 = arith.constant 0 : index
    %503 = vector.load %arg31[%c0_304, %c1_305, %c0_306, %c0_307] : memref<1x4x8x8xf32, #tpu.memory_space<vmem>>, vector<1x1x8x8xf32>
    %504 = vector.shape_cast %503 : vector<1x1x8x8xf32> to vector<8x8xf32>
    %c0_308 = arith.constant 0 : index
    %c1_309 = arith.constant 1 : index
    %c0_310 = arith.constant 0 : index
    %c0_311 = arith.constant 0 : index
    %505 = vector.load %arg32[%c0_308, %c1_309, %c0_310, %c0_311] : memref<1x4x8x8xf32, #tpu.memory_space<vmem>>, vector<1x1x8x8xf32>
    %506 = vector.shape_cast %505 : vector<1x1x8x8xf32> to vector<8x8xf32>
    %507 = arith.truncf %494 : vector<8x8xf32> to vector<8x8xbf16>
    %508 = arith.truncf %504 : vector<8x8xf32> to vector<8x8xbf16>
    %cst_312 = arith.constant dense<0.000000e+00> : vector<8x8xf32>
    %509 = tpu.matmul %507, %508, %cst_312 {dimension_numbers = #tpu.dot_dimension_numbers<[1], [1], [0], [0], [0, 0, 1, 0], [], []>} : vector<8x8xbf16>, vector<8x8xbf16>, vector<8x8xf32> -> vector<8x8xf32>
    %510 = arith.addf %509, %35 : vector<8x8xf32>
    %cst_313 = arith.constant dense<0xFF800000> : vector<8xf32>
    %511 = vector.multi_reduction <maximumf>, %510, %cst_313 [1] : vector<8x8xf32> to vector<8xf32>
    %512 = vector.shape_cast %511 : vector<8xf32> to vector<8x1xf32>
    %513 = vector.broadcast %512 : vector<8x1xf32> to vector<8x8xf32>
    %514 = arith.subf %510, %513 : vector<8x8xf32>
    %515 = math.exp %514 : vector<8x8xf32>
    %cst_314 = arith.constant dense<0.000000e+00> : vector<8xf32>
    %516 = vector.multi_reduction <add>, %515, %cst_314 [1] : vector<8x8xf32> to vector<8xf32>
    %517 = vector.shape_cast %516 : vector<8xf32> to vector<8x1xf32>
    %518 = tpu.reciprocal %517 {approx = true} : vector<8x1xf32> -> vector<8x1xf32>
    %519 = vector.broadcast %518 : vector<8x1xf32> to vector<8x8xf32>
    %520 = arith.mulf %515, %519 : vector<8x8xf32>
    %521 = arith.truncf %520 : vector<8x8xf32> to vector<8x8xbf16>
    %522 = arith.truncf %506 : vector<8x8xf32> to vector<8x8xbf16>
    %cst_315 = arith.constant dense<0.000000e+00> : vector<8x8xf32>
    %523 = tpu.matmul %521, %522, %cst_315 {dimension_numbers = #tpu.dot_dimension_numbers<[1], [0], [0], [1], [0, 0, 1, 1], [], []>} : vector<8x8xbf16>, vector<8x8xbf16>, vector<8x8xf32> -> vector<8x8xf32>
    %524 = arith.truncf %523 : vector<8x8xf32> to vector<8x8xbf16>
    %c1_316 = arith.constant 1 : index
    %c1_317 = arith.constant 1 : index
    %c0_318 = arith.constant 0 : index
    %c0_319 = arith.constant 0 : index
    %525 = vector.load %arg8[%c1_316, %c1_317, %c0_318, %c0_319] : memref<2x4x8x32xbf16, #tpu.memory_space<vmem>>, vector<1x1x8x32xbf16>
    %526 = vector.shape_cast %525 : vector<1x1x8x32xbf16> to vector<8x32xbf16>
    %cst_320 = arith.constant dense<0.000000e+00> : vector<8x32xf32>
    %527 = tpu.matmul %524, %526, %cst_320 {dimension_numbers = #tpu.dot_dimension_numbers<[1], [0], [0], [1], [0, 0, 1, 1], [], []>} : vector<8x8xbf16>, vector<8x32xbf16>, vector<8x32xf32> -> vector<8x32xf32>
    %528 = arith.addf %493, %527 : vector<8x32xf32>
    %529 = vector.extract_strided_slice %457 {offsets = [0, 16], sizes = [8, 8], strides = [1, 1]} : vector<8x96xf32> to vector<8x8xf32>
    %530 = vector.extract_strided_slice %457 {offsets = [0, 48], sizes = [8, 8], strides = [1, 1]} : vector<8x96xf32> to vector<8x8xf32>
    %531 = vector.extract_strided_slice %457 {offsets = [0, 80], sizes = [8, 8], strides = [1, 1]} : vector<8x96xf32> to vector<8x8xf32>
    %c0_321 = arith.constant 0 : index
    %c2_322 = arith.constant 2 : index
    %c0_323 = arith.constant 0 : index
    %c0_324 = arith.constant 0 : index
    %532 = vector.load %arg31[%c0_321, %c2_322, %c0_323, %c0_324] : memref<1x4x8x8xf32, #tpu.memory_space<vmem>>, vector<1x1x8x8xf32>
    %533 = vector.shape_cast %532 : vector<1x1x8x8xf32> to vector<8x8xf32>
    %534 = vector.shape_cast %530 : vector<8x8xf32> to vector<1x1x8x8xf32>
    tpu.vector_store %arg31[%c0_321, %c2_322, %c0_323, %c0_324], %534 {strides = array<i32>} : memref<1x4x8x8xf32, #tpu.memory_space<vmem>>, vector<1x1x8x8xf32>,
    %c0_325 = arith.constant 0 : index
    %c2_326 = arith.constant 2 : index
    %c0_327 = arith.constant 0 : index
    %c0_328 = arith.constant 0 : index
    %535 = vector.load %arg32[%c0_325, %c2_326, %c0_327, %c0_328] : memref<1x4x8x8xf32, #tpu.memory_space<vmem>>, vector<1x1x8x8xf32>
    %536 = vector.shape_cast %535 : vector<1x1x8x8xf32> to vector<8x8xf32>
    %537 = vector.shape_cast %531 : vector<8x8xf32> to vector<1x1x8x8xf32>
    tpu.vector_store %arg32[%c0_325, %c2_326, %c0_327, %c0_328], %537 {strides = array<i32>} : memref<1x4x8x8xf32, #tpu.memory_space<vmem>>, vector<1x1x8x8xf32>,
    %c0_329 = arith.constant 0 : index
    %c2_330 = arith.constant 2 : index
    %c0_331 = arith.constant 0 : index
    %c0_332 = arith.constant 0 : index
    %538 = vector.load %arg31[%c0_329, %c2_330, %c0_331, %c0_332] : memref<1x4x8x8xf32, #tpu.memory_space<vmem>>, vector<1x1x8x8xf32>
    %539 = vector.shape_cast %538 : vector<1x1x8x8xf32> to vector<8x8xf32>
    %c0_333 = arith.constant 0 : index
    %c2_334 = arith.constant 2 : index
    %c0_335 = arith.constant 0 : index
    %c0_336 = arith.constant 0 : index
    %540 = vector.load %arg32[%c0_333, %c2_334, %c0_335, %c0_336] : memref<1x4x8x8xf32, #tpu.memory_space<vmem>>, vector<1x1x8x8xf32>
    %541 = vector.shape_cast %540 : vector<1x1x8x8xf32> to vector<8x8xf32>
    %542 = arith.truncf %529 : vector<8x8xf32> to vector<8x8xbf16>
    %543 = arith.truncf %539 : vector<8x8xf32> to vector<8x8xbf16>
    %cst_337 = arith.constant dense<0.000000e+00> : vector<8x8xf32>
    %544 = tpu.matmul %542, %543, %cst_337 {dimension_numbers = #tpu.dot_dimension_numbers<[1], [1], [0], [0], [0, 0, 1, 0], [], []>} : vector<8x8xbf16>, vector<8x8xbf16>, vector<8x8xf32> -> vector<8x8xf32>
    %545 = arith.addf %544, %35 : vector<8x8xf32>
    %cst_338 = arith.constant dense<0xFF800000> : vector<8xf32>
    %546 = vector.multi_reduction <maximumf>, %545, %cst_338 [1] : vector<8x8xf32> to vector<8xf32>
    %547 = vector.shape_cast %546 : vector<8xf32> to vector<8x1xf32>
    %548 = vector.broadcast %547 : vector<8x1xf32> to vector<8x8xf32>
    %549 = arith.subf %545, %548 : vector<8x8xf32>
    %550 = math.exp %549 : vector<8x8xf32>
    %cst_339 = arith.constant dense<0.000000e+00> : vector<8xf32>
    %551 = vector.multi_reduction <add>, %550, %cst_339 [1] : vector<8x8xf32> to vector<8xf32>
    %552 = vector.shape_cast %551 : vector<8xf32> to vector<8x1xf32>
    %553 = tpu.reciprocal %552 {approx = true} : vector<8x1xf32> -> vector<8x1xf32>
    %554 = vector.broadcast %553 : vector<8x1xf32> to vector<8x8xf32>
    %555 = arith.mulf %550, %554 : vector<8x8xf32>
    %556 = arith.truncf %555 : vector<8x8xf32> to vector<8x8xbf16>
    %557 = arith.truncf %541 : vector<8x8xf32> to vector<8x8xbf16>
    %cst_340 = arith.constant dense<0.000000e+00> : vector<8x8xf32>
    %558 = tpu.matmul %556, %557, %cst_340 {dimension_numbers = #tpu.dot_dimension_numbers<[1], [0], [0], [1], [0, 0, 1, 1], [], []>} : vector<8x8xbf16>, vector<8x8xbf16>, vector<8x8xf32> -> vector<8x8xf32>
    %559 = arith.truncf %558 : vector<8x8xf32> to vector<8x8xbf16>
    %c1_341 = arith.constant 1 : index
    %c2_342 = arith.constant 2 : index
    %c0_343 = arith.constant 0 : index
    %c0_344 = arith.constant 0 : index
    %560 = vector.load %arg8[%c1_341, %c2_342, %c0_343, %c0_344] : memref<2x4x8x32xbf16, #tpu.memory_space<vmem>>, vector<1x1x8x32xbf16>
    %561 = vector.shape_cast %560 : vector<1x1x8x32xbf16> to vector<8x32xbf16>
    %cst_345 = arith.constant dense<0.000000e+00> : vector<8x32xf32>
    %562 = tpu.matmul %559, %561, %cst_345 {dimension_numbers = #tpu.dot_dimension_numbers<[1], [0], [0], [1], [0, 0, 1, 1], [], []>} : vector<8x8xbf16>, vector<8x32xbf16>, vector<8x32xf32> -> vector<8x32xf32>
    %563 = arith.addf %528, %562 : vector<8x32xf32>
    %564 = vector.extract_strided_slice %457 {offsets = [0, 24], sizes = [8, 8], strides = [1, 1]} : vector<8x96xf32> to vector<8x8xf32>
    %565 = vector.extract_strided_slice %457 {offsets = [0, 56], sizes = [8, 8], strides = [1, 1]} : vector<8x96xf32> to vector<8x8xf32>
    %566 = vector.extract_strided_slice %457 {offsets = [0, 88], sizes = [8, 8], strides = [1, 1]} : vector<8x96xf32> to vector<8x8xf32>
    %c0_346 = arith.constant 0 : index
    %c3_347 = arith.constant 3 : index
    %c0_348 = arith.constant 0 : index
    %c0_349 = arith.constant 0 : index
    %567 = vector.load %arg31[%c0_346, %c3_347, %c0_348, %c0_349] : memref<1x4x8x8xf32, #tpu.memory_space<vmem>>, vector<1x1x8x8xf32>
    %568 = vector.shape_cast %567 : vector<1x1x8x8xf32> to vector<8x8xf32>
    %569 = vector.shape_cast %565 : vector<8x8xf32> to vector<1x1x8x8xf32>
    tpu.vector_store %arg31[%c0_346, %c3_347, %c0_348, %c0_349], %569 {strides = array<i32>} : memref<1x4x8x8xf32, #tpu.memory_space<vmem>>, vector<1x1x8x8xf32>,
    %c0_350 = arith.constant 0 : index
    %c3_351 = arith.constant 3 : index
    %c0_352 = arith.constant 0 : index
    %c0_353 = arith.constant 0 : index
    %570 = vector.load %arg32[%c0_350, %c3_351, %c0_352, %c0_353] : memref<1x4x8x8xf32, #tpu.memory_space<vmem>>, vector<1x1x8x8xf32>
    %571 = vector.shape_cast %570 : vector<1x1x8x8xf32> to vector<8x8xf32>
    %572 = vector.shape_cast %566 : vector<8x8xf32> to vector<1x1x8x8xf32>
    tpu.vector_store %arg32[%c0_350, %c3_351, %c0_352, %c0_353], %572 {strides = array<i32>} : memref<1x4x8x8xf32, #tpu.memory_space<vmem>>, vector<1x1x8x8xf32>,
    %c0_354 = arith.constant 0 : index
    %c3_355 = arith.constant 3 : index
    %c0_356 = arith.constant 0 : index
    %c0_357 = arith.constant 0 : index
    %573 = vector.load %arg31[%c0_354, %c3_355, %c0_356, %c0_357] : memref<1x4x8x8xf32, #tpu.memory_space<vmem>>, vector<1x1x8x8xf32>
    %574 = vector.shape_cast %573 : vector<1x1x8x8xf32> to vector<8x8xf32>
    %c0_358 = arith.constant 0 : index
    %c3_359 = arith.constant 3 : index
    %c0_360 = arith.constant 0 : index
    %c0_361 = arith.constant 0 : index
    %575 = vector.load %arg32[%c0_358, %c3_359, %c0_360, %c0_361] : memref<1x4x8x8xf32, #tpu.memory_space<vmem>>, vector<1x1x8x8xf32>
    %576 = vector.shape_cast %575 : vector<1x1x8x8xf32> to vector<8x8xf32>
    %577 = arith.truncf %564 : vector<8x8xf32> to vector<8x8xbf16>
    %578 = arith.truncf %574 : vector<8x8xf32> to vector<8x8xbf16>
    %cst_362 = arith.constant dense<0.000000e+00> : vector<8x8xf32>
    %579 = tpu.matmul %577, %578, %cst_362 {dimension_numbers = #tpu.dot_dimension_numbers<[1], [1], [0], [0], [0, 0, 1, 0], [], []>} : vector<8x8xbf16>, vector<8x8xbf16>, vector<8x8xf32> -> vector<8x8xf32>
    %580 = arith.addf %579, %35 : vector<8x8xf32>
    %cst_363 = arith.constant dense<0xFF800000> : vector<8xf32>
    %581 = vector.multi_reduction <maximumf>, %580, %cst_363 [1] : vector<8x8xf32> to vector<8xf32>
    %582 = vector.shape_cast %581 : vector<8xf32> to vector<8x1xf32>
    %583 = vector.broadcast %582 : vector<8x1xf32> to vector<8x8xf32>
    %584 = arith.subf %580, %583 : vector<8x8xf32>
    %585 = math.exp %584 : vector<8x8xf32>
    %cst_364 = arith.constant dense<0.000000e+00> : vector<8xf32>
    %586 = vector.multi_reduction <add>, %585, %cst_364 [1] : vector<8x8xf32> to vector<8xf32>
    %587 = vector.shape_cast %586 : vector<8xf32> to vector<8x1xf32>
    %588 = tpu.reciprocal %587 {approx = true} : vector<8x1xf32> -> vector<8x1xf32>
    %589 = vector.broadcast %588 : vector<8x1xf32> to vector<8x8xf32>
    %590 = arith.mulf %585, %589 : vector<8x8xf32>
    %591 = arith.truncf %590 : vector<8x8xf32> to vector<8x8xbf16>
    %592 = arith.truncf %576 : vector<8x8xf32> to vector<8x8xbf16>
    %cst_365 = arith.constant dense<0.000000e+00> : vector<8x8xf32>
    %593 = tpu.matmul %591, %592, %cst_365 {dimension_numbers = #tpu.dot_dimension_numbers<[1], [0], [0], [1], [0, 0, 1, 1], [], []>} : vector<8x8xbf16>, vector<8x8xbf16>, vector<8x8xf32> -> vector<8x8xf32>
    %594 = arith.truncf %593 : vector<8x8xf32> to vector<8x8xbf16>
    %c1_366 = arith.constant 1 : index
    %c3_367 = arith.constant 3 : index
    %c0_368 = arith.constant 0 : index
    %c0_369 = arith.constant 0 : index
    %595 = vector.load %arg8[%c1_366, %c3_367, %c0_368, %c0_369] : memref<2x4x8x32xbf16, #tpu.memory_space<vmem>>, vector<1x1x8x32xbf16>
    %596 = vector.shape_cast %595 : vector<1x1x8x32xbf16> to vector<8x32xbf16>
    %cst_370 = arith.constant dense<0.000000e+00> : vector<8x32xf32>
    %597 = tpu.matmul %594, %596, %cst_370 {dimension_numbers = #tpu.dot_dimension_numbers<[1], [0], [0], [1], [0, 0, 1, 1], [], []>} : vector<8x8xbf16>, vector<8x32xbf16>, vector<8x32xf32> -> vector<8x32xf32>
    %598 = arith.addf %563, %597 : vector<8x32xf32>
    %c1_371 = arith.constant 1 : index
    %c0_372 = arith.constant 0 : index
    %c0_373 = arith.constant 0 : index
    %599 = vector.load %arg9[%c1_371, %c0_372, %c0_373] : memref<2x1x32xf32, #tpu.memory_space<vmem>>, vector<1x1x32xf32>
    %600 = vector.shape_cast %599 : vector<1x1x32xf32> to vector<1x32xf32>
    %601 = vector.broadcast %600 : vector<1x32xf32> to vector<8x32xf32>
    %602 = arith.addf %598, %601 : vector<8x32xf32>
    %603 = arith.addf %449, %602 : vector<8x32xf32>
    %c1_374 = arith.constant 1 : index
    %c0_375 = arith.constant 0 : index
    %c0_376 = arith.constant 0 : index
    %604 = vector.load %arg10[%c1_374, %c0_375, %c0_376] : memref<2x1x32xf32, #tpu.memory_space<vmem>>, vector<1x1x32xf32>
    %605 = vector.shape_cast %604 : vector<1x1x32xf32> to vector<1x32xf32>
    %c1_377 = arith.constant 1 : index
    %c0_378 = arith.constant 0 : index
    %c0_379 = arith.constant 0 : index
    %606 = vector.load %arg11[%c1_377, %c0_378, %c0_379] : memref<2x1x32xf32, #tpu.memory_space<vmem>>, vector<1x1x32xf32>
    %607 = vector.shape_cast %606 : vector<1x1x32xf32> to vector<1x32xf32>
    %cst_380 = arith.constant dense<0.000000e+00> : vector<8xf32>
    %608 = vector.multi_reduction <add>, %603, %cst_380 [1] : vector<8x32xf32> to vector<8xf32>
    %609 = vector.shape_cast %608 : vector<8xf32> to vector<8x1xf32>
    %cst_381 = arith.constant 3.200000e+01 : f32
    %610 = vector.broadcast %cst_381 : f32 to vector<8x1xf32>
    %611 = arith.divf %609, %610 : vector<8x1xf32>
    %612 = vector.broadcast %611 : vector<8x1xf32> to vector<8x32xf32>
    %613 = arith.subf %603, %612 : vector<8x32xf32>
    %614 = arith.mulf %613, %613 : vector<8x32xf32>
    %cst_382 = arith.constant dense<0.000000e+00> : vector<8xf32>
    %615 = vector.multi_reduction <add>, %614, %cst_382 [1] : vector<8x32xf32> to vector<8xf32>
    %616 = vector.shape_cast %615 : vector<8xf32> to vector<8x1xf32>
    %cst_383 = arith.constant 3.200000e+01 : f32
    %617 = vector.broadcast %cst_383 : f32 to vector<8x1xf32>
    %618 = arith.divf %616, %617 : vector<8x1xf32>
    %619 = vector.broadcast %611 : vector<8x1xf32> to vector<8x32xf32>
    %620 = arith.subf %603, %619 : vector<8x32xf32>
    %cst_384 = arith.constant 9.99999974E-6 : f32
    %621 = vector.broadcast %cst_384 : f32 to vector<8x1xf32>
    %622 = arith.addf %618, %621 : vector<8x1xf32>
    %623 = math.rsqrt %622 : vector<8x1xf32>
    %624 = vector.broadcast %623 : vector<8x1xf32> to vector<8x32xf32>
    %625 = arith.mulf %620, %624 : vector<8x32xf32>
    %626 = vector.broadcast %605 : vector<1x32xf32> to vector<8x32xf32>
    %627 = arith.mulf %625, %626 : vector<8x32xf32>
    %628 = vector.broadcast %607 : vector<1x32xf32> to vector<8x32xf32>
    %629 = arith.addf %627, %628 : vector<8x32xf32>
    %c1_385 = arith.constant 1 : index
    %c0_386 = arith.constant 0 : index
    %c0_387 = arith.constant 0 : index
    %630 = vector.load %arg12[%c1_385, %c0_386, %c0_387] : memref<2x32x32xbf16, #tpu.memory_space<vmem>>, vector<1x32x32xbf16>
    %631 = vector.shape_cast %630 : vector<1x32x32xbf16> to vector<32x32xbf16>
    %c1_388 = arith.constant 1 : index
    %c0_389 = arith.constant 0 : index
    %c0_390 = arith.constant 0 : index
    %632 = vector.load %arg13[%c1_388, %c0_389, %c0_390] : memref<2x1x32xf32, #tpu.memory_space<vmem>>, vector<1x1x32xf32>
    %633 = vector.shape_cast %632 : vector<1x1x32xf32> to vector<1x32xf32>
    %634 = arith.truncf %629 : vector<8x32xf32> to vector<8x32xbf16>
    %cst_391 = arith.constant dense<0.000000e+00> : vector<8x32xf32>
    %635 = tpu.matmul %634, %631, %cst_391 {dimension_numbers = #tpu.dot_dimension_numbers<[1], [0], [0], [1], [0, 0, 1, 1], [], []>} : vector<8x32xbf16>, vector<32x32xbf16>, vector<8x32xf32> -> vector<8x32xf32>
    %636 = vector.broadcast %633 : vector<1x32xf32> to vector<8x32xf32>
    %637 = arith.addf %635, %636 : vector<8x32xf32>
    %c0_392 = arith.constant 0 : index
    %c0_393 = arith.constant 0 : index
    %c0_394 = arith.constant 0 : index
    %638 = vector.load %arg2[%c0_392, %c0_393, %c0_394] : memref<1x8x32xf32, #tpu.memory_space<vmem>>, vector<1x8x32xf32>
    %639 = vector.shape_cast %638 : vector<1x8x32xf32> to vector<8x32xf32>
    %c1_395 = arith.constant 1 : index
    %c0_396 = arith.constant 0 : index
    %c0_397 = arith.constant 0 : index
    %640 = vector.load %arg14[%c1_395, %c0_396, %c0_397] : memref<2x32x64xbf16, #tpu.memory_space<vmem>>, vector<1x32x64xbf16>
    %641 = vector.shape_cast %640 : vector<1x32x64xbf16> to vector<32x64xbf16>
    %c1_398 = arith.constant 1 : index
    %c0_399 = arith.constant 0 : index
    %c0_400 = arith.constant 0 : index
    %642 = vector.load %arg15[%c1_398, %c0_399, %c0_400] : memref<2x1x64xf32, #tpu.memory_space<vmem>>, vector<1x1x64xf32>
    %643 = vector.shape_cast %642 : vector<1x1x64xf32> to vector<1x64xf32>
    %644 = arith.truncf %639 : vector<8x32xf32> to vector<8x32xbf16>
    %cst_401 = arith.constant dense<0.000000e+00> : vector<8x64xf32>
    %645 = tpu.matmul %644, %641, %cst_401 {dimension_numbers = #tpu.dot_dimension_numbers<[1], [0], [0], [1], [0, 0, 1, 1], [], []>} : vector<8x32xbf16>, vector<32x64xbf16>, vector<8x64xf32> -> vector<8x64xf32>
    %646 = vector.broadcast %643 : vector<1x64xf32> to vector<8x64xf32>
    %647 = arith.addf %645, %646 : vector<8x64xf32>
    %cst_402 = arith.constant 0.000000e+00 : f32
    %648 = vector.broadcast %cst_402 : f32 to vector<8x32xf32>
    %649 = vector.extract_strided_slice %637 {offsets = [0, 0], sizes = [8, 8], strides = [1, 1]} : vector<8x32xf32> to vector<8x8xf32>
    %650 = vector.extract_strided_slice %647 {offsets = [0, 0], sizes = [8, 8], strides = [1, 1]} : vector<8x64xf32> to vector<8x8xf32>
    %651 = vector.extract_strided_slice %647 {offsets = [0, 32], sizes = [8, 8], strides = [1, 1]} : vector<8x64xf32> to vector<8x8xf32>
    %c0_403 = arith.constant 0 : index
    %c0_404 = arith.constant 0 : index
    %c0_405 = arith.constant 0 : index
    %c0_406 = arith.constant 0 : index
    %652 = vector.load %arg33[%c0_403, %c0_404, %c0_405, %c0_406] : memref<1x4x8x8xf32, #tpu.memory_space<vmem>>, vector<1x1x8x8xf32>
    %653 = vector.shape_cast %652 : vector<1x1x8x8xf32> to vector<8x8xf32>
    %654 = vector.shape_cast %650 : vector<8x8xf32> to vector<1x1x8x8xf32>
    tpu.vector_store %arg33[%c0_403, %c0_404, %c0_405, %c0_406], %654 {strides = array<i32>} : memref<1x4x8x8xf32, #tpu.memory_space<vmem>>, vector<1x1x8x8xf32>,
    %c0_407 = arith.constant 0 : index
    %c0_408 = arith.constant 0 : index
    %c0_409 = arith.constant 0 : index
    %c0_410 = arith.constant 0 : index
    %655 = vector.load %arg34[%c0_407, %c0_408, %c0_409, %c0_410] : memref<1x4x8x8xf32, #tpu.memory_space<vmem>>, vector<1x1x8x8xf32>
    %656 = vector.shape_cast %655 : vector<1x1x8x8xf32> to vector<8x8xf32>
    %657 = vector.shape_cast %651 : vector<8x8xf32> to vector<1x1x8x8xf32>
    tpu.vector_store %arg34[%c0_407, %c0_408, %c0_409, %c0_410], %657 {strides = array<i32>} : memref<1x4x8x8xf32, #tpu.memory_space<vmem>>, vector<1x1x8x8xf32>,
    %658 = arith.truncf %649 : vector<8x8xf32> to vector<8x8xbf16>
    %659 = arith.truncf %650 : vector<8x8xf32> to vector<8x8xbf16>
    %cst_411 = arith.constant dense<0.000000e+00> : vector<8x8xf32>
    %660 = tpu.matmul %658, %659, %cst_411 {dimension_numbers = #tpu.dot_dimension_numbers<[1], [1], [0], [0], [0, 0, 1, 0], [], []>} : vector<8x8xbf16>, vector<8x8xbf16>, vector<8x8xf32> -> vector<8x8xf32>
    %661 = vector.broadcast %27 : vector<1x8xf32> to vector<8x8xf32>
    %662 = arith.addf %660, %661 : vector<8x8xf32>
    %cst_412 = arith.constant dense<0xFF800000> : vector<8xf32>
    %663 = vector.multi_reduction <maximumf>, %662, %cst_412 [1] : vector<8x8xf32> to vector<8xf32>
    %664 = vector.shape_cast %663 : vector<8xf32> to vector<8x1xf32>
    %665 = vector.broadcast %664 : vector<8x1xf32> to vector<8x8xf32>
    %666 = arith.subf %662, %665 : vector<8x8xf32>
    %667 = math.exp %666 : vector<8x8xf32>
    %cst_413 = arith.constant dense<0.000000e+00> : vector<8xf32>
    %668 = vector.multi_reduction <add>, %667, %cst_413 [1] : vector<8x8xf32> to vector<8xf32>
    %669 = vector.shape_cast %668 : vector<8xf32> to vector<8x1xf32>
    %670 = tpu.reciprocal %669 {approx = true} : vector<8x1xf32> -> vector<8x1xf32>
    %671 = vector.broadcast %670 : vector<8x1xf32> to vector<8x8xf32>
    %672 = arith.mulf %667, %671 : vector<8x8xf32>
    %673 = arith.truncf %672 : vector<8x8xf32> to vector<8x8xbf16>
    %674 = arith.truncf %651 : vector<8x8xf32> to vector<8x8xbf16>
    %cst_414 = arith.constant dense<0.000000e+00> : vector<8x8xf32>
    %675 = tpu.matmul %673, %674, %cst_414 {dimension_numbers = #tpu.dot_dimension_numbers<[1], [0], [0], [1], [0, 0, 1, 1], [], []>} : vector<8x8xbf16>, vector<8x8xbf16>, vector<8x8xf32> -> vector<8x8xf32>
    %676 = arith.truncf %675 : vector<8x8xf32> to vector<8x8xbf16>
    %c1_415 = arith.constant 1 : index
    %c0_416 = arith.constant 0 : index
    %c0_417 = arith.constant 0 : index
    %c0_418 = arith.constant 0 : index
    %677 = vector.load %arg16[%c1_415, %c0_416, %c0_417, %c0_418] : memref<2x4x8x32xbf16, #tpu.memory_space<vmem>>, vector<1x1x8x32xbf16>
    %678 = vector.shape_cast %677 : vector<1x1x8x32xbf16> to vector<8x32xbf16>
    %cst_419 = arith.constant dense<0.000000e+00> : vector<8x32xf32>
    %679 = tpu.matmul %676, %678, %cst_419 {dimension_numbers = #tpu.dot_dimension_numbers<[1], [0], [0], [1], [0, 0, 1, 1], [], []>} : vector<8x8xbf16>, vector<8x32xbf16>, vector<8x32xf32> -> vector<8x32xf32>
    %680 = arith.addf %648, %679 : vector<8x32xf32>
    %681 = vector.extract_strided_slice %637 {offsets = [0, 8], sizes = [8, 8], strides = [1, 1]} : vector<8x32xf32> to vector<8x8xf32>
    %682 = vector.extract_strided_slice %647 {offsets = [0, 8], sizes = [8, 8], strides = [1, 1]} : vector<8x64xf32> to vector<8x8xf32>
    %683 = vector.extract_strided_slice %647 {offsets = [0, 40], sizes = [8, 8], strides = [1, 1]} : vector<8x64xf32> to vector<8x8xf32>
    %c0_420 = arith.constant 0 : index
    %c1_421 = arith.constant 1 : index
    %c0_422 = arith.constant 0 : index
    %c0_423 = arith.constant 0 : index
    %684 = vector.load %arg33[%c0_420, %c1_421, %c0_422, %c0_423] : memref<1x4x8x8xf32, #tpu.memory_space<vmem>>, vector<1x1x8x8xf32>
    %685 = vector.shape_cast %684 : vector<1x1x8x8xf32> to vector<8x8xf32>
    %686 = vector.shape_cast %682 : vector<8x8xf32> to vector<1x1x8x8xf32>
    tpu.vector_store %arg33[%c0_420, %c1_421, %c0_422, %c0_423], %686 {strides = array<i32>} : memref<1x4x8x8xf32, #tpu.memory_space<vmem>>, vector<1x1x8x8xf32>,
    %c0_424 = arith.constant 0 : index
    %c1_425 = arith.constant 1 : index
    %c0_426 = arith.constant 0 : index
    %c0_427 = arith.constant 0 : index
    %687 = vector.load %arg34[%c0_424, %c1_425, %c0_426, %c0_427] : memref<1x4x8x8xf32, #tpu.memory_space<vmem>>, vector<1x1x8x8xf32>
    %688 = vector.shape_cast %687 : vector<1x1x8x8xf32> to vector<8x8xf32>
    %689 = vector.shape_cast %683 : vector<8x8xf32> to vector<1x1x8x8xf32>
    tpu.vector_store %arg34[%c0_424, %c1_425, %c0_426, %c0_427], %689 {strides = array<i32>} : memref<1x4x8x8xf32, #tpu.memory_space<vmem>>, vector<1x1x8x8xf32>,
    %690 = arith.truncf %681 : vector<8x8xf32> to vector<8x8xbf16>
    %691 = arith.truncf %682 : vector<8x8xf32> to vector<8x8xbf16>
    %cst_428 = arith.constant dense<0.000000e+00> : vector<8x8xf32>
    %692 = tpu.matmul %690, %691, %cst_428 {dimension_numbers = #tpu.dot_dimension_numbers<[1], [1], [0], [0], [0, 0, 1, 0], [], []>} : vector<8x8xbf16>, vector<8x8xbf16>, vector<8x8xf32> -> vector<8x8xf32>
    %693 = vector.broadcast %27 : vector<1x8xf32> to vector<8x8xf32>
    %694 = arith.addf %692, %693 : vector<8x8xf32>
    %cst_429 = arith.constant dense<0xFF800000> : vector<8xf32>
    %695 = vector.multi_reduction <maximumf>, %694, %cst_429 [1] : vector<8x8xf32> to vector<8xf32>
    %696 = vector.shape_cast %695 : vector<8xf32> to vector<8x1xf32>
    %697 = vector.broadcast %696 : vector<8x1xf32> to vector<8x8xf32>
    %698 = arith.subf %694, %697 : vector<8x8xf32>
    %699 = math.exp %698 : vector<8x8xf32>
    %cst_430 = arith.constant dense<0.000000e+00> : vector<8xf32>
    %700 = vector.multi_reduction <add>, %699, %cst_430 [1] : vector<8x8xf32> to vector<8xf32>
    %701 = vector.shape_cast %700 : vector<8xf32> to vector<8x1xf32>
    %702 = tpu.reciprocal %701 {approx = true} : vector<8x1xf32> -> vector<8x1xf32>
    %703 = vector.broadcast %702 : vector<8x1xf32> to vector<8x8xf32>
    %704 = arith.mulf %699, %703 : vector<8x8xf32>
    %705 = arith.truncf %704 : vector<8x8xf32> to vector<8x8xbf16>
    %706 = arith.truncf %683 : vector<8x8xf32> to vector<8x8xbf16>
    %cst_431 = arith.constant dense<0.000000e+00> : vector<8x8xf32>
    %707 = tpu.matmul %705, %706, %cst_431 {dimension_numbers = #tpu.dot_dimension_numbers<[1], [0], [0], [1], [0, 0, 1, 1], [], []>} : vector<8x8xbf16>, vector<8x8xbf16>, vector<8x8xf32> -> vector<8x8xf32>
    %708 = arith.truncf %707 : vector<8x8xf32> to vector<8x8xbf16>
    %c1_432 = arith.constant 1 : index
    %c1_433 = arith.constant 1 : index
    %c0_434 = arith.constant 0 : index
    %c0_435 = arith.constant 0 : index
    %709 = vector.load %arg16[%c1_432, %c1_433, %c0_434, %c0_435] : memref<2x4x8x32xbf16, #tpu.memory_space<vmem>>, vector<1x1x8x32xbf16>
    %710 = vector.shape_cast %709 : vector<1x1x8x32xbf16> to vector<8x32xbf16>
    %cst_436 = arith.constant dense<0.000000e+00> : vector<8x32xf32>
    %711 = tpu.matmul %708, %710, %cst_436 {dimension_numbers = #tpu.dot_dimension_numbers<[1], [0], [0], [1], [0, 0, 1, 1], [], []>} : vector<8x8xbf16>, vector<8x32xbf16>, vector<8x32xf32> -> vector<8x32xf32>
    %712 = arith.addf %680, %711 : vector<8x32xf32>
    %713 = vector.extract_strided_slice %637 {offsets = [0, 16], sizes = [8, 8], strides = [1, 1]} : vector<8x32xf32> to vector<8x8xf32>
    %714 = vector.extract_strided_slice %647 {offsets = [0, 16], sizes = [8, 8], strides = [1, 1]} : vector<8x64xf32> to vector<8x8xf32>
    %715 = vector.extract_strided_slice %647 {offsets = [0, 48], sizes = [8, 8], strides = [1, 1]} : vector<8x64xf32> to vector<8x8xf32>
    %c0_437 = arith.constant 0 : index
    %c2_438 = arith.constant 2 : index
    %c0_439 = arith.constant 0 : index
    %c0_440 = arith.constant 0 : index
    %716 = vector.load %arg33[%c0_437, %c2_438, %c0_439, %c0_440] : memref<1x4x8x8xf32, #tpu.memory_space<vmem>>, vector<1x1x8x8xf32>
    %717 = vector.shape_cast %716 : vector<1x1x8x8xf32> to vector<8x8xf32>
    %718 = vector.shape_cast %714 : vector<8x8xf32> to vector<1x1x8x8xf32>
    tpu.vector_store %arg33[%c0_437, %c2_438, %c0_439, %c0_440], %718 {strides = array<i32>} : memref<1x4x8x8xf32, #tpu.memory_space<vmem>>, vector<1x1x8x8xf32>,
    %c0_441 = arith.constant 0 : index
    %c2_442 = arith.constant 2 : index
    %c0_443 = arith.constant 0 : index
    %c0_444 = arith.constant 0 : index
    %719 = vector.load %arg34[%c0_441, %c2_442, %c0_443, %c0_444] : memref<1x4x8x8xf32, #tpu.memory_space<vmem>>, vector<1x1x8x8xf32>
    %720 = vector.shape_cast %719 : vector<1x1x8x8xf32> to vector<8x8xf32>
    %721 = vector.shape_cast %715 : vector<8x8xf32> to vector<1x1x8x8xf32>
    tpu.vector_store %arg34[%c0_441, %c2_442, %c0_443, %c0_444], %721 {strides = array<i32>} : memref<1x4x8x8xf32, #tpu.memory_space<vmem>>, vector<1x1x8x8xf32>,
    %722 = arith.truncf %713 : vector<8x8xf32> to vector<8x8xbf16>
    %723 = arith.truncf %714 : vector<8x8xf32> to vector<8x8xbf16>
    %cst_445 = arith.constant dense<0.000000e+00> : vector<8x8xf32>
    %724 = tpu.matmul %722, %723, %cst_445 {dimension_numbers = #tpu.dot_dimension_numbers<[1], [1], [0], [0], [0, 0, 1, 0], [], []>} : vector<8x8xbf16>, vector<8x8xbf16>, vector<8x8xf32> -> vector<8x8xf32>
    %725 = vector.broadcast %27 : vector<1x8xf32> to vector<8x8xf32>
    %726 = arith.addf %724, %725 : vector<8x8xf32>
    %cst_446 = arith.constant dense<0xFF800000> : vector<8xf32>
    %727 = vector.multi_reduction <maximumf>, %726, %cst_446 [1] : vector<8x8xf32> to vector<8xf32>
    %728 = vector.shape_cast %727 : vector<8xf32> to vector<8x1xf32>
    %729 = vector.broadcast %728 : vector<8x1xf32> to vector<8x8xf32>
    %730 = arith.subf %726, %729 : vector<8x8xf32>
    %731 = math.exp %730 : vector<8x8xf32>
    %cst_447 = arith.constant dense<0.000000e+00> : vector<8xf32>
    %732 = vector.multi_reduction <add>, %731, %cst_447 [1] : vector<8x8xf32> to vector<8xf32>
    %733 = vector.shape_cast %732 : vector<8xf32> to vector<8x1xf32>
    %734 = tpu.reciprocal %733 {approx = true} : vector<8x1xf32> -> vector<8x1xf32>
    %735 = vector.broadcast %734 : vector<8x1xf32> to vector<8x8xf32>
    %736 = arith.mulf %731, %735 : vector<8x8xf32>
    %737 = arith.truncf %736 : vector<8x8xf32> to vector<8x8xbf16>
    %738 = arith.truncf %715 : vector<8x8xf32> to vector<8x8xbf16>
    %cst_448 = arith.constant dense<0.000000e+00> : vector<8x8xf32>
    %739 = tpu.matmul %737, %738, %cst_448 {dimension_numbers = #tpu.dot_dimension_numbers<[1], [0], [0], [1], [0, 0, 1, 1], [], []>} : vector<8x8xbf16>, vector<8x8xbf16>, vector<8x8xf32> -> vector<8x8xf32>
    %740 = arith.truncf %739 : vector<8x8xf32> to vector<8x8xbf16>
    %c1_449 = arith.constant 1 : index
    %c2_450 = arith.constant 2 : index
    %c0_451 = arith.constant 0 : index
    %c0_452 = arith.constant 0 : index
    %741 = vector.load %arg16[%c1_449, %c2_450, %c0_451, %c0_452] : memref<2x4x8x32xbf16, #tpu.memory_space<vmem>>, vector<1x1x8x32xbf16>
    %742 = vector.shape_cast %741 : vector<1x1x8x32xbf16> to vector<8x32xbf16>
    %cst_453 = arith.constant dense<0.000000e+00> : vector<8x32xf32>
    %743 = tpu.matmul %740, %742, %cst_453 {dimension_numbers = #tpu.dot_dimension_numbers<[1], [0], [0], [1], [0, 0, 1, 1], [], []>} : vector<8x8xbf16>, vector<8x32xbf16>, vector<8x32xf32> -> vector<8x32xf32>
    %744 = arith.addf %712, %743 : vector<8x32xf32>
    %745 = vector.extract_strided_slice %637 {offsets = [0, 24], sizes = [8, 8], strides = [1, 1]} : vector<8x32xf32> to vector<8x8xf32>
    %746 = vector.extract_strided_slice %647 {offsets = [0, 24], sizes = [8, 8], strides = [1, 1]} : vector<8x64xf32> to vector<8x8xf32>
    %747 = vector.extract_strided_slice %647 {offsets = [0, 56], sizes = [8, 8], strides = [1, 1]} : vector<8x64xf32> to vector<8x8xf32>
    %c0_454 = arith.constant 0 : index
    %c3_455 = arith.constant 3 : index
    %c0_456 = arith.constant 0 : index
    %c0_457 = arith.constant 0 : index
    %748 = vector.load %arg33[%c0_454, %c3_455, %c0_456, %c0_457] : memref<1x4x8x8xf32, #tpu.memory_space<vmem>>, vector<1x1x8x8xf32>
    %749 = vector.shape_cast %748 : vector<1x1x8x8xf32> to vector<8x8xf32>
    %750 = vector.shape_cast %746 : vector<8x8xf32> to vector<1x1x8x8xf32>
    tpu.vector_store %arg33[%c0_454, %c3_455, %c0_456, %c0_457], %750 {strides = array<i32>} : memref<1x4x8x8xf32, #tpu.memory_space<vmem>>, vector<1x1x8x8xf32>,
    %c0_458 = arith.constant 0 : index
    %c3_459 = arith.constant 3 : index
    %c0_460 = arith.constant 0 : index
    %c0_461 = arith.constant 0 : index
    %751 = vector.load %arg34[%c0_458, %c3_459, %c0_460, %c0_461] : memref<1x4x8x8xf32, #tpu.memory_space<vmem>>, vector<1x1x8x8xf32>
    %752 = vector.shape_cast %751 : vector<1x1x8x8xf32> to vector<8x8xf32>
    %753 = vector.shape_cast %747 : vector<8x8xf32> to vector<1x1x8x8xf32>
    tpu.vector_store %arg34[%c0_458, %c3_459, %c0_460, %c0_461], %753 {strides = array<i32>} : memref<1x4x8x8xf32, #tpu.memory_space<vmem>>, vector<1x1x8x8xf32>,
    %754 = arith.truncf %745 : vector<8x8xf32> to vector<8x8xbf16>
    %755 = arith.truncf %746 : vector<8x8xf32> to vector<8x8xbf16>
    %cst_462 = arith.constant dense<0.000000e+00> : vector<8x8xf32>
    %756 = tpu.matmul %754, %755, %cst_462 {dimension_numbers = #tpu.dot_dimension_numbers<[1], [1], [0], [0], [0, 0, 1, 0], [], []>} : vector<8x8xbf16>, vector<8x8xbf16>, vector<8x8xf32> -> vector<8x8xf32>
    %757 = vector.broadcast %27 : vector<1x8xf32> to vector<8x8xf32>
    %758 = arith.addf %756, %757 : vector<8x8xf32>
    %cst_463 = arith.constant dense<0xFF800000> : vector<8xf32>
    %759 = vector.multi_reduction <maximumf>, %758, %cst_463 [1] : vector<8x8xf32> to vector<8xf32>
    %760 = vector.shape_cast %759 : vector<8xf32> to vector<8x1xf32>
    %761 = vector.broadcast %760 : vector<8x1xf32> to vector<8x8xf32>
    %762 = arith.subf %758, %761 : vector<8x8xf32>
    %763 = math.exp %762 : vector<8x8xf32>
    %cst_464 = arith.constant dense<0.000000e+00> : vector<8xf32>
    %764 = vector.multi_reduction <add>, %763, %cst_464 [1] : vector<8x8xf32> to vector<8xf32>
    %765 = vector.shape_cast %764 : vector<8xf32> to vector<8x1xf32>
    %766 = tpu.reciprocal %765 {approx = true} : vector<8x1xf32> -> vector<8x1xf32>
    %767 = vector.broadcast %766 : vector<8x1xf32> to vector<8x8xf32>
    %768 = arith.mulf %763, %767 : vector<8x8xf32>
    %769 = arith.truncf %768 : vector<8x8xf32> to vector<8x8xbf16>
    %770 = arith.truncf %747 : vector<8x8xf32> to vector<8x8xbf16>
    %cst_465 = arith.constant dense<0.000000e+00> : vector<8x8xf32>
    %771 = tpu.matmul %769, %770, %cst_465 {dimension_numbers = #tpu.dot_dimension_numbers<[1], [0], [0], [1], [0, 0, 1, 1], [], []>} : vector<8x8xbf16>, vector<8x8xbf16>, vector<8x8xf32> -> vector<8x8xf32>
    %772 = arith.truncf %771 : vector<8x8xf32> to vector<8x8xbf16>
    %c1_466 = arith.constant 1 : index
    %c3_467 = arith.constant 3 : index
    %c0_468 = arith.constant 0 : index
    %c0_469 = arith.constant 0 : index
    %773 = vector.load %arg16[%c1_466, %c3_467, %c0_468, %c0_469] : memref<2x4x8x32xbf16, #tpu.memory_space<vmem>>, vector<1x1x8x32xbf16>
    %774 = vector.shape_cast %773 : vector<1x1x8x32xbf16> to vector<8x32xbf16>
    %cst_470 = arith.constant dense<0.000000e+00> : vector<8x32xf32>
    %775 = tpu.matmul %772, %774, %cst_470 {dimension_numbers = #tpu.dot_dimension_numbers<[1], [0], [0], [1], [0, 0, 1, 1], [], []>} : vector<8x8xbf16>, vector<8x32xbf16>, vector<8x32xf32> -> vector<8x32xf32>
    %776 = arith.addf %744, %775 : vector<8x32xf32>
    %c1_471 = arith.constant 1 : index
    %c0_472 = arith.constant 0 : index
    %c0_473 = arith.constant 0 : index
    %777 = vector.load %arg17[%c1_471, %c0_472, %c0_473] : memref<2x1x32xf32, #tpu.memory_space<vmem>>, vector<1x1x32xf32>
    %778 = vector.shape_cast %777 : vector<1x1x32xf32> to vector<1x32xf32>
    %779 = vector.broadcast %778 : vector<1x32xf32> to vector<8x32xf32>
    %780 = arith.addf %776, %779 : vector<8x32xf32>
    %781 = arith.addf %629, %780 : vector<8x32xf32>
    %c1_474 = arith.constant 1 : index
    %c0_475 = arith.constant 0 : index
    %c0_476 = arith.constant 0 : index
    %782 = vector.load %arg18[%c1_474, %c0_475, %c0_476] : memref<2x1x32xf32, #tpu.memory_space<vmem>>, vector<1x1x32xf32>
    %783 = vector.shape_cast %782 : vector<1x1x32xf32> to vector<1x32xf32>
    %c1_477 = arith.constant 1 : index
    %c0_478 = arith.constant 0 : index
    %c0_479 = arith.constant 0 : index
    %784 = vector.load %arg19[%c1_477, %c0_478, %c0_479] : memref<2x1x32xf32, #tpu.memory_space<vmem>>, vector<1x1x32xf32>
    %785 = vector.shape_cast %784 : vector<1x1x32xf32> to vector<1x32xf32>
    %cst_480 = arith.constant dense<0.000000e+00> : vector<8xf32>
    %786 = vector.multi_reduction <add>, %781, %cst_480 [1] : vector<8x32xf32> to vector<8xf32>
    %787 = vector.shape_cast %786 : vector<8xf32> to vector<8x1xf32>
    %cst_481 = arith.constant 3.200000e+01 : f32
    %788 = vector.broadcast %cst_481 : f32 to vector<8x1xf32>
    %789 = arith.divf %787, %788 : vector<8x1xf32>
    %790 = vector.broadcast %789 : vector<8x1xf32> to vector<8x32xf32>
    %791 = arith.subf %781, %790 : vector<8x32xf32>
    %792 = arith.mulf %791, %791 : vector<8x32xf32>
    %cst_482 = arith.constant dense<0.000000e+00> : vector<8xf32>
    %793 = vector.multi_reduction <add>, %792, %cst_482 [1] : vector<8x32xf32> to vector<8xf32>
    %794 = vector.shape_cast %793 : vector<8xf32> to vector<8x1xf32>
    %cst_483 = arith.constant 3.200000e+01 : f32
    %795 = vector.broadcast %cst_483 : f32 to vector<8x1xf32>
    %796 = arith.divf %794, %795 : vector<8x1xf32>
    %797 = vector.broadcast %789 : vector<8x1xf32> to vector<8x32xf32>
    %798 = arith.subf %781, %797 : vector<8x32xf32>
    %cst_484 = arith.constant 9.99999974E-6 : f32
    %799 = vector.broadcast %cst_484 : f32 to vector<8x1xf32>
    %800 = arith.addf %796, %799 : vector<8x1xf32>
    %801 = math.rsqrt %800 : vector<8x1xf32>
    %802 = vector.broadcast %801 : vector<8x1xf32> to vector<8x32xf32>
    %803 = arith.mulf %798, %802 : vector<8x32xf32>
    %804 = vector.broadcast %783 : vector<1x32xf32> to vector<8x32xf32>
    %805 = arith.mulf %803, %804 : vector<8x32xf32>
    %806 = vector.broadcast %785 : vector<1x32xf32> to vector<8x32xf32>
    %807 = arith.addf %805, %806 : vector<8x32xf32>
    %c1_485 = arith.constant 1 : index
    %c0_486 = arith.constant 0 : index
    %c0_487 = arith.constant 0 : index
    %808 = vector.load %arg20[%c1_485, %c0_486, %c0_487] : memref<2x32x64xbf16, #tpu.memory_space<vmem>>, vector<1x32x64xbf16>
    %809 = vector.shape_cast %808 : vector<1x32x64xbf16> to vector<32x64xbf16>
    %c1_488 = arith.constant 1 : index
    %c0_489 = arith.constant 0 : index
    %c0_490 = arith.constant 0 : index
    %810 = vector.load %arg21[%c1_488, %c0_489, %c0_490] : memref<2x1x64xf32, #tpu.memory_space<vmem>>, vector<1x1x64xf32>
    %811 = vector.shape_cast %810 : vector<1x1x64xf32> to vector<1x64xf32>
    %812 = arith.truncf %807 : vector<8x32xf32> to vector<8x32xbf16>
    %cst_491 = arith.constant dense<0.000000e+00> : vector<8x64xf32>
    %813 = tpu.matmul %812, %809, %cst_491 {dimension_numbers = #tpu.dot_dimension_numbers<[1], [0], [0], [1], [0, 0, 1, 1], [], []>} : vector<8x32xbf16>, vector<32x64xbf16>, vector<8x64xf32> -> vector<8x64xf32>
    %814 = vector.broadcast %811 : vector<1x64xf32> to vector<8x64xf32>
    %815 = arith.addf %813, %814 : vector<8x64xf32>
    %cst_492 = arith.constant 5.000000e-01 : f32
    %816 = vector.broadcast %cst_492 : f32 to vector<8x64xf32>
    %817 = arith.mulf %816, %815 : vector<8x64xf32>
    %cst_493 = arith.constant 4.471500e-02 : f32
    %818 = vector.broadcast %cst_493 : f32 to vector<8x64xf32>
    %819 = arith.mulf %818, %815 : vector<8x64xf32>
    %820 = arith.mulf %819, %815 : vector<8x64xf32>
    %821 = arith.mulf %820, %815 : vector<8x64xf32>
    %822 = arith.addf %815, %821 : vector<8x64xf32>
    %cst_494 = arith.constant 0.797884583 : f32
    %823 = vector.broadcast %cst_494 : f32 to vector<8x64xf32>
    %824 = arith.mulf %823, %822 : vector<8x64xf32>
    %825 = math.tanh %824 : vector<8x64xf32>
    %cst_495 = arith.constant 1.000000e+00 : f32
    %826 = vector.broadcast %cst_495 : f32 to vector<8x64xf32>
    %827 = arith.addf %826, %825 : vector<8x64xf32>
    %828 = arith.mulf %817, %827 : vector<8x64xf32>
    %c1_496 = arith.constant 1 : index
    %c0_497 = arith.constant 0 : index
    %c0_498 = arith.constant 0 : index
    %829 = vector.load %arg22[%c1_496, %c0_497, %c0_498] : memref<2x64x32xbf16, #tpu.memory_space<vmem>>, vector<1x64x32xbf16>
    %830 = vector.shape_cast %829 : vector<1x64x32xbf16> to vector<64x32xbf16>
    %c1_499 = arith.constant 1 : index
    %c0_500 = arith.constant 0 : index
    %c0_501 = arith.constant 0 : index
    %831 = vector.load %arg23[%c1_499, %c0_500, %c0_501] : memref<2x1x32xf32, #tpu.memory_space<vmem>>, vector<1x1x32xf32>
    %832 = vector.shape_cast %831 : vector<1x1x32xf32> to vector<1x32xf32>
    %833 = arith.truncf %828 : vector<8x64xf32> to vector<8x64xbf16>
    %cst_502 = arith.constant dense<0.000000e+00> : vector<8x32xf32>
    %834 = tpu.matmul %833, %830, %cst_502 {dimension_numbers = #tpu.dot_dimension_numbers<[1], [0], [0], [1], [0, 0, 1, 1], [], []>} : vector<8x64xbf16>, vector<64x32xbf16>, vector<8x32xf32> -> vector<8x32xf32>
    %835 = vector.broadcast %832 : vector<1x32xf32> to vector<8x32xf32>
    %836 = arith.addf %834, %835 : vector<8x32xf32>
    %837 = arith.addf %807, %836 : vector<8x32xf32>
    %c1_503 = arith.constant 1 : index
    %c0_504 = arith.constant 0 : index
    %c0_505 = arith.constant 0 : index
    %838 = vector.load %arg24[%c1_503, %c0_504, %c0_505] : memref<2x1x32xf32, #tpu.memory_space<vmem>>, vector<1x1x32xf32>
    %839 = vector.shape_cast %838 : vector<1x1x32xf32> to vector<1x32xf32>
    %c1_506 = arith.constant 1 : index
    %c0_507 = arith.constant 0 : index
    %c0_508 = arith.constant 0 : index
    %840 = vector.load %arg25[%c1_506, %c0_507, %c0_508] : memref<2x1x32xf32, #tpu.memory_space<vmem>>, vector<1x1x32xf32>
    %841 = vector.shape_cast %840 : vector<1x1x32xf32> to vector<1x32xf32>
    %cst_509 = arith.constant dense<0.000000e+00> : vector<8xf32>
    %842 = vector.multi_reduction <add>, %837, %cst_509 [1] : vector<8x32xf32> to vector<8xf32>
    %843 = vector.shape_cast %842 : vector<8xf32> to vector<8x1xf32>
    %cst_510 = arith.constant 3.200000e+01 : f32
    %844 = vector.broadcast %cst_510 : f32 to vector<8x1xf32>
    %845 = arith.divf %843, %844 : vector<8x1xf32>
    %846 = vector.broadcast %845 : vector<8x1xf32> to vector<8x32xf32>
    %847 = arith.subf %837, %846 : vector<8x32xf32>
    %848 = arith.mulf %847, %847 : vector<8x32xf32>
    %cst_511 = arith.constant dense<0.000000e+00> : vector<8xf32>
    %849 = vector.multi_reduction <add>, %848, %cst_511 [1] : vector<8x32xf32> to vector<8xf32>
    %850 = vector.shape_cast %849 : vector<8xf32> to vector<8x1xf32>
    %cst_512 = arith.constant 3.200000e+01 : f32
    %851 = vector.broadcast %cst_512 : f32 to vector<8x1xf32>
    %852 = arith.divf %850, %851 : vector<8x1xf32>
    %853 = vector.broadcast %845 : vector<8x1xf32> to vector<8x32xf32>
    %854 = arith.subf %837, %853 : vector<8x32xf32>
    %cst_513 = arith.constant 9.99999974E-6 : f32
    %855 = vector.broadcast %cst_513 : f32 to vector<8x1xf32>
    %856 = arith.addf %852, %855 : vector<8x1xf32>
    %857 = math.rsqrt %856 : vector<8x1xf32>
    %858 = vector.broadcast %857 : vector<8x1xf32> to vector<8x32xf32>
    %859 = arith.mulf %854, %858 : vector<8x32xf32>
    %860 = vector.broadcast %839 : vector<1x32xf32> to vector<8x32xf32>
    %861 = arith.mulf %859, %860 : vector<8x32xf32>
    %862 = vector.broadcast %841 : vector<1x32xf32> to vector<8x32xf32>
    %863 = arith.addf %861, %862 : vector<8x32xf32>
    %c0_514 = arith.constant 0 : index
    %c0_515 = arith.constant 0 : index
    %c0_516 = arith.constant 0 : index
    %864 = vector.load %arg26[%c0_514, %c0_515, %c0_516] : memref<1x8x32xf32, #tpu.memory_space<vmem>>, vector<1x8x32xf32>
    %865 = vector.shape_cast %864 : vector<1x8x32xf32> to vector<8x32xf32>
    %866 = vector.shape_cast %863 : vector<8x32xf32> to vector<1x8x32xf32>
    tpu.vector_store %arg26[%c0_514, %c0_515, %c0_516], %866 {strides = array<i32>} : memref<1x8x32xf32, #tpu.memory_space<vmem>>, vector<1x8x32xf32>,
    return
  }
  func.func @transform_0(%arg0: i32) -> (i32, i32, i32) {
    %c0_i32 = arith.constant 0 : i32
    %c0_i32_0 = arith.constant 0 : i32
    %c0_i32_1 = arith.constant 0 : i32
    return %arg0, %c0_i32, %c0_i32_0 : i32, i32, i32
  }
  func.func @transform_1(%arg0: i32) -> (i32, i32, i32) {
    %c0_i32 = arith.constant 0 : i32
    %c0_i32_0 = arith.constant 0 : i32
    %c0_i32_1 = arith.constant 0 : i32
    return %arg0, %c0_i32, %c0_i32_0 : i32, i32, i32
  }
  func.func @transform_2(%arg0: i32) -> (i32, i32, i32) {
    %c0_i32 = arith.constant 0 : i32
    %c0_i32_0 = arith.constant 0 : i32
    %c0_i32_1 = arith.constant 0 : i32
    return %arg0, %c0_i32, %c0_i32_0 : i32, i32, i32
  }
  func.func @transform_3(%arg0: i32) -> (i32, i32) {
    %c0_i32 = arith.constant 0 : i32
    %c0_i32_0 = arith.constant 0 : i32
    %c0_i32_1 = arith.constant 0 : i32
    return %c0_i32, %c0_i32_0 : i32, i32
  }
  func.func @transform_4(%arg0: i32) -> (i32, i32) {
    %c0_i32 = arith.constant 0 : i32
    %c0_i32_0 = arith.constant 0 : i32
    %c0_i32_1 = arith.constant 0 : i32
    return %c0_i32, %c0_i32_0 : i32, i32
  }
  func.func @transform_5(%arg0: i32) -> (i32, i32, i32) {
    %c0_i32 = arith.constant 0 : i32
    %c0_i32_0 = arith.constant 0 : i32
    %c0_i32_1 = arith.constant 0 : i32
    %c0_i32_2 = arith.constant 0 : i32
    return %c0_i32, %c0_i32_0, %c0_i32_1 : i32, i32, i32
  }
  func.func @transform_6(%arg0: i32) -> (i32, i32, i32) {
    %c0_i32 = arith.constant 0 : i32
    %c0_i32_0 = arith.constant 0 : i32
    %c0_i32_1 = arith.constant 0 : i32
    %c0_i32_2 = arith.constant 0 : i32
    return %c0_i32, %c0_i32_0, %c0_i32_1 : i32, i32, i32
  }
  func.func @transform_7(%arg0: i32) -> (i32, i32, i32, i32) {
    %c0_i32 = arith.constant 0 : i32
    %c0_i32_0 = arith.constant 0 : i32
    %c0_i32_1 = arith.constant 0 : i32
    %c0_i32_2 = arith.constant 0 : i32
    %c0_i32_3 = arith.constant 0 : i32
    return %c0_i32, %c0_i32_0, %c0_i32_1, %c0_i32_2 : i32, i32, i32, i32
  }
  func.func @transform_8(%arg0: i32) -> (i32, i32, i32) {
    %c0_i32 = arith.constant 0 : i32
    %c0_i32_0 = arith.constant 0 : i32
    %c0_i32_1 = arith.constant 0 : i32
    %c0_i32_2 = arith.constant 0 : i32
    return %c0_i32, %c0_i32_0, %c0_i32_1 : i32, i32, i32
  }
  func.func @transform_9(%arg0: i32) -> (i32, i32, i32) {
    %c0_i32 = arith.constant 0 : i32
    %c0_i32_0 = arith.constant 0 : i32
    %c0_i32_1 = arith.constant 0 : i32
    %c0_i32_2 = arith.constant 0 : i32
    return %c0_i32, %c0_i32_0, %c0_i32_1 : i32, i32, i32
  }
  func.func @transform_10(%arg0: i32) -> (i32, i32, i32) {
    %c0_i32 = arith.constant 0 : i32
    %c0_i32_0 = arith.constant 0 : i32
    %c0_i32_1 = arith.constant 0 : i32
    %c0_i32_2 = arith.constant 0 : i32
    return %c0_i32, %c0_i32_0, %c0_i32_1 : i32, i32, i32
  }
  func.func @transform_11(%arg0: i32) -> (i32, i32, i32) {
    %c0_i32 = arith.constant 0 : i32
    %c0_i32_0 = arith.constant 0 : i32
    %c0_i32_1 = arith.constant 0 : i32
    %c0_i32_2 = arith.constant 0 : i32
    return %c0_i32, %c0_i32_0, %c0_i32_1 : i32, i32, i32
  }
  func.func @transform_12(%arg0: i32) -> (i32, i32, i32) {
    %c0_i32 = arith.constant 0 : i32
    %c0_i32_0 = arith.constant 0 : i32
    %c0_i32_1 = arith.constant 0 : i32
    %c0_i32_2 = arith.constant 0 : i32
    return %c0_i32, %c0_i32_0, %c0_i32_1 : i32, i32, i32
  }
  func.func @transform_13(%arg0: i32) -> (i32, i32, i32) {
    %c0_i32 = arith.constant 0 : i32
    %c0_i32_0 = arith.constant 0 : i32
    %c0_i32_1 = arith.constant 0 : i32
    %c0_i32_2 = arith.constant 0 : i32
    return %c0_i32, %c0_i32_0, %c0_i32_1 : i32, i32, i32
  }
  func.func @transform_14(%arg0: i32) -> (i32, i32, i32) {
    %c0_i32 = arith.constant 0 : i32
    %c0_i32_0 = arith.constant 0 : i32
    %c0_i32_1 = arith.constant 0 : i32
    %c0_i32_2 = arith.constant 0 : i32
    return %c0_i32, %c0_i32_0, %c0_i32_1 : i32, i32, i32
  }
  func.func @transform_15(%arg0: i32) -> (i32, i32, i32, i32) {
    %c0_i32 = arith.constant 0 : i32
    %c0_i32_0 = arith.constant 0 : i32
    %c0_i32_1 = arith.constant 0 : i32
    %c0_i32_2 = arith.constant 0 : i32
    %c0_i32_3 = arith.constant 0 : i32
    return %c0_i32, %c0_i32_0, %c0_i32_1, %c0_i32_2 : i32, i32, i32, i32
  }
  func.func @transform_16(%arg0: i32) -> (i32, i32, i32) {
    %c0_i32 = arith.constant 0 : i32
    %c0_i32_0 = arith.constant 0 : i32
    %c0_i32_1 = arith.constant 0 : i32
    %c0_i32_2 = arith.constant 0 : i32
    return %c0_i32, %c0_i32_0, %c0_i32_1 : i32, i32, i32
  }
  func.func @transform_17(%arg0: i32) -> (i32, i32, i32) {
    %c0_i32 = arith.constant 0 : i32
    %c0_i32_0 = arith.constant 0 : i32
    %c0_i32_1 = arith.constant 0 : i32
    %c0_i32_2 = arith.constant 0 : i32
    return %c0_i32, %c0_i32_0, %c0_i32_1 : i32, i32, i32
  }
  func.func @transform_18(%arg0: i32) -> (i32, i32, i32) {
    %c0_i32 = arith.constant 0 : i32
    %c0_i32_0 = arith.constant 0 : i32
    %c0_i32_1 = arith.constant 0 : i32
    %c0_i32_2 = arith.constant 0 : i32
    return %c0_i32, %c0_i32_0, %c0_i32_1 : i32, i32, i32
  }
  func.func @transform_19(%arg0: i32) -> (i32, i32, i32) {
    %c0_i32 = arith.constant 0 : i32
    %c0_i32_0 = arith.constant 0 : i32
    %c0_i32_1 = arith.constant 0 : i32
    %c0_i32_2 = arith.constant 0 : i32
    return %c0_i32, %c0_i32_0, %c0_i32_1 : i32, i32, i32
  }
  func.func @transform_20(%arg0: i32) -> (i32, i32, i32) {
    %c0_i32 = arith.constant 0 : i32
    %c0_i32_0 = arith.constant 0 : i32
    %c0_i32_1 = arith.constant 0 : i32
    %c0_i32_2 = arith.constant 0 : i32
    return %c0_i32, %c0_i32_0, %c0_i32_1 : i32, i32, i32
  }
  func.func @transform_21(%arg0: i32) -> (i32, i32, i32) {
    %c0_i32 = arith.constant 0 : i32
    %c0_i32_0 = arith.constant 0 : i32
    %c0_i32_1 = arith.constant 0 : i32
    %c0_i32_2 = arith.constant 0 : i32
    return %c0_i32, %c0_i32_0, %c0_i32_1 : i32, i32, i32
  }
  func.func @transform_22(%arg0: i32) -> (i32, i32, i32) {
    %c0_i32 = arith.constant 0 : i32
    %c0_i32_0 = arith.constant 0 : i32
    %c0_i32_1 = arith.constant 0 : i32
    %c0_i32_2 = arith.constant 0 : i32
    return %c0_i32, %c0_i32_0, %c0_i32_1 : i32, i32, i32
  }
  func.func @transform_23(%arg0: i32) -> (i32, i32, i32) {
    %c0_i32 = arith.constant 0 : i32
    %c0_i32_0 = arith.constant 0 : i32
    %c0_i32_1 = arith.constant 0 : i32
    %c0_i32_2 = arith.constant 0 : i32
    return %c0_i32, %c0_i32_0, %c0_i32_1 : i32, i32, i32
  }
  func.func @transform_24(%arg0: i32) -> (i32, i32, i32) {
    %c0_i32 = arith.constant 0 : i32
    %c0_i32_0 = arith.constant 0 : i32
    %c0_i32_1 = arith.constant 0 : i32
    %c0_i32_2 = arith.constant 0 : i32
    return %c0_i32, %c0_i32_0, %c0_i32_1 : i32, i32, i32
  }
  func.func @transform_25(%arg0: i32) -> (i32, i32, i32) {
    %c0_i32 = arith.constant 0 : i32
    %c0_i32_0 = arith.constant 0 : i32
    %c0_i32_1 = arith.constant 0 : i32
    return %arg0, %c0_i32, %c0_i32_0 : i32, i32, i32
  }
  func.func @transform_26(%arg0: i32) -> (i32, i32, i32, i32) {
    %c0_i32 = arith.constant 0 : i32
    %c0_i32_0 = arith.constant 0 : i32
    %c0_i32_1 = arith.constant 0 : i32
    %c0_i32_2 = arith.constant 0 : i32
    return %arg0, %c0_i32, %c0_i32_0, %c0_i32_1 : i32, i32, i32, i32
  }
  func.func @transform_27(%arg0: i32) -> (i32, i32, i32, i32) {
    %c0_i32 = arith.constant 0 : i32
    %c0_i32_0 = arith.constant 0 : i32
    %c0_i32_1 = arith.constant 0 : i32
    %c0_i32_2 = arith.constant 0 : i32
    return %arg0, %c0_i32, %c0_i32_0, %c0_i32_1 : i32, i32, i32, i32
  }
  func.func @transform_28(%arg0: i32) -> (i32, i32, i32, i32) {
    %c0_i32 = arith.constant 0 : i32
    %c0_i32_0 = arith.constant 0 : i32
    %c0_i32_1 = arith.constant 0 : i32
    %c0_i32_2 = arith.constant 0 : i32
    return %arg0, %c0_i32, %c0_i32_0, %c0_i32_1 : i32, i32, i32, i32
  }
  func.func @transform_29(%arg0: i32) -> (i32, i32, i32, i32) {
    %c0_i32 = arith.constant 0 : i32
    %c0_i32_0 = arith.constant 0 : i32
    %c0_i32_1 = arith.constant 0 : i32
    %c0_i32_2 = arith.constant 0 : i32
    return %arg0, %c0_i32, %c0_i32_0, %c0_i32_1 : i32, i32, i32, i32
  }
  func.func @transform_30(%arg0: i32) -> (i32, i32, i32, i32) {
    %c0_i32 = arith.constant 0 : i32
    %c0_i32_0 = arith.constant 0 : i32
    %c0_i32_1 = arith.constant 0 : i32
    %c0_i32_2 = arith.constant 0 : i32
    return %arg0, %c0_i32, %c0_i32_0, %c0_i32_1 : i32, i32, i32, i32
  }
  func.func @transform_31(%arg0: i32) -> (i32, i32, i32, i32) {
    %c0_i32 = arith.constant 0 : i32
    %c0_i32_0 = arith.constant 0 : i32
    %c0_i32_1 = arith.constant 0 : i32
    %c0_i32_2 = arith.constant 0 : i32
    return %arg0, %c0_i32, %c0_i32_0, %c0_i32_1 : i32, i32, i32, i32
  }
  func.func @transform_32(%arg0: i32) -> (i32, i32, i32, i32) {
    %c0_i32 = arith.constant 0 : i32
    %c0_i32_0 = arith.constant 0 : i32
    %c0_i32_1 = arith.constant 0 : i32
    %c0_i32_2 = arith.constant 0 : i32
    return %arg0, %c0_i32, %c0_i32_0, %c0_i32_1 : i32, i32, i32, i32
  }
  func.func @transform_33(%arg0: i32) -> (i32, i32, i32, i32) {
    %c0_i32 = arith.constant 0 : i32
    %c0_i32_0 = arith.constant 0 : i32
    %c0_i32_1 = arith.constant 0 : i32
    %c0_i32_2 = arith.constant 0 : i32
    return %arg0, %c0_i32, %c0_i32_0, %c0_i32_1 : i32, i32, i32, i32
  }
}

</mosaic_0001>

<llo_original>
// kernel: decoder_for_onnx_forward.1
$region0: #{decoder_for_onnx_forward.1}
  #allocation0 [shape = 'u32[]', space=smem, size = 0x4, offset = 0x4, fixed_abs, tag = 'smem constant byte address 0x4 - core index']
  #allocation1 [shape = 'u32[144,128]{1,0:T(1,128)}', space=vmem, size = 0x12000, scoped, tag = 'internal scratch']
  %s0 = inlined_call_operand.smem [shape: u32[34], index: -1, kind: input, shape index: {}]
  %s1 = sld [smem:[%s0]]
  %s2 = scalar_lea.smem %s0, 1
  %s3 = sld [smem:[%s2]]
  %s4 = scalar_lea.smem %s0, 2
  %s5 = sld [smem:[%s4]]
  %s6 = scalar_lea.smem %s0, 3
  %s7 = sld [smem:[%s6]]
  %s8 = scalar_lea.smem %s0, 4
  %s9 = sld [smem:[%s8]]
  %s10 = scalar_lea.smem %s0, 5
  %s11 = sld [smem:[%s10]]
  %s12 = scalar_lea.smem %s0, 6
  %s13 = sld [smem:[%s12]]
  %s14 = scalar_lea.smem %s0, 7
  %s15 = sld [smem:[%s14]]
  %s16 = scalar_lea.smem %s0, 8
  %s17 = sld [smem:[%s16]]
  %s18 = scalar_lea.smem %s0, 9
  %s19 = sld [smem:[%s18]]
  %s20 = scalar_lea.smem %s0, 10
  %s21 = sld [smem:[%s20]]
  %s22 = scalar_lea.smem %s0, 11
  %s23 = sld [smem:[%s22]]
  %s24 = scalar_lea.smem %s0, 12
  %s25 = sld [smem:[%s24]]
  %s26 = scalar_lea.smem %s0, 13
  %s27 = sld [smem:[%s26]]
  %s28 = scalar_lea.smem %s0, 14
  %s29 = sld [smem:[%s28]]
  %s30 = scalar_lea.smem %s0, 15
  %s31 = sld [smem:[%s30]]
  %s32 = scalar_lea.smem %s0, 16
  %s33 = sld [smem:[%s32]]
  %s34 = scalar_lea.smem %s0, 17
  %s35 = sld [smem:[%s34]]
  %s36 = scalar_lea.smem %s0, 18
  %s37 = sld [smem:[%s36]]
  %s38 = scalar_lea.smem %s0, 19
  %s39 = sld [smem:[%s38]]
  %s40 = scalar_lea.smem %s0, 20
  %s41 = sld [smem:[%s40]]
  %s42 = scalar_lea.smem %s0, 21
  %s43 = sld [smem:[%s42]]
  %s44 = scalar_lea.smem %s0, 22
  %s45 = sld [smem:[%s44]]
  %s46 = scalar_lea.smem %s0, 23
  %s47 = sld [smem:[%s46]]
  %s48 = scalar_lea.smem %s0, 24
  %s49 = sld [smem:[%s48]]
  %s50 = scalar_lea.smem %s0, 25
  %s51 = sld [smem:[%s50]]
  %s52 = scalar_lea.smem %s0, 26
  %s53 = sld [smem:[%s52]]
  %s54 = scalar_lea.smem %s0, 27
  %s55 = sld [smem:[%s54]]
  %s56 = scalar_lea.smem %s0, 28
  %s57 = sld [smem:[%s56]]
  %s58 = scalar_lea.smem %s0, 29
  %s59 = sld [smem:[%s58]]
  %s60 = scalar_lea.smem %s0, 30
  %s61 = sld [smem:[%s60]]
  %s62 = scalar_lea.smem %s0, 31
  %s63 = sld [smem:[%s62]]
  %s64 = scalar_lea.smem %s0, 32
  %s65 = sld [smem:[%s64]]
  %s66 = scalar_lea.smem %s0, 33
  %s67 = sld [smem:[%s66]]
  %68 = xla_tuple %s51, %s53, %s55, %s57, %s59, %s61, %s63, %s65, %s67
  %s69 = sld [smem:[#allocation0]]
  $region197: #{decoder_for_onnx_forward.1} parent=0
    _
  %s71 = ssub.s32 1, %s69
  %s72 = scalar_select 0, %s71, %s69
  $region1: #{decoder_for_onnx_forward.1} parent=0
    #allocation2 [shape = 'u8[8192]{0}', space=vmem, size = 0x2000, scoped, tag = 'output window, operand 0']
    #allocation3 [shape = 's32[2]{0}', space=sflag, size = 0x8, scoped, tag = 'scoped memory for decoder_for_onnx_forward.1']
    #allocation4 [shape = 'u8[32768]{0}', space=vmem, size = 0x8000, scoped, tag = 'output window, operand 1']
    #allocation5 [shape = 's32[2]{0}', space=sflag, size = 0x8, scoped, tag = 'scoped memory for decoder_for_onnx_forward.1']
    #allocation6 [shape = 'u8[32768]{0}', space=vmem, size = 0x8000, scoped, tag = 'output window, operand 2']
    #allocation7 [shape = 'u8[32768]{0}', space=vmem, size = 0x8000, scoped, tag = 'output window, operand 3']
    #allocation8 [shape = 's32[2]{0}', space=sflag, size = 0x8, scoped, tag = 'scoped memory for decoder_for_onnx_forward.1']
    #allocation9 [shape = 'u8[32768]{0}', space=vmem, size = 0x8000, scoped, tag = 'output window, operand 4']
    #allocation10 [shape = 'u8[32768]{0}', space=vmem, size = 0x8000, scoped, tag = 'output window, operand 5']
    #allocation11 [shape = 's32[2]{0}', space=sflag, size = 0x8, scoped, tag = 'scoped memory for decoder_for_onnx_forward.1']
    #allocation12 [shape = 'u8[32768]{0}', space=vmem, size = 0x8000, scoped, tag = 'output window, operand 6']
    #allocation13 [shape = 'u8[32768]{0}', space=vmem, size = 0x8000, scoped, tag = 'output window, operand 7']
    #allocation14 [shape = 's32[2]{0}', space=sflag, size = 0x8, scoped, tag = 'scoped memory for decoder_for_onnx_forward.1']
    #allocation15 [shape = 'u8[32768]{0}', space=vmem, size = 0x8000, scoped, tag = 'output window, operand 8']
    %73 = vsyncpa [#allocation3], 0
    %s74 = scalar_lea.sflag [#allocation3], 1
    %75 = vsyncpa %s74, 0
    %76 = vsyncpa [#allocation5], 0
    %s77 = scalar_lea.sflag [#allocation5], 1
    %78 = vsyncpa %s77, 0
    %79 = vsyncpa [#allocation8], 0
    %s80 = scalar_lea.sflag [#allocation8], 1
    %81 = vsyncpa %s80, 0
    %82 = vsyncpa [#allocation11], 0
    %s83 = scalar_lea.sflag [#allocation11], 1
    %84 = vsyncpa %s83, 0
    %85 = vsyncpa [#allocation14], 0
    %s86 = scalar_lea.sflag [#allocation14], 1
    %87 = vsyncpa %s86, 0
    loop: start=0, step=1, limit=4
    $region2: #{decoder_for_onnx_forward.1} parent=1 // loop_pre_header
      _
    $region3: #{decoder_for_onnx_forward.1} parent=1 // loop_header
      %s89 = sphi 0, %s93
      %p90 = scmp.ge.s32.totalorder %s89, 4
      %s99 = sphi 0, %s101
      %s102 = sphi 0, %s99
      %s103 = sphi 0, %s102
      %s119 = sphi 0, %s103
      %s125 = sphi 0, %s127
      %s128 = sphi 0, %s125
      %s129 = sphi 0, %s128
      %s145 = sphi 0, %s129
      %s151 = sphi 0, %s153
      %s154 = sphi 0, %s151
      %s155 = sphi 0, %s154
      %s171 = sphi 0, %s155
      %s175 = sphi 0, %s175
      %s177 = sphi 0, %s175
      %s178 = sphi 0, %s177
      %s192 = sphi 0, %s178
      %s196 = sphi 0, %s196
      %s198 = sphi 0, %s196
      %s199 = sphi 0, %s198
      %s213 = sphi 0, %s199
      %s217 = sphi 0, %s217
      %s219 = sphi 0, %s217
      %s220 = sphi 0, %s219
      %s234 = sphi 0, %s220
      %s238 = sphi 0, %s238
      %s240 = sphi 0, %s238
      %s241 = sphi 0, %s240
      %s255 = sphi 0, %s241
      %s259 = sphi 0, %s259
      %s261 = sphi 0, %s259
      %s262 = sphi 0, %s261
      %s276 = sphi 0, %s262
      %s280 = sphi 0, %s280
      %s282 = sphi 0, %s280
      %s283 = sphi 0, %s282
      %s297 = sphi 0, %s283
      %s301 = sphi 0, %s301
      %s303 = sphi 0, %s301
      %s304 = sphi 0, %s303
      %s318 = sphi 0, %s304
      %s322 = sphi 0, %s322
      %s324 = sphi 0, %s322
      %s325 = sphi 0, %s324
      %s339 = sphi 0, %s325
      %s343 = sphi 0, %s343
      %s345 = sphi 0, %s343
      %s346 = sphi 0, %s345
      %s360 = sphi 0, %s346
      %s364 = sphi 0, %s364
      %s366 = sphi 0, %s364
      %s367 = sphi 0, %s366
      %s381 = sphi 0, %s367
      %s385 = sphi 0, %s385
      %s387 = sphi 0, %s385
      %s388 = sphi 0, %s387
      %s402 = sphi 0, %s388
      %s406 = sphi 0, %s406
      %s408 = sphi 0, %s406
      %s409 = sphi 0, %s408
      %s423 = sphi 0, %s409
      %s427 = sphi 0, %s427
      %s429 = sphi 0, %s427
      %s430 = sphi 0, %s429
      %s444 = sphi 0, %s430
      %s448 = sphi 0, %s448
      %s450 = sphi 0, %s448
      %s451 = sphi 0, %s450
      %s465 = sphi 0, %s451
      %s469 = sphi 0, %s469
      %s471 = sphi 0, %s469
      %s472 = sphi 0, %s471
      %s486 = sphi 0, %s472
      %s490 = sphi 0, %s490
      %s492 = sphi 0, %s490
      %s493 = sphi 0, %s492
      %s507 = sphi 0, %s493
      %s511 = sphi 0, %s511
      %s513 = sphi 0, %s511
      %s514 = sphi 0, %s513
      %s528 = sphi 0, %s514
      %s532 = sphi 0, %s532
      %s534 = sphi 0, %s532
      %s535 = sphi 0, %s534
      %s549 = sphi 0, %s535
      %s553 = sphi 0, %s553
      %s555 = sphi 0, %s553
      %s556 = sphi 0, %s555
      %s570 = sphi 0, %s556
      %s574 = sphi 0, %s574
      %s576 = sphi 0, %s574
      %s577 = sphi 0, %s576
      %s591 = sphi 0, %s577
      %s595 = sphi 0, %s595
      %s597 = sphi 0, %s595
      %s598 = sphi 0, %s597
      %s612 = sphi 0, %s598
      %s616 = sphi 0, %s616
      %s618 = sphi 0, %s616
      %s619 = sphi 0, %s618
      %s633 = sphi 0, %s619
      %s639 = sphi 0, %s641
      %s642 = sphi 0, %s639
      %s643 = sphi 0, %s642
      %s659 = sphi 0, %s643
      %s665 = sphi 0, %s667
      %s668 = sphi 0, %s665
      %s669 = sphi 0, %s668
      %s685 = sphi 0, %s669
      %s691 = sphi 0, %s693
      %s694 = sphi 0, %s691
      %s695 = sphi 0, %s694
      %s711 = sphi 0, %s695
      %s717 = sphi 0, %s719
      %s720 = sphi 0, %s717
      %s721 = sphi 0, %s720
      %s737 = sphi 0, %s721
      %s743 = sphi 0, %s745
      %s746 = sphi 0, %s743
      %s747 = sphi 0, %s746
      %s763 = sphi 0, %s747
      %s769 = sphi 0, %s771
      %s772 = sphi 0, %s769
      %s773 = sphi 0, %s772
      %s789 = sphi 0, %s773
      %s795 = sphi 0, %s797
      %s798 = sphi 0, %s795
      %s799 = sphi 0, %s798
      %s815 = sphi 0, %s799
      %s821 = sphi 0, %s823
      %s824 = sphi 0, %s821
      %s825 = sphi 0, %s824
      %s841 = sphi 0, %s825
      %s847 = sphi 0, %s849
      %s850 = sphi 0, %s847
      %s851 = sphi 0, %s850
      %s867 = sphi 0, %s851
    $region4: #{decoder_for_onnx_forward.1} parent=1 // loop_header_branch
      %92 = sbr.rel (%p90) target = $region8
    $region5: #{decoder_for_onnx_forward.1} parent=1 // loop_body
      %s94 = ssub.s32 %s89, 1
      %s95 = ssub.s32 %s89, 2
      %s96 = sadd.s32 %s89, 1
      %s97 = ssub.s32 %s89, %s96
      %p98 = scmp.eq.s32.totalorder %s97, 0
      %s100 = sadd.s32 %s99, 1
      %s101 = scalar_select %p98, %s99, %s100
      %p104 = pneg %p98
      %p105 = scmp.eq.s32.totalorder %s89, 1
      %p106 = por %p104, %p105
      %p107 = scmp.ne.s32.totalorder %s99, %s102
      %p108 = scmp.eq.s32.totalorder %s89, 0
      %p109 = por %p107, %p108
      %p110 = scmp.ne.s32.totalorder %s99, %s102
      %p111 = scmp.eq.s32.totalorder %s94, 1
      %p112 = por %p110, %p111
      %p113 = scmp.ne.s32.totalorder %s102, %s103
      %p114 = scmp.eq.s32.totalorder %s94, 0
      %p115 = por %p113, %p114
      %p116 = scmp.ne.s32.totalorder %s102, %s103
      %p117 = scmp.eq.s32.totalorder %s95, 1
      %p118 = por %p116, %p117
      %p120 = scmp.ne.s32.totalorder %s103, %s119
      %p121 = scmp.eq.s32.totalorder %s95, 0
      %p122 = por %p120, %p121
      %s123 = ssub.s32 %s89, %s96
      %p124 = scmp.eq.s32.totalorder %s123, 0
      %s126 = sadd.s32 %s125, 1
      %s127 = scalar_select %p124, %s125, %s126
      %p130 = pneg %p124
      %p131 = scmp.eq.s32.totalorder %s89, 1
      %p132 = por %p130, %p131
      %p133 = scmp.ne.s32.totalorder %s125, %s128
      %p134 = scmp.eq.s32.totalorder %s89, 0
      %p135 = por %p133, %p134
      %p136 = scmp.ne.s32.totalorder %s125, %s128
      %p137 = scmp.eq.s32.totalorder %s94, 1
      %p138 = por %p136, %p137
      %p139 = scmp.ne.s32.totalorder %s128, %s129
      %p140 = scmp.eq.s32.totalorder %s94, 0
      %p141 = por %p139, %p140
      %p142 = scmp.ne.s32.totalorder %s128, %s129
      %p143 = scmp.eq.s32.totalorder %s95, 1
      %p144 = por %p142, %p143
      %p146 = scmp.ne.s32.totalorder %s129, %s145
      %p147 = scmp.eq.s32.totalorder %s95, 0
      %p148 = por %p146, %p147
      %s149 = ssub.s32 %s89, %s96
      %p150 = scmp.eq.s32.totalorder %s149, 0
      %s152 = sadd.s32 %s151, 1
      %s153 = scalar_select %p150, %s151, %s152
      %p156 = pneg %p150
      %p157 = scmp.eq.s32.totalorder %s89, 1
      %p158 = por %p156, %p157
      %p159 = scmp.ne.s32.totalorder %s151, %s154
      %p160 = scmp.eq.s32.totalorder %s89, 0
      %p161 = por %p159, %p160
      %p162 = scmp.ne.s32.totalorder %s151, %s154
      %p163 = scmp.eq.s32.totalorder %s94, 1
      %p164 = por %p162, %p163
      %p165 = scmp.ne.s32.totalorder %s154, %s155
      %p166 = scmp.eq.s32.totalorder %s94, 0
      %p167 = por %p165, %p166
      %p168 = scmp.ne.s32.totalorder %s154, %s155
      %p169 = scmp.eq.s32.totalorder %s95, 1
      %p170 = por %p168, %p169
      %p172 = scmp.ne.s32.totalorder %s155, %s171
      %p173 = scmp.eq.s32.totalorder %s95, 0
      %p174 = por %p172, %p173
      %s176 = sadd.s32 %s175, 1
      %p179 = scmp.eq.s32.totalorder %s89, 1
      %p180 = scmp.ne.s32.totalorder %s175, %s177
      %p181 = scmp.eq.s32.totalorder %s89, 0
      %p182 = por %p180, %p181
      %p183 = scmp.ne.s32.totalorder %s175, %s177
      %p184 = scmp.eq.s32.totalorder %s94, 1
      %p185 = por %p183, %p184
      %p186 = scmp.ne.s32.totalorder %s177, %s178
      %p187 = scmp.eq.s32.totalorder %s94, 0
      %p188 = por %p186, %p187
      %p189 = scmp.ne.s32.totalorder %s177, %s178
      %p190 = scmp.eq.s32.totalorder %s95, 1
      %p191 = por %p189, %p190
      %p193 = scmp.ne.s32.totalorder %s178, %s192
      %p194 = scmp.eq.s32.totalorder %s95, 0
      %p195 = por %p193, %p194
      %s197 = sadd.s32 %s196, 1
      %p200 = scmp.eq.s32.totalorder %s89, 1
      %p201 = scmp.ne.s32.totalorder %s196, %s198
      %p202 = scmp.eq.s32.totalorder %s89, 0
      %p203 = por %p201, %p202
      %p204 = scmp.ne.s32.totalorder %s196, %s198
      %p205 = scmp.eq.s32.totalorder %s94, 1
      %p206 = por %p204, %p205
      %p207 = scmp.ne.s32.totalorder %s198, %s199
      %p208 = scmp.eq.s32.totalorder %s94, 0
      %p209 = por %p207, %p208
      %p210 = scmp.ne.s32.totalorder %s198, %s199
      %p211 = scmp.eq.s32.totalorder %s95, 1
      %p212 = por %p210, %p211
      %p214 = scmp.ne.s32.totalorder %s199, %s213
      %p215 = scmp.eq.s32.totalorder %s95, 0
      %p216 = por %p214, %p215
      %s218 = sadd.s32 %s217, 1
      %p221 = scmp.eq.s32.totalorder %s89, 1
      %p222 = scmp.ne.s32.totalorder %s217, %s219
      %p223 = scmp.eq.s32.totalorder %s89, 0
      %p224 = por %p222, %p223
      %p225 = scmp.ne.s32.totalorder %s217, %s219
      %p226 = scmp.eq.s32.totalorder %s94, 1
      %p227 = por %p225, %p226
      %p228 = scmp.ne.s32.totalorder %s219, %s220
      %p229 = scmp.eq.s32.totalorder %s94, 0
      %p230 = por %p228, %p229
      %p231 = scmp.ne.s32.totalorder %s219, %s220
      %p232 = scmp.eq.s32.totalorder %s95, 1
      %p233 = por %p231, %p232
      %p235 = scmp.ne.s32.totalorder %s220, %s234
      %p236 = scmp.eq.s32.totalorder %s95, 0
      %p237 = por %p235, %p236
      %s239 = sadd.s32 %s238, 1
      %p242 = scmp.eq.s32.totalorder %s89, 1
      %p243 = scmp.ne.s32.totalorder %s238, %s240
      %p244 = scmp.eq.s32.totalorder %s89, 0
      %p245 = por %p243, %p244
      %p246 = scmp.ne.s32.totalorder %s238, %s240
      %p247 = scmp.eq.s32.totalorder %s94, 1
      %p248 = por %p246, %p247
      %p249 = scmp.ne.s32.totalorder %s240, %s241
      %p250 = scmp.eq.s32.totalorder %s94, 0
      %p251 = por %p249, %p250
      %p252 = scmp.ne.s32.totalorder %s240, %s241
      %p253 = scmp.eq.s32.totalorder %s95, 1
      %p254 = por %p252, %p253
      %p256 = scmp.ne.s32.totalorder %s241, %s255
      %p257 = scmp.eq.s32.totalorder %s95, 0
      %p258 = por %p256, %p257
      %s260 = sadd.s32 %s259, 1
      %p263 = scmp.eq.s32.totalorder %s89, 1
      %p264 = scmp.ne.s32.totalorder %s259, %s261
      %p265 = scmp.eq.s32.totalorder %s89, 0
      %p266 = por %p264, %p265
      %p267 = scmp.ne.s32.totalorder %s259, %s261
      %p268 = scmp.eq.s32.totalorder %s94, 1
      %p269 = por %p267, %p268
      %p270 = scmp.ne.s32.totalorder %s261, %s262
      %p271 = scmp.eq.s32.totalorder %s94, 0
      %p272 = por %p270, %p271
      %p273 = scmp.ne.s32.totalorder %s261, %s262
      %p274 = scmp.eq.s32.totalorder %s95, 1
      %p275 = por %p273, %p274
      %p277 = scmp.ne.s32.totalorder %s262, %s276
      %p278 = scmp.eq.s32.totalorder %s95, 0
      %p279 = por %p277, %p278
      %s281 = sadd.s32 %s280, 1
      %p284 = scmp.eq.s32.totalorder %s89, 1
      %p285 = scmp.ne.s32.totalorder %s280, %s282
      %p286 = scmp.eq.s32.totalorder %s89, 0
      %p287 = por %p285, %p286
      %p288 = scmp.ne.s32.totalorder %s280, %s282
      %p289 = scmp.eq.s32.totalorder %s94, 1
      %p290 = por %p288, %p289
      %p291 = scmp.ne.s32.totalorder %s282, %s283
      %p292 = scmp.eq.s32.totalorder %s94, 0
      %p293 = por %p291, %p292
      %p294 = scmp.ne.s32.totalorder %s282, %s283
      %p295 = scmp.eq.s32.totalorder %s95, 1
      %p296 = por %p294, %p295
      %p298 = scmp.ne.s32.totalorder %s283, %s297
      %p299 = scmp.eq.s32.totalorder %s95, 0
      %p300 = por %p298, %p299
      %s302 = sadd.s32 %s301, 1
      %p305 = scmp.eq.s32.totalorder %s89, 1
      %p306 = scmp.ne.s32.totalorder %s301, %s303
      %p307 = scmp.eq.s32.totalorder %s89, 0
      %p308 = por %p306, %p307
      %p309 = scmp.ne.s32.totalorder %s301, %s303
      %p310 = scmp.eq.s32.totalorder %s94, 1
      %p311 = por %p309, %p310
      %p312 = scmp.ne.s32.totalorder %s303, %s304
      %p313 = scmp.eq.s32.totalorder %s94, 0
      %p314 = por %p312, %p313
      %p315 = scmp.ne.s32.totalorder %s303, %s304
      %p316 = scmp.eq.s32.totalorder %s95, 1
      %p317 = por %p315, %p316
      %p319 = scmp.ne.s32.totalorder %s304, %s318
      %p320 = scmp.eq.s32.totalorder %s95, 0
      %p321 = por %p319, %p320
      %s323 = sadd.s32 %s322, 1
      %p326 = scmp.eq.s32.totalorder %s89, 1
      %p327 = scmp.ne.s32.totalorder %s322, %s324
      %p328 = scmp.eq.s32.totalorder %s89, 0
      %p329 = por %p327, %p328
      %p330 = scmp.ne.s32.totalorder %s322, %s324
      %p331 = scmp.eq.s32.totalorder %s94, 1
      %p332 = por %p330, %p331
      %p333 = scmp.ne.s32.totalorder %s324, %s325
      %p334 = scmp.eq.s32.totalorder %s94, 0
      %p335 = por %p333, %p334
      %p336 = scmp.ne.s32.totalorder %s324, %s325
      %p337 = scmp.eq.s32.totalorder %s95, 1
      %p338 = por %p336, %p337
      %p340 = scmp.ne.s32.totalorder %s325, %s339
      %p341 = scmp.eq.s32.totalorder %s95, 0
      %p342 = por %p340, %p341
      %s344 = sadd.s32 %s343, 1
      %p347 = scmp.eq.s32.totalorder %s89, 1
      %p348 = scmp.ne.s32.totalorder %s343, %s345
      %p349 = scmp.eq.s32.totalorder %s89, 0
      %p350 = por %p348, %p349
      %p351 = scmp.ne.s32.totalorder %s343, %s345
      %p352 = scmp.eq.s32.totalorder %s94, 1
      %p353 = por %p351, %p352
      %p354 = scmp.ne.s32.totalorder %s345, %s346
      %p355 = scmp.eq.s32.totalorder %s94, 0
      %p356 = por %p354, %p355
      %p357 = scmp.ne.s32.totalorder %s345, %s346
      %p358 = scmp.eq.s32.totalorder %s95, 1
      %p359 = por %p357, %p358
      %p361 = scmp.ne.s32.totalorder %s346, %s360
      %p362 = scmp.eq.s32.totalorder %s95, 0
      %p363 = por %p361, %p362
      %s365 = sadd.s32 %s364, 1
      %p368 = scmp.eq.s32.totalorder %s89, 1
      %p369 = scmp.ne.s32.totalorder %s364, %s366
      %p370 = scmp.eq.s32.totalorder %s89, 0
      %p371 = por %p369, %p370
      %p372 = scmp.ne.s32.totalorder %s364, %s366
      %p373 = scmp.eq.s32.totalorder %s94, 1
      %p374 = por %p372, %p373
      %p375 = scmp.ne.s32.totalorder %s366, %s367
      %p376 = scmp.eq.s32.totalorder %s94, 0
      %p377 = por %p375, %p376
      %p378 = scmp.ne.s32.totalorder %s366, %s367
      %p379 = scmp.eq.s32.totalorder %s95, 1
      %p380 = por %p378, %p379
      %p382 = scmp.ne.s32.totalorder %s367, %s381
      %p383 = scmp.eq.s32.totalorder %s95, 0
      %p384 = por %p382, %p383
      %s386 = sadd.s32 %s385, 1
      %p389 = scmp.eq.s32.totalorder %s89, 1
      %p390 = scmp.ne.s32.totalorder %s385, %s387
      %p391 = scmp.eq.s32.totalorder %s89, 0
      %p392 = por %p390, %p391
      %p393 = scmp.ne.s32.totalorder %s385, %s387
      %p394 = scmp.eq.s32.totalorder %s94, 1
      %p395 = por %p393, %p394
      %p396 = scmp.ne.s32.totalorder %s387, %s388
      %p397 = scmp.eq.s32.totalorder %s94, 0
      %p398 = por %p396, %p397
      %p399 = scmp.ne.s32.totalorder %s387, %s388
      %p400 = scmp.eq.s32.totalorder %s95, 1
      %p401 = por %p399, %p400
      %p403 = scmp.ne.s32.totalorder %s388, %s402
      %p404 = scmp.eq.s32.totalorder %s95, 0
      %p405 = por %p403, %p404
      %s407 = sadd.s32 %s406, 1
      %p410 = scmp.eq.s32.totalorder %s89, 1
      %p411 = scmp.ne.s32.totalorder %s406, %s408
      %p412 = scmp.eq.s32.totalorder %s89, 0
      %p413 = por %p411, %p412
      %p414 = scmp.ne.s32.totalorder %s406, %s408
      %p415 = scmp.eq.s32.totalorder %s94, 1
      %p416 = por %p414, %p415
      %p417 = scmp.ne.s32.totalorder %s408, %s409
      %p418 = scmp.eq.s32.totalorder %s94, 0
      %p419 = por %p417, %p418
      %p420 = scmp.ne.s32.totalorder %s408, %s409
      %p421 = scmp.eq.s32.totalorder %s95, 1
      %p422 = por %p420, %p421
      %p424 = scmp.ne.s32.totalorder %s409, %s423
      %p425 = scmp.eq.s32.totalorder %s95, 0
      %p426 = por %p424, %p425
      %s428 = sadd.s32 %s427, 1
      %p431 = scmp.eq.s32.totalorder %s89, 1
      %p432 = scmp.ne.s32.totalorder %s427, %s429
      %p433 = scmp.eq.s32.totalorder %s89, 0
      %p434 = por %p432, %p433
      %p435 = scmp.ne.s32.totalorder %s427, %s429
      %p436 = scmp.eq.s32.totalorder %s94, 1
      %p437 = por %p435, %p436
      %p438 = scmp.ne.s32.totalorder %s429, %s430
      %p439 = scmp.eq.s32.totalorder %s94, 0
      %p440 = por %p438, %p439
      %p441 = scmp.ne.s32.totalorder %s429, %s430
      %p442 = scmp.eq.s32.totalorder %s95, 1
      %p443 = por %p441, %p442
      %p445 = scmp.ne.s32.totalorder %s430, %s444
      %p446 = scmp.eq.s32.totalorder %s95, 0
      %p447 = por %p445, %p446
      %s449 = sadd.s32 %s448, 1
      %p452 = scmp.eq.s32.totalorder %s89, 1
      %p453 = scmp.ne.s32.totalorder %s448, %s450
      %p454 = scmp.eq.s32.totalorder %s89, 0
      %p455 = por %p453, %p454
      %p456 = scmp.ne.s32.totalorder %s448, %s450
      %p457 = scmp.eq.s32.totalorder %s94, 1
      %p458 = por %p456, %p457
      %p459 = scmp.ne.s32.totalorder %s450, %s451
      %p460 = scmp.eq.s32.totalorder %s94, 0
      %p461 = por %p459, %p460
      %p462 = scmp.ne.s32.totalorder %s450, %s451
      %p463 = scmp.eq.s32.totalorder %s95, 1
      %p464 = por %p462, %p463
      %p466 = scmp.ne.s32.totalorder %s451, %s465
      %p467 = scmp.eq.s32.totalorder %s95, 0
      %p468 = por %p466, %p467
      %s470 = sadd.s32 %s469, 1
      %p473 = scmp.eq.s32.totalorder %s89, 1
      %p474 = scmp.ne.s32.totalorder %s469, %s471
      %p475 = scmp.eq.s32.totalorder %s89, 0
      %p476 = por %p474, %p475
      %p477 = scmp.ne.s32.totalorder %s469, %s471
      %p478 = scmp.eq.s32.totalorder %s94, 1
      %p479 = por %p477, %p478
      %p480 = scmp.ne.s32.totalorder %s471, %s472
      %p481 = scmp.eq.s32.totalorder %s94, 0
      %p482 = por %p480, %p481
      %p483 = scmp.ne.s32.totalorder %s471, %s472
      %p484 = scmp.eq.s32.totalorder %s95, 1
      %p485 = por %p483, %p484
      %p487 = scmp.ne.s32.totalorder %s472, %s486
      %p488 = scmp.eq.s32.totalorder %s95, 0
      %p489 = por %p487, %p488
      %s491 = sadd.s32 %s490, 1
      %p494 = scmp.eq.s32.totalorder %s89, 1
      %p495 = scmp.ne.s32.totalorder %s490, %s492
      %p496 = scmp.eq.s32.totalorder %s89, 0
      %p497 = por %p495, %p496
      %p498 = scmp.ne.s32.totalorder %s490, %s492
      %p499 = scmp.eq.s32.totalorder %s94, 1
      %p500 = por %p498, %p499
      %p501 = scmp.ne.s32.totalorder %s492, %s493
      %p502 = scmp.eq.s32.totalorder %s94, 0
      %p503 = por %p501, %p502
      %p504 = scmp.ne.s32.totalorder %s492, %s493
      %p505 = scmp.eq.s32.totalorder %s95, 1
      %p506 = por %p504, %p505
      %p508 = scmp.ne.s32.totalorder %s493, %s507
      %p509 = scmp.eq.s32.totalorder %s95, 0
      %p510 = por %p508, %p509
      %s512 = sadd.s32 %s511, 1
      %p515 = scmp.eq.s32.totalorder %s89, 1
      %p516 = scmp.ne.s32.totalorder %s511, %s513
      %p517 = scmp.eq.s32.totalorder %s89, 0
      %p518 = por %p516, %p517
      %p519 = scmp.ne.s32.totalorder %s511, %s513
      %p520 = scmp.eq.s32.totalorder %s94, 1
      %p521 = por %p519, %p520
      %p522 = scmp.ne.s32.totalorder %s513, %s514
      %p523 = scmp.eq.s32.totalorder %s94, 0
      %p524 = por %p522, %p523
      %p525 = scmp.ne.s32.totalorder %s513, %s514
      %p526 = scmp.eq.s32.totalorder %s95, 1
      %p527 = por %p525, %p526
      %p529 = scmp.ne.s32.totalorder %s514, %s528
      %p530 = scmp.eq.s32.totalorder %s95, 0
      %p531 = por %p529, %p530
      %s533 = sadd.s32 %s532, 1
      %p536 = scmp.eq.s32.totalorder %s89, 1
      %p537 = scmp.ne.s32.totalorder %s532, %s534
      %p538 = scmp.eq.s32.totalorder %s89, 0
      %p539 = por %p537, %p538
      %p540 = scmp.ne.s32.totalorder %s532, %s534
      %p541 = scmp.eq.s32.totalorder %s94, 1
      %p542 = por %p540, %p541
      %p543 = scmp.ne.s32.totalorder %s534, %s535
      %p544 = scmp.eq.s32.totalorder %s94, 0
      %p545 = por %p543, %p544
      %p546 = scmp.ne.s32.totalorder %s534, %s535
      %p547 = scmp.eq.s32.totalorder %s95, 1
      %p548 = por %p546, %p547
      %p550 = scmp.ne.s32.totalorder %s535, %s549
      %p551 = scmp.eq.s32.totalorder %s95, 0
      %p552 = por %p550, %p551
      %s554 = sadd.s32 %s553, 1
      %p557 = scmp.eq.s32.totalorder %s89, 1
      %p558 = scmp.ne.s32.totalorder %s553, %s555
      %p559 = scmp.eq.s32.totalorder %s89, 0
      %p560 = por %p558, %p559
      %p561 = scmp.ne.s32.totalorder %s553, %s555
      %p562 = scmp.eq.s32.totalorder %s94, 1
      %p563 = por %p561, %p562
      %p564 = scmp.ne.s32.totalorder %s555, %s556
      %p565 = scmp.eq.s32.totalorder %s94, 0
      %p566 = por %p564, %p565
      %p567 = scmp.ne.s32.totalorder %s555, %s556
      %p568 = scmp.eq.s32.totalorder %s95, 1
      %p569 = por %p567, %p568
      %p571 = scmp.ne.s32.totalorder %s556, %s570
      %p572 = scmp.eq.s32.totalorder %s95, 0
      %p573 = por %p571, %p572
      %s575 = sadd.s32 %s574, 1
      %p578 = scmp.eq.s32.totalorder %s89, 1
      %p579 = scmp.ne.s32.totalorder %s574, %s576
      %p580 = scmp.eq.s32.totalorder %s89, 0
      %p581 = por %p579, %p580
      %p582 = scmp.ne.s32.totalorder %s574, %s576
      %p583 = scmp.eq.s32.totalorder %s94, 1
      %p584 = por %p582, %p583
      %p585 = scmp.ne.s32.totalorder %s576, %s577
      %p586 = scmp.eq.s32.totalorder %s94, 0
      %p587 = por %p585, %p586
      %p588 = scmp.ne.s32.totalorder %s576, %s577
      %p589 = scmp.eq.s32.totalorder %s95, 1
      %p590 = por %p588, %p589
      %p592 = scmp.ne.s32.totalorder %s577, %s591
      %p593 = scmp.eq.s32.totalorder %s95, 0
      %p594 = por %p592, %p593
      %s596 = sadd.s32 %s595, 1
      %p599 = scmp.eq.s32.totalorder %s89, 1
      %p600 = scmp.ne.s32.totalorder %s595, %s597
      %p601 = scmp.eq.s32.totalorder %s89, 0
      %p602 = por %p600, %p601
      %p603 = scmp.ne.s32.totalorder %s595, %s597
      %p604 = scmp.eq.s32.totalorder %s94, 1
      %p605 = por %p603, %p604
      %p606 = scmp.ne.s32.totalorder %s597, %s598
      %p607 = scmp.eq.s32.totalorder %s94, 0
      %p608 = por %p606, %p607
      %p609 = scmp.ne.s32.totalorder %s597, %s598
      %p610 = scmp.eq.s32.totalorder %s95, 1
      %p611 = por %p609, %p610
      %p613 = scmp.ne.s32.totalorder %s598, %s612
      %p614 = scmp.eq.s32.totalorder %s95, 0
      %p615 = por %p613, %p614
      %s617 = sadd.s32 %s616, 1
      %p620 = scmp.eq.s32.totalorder %s89, 1
      %p621 = scmp.ne.s32.totalorder %s616, %s618
      %p622 = scmp.eq.s32.totalorder %s89, 0
      %p623 = por %p621, %p622
      %p624 = scmp.ne.s32.totalorder %s616, %s618
      %p625 = scmp.eq.s32.totalorder %s94, 1
      %p626 = por %p624, %p625
      %p627 = scmp.ne.s32.totalorder %s618, %s619
      %p628 = scmp.eq.s32.totalorder %s94, 0
      %p629 = por %p627, %p628
      %p630 = scmp.ne.s32.totalorder %s618, %s619
      %p631 = scmp.eq.s32.totalorder %s95, 1
      %p632 = por %p630, %p631
      %p634 = scmp.ne.s32.totalorder %s619, %s633
      %p635 = scmp.eq.s32.totalorder %s95, 0
      %p636 = por %p634, %p635
      %s637 = ssub.s32 %s89, %s96
      %p638 = scmp.eq.s32.totalorder %s637, 0
      %s640 = sadd.s32 %s639, 1
      %s641 = scalar_select %p638, %s639, %s640
      %p644 = pneg %p638
      %p645 = scmp.eq.s32.totalorder %s89, 1
      %p646 = por %p644, %p645
      %p647 = scmp.ne.s32.totalorder %s639, %s642
      %p648 = scmp.eq.s32.totalorder %s89, 0
      %p649 = por %p647, %p648
      %p650 = scmp.ne.s32.totalorder %s639, %s642
      %p651 = scmp.eq.s32.totalorder %s94, 1
      %p652 = por %p650, %p651
      %p653 = scmp.ne.s32.totalorder %s642, %s643
      %p654 = scmp.eq.s32.totalorder %s94, 0
      %p655 = por %p653, %p654
      %p656 = scmp.ne.s32.totalorder %s642, %s643
      %p657 = scmp.eq.s32.totalorder %s95, 1
      %p658 = por %p656, %p657
      %p660 = scmp.ne.s32.totalorder %s643, %s659
      %p661 = scmp.eq.s32.totalorder %s95, 0
      %p662 = por %p660, %p661
      %s663 = ssub.s32 %s89, %s96
      %p664 = scmp.eq.s32.totalorder %s663, 0
      %s666 = sadd.s32 %s665, 1
      %s667 = scalar_select %p664, %s665, %s666
      %p670 = pneg %p664
      %p671 = scmp.eq.s32.totalorder %s89, 1
      %p672 = por %p670, %p671
      %p673 = scmp.ne.s32.totalorder %s665, %s668
      %p674 = scmp.eq.s32.totalorder %s89, 0
      %p675 = por %p673, %p674
      %p676 = scmp.ne.s32.totalorder %s665, %s668
      %p677 = scmp.eq.s32.totalorder %s94, 1
      %p678 = por %p676, %p677
      %p679 = scmp.ne.s32.totalorder %s668, %s669
      %p680 = scmp.eq.s32.totalorder %s94, 0
      %p681 = por %p679, %p680
      %p682 = scmp.ne.s32.totalorder %s668, %s669
      %p683 = scmp.eq.s32.totalorder %s95, 1
      %p684 = por %p682, %p683
      %p686 = scmp.ne.s32.totalorder %s669, %s685
      %p687 = scmp.eq.s32.totalorder %s95, 0
      %p688 = por %p686, %p687
      %s689 = ssub.s32 %s89, %s96
      %p690 = scmp.eq.s32.totalorder %s689, 0
      %s692 = sadd.s32 %s691, 1
      %s693 = scalar_select %p690, %s691, %s692
      %p696 = pneg %p690
      %p697 = scmp.eq.s32.totalorder %s89, 1
      %p698 = por %p696, %p697
      %p699 = scmp.ne.s32.totalorder %s691, %s694
      %p700 = scmp.eq.s32.totalorder %s89, 0
      %p701 = por %p699, %p700
      %p702 = scmp.ne.s32.totalorder %s691, %s694
      %p703 = scmp.eq.s32.totalorder %s94, 1
      %p704 = por %p702, %p703
      %p705 = scmp.ne.s32.totalorder %s694, %s695
      %p706 = scmp.eq.s32.totalorder %s94, 0
      %p707 = por %p705, %p706
      %p708 = scmp.ne.s32.totalorder %s694, %s695
      %p709 = scmp.eq.s32.totalorder %s95, 1
      %p710 = por %p708, %p709
      %p712 = scmp.ne.s32.totalorder %s695, %s711
      %p713 = scmp.eq.s32.totalorder %s95, 0
      %p714 = por %p712, %p713
      %s715 = ssub.s32 %s89, %s96
      %p716 = scmp.eq.s32.totalorder %s715, 0
      %s718 = sadd.s32 %s717, 1
      %s719 = scalar_select %p716, %s717, %s718
      %p722 = pneg %p716
      %p723 = scmp.eq.s32.totalorder %s89, 1
      %p724 = por %p722, %p723
      %p725 = scmp.ne.s32.totalorder %s717, %s720
      %p726 = scmp.eq.s32.totalorder %s89, 0
      %p727 = por %p725, %p726
      %p728 = scmp.ne.s32.totalorder %s717, %s720
      %p729 = scmp.eq.s32.totalorder %s94, 1
      %p730 = por %p728, %p729
      %p731 = scmp.ne.s32.totalorder %s720, %s721
      %p732 = scmp.eq.s32.totalorder %s94, 0
      %p733 = por %p731, %p732
      %p734 = scmp.ne.s32.totalorder %s720, %s721
      %p735 = scmp.eq.s32.totalorder %s95, 1
      %p736 = por %p734, %p735
      %p738 = scmp.ne.s32.totalorder %s721, %s737
      %p739 = scmp.eq.s32.totalorder %s95, 0
      %p740 = por %p738, %p739
      %s741 = ssub.s32 %s89, %s96
      %p742 = scmp.eq.s32.totalorder %s741, 0
      %s744 = sadd.s32 %s743, 1
      %s745 = scalar_select %p742, %s743, %s744
      %p748 = pneg %p742
      %p749 = scmp.eq.s32.totalorder %s89, 1
      %p750 = por %p748, %p749
      %p751 = scmp.ne.s32.totalorder %s743, %s746
      %p752 = scmp.eq.s32.totalorder %s89, 0
      %p753 = por %p751, %p752
      %p754 = scmp.ne.s32.totalorder %s743, %s746
      %p755 = scmp.eq.s32.totalorder %s94, 1
      %p756 = por %p754, %p755
      %p757 = scmp.ne.s32.totalorder %s746, %s747
      %p758 = scmp.eq.s32.totalorder %s94, 0
      %p759 = por %p757, %p758
      %p760 = scmp.ne.s32.totalorder %s746, %s747
      %p761 = scmp.eq.s32.totalorder %s95, 1
      %p762 = por %p760, %p761
      %p764 = scmp.ne.s32.totalorder %s747, %s763
      %p765 = scmp.eq.s32.totalorder %s95, 0
      %p766 = por %p764, %p765
      %s767 = ssub.s32 %s89, %s96
      %p768 = scmp.eq.s32.totalorder %s767, 0
      %s770 = sadd.s32 %s769, 1
      %s771 = scalar_select %p768, %s769, %s770
      %p774 = pneg %p768
      %p775 = scmp.eq.s32.totalorder %s89, 1
      %p776 = por %p774, %p775
      %p777 = scmp.ne.s32.totalorder %s769, %s772
      %p778 = scmp.eq.s32.totalorder %s89, 0
      %p779 = por %p777, %p778
      %p780 = scmp.ne.s32.totalorder %s769, %s772
      %p781 = scmp.eq.s32.totalorder %s94, 1
      %p782 = por %p780, %p781
      %p783 = scmp.ne.s32.totalorder %s772, %s773
      %p784 = scmp.eq.s32.totalorder %s94, 0
      %p785 = por %p783, %p784
      %p786 = scmp.ne.s32.totalorder %s772, %s773
      %p787 = scmp.eq.s32.totalorder %s95, 1
      %p788 = por %p786, %p787
      %p790 = scmp.ne.s32.totalorder %s773, %s789
      %p791 = scmp.eq.s32.totalorder %s95, 0
      %p792 = por %p790, %p791
      %s793 = ssub.s32 %s89, %s96
      %p794 = scmp.eq.s32.totalorder %s793, 0
      %s796 = sadd.s32 %s795, 1
      %s797 = scalar_select %p794, %s795, %s796
      %p800 = pneg %p794
      %p801 = scmp.eq.s32.totalorder %s89, 1
      %p802 = por %p800, %p801
      %p803 = scmp.ne.s32.totalorder %s795, %s798
      %p804 = scmp.eq.s32.totalorder %s89, 0
      %p805 = por %p803, %p804
      %p806 = scmp.ne.s32.totalorder %s795, %s798
      %p807 = scmp.eq.s32.totalorder %s94, 1
      %p808 = por %p806, %p807
      %p809 = scmp.ne.s32.totalorder %s798, %s799
      %p810 = scmp.eq.s32.totalorder %s94, 0
      %p811 = por %p809, %p810
      %p812 = scmp.ne.s32.totalorder %s798, %s799
      %p813 = scmp.eq.s32.totalorder %s95, 1
      %p814 = por %p812, %p813
      %p816 = scmp.ne.s32.totalorder %s799, %s815
      %p817 = scmp.eq.s32.totalorder %s95, 0
      %p818 = por %p816, %p817
      %s819 = ssub.s32 %s89, %s96
      %p820 = scmp.eq.s32.totalorder %s819, 0
      %s822 = sadd.s32 %s821, 1
      %s823 = scalar_select %p820, %s821, %s822
      %p826 = pneg %p820
      %p827 = scmp.eq.s32.totalorder %s89, 1
      %p828 = por %p826, %p827
      %p829 = scmp.ne.s32.totalorder %s821, %s824
      %p830 = scmp.eq.s32.totalorder %s89, 0
      %p831 = por %p829, %p830
      %p832 = scmp.ne.s32.totalorder %s821, %s824
      %p833 = scmp.eq.s32.totalorder %s94, 1
      %p834 = por %p832, %p833
      %p835 = scmp.ne.s32.totalorder %s824, %s825
      %p836 = scmp.eq.s32.totalorder %s94, 0
      %p837 = por %p835, %p836
      %p838 = scmp.ne.s32.totalorder %s824, %s825
      %p839 = scmp.eq.s32.totalorder %s95, 1
      %p840 = por %p838, %p839
      %p842 = scmp.ne.s32.totalorder %s825, %s841
      %p843 = scmp.eq.s32.totalorder %s95, 0
      %p844 = por %p842, %p843
      %s845 = ssub.s32 %s89, %s96
      %p846 = scmp.eq.s32.totalorder %s845, 0
      %s848 = sadd.s32 %s847, 1
      %s849 = scalar_select %p846, %s847, %s848
      %p852 = pneg %p846
      %p853 = scmp.eq.s32.totalorder %s89, 1
      %p854 = por %p852, %p853
      %p855 = scmp.ne.s32.totalorder %s847, %s850
      %p856 = scmp.eq.s32.totalorder %s89, 0
      %p857 = por %p855, %p856
      %p858 = scmp.ne.s32.totalorder %s847, %s850
      %p859 = scmp.eq.s32.totalorder %s94, 1
      %p860 = por %p858, %p859
      %p861 = scmp.ne.s32.totalorder %s850, %s851
      %p862 = scmp.eq.s32.totalorder %s94, 0
      %p863 = por %p861, %p862
      %p864 = scmp.ne.s32.totalorder %s850, %s851
      %p865 = scmp.eq.s32.totalorder %s95, 1
      %p866 = por %p864, %p865
      %p868 = scmp.ne.s32.totalorder %s851, %s867
      %p869 = scmp.eq.s32.totalorder %s95, 0
      %p870 = por %p868, %p869
      %p871 = scmp.le.s32.totalorder 1, %s89
      %p872 = scmp.lt.s32.totalorder %s89, 3
      %p873 = pnand %p871, %p872
      %p874 = pneg %p873
      // Predicated region
      $region9: #{decoder_for_onnx_forward.1} parent=5 // pred_check
        _
      $region10: #{decoder_for_onnx_forward.1} parent=5 // pred_check_branch
        %876 = sbr.rel (%p873) target = $region12
      $region11: #{decoder_for_onnx_forward.1} parent=5 // pred_region
        %s877 = ssub.s32 %s89, 1
        // Predicated region
        $region13: #{decoder_for_onnx_forward.1} parent=11 // pred_check
          %p878 = pneg %p188
        $region14: #{decoder_for_onnx_forward.1} parent=11 // pred_check_branch
          %880 = sbr.rel (%p878) target = $region16
        $region15: #{decoder_for_onnx_forward.1} parent=11 // pred_region
          _
        $region16: #{decoder_for_onnx_forward.1} parent=11 // pred_fallthru
          _
        // Predicated region
        $region17: #{decoder_for_onnx_forward.1} parent=11 // pred_check
          %p881 = pneg %p209
        $region18: #{decoder_for_onnx_forward.1} parent=11 // pred_check_branch
          %883 = sbr.rel (%p881) target = $region20
        $region19: #{decoder_for_onnx_forward.1} parent=11 // pred_region
          _
        $region20: #{decoder_for_onnx_forward.1} parent=11 // pred_fallthru
          _
        // Predicated region
        $region21: #{decoder_for_onnx_forward.1} parent=11 // pred_check
          %p884 = pneg %p230
        $region22: #{decoder_for_onnx_forward.1} parent=11 // pred_check_branch
          %886 = sbr.rel (%p884) target = $region24
        $region23: #{decoder_for_onnx_forward.1} parent=11 // pred_region
          _
        $region24: #{decoder_for_onnx_forward.1} parent=11 // pred_fallthru
          _
        // Predicated region
        $region25: #{decoder_for_onnx_forward.1} parent=11 // pred_check
          %p887 = pneg %p251
        $region26: #{decoder_for_onnx_forward.1} parent=11 // pred_check_branch
          %889 = sbr.rel (%p887) target = $region28
        $region27: #{decoder_for_onnx_forward.1} parent=11 // pred_region
          _
        $region28: #{decoder_for_onnx_forward.1} parent=11 // pred_fallthru
          _
        // Predicated region
        $region29: #{decoder_for_onnx_forward.1} parent=11 // pred_check
          %p890 = pneg %p272
        $region30: #{decoder_for_onnx_forward.1} parent=11 // pred_check_branch
          %892 = sbr.rel (%p890) target = $region32
        $region31: #{decoder_for_onnx_forward.1} parent=11 // pred_region
          _
        $region32: #{decoder_for_onnx_forward.1} parent=11 // pred_fallthru
          _
        // Predicated region
        $region33: #{decoder_for_onnx_forward.1} parent=11 // pred_check
          %p893 = pneg %p293
        $region34: #{decoder_for_onnx_forward.1} parent=11 // pred_check_branch
          %895 = sbr.rel (%p893) target = $region36
        $region35: #{decoder_for_onnx_forward.1} parent=11 // pred_region
          _
        $region36: #{decoder_for_onnx_forward.1} parent=11 // pred_fallthru
          _
        // Predicated region
        $region37: #{decoder_for_onnx_forward.1} parent=11 // pred_check
          %p896 = pneg %p314
        $region38: #{decoder_for_onnx_forward.1} parent=11 // pred_check_branch
          %898 = sbr.rel (%p896) target = $region40
        $region39: #{decoder_for_onnx_forward.1} parent=11 // pred_region
          _
        $region40: #{decoder_for_onnx_forward.1} parent=11 // pred_fallthru
          _
        // Predicated region
        $region41: #{decoder_for_onnx_forward.1} parent=11 // pred_check
          %p899 = pneg %p335
        $region42: #{decoder_for_onnx_forward.1} parent=11 // pred_check_branch
          %901 = sbr.rel (%p899) target = $region44
        $region43: #{decoder_for_onnx_forward.1} parent=11 // pred_region
          _
        $region44: #{decoder_for_onnx_forward.1} parent=11 // pred_fallthru
          _
        // Predicated region
        $region45: #{decoder_for_onnx_forward.1} parent=11 // pred_check
          %p902 = pneg %p356
        $region46: #{decoder_for_onnx_forward.1} parent=11 // pred_check_branch
          %904 = sbr.rel (%p902) target = $region48
        $region47: #{decoder_for_onnx_forward.1} parent=11 // pred_region
          _
        $region48: #{decoder_for_onnx_forward.1} parent=11 // pred_fallthru
          _
        // Predicated region
        $region49: #{decoder_for_onnx_forward.1} parent=11 // pred_check
          %p905 = pneg %p377
        $region50: #{decoder_for_onnx_forward.1} parent=11 // pred_check_branch
          %907 = sbr.rel (%p905) target = $region52
        $region51: #{decoder_for_onnx_forward.1} parent=11 // pred_region
          _
        $region52: #{decoder_for_onnx_forward.1} parent=11 // pred_fallthru
          _
        // Predicated region
        $region53: #{decoder_for_onnx_forward.1} parent=11 // pred_check
          %p908 = pneg %p398
        $region54: #{decoder_for_onnx_forward.1} parent=11 // pred_check_branch
          %910 = sbr.rel (%p908) target = $region56
        $region55: #{decoder_for_onnx_forward.1} parent=11 // pred_region
          _
        $region56: #{decoder_for_onnx_forward.1} parent=11 // pred_fallthru
          _
        // Predicated region
        $region57: #{decoder_for_onnx_forward.1} parent=11 // pred_check
          %p911 = pneg %p419
        $region58: #{decoder_for_onnx_forward.1} parent=11 // pred_check_branch
          %913 = sbr.rel (%p911) target = $region60
        $region59: #{decoder_for_onnx_forward.1} parent=11 // pred_region
          _
        $region60: #{decoder_for_onnx_forward.1} parent=11 // pred_fallthru
          _
        // Predicated region
        $region61: #{decoder_for_onnx_forward.1} parent=11 // pred_check
          %p914 = pneg %p440
        $region62: #{decoder_for_onnx_forward.1} parent=11 // pred_check_branch
          %916 = sbr.rel (%p914) target = $region64
        $region63: #{decoder_for_onnx_forward.1} parent=11 // pred_region
          _
        $region64: #{decoder_for_onnx_forward.1} parent=11 // pred_fallthru
          _
        // Predicated region
        $region65: #{decoder_for_onnx_forward.1} parent=11 // pred_check
          %p917 = pneg %p461
        $region66: #{decoder_for_onnx_forward.1} parent=11 // pred_check_branch
          %919 = sbr.rel (%p917) target = $region68
        $region67: #{decoder_for_onnx_forward.1} parent=11 // pred_region
          _
        $region68: #{decoder_for_onnx_forward.1} parent=11 // pred_fallthru
          _
        // Predicated region
        $region69: #{decoder_for_onnx_forward.1} parent=11 // pred_check
          %p920 = pneg %p482
        $region70: #{decoder_for_onnx_forward.1} parent=11 // pred_check_branch
          %922 = sbr.rel (%p920) target = $region72
        $region71: #{decoder_for_onnx_forward.1} parent=11 // pred_region
          _
        $region72: #{decoder_for_onnx_forward.1} parent=11 // pred_fallthru
          _
        // Predicated region
        $region73: #{decoder_for_onnx_forward.1} parent=11 // pred_check
          %p923 = pneg %p503
        $region74: #{decoder_for_onnx_forward.1} parent=11 // pred_check_branch
          %925 = sbr.rel (%p923) target = $region76
        $region75: #{decoder_for_onnx_forward.1} parent=11 // pred_region
          _
        $region76: #{decoder_for_onnx_forward.1} parent=11 // pred_fallthru
          _
        // Predicated region
        $region77: #{decoder_for_onnx_forward.1} parent=11 // pred_check
          %p926 = pneg %p524
        $region78: #{decoder_for_onnx_forward.1} parent=11 // pred_check_branch
          %928 = sbr.rel (%p926) target = $region80
        $region79: #{decoder_for_onnx_forward.1} parent=11 // pred_region
          _
        $region80: #{decoder_for_onnx_forward.1} parent=11 // pred_fallthru
          _
        // Predicated region
        $region81: #{decoder_for_onnx_forward.1} parent=11 // pred_check
          %p929 = pneg %p545
        $region82: #{decoder_for_onnx_forward.1} parent=11 // pred_check_branch
          %931 = sbr.rel (%p929) target = $region84
        $region83: #{decoder_for_onnx_forward.1} parent=11 // pred_region
          _
        $region84: #{decoder_for_onnx_forward.1} parent=11 // pred_fallthru
          _
        // Predicated region
        $region85: #{decoder_for_onnx_forward.1} parent=11 // pred_check
          %p932 = pneg %p566
        $region86: #{decoder_for_onnx_forward.1} parent=11 // pred_check_branch
          %934 = sbr.rel (%p932) target = $region88
        $region87: #{decoder_for_onnx_forward.1} parent=11 // pred_region
          _
        $region88: #{decoder_for_onnx_forward.1} parent=11 // pred_fallthru
          _
        // Predicated region
        $region89: #{decoder_for_onnx_forward.1} parent=11 // pred_check
          %p935 = pneg %p587
        $region90: #{decoder_for_onnx_forward.1} parent=11 // pred_check_branch
          %937 = sbr.rel (%p935) target = $region92
        $region91: #{decoder_for_onnx_forward.1} parent=11 // pred_region
          _
        $region92: #{decoder_for_onnx_forward.1} parent=11 // pred_fallthru
          _
        // Predicated region
        $region93: #{decoder_for_onnx_forward.1} parent=11 // pred_check
          %p938 = pneg %p608
        $region94: #{decoder_for_onnx_forward.1} parent=11 // pred_check_branch
          %940 = sbr.rel (%p938) target = $region96
        $region95: #{decoder_for_onnx_forward.1} parent=11 // pred_region
          _
        $region96: #{decoder_for_onnx_forward.1} parent=11 // pred_fallthru
          _
        // Predicated region
        $region97: #{decoder_for_onnx_forward.1} parent=11 // pred_check
          %p941 = pneg %p629
        $region98: #{decoder_for_onnx_forward.1} parent=11 // pred_check_branch
          %943 = sbr.rel (%p941) target = $region100
        $region99: #{decoder_for_onnx_forward.1} parent=11 // pred_region
          _
        $region100: #{decoder_for_onnx_forward.1} parent=11 // pred_fallthru
          _
      $region12: #{decoder_for_onnx_forward.1} parent=5 // pred_fallthru
        _
      %p944 = scmp.lt.s32.totalorder %s89, 2
      // Predicated region
      $region101: #{decoder_for_onnx_forward.1} parent=5 // pred_check
        %p945 = pneg %p944
      $region102: #{decoder_for_onnx_forward.1} parent=5 // pred_check_branch
        %947 = sbr.rel (%p945) target = $region104
      $region103: #{decoder_for_onnx_forward.1} parent=5 // pred_region
        // Predicated region
        $region105: #{decoder_for_onnx_forward.1} parent=103 // pred_check
          %p948 = pneg %p109
        $region106: #{decoder_for_onnx_forward.1} parent=103 // pred_check_branch
          %950 = sbr.rel (%p948) target = $region108
        $region107: #{decoder_for_onnx_forward.1} parent=103 // pred_region
          %p951 = scmp.lt.s32.totalorder %s89, 1
          %s952 = scalar_select %p951, %s89, 1
          %s953 = smul.addr %s952, 8
          %s954 = scalar_lea.vmem %s1, %s953
        $region108: #{decoder_for_onnx_forward.1} parent=103 // pred_fallthru
          _
        // Predicated region
        $region109: #{decoder_for_onnx_forward.1} parent=103 // pred_check
          %p955 = pneg %p135
        $region110: #{decoder_for_onnx_forward.1} parent=103 // pred_check_branch
          %957 = sbr.rel (%p955) target = $region112
        $region111: #{decoder_for_onnx_forward.1} parent=103 // pred_region
          %p958 = scmp.lt.s32.totalorder %s89, 1
          %s959 = scalar_select %p958, %s89, 1
          %s960 = smul.addr %s959, 8
          %s961 = scalar_lea.vmem %s3, %s960
        $region112: #{decoder_for_onnx_forward.1} parent=103 // pred_fallthru
          _
        // Predicated region
        $region113: #{decoder_for_onnx_forward.1} parent=103 // pred_check
          %p962 = pneg %p161
        $region114: #{decoder_for_onnx_forward.1} parent=103 // pred_check_branch
          %964 = sbr.rel (%p962) target = $region116
        $region115: #{decoder_for_onnx_forward.1} parent=103 // pred_region
          %p965 = scmp.lt.s32.totalorder %s89, 1
          %s966 = scalar_select %p965, %s89, 1
          %s967 = scalar_lea.vmem %s5, %s966
        $region116: #{decoder_for_onnx_forward.1} parent=103 // pred_fallthru
          _
      $region104: #{decoder_for_onnx_forward.1} parent=5 // pred_fallthru
        _
      %p968 = scmp.le.s32.totalorder 1, %s89
      %p969 = scmp.lt.s32.totalorder %s89, 3
      %p970 = pnand %p968, %p969
      %p971 = pneg %p970
      // Predicated region
      $region117: #{decoder_for_onnx_forward.1} parent=5 // pred_check
        _
      $region118: #{decoder_for_onnx_forward.1} parent=5 // pred_check_branch
        %973 = sbr.rel (%p970) target = $region120
      $region119: #{decoder_for_onnx_forward.1} parent=5 // pred_region
        %s974 = ssub.s32 %s89, 1
        %p975 = scmp.lt.s32.totalorder %s94, 1
        %s976 = scalar_select %p975, %s94, 1
        %s977 = smul.addr %s976, 8
        %s978 = scalar_lea.vmem %s1, %s977
        %p979 = pneg %p115
        %p980 = pneg %p112
        %p981 = scmp.lt.s32.totalorder %s94, 1
        %s982 = scalar_select %p981, %s94, 1
        %s983 = smul.addr %s982, 8
        %s984 = scalar_lea.vmem %s3, %s983
        %p985 = pneg %p141
        %p986 = pneg %p138
        %p987 = scmp.lt.s32.totalorder %s94, 1
        %s988 = scalar_select %p987, %s94, 1
        %s989 = scalar_lea.vmem %s5, %s988
        %p990 = pneg %p167
        %p991 = pneg %p164
        %p992 = pneg %p188
        %p993 = pneg %p185
        %p994 = pneg %p209
        %p995 = pneg %p206
        %p996 = pneg %p230
        %p997 = pneg %p227
        %p998 = pneg %p251
        %p999 = pneg %p248
        %p1000 = pneg %p272
        %p1001 = pneg %p269
        %p1002 = pneg %p293
        %p1003 = pneg %p290
        %p1004 = pneg %p314
        %p1005 = pneg %p311
        %p1006 = pneg %p335
        %p1007 = pneg %p332
        %p1008 = pneg %p356
        %p1009 = pneg %p353
        %p1010 = pneg %p377
        %p1011 = pneg %p374
        %p1012 = pneg %p398
        %p1013 = pneg %p395
        %p1014 = pneg %p419
        %p1015 = pneg %p416
        %p1016 = pneg %p440
        %p1017 = pneg %p437
        %p1018 = pneg %p461
        %p1019 = pneg %p458
        %p1020 = pneg %p482
        %p1021 = pneg %p479
        %p1022 = pneg %p503
        %p1023 = pneg %p500
        %p1024 = pneg %p524
        %p1025 = pneg %p521
        %p1026 = pneg %p545
        %p1027 = pneg %p542
        %p1028 = pneg %p566
        %p1029 = pneg %p563
        %p1030 = pneg %p587
        %p1031 = pneg %p584
        %p1032 = pneg %p608
        %p1033 = pneg %p605
        %p1034 = pneg %p629
        %p1035 = pneg %p626
        %p1036 = pneg %p655
        %p1037 = pneg %p652
        %s1038 = sand.u32 %s642, 1
        %s1039 = scalar_lea.sflag [#allocation3], %s1038
        %s1040 = sand.u32 %s642, 1
        %s1041 = smul.addr %s1040, 8
        %s1042 = scalar_lea.vmem [#allocation2], %s1041
        %p1043 = pneg %p681
        %p1044 = pneg %p678
        %s1045 = sand.u32 %s94, 1
        %s1046 = scalar_lea.sflag [#allocation5], %s1045
        %s1047 = sand.u32 %s668, 1
        %s1048 = smul.addr %s1047, 32
        %s1049 = scalar_lea.vmem [#allocation4], %s1048
        %p1050 = pneg %p707
        %p1051 = pneg %p704
        %s1052 = sand.u32 %s94, 1
        %s1053 = scalar_lea.sflag [#allocation5], %s1052
        %s1054 = sand.u32 %s694, 1
        %s1055 = smul.addr %s1054, 32
        %s1056 = scalar_lea.vmem [#allocation6], %s1055
        %p1057 = pneg %p733
        %p1058 = pneg %p730
        %s1059 = sand.u32 %s94, 1
        %s1060 = scalar_lea.sflag [#allocation8], %s1059
        %s1061 = sand.u32 %s720, 1
        %s1062 = smul.addr %s1061, 32
        %s1063 = scalar_lea.vmem [#allocation7], %s1062
        %p1064 = pneg %p759
        %p1065 = pneg %p756
        %s1066 = sand.u32 %s94, 1
        %s1067 = scalar_lea.sflag [#allocation8], %s1066
        %s1068 = sand.u32 %s746, 1
        %s1069 = smul.addr %s1068, 32
        %s1070 = scalar_lea.vmem [#allocation9], %s1069
        %p1071 = pneg %p785
        %p1072 = pneg %p782
        %s1073 = sand.u32 %s94, 1
        %s1074 = scalar_lea.sflag [#allocation11], %s1073
        %s1075 = sand.u32 %s772, 1
        %s1076 = smul.addr %s1075, 32
        %s1077 = scalar_lea.vmem [#allocation10], %s1076
        %p1078 = pneg %p811
        %p1079 = pneg %p808
        %s1080 = sand.u32 %s94, 1
        %s1081 = scalar_lea.sflag [#allocation11], %s1080
        %s1082 = sand.u32 %s798, 1
        %s1083 = smul.addr %s1082, 32
        %s1084 = scalar_lea.vmem [#allocation12], %s1083
        %p1085 = pneg %p837
        %p1086 = pneg %p834
        %s1087 = sand.u32 %s94, 1
        %s1088 = scalar_lea.sflag [#allocation14], %s1087
        %s1089 = sand.u32 %s824, 1
        %s1090 = smul.addr %s1089, 32
        %s1091 = scalar_lea.vmem [#allocation13], %s1090
        %p1092 = pneg %p863
        %p1093 = pneg %p860
        %s1094 = sand.u32 %s94, 1
        %s1095 = scalar_lea.sflag [#allocation14], %s1094
        %s1096 = sand.u32 %s850, 1
        %s1097 = smul.addr %s1096, 32
        %s1098 = scalar_lea.vmem [#allocation15], %s1097
        %p1099 = scmp.lt.s32.totalorder %s94, 1
        %s1100 = scalar_select %p1099, %s94, 1
        %s1101 = smul.addr %s1100, 8
        %s1102 = scalar_lea.vmem %s1, %s1101
        %p1103 = scmp.lt.s32.totalorder %s94, 1
        %s1104 = scalar_select %p1103, %s94, 1
        %s1105 = smul.addr %s1104, 8
        %s1106 = scalar_lea.vmem %s3, %s1105
        %p1107 = scmp.lt.s32.totalorder %s94, 1
        %s1108 = scalar_select %p1107, %s94, 1
        %s1109 = scalar_lea.vmem %s5, %s1108
        %v1111 = vld [vmem:[%s1102] sm:$0xff]
        %v1112 = vld [vmem:[%s7] sm:$0x1]
        %v1113 = vld [vmem:[%s9] sm:$0x1]
        %vm1114 = vcmask 261120
        %v1115 = vsel %vm1114, %v1111, 0.0
        %1116 = vadd.xlane.f32.xlu0 %v1115
        %v1117 = vpop.xlane.xlu0 %1116
        %v1118 = vrcp.pop 32.0
        %v1119 = vmul.f32 %v1117, %v1118
        %v1120 = vsub.f32 %v1111, %v1119
        %v1121 = vmul.f32 %v1120, %v1120
        %v1122 = vsel %vm1114, %v1121, 0.0
        %1123 = vadd.xlane.f32.xlu0 %v1122
        %v1124 = vpop.xlane.xlu0 %1123
        %v1125 = vmul.f32 %v1124, %v1118
        %v1126 = vadd.f32 %v1125, 1e-05
        %v1127 = vrsqrt.pop %v1126
        %v1128 = vmul.f32 %v1120, %v1127
        %v1130 = vlaneseq
        %v1131 = vshrl.u32 %v1130, 7
        %v1132 = vsub.s32 0, %v1131
        %v1133 = vrot.slane %v1112, %v1132
        %v1135 = vmul.f32 %v1128, %v1133
        %v1137 = vlaneseq
        %v1138 = vshrl.u32 %v1137, 7
        %v1139 = vsub.s32 0, %v1138
        %v1140 = vrot.slane %v1113, %v1139
        %v1142 = vadd.f32 %v1135, %v1140
        %v1143 = vld [vmem:[%s1109] sm:$0x1]
        %v1144 = vlaneseq
        %v1145 = vshrl.u32 %v1144, 7
        %v1146 = vlaneseq
        %v1147 = vand.u32 %v1146, 127
        %vm1148 = vcmp.le.s32.totalorder %v1147, %v1145
        %v1149 = vsel %vm1148, 0.0, -1e+09
        %v1150 = vld [vmem:[%s11] sm:$0xf]
        %v1151 = vld [vmem:[%s11 + $0x4] sm:$0xf]
        %v1152 = vld [vmem:[%s11 + $0x8] sm:$0xf]
        %v1153 = vld [vmem:[%s11 + $0xc] sm:$0xf]
        %v1154 = vld [vmem:[%s13] sm:$0x1]
        %v1155 = vpack.c.bf16 %v1142, %v1142
        %v1157 = vlaneseq
        %v1158 = vshrl.u32 %v1157, 7
        %v1159 = vsub.s32 0, %v1158
        %v1160 = vrot.slane %v1154, %v1159
        %v1166 = vunpack.c.l.b16 %v1150
        %v1167 = vunpack.c.l.b16 %v1151
        %v1168 = vunpack.c.l.b16 %v1152
        %v1169 = vunpack.c.l.b16 %v1153
        %v1170 = vpack.c.b16 %v1167, %v1166
        %v1171 = vpack.c.b16 %v1169, %v1168
        %v1175 = vsel %vm1114, %v1155, 0
        %1177 = vmatprep.subr.bf16.mxu0 0
        %1178 = vmatpush1.bf16.msra.mxu0 %v1170
        %1179 = vmatprep.subr.bf16.mxu0 0
        %1180 = vmatpush1.bf16.msra.mxu0 %v1171
        %1181 = vmatprep.subr.bf16.mxu0 0
        %1182 = vmatpush1.bf16.msra.mxu0 0
        %1183 = vmatprep.subr.bf16.mxu0 0
        %1184 = vmatpush1.bf16.msra.mxu0 0
        %1185 = vmatprep.subr.bf16.mxu0 0
        %1186 = vmatpush1.bf16.msra.mxu0 0
        %1187 = vmatprep.subr.bf16.mxu0 0
        %1188 = vmatpush1.bf16.msra.mxu0 0
        %1189 = vmatprep.subr.bf16.mxu0 0
        %1190 = vmatpush1.bf16.msra.mxu0 0
        %1191 = vmatprep.subr.bf16.mxu0 0
        %1192 = vmatpush1.bf16.msra.mxu0 0
        %1193 = vmatprep.subr.bf16.mxu0 0
        %1194 = vmatpush1.bf16.msra.mxu0 0
        %1195 = vmatprep.subr.bf16.mxu0 0
        %1196 = vmatpush1.bf16.msra.mxu0 0
        %1197 = vmatprep.subr.bf16.mxu0 0
        %1198 = vmatpush1.bf16.msra.mxu0 0
        %1199 = vmatprep.subr.bf16.mxu0 0
        %1200 = vmatpush1.bf16.msra.mxu0 0
        %1201 = vmatprep.subr.bf16.mxu0 0
        %1202 = vmatpush1.bf16.msra.mxu0 0
        %1203 = vmatprep.subr.bf16.mxu0 0
        %1204 = vmatpush1.bf16.msra.mxu0 0
        %1205 = vmatprep.subr.bf16.mxu0 0
        %1206 = vmatpush1.bf16.msra.mxu0 0
        %1207 = vmatprep.subr.bf16.mxu0 0
        %1208 = vmatpush1.bf16.msra.mxu0 0
        %1209 = vmatprep.mubr.bf16.mxu0 0
        %1210 = vmatmul.mubr.bf16.gmra.mrb[0].mxu0 %v1175
        %v1211 = vpop.f32.mrb[0].mxu0
        %v1212 = vadd.f32 %v1160, %v1211
        %v1213 = vpop.f32.mrb[0].mxu0
        %v1214 = vpop.f32.mrb[0].mxu0
        %v1215 = vpop.f32.mrb[0].mxu0
        %1216 = vdwg.mxu0
        %1218 = vrot.lane.b32.xlu0 %v1212, 96
        %v1219 = vpop.permute.xlu0 %1218
        %vm1221 = vcmask 64512
        %1222 = vst.msk [vmem:[%s1049] sm:$0xff] %vm1221, %v1219
        %1223 = vrot.lane.b32.xlu0 %v1212, 64
        %v1224 = vpop.permute.xlu0 %1223
        %1226 = vst.msk [vmem:[%s1056] sm:$0xff] %vm1221, %v1224
        %v1227 = vld [vmem:[%s1049] sm:$0xff]
        %v1228 = vld [vmem:[%s1056] sm:$0xff]
        %v1229 = vpack.c.bf16 %v1212, %v1212
        %v1230 = vpack.c.bf16 %v1227, %v1227
        %v1232 = vsel %vm1221, %v1229, 0
        %v1235 = vsel %vm1221, %v1230, 0
        %1237 = vmatprep.subr.bf16.mxu0 0
        %1238 = vmatpush1.bf16.xpose.msra.mxu0 %v1235
        %1239 = vmatprep.subr.bf16.mxu0 0
        %1240 = vmatpush1.bf16.xpose.msra.mxu0 0
        %1241 = vmatprep.subr.bf16.mxu0 0
        %1242 = vmatpush1.bf16.xpose.msra.mxu0 0
        %1243 = vmatprep.subr.bf16.mxu0 0
        %1244 = vmatpush1.bf16.xpose.msra.mxu0 0
        %1245 = vmatprep.subr.bf16.mxu0 0
        %1246 = vmatpush1.bf16.xpose.msra.mxu0 0
        %1247 = vmatprep.subr.bf16.mxu0 0
        %1248 = vmatpush1.bf16.xpose.msra.mxu0 0
        %1249 = vmatprep.subr.bf16.mxu0 0
        %1250 = vmatpush1.bf16.xpose.msra.mxu0 0
        %1251 = vmatprep.subr.bf16.mxu0 0
        %1252 = vmatpush1.bf16.xpose.msra.mxu0 0
        %1253 = vmatprep.subr.bf16.mxu0 0
        %1254 = vmatpush1.bf16.xpose.msra.mxu0 0
        %1255 = vmatprep.subr.bf16.mxu0 0
        %1256 = vmatpush1.bf16.xpose.msra.mxu0 0
        %1257 = vmatprep.subr.bf16.mxu0 0
        %1258 = vmatpush1.bf16.xpose.msra.mxu0 0
        %1259 = vmatprep.subr.bf16.mxu0 0
        %1260 = vmatpush1.bf16.xpose.msra.mxu0 0
        %1261 = vmatprep.subr.bf16.mxu0 0
        %1262 = vmatpush1.bf16.xpose.msra.mxu0 0
        %1263 = vmatprep.subr.bf16.mxu0 0
        %1264 = vmatpush1.bf16.xpose.msra.mxu0 0
        %1265 = vmatprep.subr.bf16.mxu0 0
        %1266 = vmatpush1.bf16.xpose.msra.mxu0 0
        %1267 = vmatprep.subr.bf16.mxu0 0
        %1268 = vmatpush1.bf16.xpose.msra.mxu0 0
        %1269 = vmatprep.mubr.bf16.mxu0 0
        %1270 = vmatmul.mubr.bf16.gmra.mrb[0].mxu0 %v1232
        %v1271 = vpop.f32.mrb[0].mxu0
        %v1272 = vadd.f32 %v1149, %v1271
        %v1273 = vpop.f32.mrb[0].mxu0
        %v1274 = vpop.f32.mrb[0].mxu0
        %v1275 = vpop.f32.mrb[0].mxu0
        %1276 = vdwg.mxu0
        %v1277 = vsel %vm1221, %v1272, -inf
        %1278 = vmax.xlane.f32.xlu0 %v1277
        %v1279 = vpop.xlane.xlu0 %1278
        %v1280 = vsub.f32 %v1272, %v1279
        %v1281 = vmul.f32 %v1280, 1.442695
        %v1282 = vpow.pop %v1281
        %v1283 = vsel %vm1221, %v1282, 0.0
        %1284 = vadd.xlane.f32.xlu0 %v1283
        %v1285 = vpop.xlane.xlu0 %1284
        %v1286 = vrcp.pop %v1285
        %v1287 = vmul.f32 %v1282, %v1286
        %v1288 = vpack.c.bf16 %v1287, %v1287
        %v1289 = vpack.c.bf16 %v1228, %v1228
        %v1291 = vsel %vm1221, %v1288, 0
        %vm1293 = vcmask 1043456
        %v1295 = vsel %vm1293, %v1289, 0
        %1297 = vmatprep.subr.bf16.mxu0 0
        %1298 = vmatpush1.bf16.msra.mxu0 %v1295
        %1299 = vmatprep.subr.bf16.mxu0 0
        %1300 = vmatpush1.bf16.msra.mxu0 0
        %1301 = vmatprep.subr.bf16.mxu0 0
        %1302 = vmatpush1.bf16.msra.mxu0 0
        %1303 = vmatprep.subr.bf16.mxu0 0
        %1304 = vmatpush1.bf16.msra.mxu0 0
        %1305 = vmatprep.subr.bf16.mxu0 0
        %1306 = vmatpush1.bf16.msra.mxu0 0
        %1307 = vmatprep.subr.bf16.mxu0 0
        %1308 = vmatpush1.bf16.msra.mxu0 0
        %1309 = vmatprep.subr.bf16.mxu0 0
        %1310 = vmatpush1.bf16.msra.mxu0 0
        %1311 = vmatprep.subr.bf16.mxu0 0
        %1312 = vmatpush1.bf16.msra.mxu0 0
        %1313 = vmatprep.subr.bf16.mxu0 0
        %1314 = vmatpush1.bf16.msra.mxu0 0
        %1315 = vmatprep.subr.bf16.mxu0 0
        %1316 = vmatpush1.bf16.msra.mxu0 0
        %1317 = vmatprep.subr.bf16.mxu0 0
        %1318 = vmatpush1.bf16.msra.mxu0 0
        %1319 = vmatprep.subr.bf16.mxu0 0
        %1320 = vmatpush1.bf16.msra.mxu0 0
        %1321 = vmatprep.subr.bf16.mxu0 0
        %1322 = vmatpush1.bf16.msra.mxu0 0
        %1323 = vmatprep.subr.bf16.mxu0 0
        %1324 = vmatpush1.bf16.msra.mxu0 0
        %1325 = vmatprep.subr.bf16.mxu0 0
        %1326 = vmatpush1.bf16.msra.mxu0 0
        %1327 = vmatprep.subr.bf16.mxu0 0
        %1328 = vmatpush1.bf16.msra.mxu0 0
        %1329 = vmatprep.mubr.bf16.mxu0 0
        %1330 = vmatmul.mubr.bf16.gmra.mrb[0].mxu0 %v1291
        %v1331 = vpop.f32.mrb[0].mxu0
        %v1332 = vadd.f32 0.0, %v1331
        %v1333 = vpop.f32.mrb[0].mxu0
        %v1334 = vpop.f32.mrb[0].mxu0
        %v1335 = vpop.f32.mrb[0].mxu0
        %1336 = vdwg.mxu0
        %v1337 = vpack.c.bf16 %v1332, %v1332
        %v1338 = vld [vmem:[%s15] sm:$0xf]
        %1339 = vrot.lane.b32.xlu0 %v1212, 88
        %v1340 = vpop.permute.xlu0 %1339
        %s1342 = scalar_lea.vmem %s1049, 8 [#allocation4]
        %1343 = vst.msk [vmem:[%s1342] sm:$0xff] %vm1221, %v1340
        %1344 = vrot.lane.b32.xlu0 %v1212, 56
        %v1345 = vpop.permute.xlu0 %1344
        %s1347 = scalar_lea.vmem %s1056, 8 [#allocation6]
        %1348 = vst.msk [vmem:[%s1347] sm:$0xff] %vm1221, %v1345
        %v1349 = vld [vmem:[%s1342] sm:$0xff]
        %v1350 = vld [vmem:[%s1347] sm:$0xff]
        %v1351 = vpack.c.bf16 %v1349, %v1349
        %1353 = vrot.lane.b32.xlu0 %v1229, 120
        %v1354 = vpop.permute.xlu0 %1353
        %v1356 = vsel %vm1221, %v1354, 0
        %v1359 = vsel %vm1221, %v1351, 0
        %1361 = vmatprep.subr.bf16.mxu0 0
        %1362 = vmatpush1.bf16.xpose.msra.mxu0 %v1359
        %1363 = vmatprep.subr.bf16.mxu0 0
        %1364 = vmatpush1.bf16.xpose.msra.mxu0 0
        %1365 = vmatprep.subr.bf16.mxu0 0
        %1366 = vmatpush1.bf16.xpose.msra.mxu0 0
        %1367 = vmatprep.subr.bf16.mxu0 0
        %1368 = vmatpush1.bf16.xpose.msra.mxu0 0
        %1369 = vmatprep.subr.bf16.mxu0 0
        %1370 = vmatpush1.bf16.xpose.msra.mxu0 0
        %1371 = vmatprep.subr.bf16.mxu0 0
        %1372 = vmatpush1.bf16.xpose.msra.mxu0 0
        %1373 = vmatprep.subr.bf16.mxu0 0
        %1374 = vmatpush1.bf16.xpose.msra.mxu0 0
        %1375 = vmatprep.subr.bf16.mxu0 0
        %1376 = vmatpush1.bf16.xpose.msra.mxu0 0
        %1377 = vmatprep.subr.bf16.mxu0 0
        %1378 = vmatpush1.bf16.xpose.msra.mxu0 0
        %1379 = vmatprep.subr.bf16.mxu0 0
        %1380 = vmatpush1.bf16.xpose.msra.mxu0 0
        %1381 = vmatprep.subr.bf16.mxu0 0
        %1382 = vmatpush1.bf16.xpose.msra.mxu0 0
        %1383 = vmatprep.subr.bf16.mxu0 0
        %1384 = vmatpush1.bf16.xpose.msra.mxu0 0
        %1385 = vmatprep.subr.bf16.mxu0 0
        %1386 = vmatpush1.bf16.xpose.msra.mxu0 0
        %1387 = vmatprep.subr.bf16.mxu0 0
        %1388 = vmatpush1.bf16.xpose.msra.mxu0 0
        %1389 = vmatprep.subr.bf16.mxu0 0
        %1390 = vmatpush1.bf16.xpose.msra.mxu0 0
        %1391 = vmatprep.subr.bf16.mxu0 0
        %1392 = vmatpush1.bf16.xpose.msra.mxu0 0
        %1393 = vmatprep.mubr.bf16.mxu0 0
        %1394 = vmatmul.mubr.bf16.gmra.mrb[0].mxu0 %v1356
        %v1395 = vpop.f32.mrb[0].mxu0
        %v1396 = vadd.f32 %v1149, %v1395
        %v1397 = vpop.f32.mrb[0].mxu0
        %v1398 = vpop.f32.mrb[0].mxu0
        %v1399 = vpop.f32.mrb[0].mxu0
        %1400 = vdwg.mxu0
        %v1401 = vsel %vm1221, %v1396, -inf
        %1402 = vmax.xlane.f32.xlu0 %v1401
        %v1403 = vpop.xlane.xlu0 %1402
        %v1404 = vsub.f32 %v1396, %v1403
        %v1405 = vmul.f32 %v1404, 1.442695
        %v1406 = vpow.pop %v1405
        %v1407 = vsel %vm1221, %v1406, 0.0
        %1408 = vadd.xlane.f32.xlu0 %v1407
        %v1409 = vpop.xlane.xlu0 %1408
        %v1410 = vrcp.pop %v1409
        %v1411 = vmul.f32 %v1406, %v1410
        %v1412 = vpack.c.bf16 %v1411, %v1411
        %v1413 = vpack.c.bf16 %v1350, %v1350
        %v1415 = vsel %vm1221, %v1412, 0
        %v1418 = vsel %vm1293, %v1413, 0
        %1420 = vmatprep.subr.bf16.mxu0 0
        %1421 = vmatpush1.bf16.msra.mxu0 %v1418
        %1422 = vmatprep.subr.bf16.mxu0 0
        %1423 = vmatpush1.bf16.msra.mxu0 0
        %1424 = vmatprep.subr.bf16.mxu0 0
        %1425 = vmatpush1.bf16.msra.mxu0 0
        %1426 = vmatprep.subr.bf16.mxu0 0
        %1427 = vmatpush1.bf16.msra.mxu0 0
        %1428 = vmatprep.subr.bf16.mxu0 0
        %1429 = vmatpush1.bf16.msra.mxu0 0
        %1430 = vmatprep.subr.bf16.mxu0 0
        %1431 = vmatpush1.bf16.msra.mxu0 0
        %1432 = vmatprep.subr.bf16.mxu0 0
        %1433 = vmatpush1.bf16.msra.mxu0 0
        %1434 = vmatprep.subr.bf16.mxu0 0
        %1435 = vmatpush1.bf16.msra.mxu0 0
        %1436 = vmatprep.subr.bf16.mxu0 0
        %1437 = vmatpush1.bf16.msra.mxu0 0
        %1438 = vmatprep.subr.bf16.mxu0 0
        %1439 = vmatpush1.bf16.msra.mxu0 0
        %1440 = vmatprep.subr.bf16.mxu0 0
        %1441 = vmatpush1.bf16.msra.mxu0 0
        %1442 = vmatprep.subr.bf16.mxu0 0
        %1443 = vmatpush1.bf16.msra.mxu0 0
        %1444 = vmatprep.subr.bf16.mxu0 0
        %1445 = vmatpush1.bf16.msra.mxu0 0
        %1446 = vmatprep.subr.bf16.mxu0 0
        %1447 = vmatpush1.bf16.msra.mxu0 0
        %1448 = vmatprep.subr.bf16.mxu0 0
        %1449 = vmatpush1.bf16.msra.mxu0 0
        %1450 = vmatprep.subr.bf16.mxu0 0
        %1451 = vmatpush1.bf16.msra.mxu0 0
        %1452 = vmatprep.mubr.bf16.mxu0 0
        %1453 = vmatmul.mubr.bf16.gmra.mrb[0].mxu0 %v1415
        %v1454 = vpop.f32.mrb[0].mxu0
        %v1455 = vadd.f32 0.0, %v1454
        %v1456 = vpop.f32.mrb[0].mxu0
        %v1457 = vpop.f32.mrb[0].mxu0
        %v1458 = vpop.f32.mrb[0].mxu0
        %1459 = vdwg.mxu0
        %v1460 = vpack.c.bf16 %v1455, %v1455
        %s1461 = scalar_lea.vmem %s15, 4
        %v1462 = vld [vmem:[%s1461] sm:$0xf]
        %v1464 = vsel %vm1221, %v1460, 0
        %v1467 = vsel %vm1293, %v1462, 0
        %1469 = vmatprep.subr.bf16.mxu0 0
        %1470 = vmatpush1.bf16.msra.mxu0 %v1467
        %1471 = vmatprep.subr.bf16.mxu0 0
        %1472 = vmatpush1.bf16.msra.mxu0 0
        %1473 = vmatprep.subr.bf16.mxu0 0
        %1474 = vmatpush1.bf16.msra.mxu0 0
        %1475 = vmatprep.subr.bf16.mxu0 0
        %1476 = vmatpush1.bf16.msra.mxu0 0
        %1477 = vmatprep.subr.bf16.mxu0 0
        %1478 = vmatpush1.bf16.msra.mxu0 0
        %1479 = vmatprep.subr.bf16.mxu0 0
        %1480 = vmatpush1.bf16.msra.mxu0 0
        %1481 = vmatprep.subr.bf16.mxu0 0
        %1482 = vmatpush1.bf16.msra.mxu0 0
        %1483 = vmatprep.subr.bf16.mxu0 0
        %1484 = vmatpush1.bf16.msra.mxu0 0
        %1485 = vmatprep.subr.bf16.mxu0 0
        %1486 = vmatpush1.bf16.msra.mxu0 0
        %1487 = vmatprep.subr.bf16.mxu0 0
        %1488 = vmatpush1.bf16.msra.mxu0 0
        %1489 = vmatprep.subr.bf16.mxu0 0
        %1490 = vmatpush1.bf16.msra.mxu0 0
        %1491 = vmatprep.subr.bf16.mxu0 0
        %1492 = vmatpush1.bf16.msra.mxu0 0
        %1493 = vmatprep.subr.bf16.mxu0 0
        %1494 = vmatpush1.bf16.msra.mxu0 0
        %1495 = vmatprep.subr.bf16.mxu0 0
        %1496 = vmatpush1.bf16.msra.mxu0 0
        %1497 = vmatprep.subr.bf16.mxu0 0
        %1498 = vmatpush1.bf16.msra.mxu0 0
        %1499 = vmatprep.subr.bf16.mxu0 0
        %1500 = vmatpush1.bf16.msra.mxu0 0
        %1501 = vmatprep.mubr.bf16.mxu0 0
        %1502 = vmatmul.mubr.bf16.gmra.mrb[0].mxu0 %v1464
        %v1503 = vpop.f32.mrb[0].mxu0
        %v1504 = vadd.f32 0.0, %v1503
        %v1505 = vpop.f32.mrb[0].mxu0
        %v1506 = vpop.f32.mrb[0].mxu0
        %v1507 = vpop.f32.mrb[0].mxu0
        %1508 = vdwg.mxu0
        %v1510 = vsel %vm1221, %v1337, 0
        %v1513 = vsel %vm1293, %v1338, 0
        %1515 = vmatprep.subr.bf16.mxu0 0
        %1516 = vmatpush1.bf16.msra.mxu0 %v1513
        %1517 = vmatprep.subr.bf16.mxu0 0
        %1518 = vmatpush1.bf16.msra.mxu0 0
        %1519 = vmatprep.subr.bf16.mxu0 0
        %1520 = vmatpush1.bf16.msra.mxu0 0
        %1521 = vmatprep.subr.bf16.mxu0 0
        %1522 = vmatpush1.bf16.msra.mxu0 0
        %1523 = vmatprep.subr.bf16.mxu0 0
        %1524 = vmatpush1.bf16.msra.mxu0 0
        %1525 = vmatprep.subr.bf16.mxu0 0
        %1526 = vmatpush1.bf16.msra.mxu0 0
        %1527 = vmatprep.subr.bf16.mxu0 0
        %1528 = vmatpush1.bf16.msra.mxu0 0
        %1529 = vmatprep.subr.bf16.mxu0 0
        %1530 = vmatpush1.bf16.msra.mxu0 0
        %1531 = vmatprep.subr.bf16.mxu0 0
        %1532 = vmatpush1.bf16.msra.mxu0 0
        %1533 = vmatprep.subr.bf16.mxu0 0
        %1534 = vmatpush1.bf16.msra.mxu0 0
        %1535 = vmatprep.subr.bf16.mxu0 0
        %1536 = vmatpush1.bf16.msra.mxu0 0
        %1537 = vmatprep.subr.bf16.mxu0 0
        %1538 = vmatpush1.bf16.msra.mxu0 0
        %1539 = vmatprep.subr.bf16.mxu0 0
        %1540 = vmatpush1.bf16.msra.mxu0 0
        %1541 = vmatprep.subr.bf16.mxu0 0
        %1542 = vmatpush1.bf16.msra.mxu0 0
        %1543 = vmatprep.subr.bf16.mxu0 0
        %1544 = vmatpush1.bf16.msra.mxu0 0
        %1545 = vmatprep.subr.bf16.mxu0 0
        %1546 = vmatpush1.bf16.msra.mxu0 0
        %1547 = vmatprep.mubr.bf16.mxu0 0
        %1548 = vmatmul.mubr.bf16.gmra.mrb[0].mxu0 %v1510
        %v1549 = vpop.f32.mrb[0].mxu0
        %v1550 = vadd.f32 %v1504, %v1549
        %v1551 = vpop.f32.mrb[0].mxu0
        %v1552 = vpop.f32.mrb[0].mxu0
        %v1553 = vpop.f32.mrb[0].mxu0
        %1554 = vdwg.mxu0
        %1555 = vrot.lane.b32.xlu0 %v1212, 80
        %v1556 = vpop.permute.xlu0 %1555
        %s1558 = scalar_lea.vmem %s1049, 16 [#allocation4]
        %1559 = vst.msk [vmem:[%s1558] sm:$0xff] %vm1221, %v1556
        %1560 = vrot.lane.b32.xlu0 %v1212, 48
        %v1561 = vpop.permute.xlu0 %1560
        %s1563 = scalar_lea.vmem %s1056, 16 [#allocation6]
        %1564 = vst.msk [vmem:[%s1563] sm:$0xff] %vm1221, %v1561
        %v1565 = vld [vmem:[%s1558] sm:$0xff]
        %v1566 = vld [vmem:[%s1563] sm:$0xff]
        %v1567 = vpack.c.bf16 %v1565, %v1565
        %1568 = vrot.lane.b32.xlu0 %v1229, 112
        %v1569 = vpop.permute.xlu0 %1568
        %v1571 = vsel %vm1221, %v1569, 0
        %v1574 = vsel %vm1221, %v1567, 0
        %1576 = vmatprep.subr.bf16.mxu0 0
        %1577 = vmatpush1.bf16.xpose.msra.mxu0 %v1574
        %1578 = vmatprep.subr.bf16.mxu0 0
        %1579 = vmatpush1.bf16.xpose.msra.mxu0 0
        %1580 = vmatprep.subr.bf16.mxu0 0
        %1581 = vmatpush1.bf16.xpose.msra.mxu0 0
        %1582 = vmatprep.subr.bf16.mxu0 0
        %1583 = vmatpush1.bf16.xpose.msra.mxu0 0
        %1584 = vmatprep.subr.bf16.mxu0 0
        %1585 = vmatpush1.bf16.xpose.msra.mxu0 0
        %1586 = vmatprep.subr.bf16.mxu0 0
        %1587 = vmatpush1.bf16.xpose.msra.mxu0 0
        %1588 = vmatprep.subr.bf16.mxu0 0
        %1589 = vmatpush1.bf16.xpose.msra.mxu0 0
        %1590 = vmatprep.subr.bf16.mxu0 0
        %1591 = vmatpush1.bf16.xpose.msra.mxu0 0
        %1592 = vmatprep.subr.bf16.mxu0 0
        %1593 = vmatpush1.bf16.xpose.msra.mxu0 0
        %1594 = vmatprep.subr.bf16.mxu0 0
        %1595 = vmatpush1.bf16.xpose.msra.mxu0 0
        %1596 = vmatprep.subr.bf16.mxu0 0
        %1597 = vmatpush1.bf16.xpose.msra.mxu0 0
        %1598 = vmatprep.subr.bf16.mxu0 0
        %1599 = vmatpush1.bf16.xpose.msra.mxu0 0
        %1600 = vmatprep.subr.bf16.mxu0 0
        %1601 = vmatpush1.bf16.xpose.msra.mxu0 0
        %1602 = vmatprep.subr.bf16.mxu0 0
        %1603 = vmatpush1.bf16.xpose.msra.mxu0 0
        %1604 = vmatprep.subr.bf16.mxu0 0
        %1605 = vmatpush1.bf16.xpose.msra.mxu0 0
        %1606 = vmatprep.subr.bf16.mxu0 0
        %1607 = vmatpush1.bf16.xpose.msra.mxu0 0
        %1608 = vmatprep.mubr.bf16.mxu0 0
        %1609 = vmatmul.mubr.bf16.gmra.mrb[0].mxu0 %v1571
        %v1610 = vpop.f32.mrb[0].mxu0
        %v1611 = vadd.f32 %v1149, %v1610
        %v1612 = vpop.f32.mrb[0].mxu0
        %v1613 = vpop.f32.mrb[0].mxu0
        %v1614 = vpop.f32.mrb[0].mxu0
        %1615 = vdwg.mxu0
        %v1616 = vsel %vm1221, %v1611, -inf
        %1617 = vmax.xlane.f32.xlu0 %v1616
        %v1618 = vpop.xlane.xlu0 %1617
        %v1619 = vsub.f32 %v1611, %v1618
        %v1620 = vmul.f32 %v1619, 1.442695
        %v1621 = vpow.pop %v1620
        %v1622 = vsel %vm1221, %v1621, 0.0
        %1623 = vadd.xlane.f32.xlu0 %v1622
        %v1624 = vpop.xlane.xlu0 %1623
        %v1625 = vrcp.pop %v1624
        %v1626 = vmul.f32 %v1621, %v1625
        %v1627 = vpack.c.bf16 %v1626, %v1626
        %v1628 = vpack.c.bf16 %v1566, %v1566
        %v1630 = vsel %vm1221, %v1627, 0
        %v1633 = vsel %vm1293, %v1628, 0
        %1635 = vmatprep.subr.bf16.mxu0 0
        %1636 = vmatpush1.bf16.msra.mxu0 %v1633
        %1637 = vmatprep.subr.bf16.mxu0 0
        %1638 = vmatpush1.bf16.msra.mxu0 0
        %1639 = vmatprep.subr.bf16.mxu0 0
        %1640 = vmatpush1.bf16.msra.mxu0 0
        %1641 = vmatprep.subr.bf16.mxu0 0
        %1642 = vmatpush1.bf16.msra.mxu0 0
        %1643 = vmatprep.subr.bf16.mxu0 0
        %1644 = vmatpush1.bf16.msra.mxu0 0
        %1645 = vmatprep.subr.bf16.mxu0 0
        %1646 = vmatpush1.bf16.msra.mxu0 0
        %1647 = vmatprep.subr.bf16.mxu0 0
        %1648 = vmatpush1.bf16.msra.mxu0 0
        %1649 = vmatprep.subr.bf16.mxu0 0
        %1650 = vmatpush1.bf16.msra.mxu0 0
        %1651 = vmatprep.subr.bf16.mxu0 0
        %1652 = vmatpush1.bf16.msra.mxu0 0
        %1653 = vmatprep.subr.bf16.mxu0 0
        %1654 = vmatpush1.bf16.msra.mxu0 0
        %1655 = vmatprep.subr.bf16.mxu0 0
        %1656 = vmatpush1.bf16.msra.mxu0 0
        %1657 = vmatprep.subr.bf16.mxu0 0
        %1658 = vmatpush1.bf16.msra.mxu0 0
        %1659 = vmatprep.subr.bf16.mxu0 0
        %1660 = vmatpush1.bf16.msra.mxu0 0
        %1661 = vmatprep.subr.bf16.mxu0 0
        %1662 = vmatpush1.bf16.msra.mxu0 0
        %1663 = vmatprep.subr.bf16.mxu0 0
        %1664 = vmatpush1.bf16.msra.mxu0 0
        %1665 = vmatprep.subr.bf16.mxu0 0
        %1666 = vmatpush1.bf16.msra.mxu0 0
        %1667 = vmatprep.mubr.bf16.mxu0 0
        %1668 = vmatmul.mubr.bf16.gmra.mrb[0].mxu0 %v1630
        %v1669 = vpop.f32.mrb[0].mxu0
        %v1670 = vadd.f32 0.0, %v1669
        %v1671 = vpop.f32.mrb[0].mxu0
        %v1672 = vpop.f32.mrb[0].mxu0
        %v1673 = vpop.f32.mrb[0].mxu0
        %1674 = vdwg.mxu0
        %v1675 = vpack.c.bf16 %v1670, %v1670
        %s1676 = scalar_lea.vmem %s15, 8
        %v1677 = vld [vmem:[%s1676] sm:$0xf]
        %v1679 = vsel %vm1221, %v1675, 0
        %v1682 = vsel %vm1293, %v1677, 0
        %1684 = vmatprep.subr.bf16.mxu0 0
        %1685 = vmatpush1.bf16.msra.mxu0 %v1682
        %1686 = vmatprep.subr.bf16.mxu0 0
        %1687 = vmatpush1.bf16.msra.mxu0 0
        %1688 = vmatprep.subr.bf16.mxu0 0
        %1689 = vmatpush1.bf16.msra.mxu0 0
        %1690 = vmatprep.subr.bf16.mxu0 0
        %1691 = vmatpush1.bf16.msra.mxu0 0
        %1692 = vmatprep.subr.bf16.mxu0 0
        %1693 = vmatpush1.bf16.msra.mxu0 0
        %1694 = vmatprep.subr.bf16.mxu0 0
        %1695 = vmatpush1.bf16.msra.mxu0 0
        %1696 = vmatprep.subr.bf16.mxu0 0
        %1697 = vmatpush1.bf16.msra.mxu0 0
        %1698 = vmatprep.subr.bf16.mxu0 0
        %1699 = vmatpush1.bf16.msra.mxu0 0
        %1700 = vmatprep.subr.bf16.mxu0 0
        %1701 = vmatpush1.bf16.msra.mxu0 0
        %1702 = vmatprep.subr.bf16.mxu0 0
        %1703 = vmatpush1.bf16.msra.mxu0 0
        %1704 = vmatprep.subr.bf16.mxu0 0
        %1705 = vmatpush1.bf16.msra.mxu0 0
        %1706 = vmatprep.subr.bf16.mxu0 0
        %1707 = vmatpush1.bf16.msra.mxu0 0
        %1708 = vmatprep.subr.bf16.mxu0 0
        %1709 = vmatpush1.bf16.msra.mxu0 0
        %1710 = vmatprep.subr.bf16.mxu0 0
        %1711 = vmatpush1.bf16.msra.mxu0 0
        %1712 = vmatprep.subr.bf16.mxu0 0
        %1713 = vmatpush1.bf16.msra.mxu0 0
        %1714 = vmatprep.subr.bf16.mxu0 0
        %1715 = vmatpush1.bf16.msra.mxu0 0
        %1716 = vmatprep.mubr.bf16.mxu0 0
        %1717 = vmatmul.mubr.bf16.gmra.mrb[0].mxu0 %v1679
        %v1718 = vpop.f32.mrb[0].mxu0
        %v1719 = vadd.f32 0.0, %v1718
        %v1720 = vpop.f32.mrb[0].mxu0
        %v1721 = vpop.f32.mrb[0].mxu0
        %v1722 = vpop.f32.mrb[0].mxu0
        %1723 = vdwg.mxu0
        %v1724 = vadd.f32 %v1550, %v1719
        %1725 = vrot.lane.b32.xlu0 %v1212, 72
        %v1726 = vpop.permute.xlu0 %1725
        %s1728 = scalar_lea.vmem %s1049, 24 [#allocation4]
        %1729 = vst.msk [vmem:[%s1728] sm:$0xff] %vm1221, %v1726
        %1730 = vrot.lane.b32.xlu0 %v1212, 40
        %v1731 = vpop.permute.xlu0 %1730
        %s1733 = scalar_lea.vmem %s1056, 24 [#allocation6]
        %1734 = vst.msk [vmem:[%s1733] sm:$0xff] %vm1221, %v1731
        %v1735 = vld [vmem:[%s1728] sm:$0xff]
        %v1736 = vld [vmem:[%s1733] sm:$0xff]
        %v1737 = vpack.c.bf16 %v1735, %v1735
        %1738 = vrot.lane.b32.xlu0 %v1229, 104
        %v1739 = vpop.permute.xlu0 %1738
        %v1741 = vsel %vm1221, %v1739, 0
        %v1744 = vsel %vm1221, %v1737, 0
        %1746 = vmatprep.subr.bf16.mxu0 0
        %1747 = vmatpush1.bf16.xpose.msra.mxu0 %v1744
        %1748 = vmatprep.subr.bf16.mxu0 0
        %1749 = vmatpush1.bf16.xpose.msra.mxu0 0
        %1750 = vmatprep.subr.bf16.mxu0 0
        %1751 = vmatpush1.bf16.xpose.msra.mxu0 0
        %1752 = vmatprep.subr.bf16.mxu0 0
        %1753 = vmatpush1.bf16.xpose.msra.mxu0 0
        %1754 = vmatprep.subr.bf16.mxu0 0
        %1755 = vmatpush1.bf16.xpose.msra.mxu0 0
        %1756 = vmatprep.subr.bf16.mxu0 0
        %1757 = vmatpush1.bf16.xpose.msra.mxu0 0
        %1758 = vmatprep.subr.bf16.mxu0 0
        %1759 = vmatpush1.bf16.xpose.msra.mxu0 0
        %1760 = vmatprep.subr.bf16.mxu0 0
        %1761 = vmatpush1.bf16.xpose.msra.mxu0 0
        %1762 = vmatprep.subr.bf16.mxu0 0
        %1763 = vmatpush1.bf16.xpose.msra.mxu0 0
        %1764 = vmatprep.subr.bf16.mxu0 0
        %1765 = vmatpush1.bf16.xpose.msra.mxu0 0
        %1766 = vmatprep.subr.bf16.mxu0 0
        %1767 = vmatpush1.bf16.xpose.msra.mxu0 0
        %1768 = vmatprep.subr.bf16.mxu0 0
        %1769 = vmatpush1.bf16.xpose.msra.mxu0 0
        %1770 = vmatprep.subr.bf16.mxu0 0
        %1771 = vmatpush1.bf16.xpose.msra.mxu0 0
        %1772 = vmatprep.subr.bf16.mxu0 0
        %1773 = vmatpush1.bf16.xpose.msra.mxu0 0
        %1774 = vmatprep.subr.bf16.mxu0 0
        %1775 = vmatpush1.bf16.xpose.msra.mxu0 0
        %1776 = vmatprep.subr.bf16.mxu0 0
        %1777 = vmatpush1.bf16.xpose.msra.mxu0 0
        %1778 = vmatprep.mubr.bf16.mxu0 0
        %1779 = vmatmul.mubr.bf16.gmra.mrb[0].mxu0 %v1741
        %v1780 = vpop.f32.mrb[0].mxu0
        %v1781 = vadd.f32 %v1149, %v1780
        %v1782 = vpop.f32.mrb[0].mxu0
        %v1783 = vpop.f32.mrb[0].mxu0
        %v1784 = vpop.f32.mrb[0].mxu0
        %1785 = vdwg.mxu0
        %v1786 = vsel %vm1221, %v1781, -inf
        %1787 = vmax.xlane.f32.xlu0 %v1786
        %v1788 = vpop.xlane.xlu0 %1787
        %v1789 = vsub.f32 %v1781, %v1788
        %v1790 = vmul.f32 %v1789, 1.442695
        %v1791 = vpow.pop %v1790
        %v1792 = vsel %vm1221, %v1791, 0.0
        %1793 = vadd.xlane.f32.xlu0 %v1792
        %v1794 = vpop.xlane.xlu0 %1793
        %v1795 = vrcp.pop %v1794
        %v1796 = vmul.f32 %v1791, %v1795
        %v1797 = vpack.c.bf16 %v1796, %v1796
        %v1798 = vpack.c.bf16 %v1736, %v1736
        %v1800 = vsel %vm1221, %v1797, 0
        %v1803 = vsel %vm1293, %v1798, 0
        %1805 = vmatprep.subr.bf16.mxu0 0
        %1806 = vmatpush1.bf16.msra.mxu0 %v1803
        %1807 = vmatprep.subr.bf16.mxu0 0
        %1808 = vmatpush1.bf16.msra.mxu0 0
        %1809 = vmatprep.subr.bf16.mxu0 0
        %1810 = vmatpush1.bf16.msra.mxu0 0
        %1811 = vmatprep.subr.bf16.mxu0 0
        %1812 = vmatpush1.bf16.msra.mxu0 0
        %1813 = vmatprep.subr.bf16.mxu0 0
        %1814 = vmatpush1.bf16.msra.mxu0 0
        %1815 = vmatprep.subr.bf16.mxu0 0
        %1816 = vmatpush1.bf16.msra.mxu0 0
        %1817 = vmatprep.subr.bf16.mxu0 0
        %1818 = vmatpush1.bf16.msra.mxu0 0
        %1819 = vmatprep.subr.bf16.mxu0 0
        %1820 = vmatpush1.bf16.msra.mxu0 0
        %1821 = vmatprep.subr.bf16.mxu0 0
        %1822 = vmatpush1.bf16.msra.mxu0 0
        %1823 = vmatprep.subr.bf16.mxu0 0
        %1824 = vmatpush1.bf16.msra.mxu0 0
        %1825 = vmatprep.subr.bf16.mxu0 0
        %1826 = vmatpush1.bf16.msra.mxu0 0
        %1827 = vmatprep.subr.bf16.mxu0 0
        %1828 = vmatpush1.bf16.msra.mxu0 0
        %1829 = vmatprep.subr.bf16.mxu0 0
        %1830 = vmatpush1.bf16.msra.mxu0 0
        %1831 = vmatprep.subr.bf16.mxu0 0
        %1832 = vmatpush1.bf16.msra.mxu0 0
        %1833 = vmatprep.subr.bf16.mxu0 0
        %1834 = vmatpush1.bf16.msra.mxu0 0
        %1835 = vmatprep.subr.bf16.mxu0 0
        %1836 = vmatpush1.bf16.msra.mxu0 0
        %1837 = vmatprep.mubr.bf16.mxu0 0
        %1838 = vmatmul.mubr.bf16.gmra.mrb[0].mxu0 %v1800
        %v1839 = vpop.f32.mrb[0].mxu0
        %v1840 = vadd.f32 0.0, %v1839
        %v1841 = vpop.f32.mrb[0].mxu0
        %v1842 = vpop.f32.mrb[0].mxu0
        %v1843 = vpop.f32.mrb[0].mxu0
        %1844 = vdwg.mxu0
        %v1845 = vpack.c.bf16 %v1840, %v1840
        %s1846 = scalar_lea.vmem %s15, 12
        %v1847 = vld [vmem:[%s1846] sm:$0xf]
        %v1849 = vsel %vm1221, %v1845, 0
        %v1852 = vsel %vm1293, %v1847, 0
        %1854 = vmatprep.subr.bf16.mxu0 0
        %1855 = vmatpush1.bf16.msra.mxu0 %v1852
        %1856 = vmatprep.subr.bf16.mxu0 0
        %1857 = vmatpush1.bf16.msra.mxu0 0
        %1858 = vmatprep.subr.bf16.mxu0 0
        %1859 = vmatpush1.bf16.msra.mxu0 0
        %1860 = vmatprep.subr.bf16.mxu0 0
        %1861 = vmatpush1.bf16.msra.mxu0 0
        %1862 = vmatprep.subr.bf16.mxu0 0
        %1863 = vmatpush1.bf16.msra.mxu0 0
        %1864 = vmatprep.subr.bf16.mxu0 0
        %1865 = vmatpush1.bf16.msra.mxu0 0
        %1866 = vmatprep.subr.bf16.mxu0 0
        %1867 = vmatpush1.bf16.msra.mxu0 0
        %1868 = vmatprep.subr.bf16.mxu0 0
        %1869 = vmatpush1.bf16.msra.mxu0 0
        %1870 = vmatprep.subr.bf16.mxu0 0
        %1871 = vmatpush1.bf16.msra.mxu0 0
        %1872 = vmatprep.subr.bf16.mxu0 0
        %1873 = vmatpush1.bf16.msra.mxu0 0
        %1874 = vmatprep.subr.bf16.mxu0 0
        %1875 = vmatpush1.bf16.msra.mxu0 0
        %1876 = vmatprep.subr.bf16.mxu0 0
        %1877 = vmatpush1.bf16.msra.mxu0 0
        %1878 = vmatprep.subr.bf16.mxu0 0
        %1879 = vmatpush1.bf16.msra.mxu0 0
        %1880 = vmatprep.subr.bf16.mxu0 0
        %1881 = vmatpush1.bf16.msra.mxu0 0
        %1882 = vmatprep.subr.bf16.mxu0 0
        %1883 = vmatpush1.bf16.msra.mxu0 0
        %1884 = vmatprep.subr.bf16.mxu0 0
        %1885 = vmatpush1.bf16.msra.mxu0 0
        %1886 = vmatprep.mubr.bf16.mxu0 0
        %1887 = vmatmul.mubr.bf16.gmra.mrb[0].mxu0 %v1849
        %v1888 = vpop.f32.mrb[0].mxu0
        %v1889 = vadd.f32 0.0, %v1888
        %v1890 = vpop.f32.mrb[0].mxu0
        %v1891 = vpop.f32.mrb[0].mxu0
        %v1892 = vpop.f32.mrb[0].mxu0
        %1893 = vdwg.mxu0
        %v1894 = vadd.f32 %v1724, %v1889
        %v1895 = vld [vmem:[%s17] sm:$0x1]
        %v1897 = vlaneseq
        %v1898 = vshrl.u32 %v1897, 7
        %v1899 = vsub.s32 0, %v1898
        %v1900 = vrot.slane %v1895, %v1899
        %v1902 = vadd.f32 %v1894, %v1900
        %v1903 = vadd.f32 %v1142, %v1902
        %v1904 = vld [vmem:[%s19] sm:$0x1]
        %v1905 = vld [vmem:[%s21] sm:$0x1]
        %v1906 = vsel %vm1114, %v1903, 0.0
        %1907 = vadd.xlane.f32.xlu0 %v1906
        %v1908 = vpop.xlane.xlu0 %1907
        %v1909 = vmul.f32 %v1908, %v1118
        %v1910 = vsub.f32 %v1903, %v1909
        %v1911 = vmul.f32 %v1910, %v1910
        %v1912 = vsel %vm1114, %v1911, 0.0
        %1913 = vadd.xlane.f32.xlu0 %v1912
        %v1914 = vpop.xlane.xlu0 %1913
        %v1915 = vmul.f32 %v1914, %v1118
        %v1916 = vadd.f32 %v1915, 1e-05
        %v1917 = vrsqrt.pop %v1916
        %v1918 = vmul.f32 %v1910, %v1917
        %v1920 = vlaneseq
        %v1921 = vshrl.u32 %v1920, 7
        %v1922 = vsub.s32 0, %v1921
        %v1923 = vrot.slane %v1904, %v1922
        %v1925 = vmul.f32 %v1918, %v1923
        %v1927 = vlaneseq
        %v1928 = vshrl.u32 %v1927, 7
        %v1929 = vsub.s32 0, %v1928
        %v1930 = vrot.slane %v1905, %v1929
        %v1932 = vadd.f32 %v1925, %v1930
        %v1933 = vld [vmem:[%s23] sm:$0xf]
        %v1934 = vld [vmem:[%s23 + $0x4] sm:$0xf]
        %v1935 = vld [vmem:[%s23 + $0x8] sm:$0xf]
        %v1936 = vld [vmem:[%s23 + $0xc] sm:$0xf]
        %v1937 = vld [vmem:[%s25] sm:$0x1]
        %v1938 = vpack.c.bf16 %v1932, %v1932
        %v1940 = vlaneseq
        %v1941 = vshrl.u32 %v1940, 7
        %v1942 = vsub.s32 0, %v1941
        %v1943 = vrot.slane %v1937, %v1942
        %v1949 = vunpack.c.l.b16 %v1933
        %v1950 = vunpack.c.l.b16 %v1934
        %v1951 = vunpack.c.l.b16 %v1935
        %v1952 = vunpack.c.l.b16 %v1936
        %v1953 = vpack.c.b16 %v1950, %v1949
        %v1954 = vpack.c.b16 %v1952, %v1951
        %v1958 = vsel %vm1114, %v1938, 0
        %1960 = vmatprep.subr.bf16.mxu0 0
        %1961 = vmatpush1.bf16.msra.mxu0 %v1953
        %1962 = vmatprep.subr.bf16.mxu0 0
        %1963 = vmatpush1.bf16.msra.mxu0 %v1954
        %1964 = vmatprep.subr.bf16.mxu0 0
        %1965 = vmatpush1.bf16.msra.mxu0 0
        %1966 = vmatprep.subr.bf16.mxu0 0
        %1967 = vmatpush1.bf16.msra.mxu0 0
        %1968 = vmatprep.subr.bf16.mxu0 0
        %1969 = vmatpush1.bf16.msra.mxu0 0
        %1970 = vmatprep.subr.bf16.mxu0 0
        %1971 = vmatpush1.bf16.msra.mxu0 0
        %1972 = vmatprep.subr.bf16.mxu0 0
        %1973 = vmatpush1.bf16.msra.mxu0 0
        %1974 = vmatprep.subr.bf16.mxu0 0
        %1975 = vmatpush1.bf16.msra.mxu0 0
        %1976 = vmatprep.subr.bf16.mxu0 0
        %1977 = vmatpush1.bf16.msra.mxu0 0
        %1978 = vmatprep.subr.bf16.mxu0 0
        %1979 = vmatpush1.bf16.msra.mxu0 0
        %1980 = vmatprep.subr.bf16.mxu0 0
        %1981 = vmatpush1.bf16.msra.mxu0 0
        %1982 = vmatprep.subr.bf16.mxu0 0
        %1983 = vmatpush1.bf16.msra.mxu0 0
        %1984 = vmatprep.subr.bf16.mxu0 0
        %1985 = vmatpush1.bf16.msra.mxu0 0
        %1986 = vmatprep.subr.bf16.mxu0 0
        %1987 = vmatpush1.bf16.msra.mxu0 0
        %1988 = vmatprep.subr.bf16.mxu0 0
        %1989 = vmatpush1.bf16.msra.mxu0 0
        %1990 = vmatprep.subr.bf16.mxu0 0
        %1991 = vmatpush1.bf16.msra.mxu0 0
        %1992 = vmatprep.mubr.bf16.mxu0 0
        %1993 = vmatmul.mubr.bf16.gmra.mrb[0].mxu0 %v1958
        %v1994 = vpop.f32.mrb[0].mxu0
        %v1995 = vadd.f32 %v1943, %v1994
        %v1996 = vpop.f32.mrb[0].mxu0
        %v1997 = vpop.f32.mrb[0].mxu0
        %v1998 = vpop.f32.mrb[0].mxu0
        %1999 = vdwg.mxu0
        %v2000 = vld [vmem:[%s1106] sm:$0xff]
        %v2001 = vld [vmem:[%s27] sm:$0xf]
        %v2002 = vld [vmem:[%s27 + $0x4] sm:$0xf]
        %v2003 = vld [vmem:[%s27 + $0x8] sm:$0xf]
        %v2004 = vld [vmem:[%s27 + $0xc] sm:$0xf]
        %v2005 = vld [vmem:[%s29] sm:$0x1]
        %v2006 = vpack.c.bf16 %v2000, %v2000
        %v2008 = vlaneseq
        %v2009 = vshrl.u32 %v2008, 7
        %v2010 = vsub.s32 0, %v2009
        %v2011 = vrot.slane %v2005, %v2010
        %v2017 = vunpack.c.l.b16 %v2001
        %v2018 = vunpack.c.l.b16 %v2002
        %v2019 = vunpack.c.l.b16 %v2003
        %v2020 = vunpack.c.l.b16 %v2004
        %v2021 = vpack.c.b16 %v2018, %v2017
        %v2022 = vpack.c.b16 %v2020, %v2019
        %v2026 = vsel %vm1114, %v2006, 0
        %2028 = vmatprep.subr.bf16.mxu0 0
        %2029 = vmatpush1.bf16.msra.mxu0 %v2021
        %2030 = vmatprep.subr.bf16.mxu0 0
        %2031 = vmatpush1.bf16.msra.mxu0 %v2022
        %2032 = vmatprep.subr.bf16.mxu0 0
        %2033 = vmatpush1.bf16.msra.mxu0 0
        %2034 = vmatprep.subr.bf16.mxu0 0
        %2035 = vmatpush1.bf16.msra.mxu0 0
        %2036 = vmatprep.subr.bf16.mxu0 0
        %2037 = vmatpush1.bf16.msra.mxu0 0
        %2038 = vmatprep.subr.bf16.mxu0 0
        %2039 = vmatpush1.bf16.msra.mxu0 0
        %2040 = vmatprep.subr.bf16.mxu0 0
        %2041 = vmatpush1.bf16.msra.mxu0 0
        %2042 = vmatprep.subr.bf16.mxu0 0
        %2043 = vmatpush1.bf16.msra.mxu0 0
        %2044 = vmatprep.subr.bf16.mxu0 0
        %2045 = vmatpush1.bf16.msra.mxu0 0
        %2046 = vmatprep.subr.bf16.mxu0 0
        %2047 = vmatpush1.bf16.msra.mxu0 0
        %2048 = vmatprep.subr.bf16.mxu0 0
        %2049 = vmatpush1.bf16.msra.mxu0 0
        %2050 = vmatprep.subr.bf16.mxu0 0
        %2051 = vmatpush1.bf16.msra.mxu0 0
        %2052 = vmatprep.subr.bf16.mxu0 0
        %2053 = vmatpush1.bf16.msra.mxu0 0
        %2054 = vmatprep.subr.bf16.mxu0 0
        %2055 = vmatpush1.bf16.msra.mxu0 0
        %2056 = vmatprep.subr.bf16.mxu0 0
        %2057 = vmatpush1.bf16.msra.mxu0 0
        %2058 = vmatprep.subr.bf16.mxu0 0
        %2059 = vmatpush1.bf16.msra.mxu0 0
        %2060 = vmatprep.mubr.bf16.mxu0 0
        %2061 = vmatmul.mubr.bf16.gmra.mrb[0].mxu0 %v2026
        %v2062 = vpop.f32.mrb[0].mxu0
        %v2063 = vadd.f32 %v2011, %v2062
        %v2064 = vpop.f32.mrb[0].mxu0
        %v2065 = vpop.f32.mrb[0].mxu0
        %v2066 = vpop.f32.mrb[0].mxu0
        %2067 = vdwg.mxu0
        %2068 = vst.msk [vmem:[%s1063] sm:$0xff] %vm1221, %v2063
        %2070 = vrot.lane.b32.xlu0 %v2063, 96
        %v2071 = vpop.permute.xlu0 %2070
        %2073 = vst.msk [vmem:[%s1070] sm:$0xff] %vm1221, %v2071
        %v2074 = vpack.c.bf16 %v1995, %v1995
        %v2075 = vpack.c.bf16 %v2063, %v2063
        %v2077 = vlaneseq
        %v2078 = vshrl.u32 %v2077, 7
        %v2079 = vsub.s32 0, %v2078
        %v2080 = vrot.slane %v1143, %v2079
        %v2083 = vsel %vm1221, %v2074, 0
        %v2086 = vsel %vm1221, %v2075, 0
        %2088 = vmatprep.subr.bf16.mxu0 0
        %2089 = vmatpush1.bf16.xpose.msra.mxu0 %v2086
        %2090 = vmatprep.subr.bf16.mxu0 0
        %2091 = vmatpush1.bf16.xpose.msra.mxu0 0
        %2092 = vmatprep.subr.bf16.mxu0 0
        %2093 = vmatpush1.bf16.xpose.msra.mxu0 0
        %2094 = vmatprep.subr.bf16.mxu0 0
        %2095 = vmatpush1.bf16.xpose.msra.mxu0 0
        %2096 = vmatprep.subr.bf16.mxu0 0
        %2097 = vmatpush1.bf16.xpose.msra.mxu0 0
        %2098 = vmatprep.subr.bf16.mxu0 0
        %2099 = vmatpush1.bf16.xpose.msra.mxu0 0
        %2100 = vmatprep.subr.bf16.mxu0 0
        %2101 = vmatpush1.bf16.xpose.msra.mxu0 0
        %2102 = vmatprep.subr.bf16.mxu0 0
        %2103 = vmatpush1.bf16.xpose.msra.mxu0 0
        %2104 = vmatprep.subr.bf16.mxu0 0
        %2105 = vmatpush1.bf16.xpose.msra.mxu0 0
        %2106 = vmatprep.subr.bf16.mxu0 0
        %2107 = vmatpush1.bf16.xpose.msra.mxu0 0
        %2108 = vmatprep.subr.bf16.mxu0 0
        %2109 = vmatpush1.bf16.xpose.msra.mxu0 0
        %2110 = vmatprep.subr.bf16.mxu0 0
        %2111 = vmatpush1.bf16.xpose.msra.mxu0 0
        %2112 = vmatprep.subr.bf16.mxu0 0
        %2113 = vmatpush1.bf16.xpose.msra.mxu0 0
        %2114 = vmatprep.subr.bf16.mxu0 0
        %2115 = vmatpush1.bf16.xpose.msra.mxu0 0
        %2116 = vmatprep.subr.bf16.mxu0 0
        %2117 = vmatpush1.bf16.xpose.msra.mxu0 0
        %2118 = vmatprep.subr.bf16.mxu0 0
        %2119 = vmatpush1.bf16.xpose.msra.mxu0 0
        %2120 = vmatprep.mubr.bf16.mxu0 0
        %2121 = vmatmul.mubr.bf16.gmra.mrb[0].mxu0 %v2083
        %v2122 = vpop.f32.mrb[0].mxu0
        %v2123 = vadd.f32 %v2080, %v2122
        %v2124 = vpop.f32.mrb[0].mxu0
        %v2125 = vpop.f32.mrb[0].mxu0
        %v2126 = vpop.f32.mrb[0].mxu0
        %2127 = vdwg.mxu0
        %v2128 = vsel %vm1221, %v2123, -inf
        %2129 = vmax.xlane.f32.xlu0 %v2128
        %v2130 = vpop.xlane.xlu0 %2129
        %v2131 = vsub.f32 %v2123, %v2130
        %v2132 = vmul.f32 %v2131, 1.442695
        %v2133 = vpow.pop %v2132
        %v2134 = vsel %vm1221, %v2133, 0.0
        %2135 = vadd.xlane.f32.xlu0 %v2134
        %v2136 = vpop.xlane.xlu0 %2135
        %v2137 = vrcp.pop %v2136
        %v2138 = vmul.f32 %v2133, %v2137
        %v2139 = vpack.c.bf16 %v2138, %v2138
        %2141 = vrot.lane.b32.xlu0 %v2075, 96
        %v2142 = vpop.permute.xlu0 %2141
        %v2144 = vsel %vm1221, %v2139, 0
        %v2147 = vsel %vm1293, %v2142, 0
        %2149 = vmatprep.subr.bf16.mxu0 0
        %2150 = vmatpush1.bf16.msra.mxu0 %v2147
        %2151 = vmatprep.subr.bf16.mxu0 0
        %2152 = vmatpush1.bf16.msra.mxu0 0
        %2153 = vmatprep.subr.bf16.mxu0 0
        %2154 = vmatpush1.bf16.msra.mxu0 0
        %2155 = vmatprep.subr.bf16.mxu0 0
        %2156 = vmatpush1.bf16.msra.mxu0 0
        %2157 = vmatprep.subr.bf16.mxu0 0
        %2158 = vmatpush1.bf16.msra.mxu0 0
        %2159 = vmatprep.subr.bf16.mxu0 0
        %2160 = vmatpush1.bf16.msra.mxu0 0
        %2161 = vmatprep.subr.bf16.mxu0 0
        %2162 = vmatpush1.bf16.msra.mxu0 0
        %2163 = vmatprep.subr.bf16.mxu0 0
        %2164 = vmatpush1.bf16.msra.mxu0 0
        %2165 = vmatprep.subr.bf16.mxu0 0
        %2166 = vmatpush1.bf16.msra.mxu0 0
        %2167 = vmatprep.subr.bf16.mxu0 0
        %2168 = vmatpush1.bf16.msra.mxu0 0
        %2169 = vmatprep.subr.bf16.mxu0 0
        %2170 = vmatpush1.bf16.msra.mxu0 0
        %2171 = vmatprep.subr.bf16.mxu0 0
        %2172 = vmatpush1.bf16.msra.mxu0 0
        %2173 = vmatprep.subr.bf16.mxu0 0
        %2174 = vmatpush1.bf16.msra.mxu0 0
        %2175 = vmatprep.subr.bf16.mxu0 0
        %2176 = vmatpush1.bf16.msra.mxu0 0
        %2177 = vmatprep.subr.bf16.mxu0 0
        %2178 = vmatpush1.bf16.msra.mxu0 0
        %2179 = vmatprep.subr.bf16.mxu0 0
        %2180 = vmatpush1.bf16.msra.mxu0 0
        %2181 = vmatprep.mubr.bf16.mxu0 0
        %2182 = vmatmul.mubr.bf16.gmra.mrb[0].mxu0 %v2144
        %v2183 = vpop.f32.mrb[0].mxu0
        %v2184 = vadd.f32 0.0, %v2183
        %v2185 = vpop.f32.mrb[0].mxu0
        %v2186 = vpop.f32.mrb[0].mxu0
        %v2187 = vpop.f32.mrb[0].mxu0
        %2188 = vdwg.mxu0
        %v2189 = vpack.c.bf16 %v2184, %v2184
        %v2190 = vld [vmem:[%s31] sm:$0xf]
        %2191 = vrot.lane.b32.xlu0 %v2063, 120
        %v2192 = vpop.permute.xlu0 %2191
        %s2194 = scalar_lea.vmem %s1063, 8 [#allocation7]
        %2195 = vst.msk [vmem:[%s2194] sm:$0xff] %vm1221, %v2192
        %2196 = vrot.lane.b32.xlu0 %v2063, 88
        %v2197 = vpop.permute.xlu0 %2196
        %s2199 = scalar_lea.vmem %s1070, 8 [#allocation9]
        %2200 = vst.msk [vmem:[%s2199] sm:$0xff] %vm1221, %v2197
        %2202 = vrot.lane.b32.xlu0 %v2074, 120
        %v2203 = vpop.permute.xlu0 %2202
        %2204 = vrot.lane.b32.xlu0 %v2075, 120
        %v2205 = vpop.permute.xlu0 %2204
        %v2207 = vsel %vm1221, %v2203, 0
        %v2210 = vsel %vm1221, %v2205, 0
        %2212 = vmatprep.subr.bf16.mxu0 0
        %2213 = vmatpush1.bf16.xpose.msra.mxu0 %v2210
        %2214 = vmatprep.subr.bf16.mxu0 0
        %2215 = vmatpush1.bf16.xpose.msra.mxu0 0
        %2216 = vmatprep.subr.bf16.mxu0 0
        %2217 = vmatpush1.bf16.xpose.msra.mxu0 0
        %2218 = vmatprep.subr.bf16.mxu0 0
        %2219 = vmatpush1.bf16.xpose.msra.mxu0 0
        %2220 = vmatprep.subr.bf16.mxu0 0
        %2221 = vmatpush1.bf16.xpose.msra.mxu0 0
        %2222 = vmatprep.subr.bf16.mxu0 0
        %2223 = vmatpush1.bf16.xpose.msra.mxu0 0
        %2224 = vmatprep.subr.bf16.mxu0 0
        %2225 = vmatpush1.bf16.xpose.msra.mxu0 0
        %2226 = vmatprep.subr.bf16.mxu0 0
        %2227 = vmatpush1.bf16.xpose.msra.mxu0 0
        %2228 = vmatprep.subr.bf16.mxu0 0
        %2229 = vmatpush1.bf16.xpose.msra.mxu0 0
        %2230 = vmatprep.subr.bf16.mxu0 0
        %2231 = vmatpush1.bf16.xpose.msra.mxu0 0
        %2232 = vmatprep.subr.bf16.mxu0 0
        %2233 = vmatpush1.bf16.xpose.msra.mxu0 0
        %2234 = vmatprep.subr.bf16.mxu0 0
        %2235 = vmatpush1.bf16.xpose.msra.mxu0 0
        %2236 = vmatprep.subr.bf16.mxu0 0
        %2237 = vmatpush1.bf16.xpose.msra.mxu0 0
        %2238 = vmatprep.subr.bf16.mxu0 0
        %2239 = vmatpush1.bf16.xpose.msra.mxu0 0
        %2240 = vmatprep.subr.bf16.mxu0 0
        %2241 = vmatpush1.bf16.xpose.msra.mxu0 0
        %2242 = vmatprep.subr.bf16.mxu0 0
        %2243 = vmatpush1.bf16.xpose.msra.mxu0 0
        %2244 = vmatprep.mubr.bf16.mxu0 0
        %2245 = vmatmul.mubr.bf16.gmra.mrb[0].mxu0 %v2207
        %v2246 = vpop.f32.mrb[0].mxu0
        %v2247 = vadd.f32 %v2080, %v2246
        %v2248 = vpop.f32.mrb[0].mxu0
        %v2249 = vpop.f32.mrb[0].mxu0
        %v2250 = vpop.f32.mrb[0].mxu0
        %2251 = vdwg.mxu0
        %v2252 = vsel %vm1221, %v2247, -inf
        %2253 = vmax.xlane.f32.xlu0 %v2252
        %v2254 = vpop.xlane.xlu0 %2253
        %v2255 = vsub.f32 %v2247, %v2254
        %v2256 = vmul.f32 %v2255, 1.442695
        %v2257 = vpow.pop %v2256
        %v2258 = vsel %vm1221, %v2257, 0.0
        %2259 = vadd.xlane.f32.xlu0 %v2258
        %v2260 = vpop.xlane.xlu0 %2259
        %v2261 = vrcp.pop %v2260
        %v2262 = vmul.f32 %v2257, %v2261
        %v2263 = vpack.c.bf16 %v2262, %v2262
        %2264 = vrot.lane.b32.xlu0 %v2075, 88
        %v2265 = vpop.permute.xlu0 %2264
        %v2267 = vsel %vm1221, %v2263, 0
        %v2270 = vsel %vm1293, %v2265, 0
        %2272 = vmatprep.subr.bf16.mxu0 0
        %2273 = vmatpush1.bf16.msra.mxu0 %v2270
        %2274 = vmatprep.subr.bf16.mxu0 0
        %2275 = vmatpush1.bf16.msra.mxu0 0
        %2276 = vmatprep.subr.bf16.mxu0 0
        %2277 = vmatpush1.bf16.msra.mxu0 0
        %2278 = vmatprep.subr.bf16.mxu0 0
        %2279 = vmatpush1.bf16.msra.mxu0 0
        %2280 = vmatprep.subr.bf16.mxu0 0
        %2281 = vmatpush1.bf16.msra.mxu0 0
        %2282 = vmatprep.subr.bf16.mxu0 0
        %2283 = vmatpush1.bf16.msra.mxu0 0
        %2284 = vmatprep.subr.bf16.mxu0 0
        %2285 = vmatpush1.bf16.msra.mxu0 0
        %2286 = vmatprep.subr.bf16.mxu0 0
        %2287 = vmatpush1.bf16.msra.mxu0 0
        %2288 = vmatprep.subr.bf16.mxu0 0
        %2289 = vmatpush1.bf16.msra.mxu0 0
        %2290 = vmatprep.subr.bf16.mxu0 0
        %2291 = vmatpush1.bf16.msra.mxu0 0
        %2292 = vmatprep.subr.bf16.mxu0 0
        %2293 = vmatpush1.bf16.msra.mxu0 0
        %2294 = vmatprep.subr.bf16.mxu0 0
        %2295 = vmatpush1.bf16.msra.mxu0 0
        %2296 = vmatprep.subr.bf16.mxu0 0
        %2297 = vmatpush1.bf16.msra.mxu0 0
        %2298 = vmatprep.subr.bf16.mxu0 0
        %2299 = vmatpush1.bf16.msra.mxu0 0
        %2300 = vmatprep.subr.bf16.mxu0 0
        %2301 = vmatpush1.bf16.msra.mxu0 0
        %2302 = vmatprep.subr.bf16.mxu0 0
        %2303 = vmatpush1.bf16.msra.mxu0 0
        %2304 = vmatprep.mubr.bf16.mxu0 0
        %2305 = vmatmul.mubr.bf16.gmra.mrb[0].mxu0 %v2267
        %v2306 = vpop.f32.mrb[0].mxu0
        %v2307 = vadd.f32 0.0, %v2306
        %v2308 = vpop.f32.mrb[0].mxu0
        %v2309 = vpop.f32.mrb[0].mxu0
        %v2310 = vpop.f32.mrb[0].mxu0
        %2311 = vdwg.mxu0
        %v2312 = vpack.c.bf16 %v2307, %v2307
        %s2313 = scalar_lea.vmem %s31, 4
        %v2314 = vld [vmem:[%s2313] sm:$0xf]
        %v2316 = vsel %vm1221, %v2312, 0
        %v2319 = vsel %vm1293, %v2314, 0
        %2321 = vmatprep.subr.bf16.mxu0 0
        %2322 = vmatpush1.bf16.msra.mxu0 %v2319
        %2323 = vmatprep.subr.bf16.mxu0 0
        %2324 = vmatpush1.bf16.msra.mxu0 0
        %2325 = vmatprep.subr.bf16.mxu0 0
        %2326 = vmatpush1.bf16.msra.mxu0 0
        %2327 = vmatprep.subr.bf16.mxu0 0
        %2328 = vmatpush1.bf16.msra.mxu0 0
        %2329 = vmatprep.subr.bf16.mxu0 0
        %2330 = vmatpush1.bf16.msra.mxu0 0
        %2331 = vmatprep.subr.bf16.mxu0 0
        %2332 = vmatpush1.bf16.msra.mxu0 0
        %2333 = vmatprep.subr.bf16.mxu0 0
        %2334 = vmatpush1.bf16.msra.mxu0 0
        %2335 = vmatprep.subr.bf16.mxu0 0
        %2336 = vmatpush1.bf16.msra.mxu0 0
        %2337 = vmatprep.subr.bf16.mxu0 0
        %2338 = vmatpush1.bf16.msra.mxu0 0
        %2339 = vmatprep.subr.bf16.mxu0 0
        %2340 = vmatpush1.bf16.msra.mxu0 0
        %2341 = vmatprep.subr.bf16.mxu0 0
        %2342 = vmatpush1.bf16.msra.mxu0 0
        %2343 = vmatprep.subr.bf16.mxu0 0
        %2344 = vmatpush1.bf16.msra.mxu0 0
        %2345 = vmatprep.subr.bf16.mxu0 0
        %2346 = vmatpush1.bf16.msra.mxu0 0
        %2347 = vmatprep.subr.bf16.mxu0 0
        %2348 = vmatpush1.bf16.msra.mxu0 0
        %2349 = vmatprep.subr.bf16.mxu0 0
        %2350 = vmatpush1.bf16.msra.mxu0 0
        %2351 = vmatprep.subr.bf16.mxu0 0
        %2352 = vmatpush1.bf16.msra.mxu0 0
        %2353 = vmatprep.mubr.bf16.mxu0 0
        %2354 = vmatmul.mubr.bf16.gmra.mrb[0].mxu0 %v2316
        %v2355 = vpop.f32.mrb[0].mxu0
        %v2356 = vadd.f32 0.0, %v2355
        %v2357 = vpop.f32.mrb[0].mxu0
        %v2358 = vpop.f32.mrb[0].mxu0
        %v2359 = vpop.f32.mrb[0].mxu0
        %2360 = vdwg.mxu0
        %v2362 = vsel %vm1221, %v2189, 0
        %v2365 = vsel %vm1293, %v2190, 0
        %2367 = vmatprep.subr.bf16.mxu0 0
        %2368 = vmatpush1.bf16.msra.mxu0 %v2365
        %2369 = vmatprep.subr.bf16.mxu0 0
        %2370 = vmatpush1.bf16.msra.mxu0 0
        %2371 = vmatprep.subr.bf16.mxu0 0
        %2372 = vmatpush1.bf16.msra.mxu0 0
        %2373 = vmatprep.subr.bf16.mxu0 0
        %2374 = vmatpush1.bf16.msra.mxu0 0
        %2375 = vmatprep.subr.bf16.mxu0 0
        %2376 = vmatpush1.bf16.msra.mxu0 0
        %2377 = vmatprep.subr.bf16.mxu0 0
        %2378 = vmatpush1.bf16.msra.mxu0 0
        %2379 = vmatprep.subr.bf16.mxu0 0
        %2380 = vmatpush1.bf16.msra.mxu0 0
        %2381 = vmatprep.subr.bf16.mxu0 0
        %2382 = vmatpush1.bf16.msra.mxu0 0
        %2383 = vmatprep.subr.bf16.mxu0 0
        %2384 = vmatpush1.bf16.msra.mxu0 0
        %2385 = vmatprep.subr.bf16.mxu0 0
        %2386 = vmatpush1.bf16.msra.mxu0 0
        %2387 = vmatprep.subr.bf16.mxu0 0
        %2388 = vmatpush1.bf16.msra.mxu0 0
        %2389 = vmatprep.subr.bf16.mxu0 0
        %2390 = vmatpush1.bf16.msra.mxu0 0
        %2391 = vmatprep.subr.bf16.mxu0 0
        %2392 = vmatpush1.bf16.msra.mxu0 0
        %2393 = vmatprep.subr.bf16.mxu0 0
        %2394 = vmatpush1.bf16.msra.mxu0 0
        %2395 = vmatprep.subr.bf16.mxu0 0
        %2396 = vmatpush1.bf16.msra.mxu0 0
        %2397 = vmatprep.subr.bf16.mxu0 0
        %2398 = vmatpush1.bf16.msra.mxu0 0
        %2399 = vmatprep.mubr.bf16.mxu0 0
        %2400 = vmatmul.mubr.bf16.gmra.mrb[0].mxu0 %v2362
        %v2401 = vpop.f32.mrb[0].mxu0
        %v2402 = vadd.f32 %v2356, %v2401
        %v2403 = vpop.f32.mrb[0].mxu0
        %v2404 = vpop.f32.mrb[0].mxu0
        %v2405 = vpop.f32.mrb[0].mxu0
        %2406 = vdwg.mxu0
        %2407 = vrot.lane.b32.xlu0 %v2063, 112
        %v2408 = vpop.permute.xlu0 %2407
        %s2410 = scalar_lea.vmem %s1063, 16 [#allocation7]
        %2411 = vst.msk [vmem:[%s2410] sm:$0xff] %vm1221, %v2408
        %2412 = vrot.lane.b32.xlu0 %v2063, 80
        %v2413 = vpop.permute.xlu0 %2412
        %s2415 = scalar_lea.vmem %s1070, 16 [#allocation9]
        %2416 = vst.msk [vmem:[%s2415] sm:$0xff] %vm1221, %v2413
        %2417 = vrot.lane.b32.xlu0 %v2074, 112
        %v2418 = vpop.permute.xlu0 %2417
        %2419 = vrot.lane.b32.xlu0 %v2075, 112
        %v2420 = vpop.permute.xlu0 %2419
        %v2422 = vsel %vm1221, %v2418, 0
        %v2425 = vsel %vm1221, %v2420, 0
        %2427 = vmatprep.subr.bf16.mxu0 0
        %2428 = vmatpush1.bf16.xpose.msra.mxu0 %v2425
        %2429 = vmatprep.subr.bf16.mxu0 0
        %2430 = vmatpush1.bf16.xpose.msra.mxu0 0
        %2431 = vmatprep.subr.bf16.mxu0 0
        %2432 = vmatpush1.bf16.xpose.msra.mxu0 0
        %2433 = vmatprep.subr.bf16.mxu0 0
        %2434 = vmatpush1.bf16.xpose.msra.mxu0 0
        %2435 = vmatprep.subr.bf16.mxu0 0
        %2436 = vmatpush1.bf16.xpose.msra.mxu0 0
        %2437 = vmatprep.subr.bf16.mxu0 0
        %2438 = vmatpush1.bf16.xpose.msra.mxu0 0
        %2439 = vmatprep.subr.bf16.mxu0 0
        %2440 = vmatpush1.bf16.xpose.msra.mxu0 0
        %2441 = vmatprep.subr.bf16.mxu0 0
        %2442 = vmatpush1.bf16.xpose.msra.mxu0 0
        %2443 = vmatprep.subr.bf16.mxu0 0
        %2444 = vmatpush1.bf16.xpose.msra.mxu0 0
        %2445 = vmatprep.subr.bf16.mxu0 0
        %2446 = vmatpush1.bf16.xpose.msra.mxu0 0
        %2447 = vmatprep.subr.bf16.mxu0 0
        %2448 = vmatpush1.bf16.xpose.msra.mxu0 0
        %2449 = vmatprep.subr.bf16.mxu0 0
        %2450 = vmatpush1.bf16.xpose.msra.mxu0 0
        %2451 = vmatprep.subr.bf16.mxu0 0
        %2452 = vmatpush1.bf16.xpose.msra.mxu0 0
        %2453 = vmatprep.subr.bf16.mxu0 0
        %2454 = vmatpush1.bf16.xpose.msra.mxu0 0
        %2455 = vmatprep.subr.bf16.mxu0 0
        %2456 = vmatpush1.bf16.xpose.msra.mxu0 0
        %2457 = vmatprep.subr.bf16.mxu0 0
        %2458 = vmatpush1.bf16.xpose.msra.mxu0 0
        %2459 = vmatprep.mubr.bf16.mxu0 0
        %2460 = vmatmul.mubr.bf16.gmra.mrb[0].mxu0 %v2422
        %v2461 = vpop.f32.mrb[0].mxu0
        %v2462 = vadd.f32 %v2080, %v2461
        %v2463 = vpop.f32.mrb[0].mxu0
        %v2464 = vpop.f32.mrb[0].mxu0
        %v2465 = vpop.f32.mrb[0].mxu0
        %2466 = vdwg.mxu0
        %v2467 = vsel %vm1221, %v2462, -inf
        %2468 = vmax.xlane.f32.xlu0 %v2467
        %v2469 = vpop.xlane.xlu0 %2468
        %v2470 = vsub.f32 %v2462, %v2469
        %v2471 = vmul.f32 %v2470, 1.442695
        %v2472 = vpow.pop %v2471
        %v2473 = vsel %vm1221, %v2472, 0.0
        %2474 = vadd.xlane.f32.xlu0 %v2473
        %v2475 = vpop.xlane.xlu0 %2474
        %v2476 = vrcp.pop %v2475
        %v2477 = vmul.f32 %v2472, %v2476
        %v2478 = vpack.c.bf16 %v2477, %v2477
        %2479 = vrot.lane.b32.xlu0 %v2075, 80
        %v2480 = vpop.permute.xlu0 %2479
        %v2482 = vsel %vm1221, %v2478, 0
        %v2485 = vsel %vm1293, %v2480, 0
        %2487 = vmatprep.subr.bf16.mxu0 0
        %2488 = vmatpush1.bf16.msra.mxu0 %v2485
        %2489 = vmatprep.subr.bf16.mxu0 0
        %2490 = vmatpush1.bf16.msra.mxu0 0
        %2491 = vmatprep.subr.bf16.mxu0 0
        %2492 = vmatpush1.bf16.msra.mxu0 0
        %2493 = vmatprep.subr.bf16.mxu0 0
        %2494 = vmatpush1.bf16.msra.mxu0 0
        %2495 = vmatprep.subr.bf16.mxu0 0
        %2496 = vmatpush1.bf16.msra.mxu0 0
        %2497 = vmatprep.subr.bf16.mxu0 0
        %2498 = vmatpush1.bf16.msra.mxu0 0
        %2499 = vmatprep.subr.bf16.mxu0 0
        %2500 = vmatpush1.bf16.msra.mxu0 0
        %2501 = vmatprep.subr.bf16.mxu0 0
        %2502 = vmatpush1.bf16.msra.mxu0 0
        %2503 = vmatprep.subr.bf16.mxu0 0
        %2504 = vmatpush1.bf16.msra.mxu0 0
        %2505 = vmatprep.subr.bf16.mxu0 0
        %2506 = vmatpush1.bf16.msra.mxu0 0
        %2507 = vmatprep.subr.bf16.mxu0 0
        %2508 = vmatpush1.bf16.msra.mxu0 0
        %2509 = vmatprep.subr.bf16.mxu0 0
        %2510 = vmatpush1.bf16.msra.mxu0 0
        %2511 = vmatprep.subr.bf16.mxu0 0
        %2512 = vmatpush1.bf16.msra.mxu0 0
        %2513 = vmatprep.subr.bf16.mxu0 0
        %2514 = vmatpush1.bf16.msra.mxu0 0
        %2515 = vmatprep.subr.bf16.mxu0 0
        %2516 = vmatpush1.bf16.msra.mxu0 0
        %2517 = vmatprep.subr.bf16.mxu0 0
        %2518 = vmatpush1.bf16.msra.mxu0 0
        %2519 = vmatprep.mubr.bf16.mxu0 0
        %2520 = vmatmul.mubr.bf16.gmra.mrb[0].mxu0 %v2482
        %v2521 = vpop.f32.mrb[0].mxu0
        %v2522 = vadd.f32 0.0, %v2521
        %v2523 = vpop.f32.mrb[0].mxu0
        %v2524 = vpop.f32.mrb[0].mxu0
        %v2525 = vpop.f32.mrb[0].mxu0
        %2526 = vdwg.mxu0
        %v2527 = vpack.c.bf16 %v2522, %v2522
        %s2528 = scalar_lea.vmem %s31, 8
        %v2529 = vld [vmem:[%s2528] sm:$0xf]
        %v2531 = vsel %vm1221, %v2527, 0
        %v2534 = vsel %vm1293, %v2529, 0
        %2536 = vmatprep.subr.bf16.mxu0 0
        %2537 = vmatpush1.bf16.msra.mxu0 %v2534
        %2538 = vmatprep.subr.bf16.mxu0 0
        %2539 = vmatpush1.bf16.msra.mxu0 0
        %2540 = vmatprep.subr.bf16.mxu0 0
        %2541 = vmatpush1.bf16.msra.mxu0 0
        %2542 = vmatprep.subr.bf16.mxu0 0
        %2543 = vmatpush1.bf16.msra.mxu0 0
        %2544 = vmatprep.subr.bf16.mxu0 0
        %2545 = vmatpush1.bf16.msra.mxu0 0
        %2546 = vmatprep.subr.bf16.mxu0 0
        %2547 = vmatpush1.bf16.msra.mxu0 0
        %2548 = vmatprep.subr.bf16.mxu0 0
        %2549 = vmatpush1.bf16.msra.mxu0 0
        %2550 = vmatprep.subr.bf16.mxu0 0
        %2551 = vmatpush1.bf16.msra.mxu0 0
        %2552 = vmatprep.subr.bf16.mxu0 0
        %2553 = vmatpush1.bf16.msra.mxu0 0
        %2554 = vmatprep.subr.bf16.mxu0 0
        %2555 = vmatpush1.bf16.msra.mxu0 0
        %2556 = vmatprep.subr.bf16.mxu0 0
        %2557 = vmatpush1.bf16.msra.mxu0 0
        %2558 = vmatprep.subr.bf16.mxu0 0
        %2559 = vmatpush1.bf16.msra.mxu0 0
        %2560 = vmatprep.subr.bf16.mxu0 0
        %2561 = vmatpush1.bf16.msra.mxu0 0
        %2562 = vmatprep.subr.bf16.mxu0 0
        %2563 = vmatpush1.bf16.msra.mxu0 0
        %2564 = vmatprep.subr.bf16.mxu0 0
        %2565 = vmatpush1.bf16.msra.mxu0 0
        %2566 = vmatprep.subr.bf16.mxu0 0
        %2567 = vmatpush1.bf16.msra.mxu0 0
        %2568 = vmatprep.mubr.bf16.mxu0 0
        %2569 = vmatmul.mubr.bf16.gmra.mrb[0].mxu0 %v2531
        %v2570 = vpop.f32.mrb[0].mxu0
        %v2571 = vadd.f32 0.0, %v2570
        %v2572 = vpop.f32.mrb[0].mxu0
        %v2573 = vpop.f32.mrb[0].mxu0
        %v2574 = vpop.f32.mrb[0].mxu0
        %2575 = vdwg.mxu0
        %v2576 = vadd.f32 %v2402, %v2571
        %2577 = vrot.lane.b32.xlu0 %v2063, 104
        %v2578 = vpop.permute.xlu0 %2577
        %s2580 = scalar_lea.vmem %s1063, 24 [#allocation7]
        %2581 = vst.msk [vmem:[%s2580] sm:$0xff] %vm1221, %v2578
        %2582 = vrot.lane.b32.xlu0 %v2063, 72
        %v2583 = vpop.permute.xlu0 %2582
        %s2585 = scalar_lea.vmem %s1070, 24 [#allocation9]
        %2586 = vst.msk [vmem:[%s2585] sm:$0xff] %vm1221, %v2583
        %2587 = vrot.lane.b32.xlu0 %v2074, 104
        %v2588 = vpop.permute.xlu0 %2587
        %2589 = vrot.lane.b32.xlu0 %v2075, 104
        %v2590 = vpop.permute.xlu0 %2589
        %v2592 = vsel %vm1221, %v2588, 0
        %v2595 = vsel %vm1221, %v2590, 0
        %2597 = vmatprep.subr.bf16.mxu0 0
        %2598 = vmatpush1.bf16.xpose.msra.mxu0 %v2595
        %2599 = vmatprep.subr.bf16.mxu0 0
        %2600 = vmatpush1.bf16.xpose.msra.mxu0 0
        %2601 = vmatprep.subr.bf16.mxu0 0
        %2602 = vmatpush1.bf16.xpose.msra.mxu0 0
        %2603 = vmatprep.subr.bf16.mxu0 0
        %2604 = vmatpush1.bf16.xpose.msra.mxu0 0
        %2605 = vmatprep.subr.bf16.mxu0 0
        %2606 = vmatpush1.bf16.xpose.msra.mxu0 0
        %2607 = vmatprep.subr.bf16.mxu0 0
        %2608 = vmatpush1.bf16.xpose.msra.mxu0 0
        %2609 = vmatprep.subr.bf16.mxu0 0
        %2610 = vmatpush1.bf16.xpose.msra.mxu0 0
        %2611 = vmatprep.subr.bf16.mxu0 0
        %2612 = vmatpush1.bf16.xpose.msra.mxu0 0
        %2613 = vmatprep.subr.bf16.mxu0 0
        %2614 = vmatpush1.bf16.xpose.msra.mxu0 0
        %2615 = vmatprep.subr.bf16.mxu0 0
        %2616 = vmatpush1.bf16.xpose.msra.mxu0 0
        %2617 = vmatprep.subr.bf16.mxu0 0
        %2618 = vmatpush1.bf16.xpose.msra.mxu0 0
        %2619 = vmatprep.subr.bf16.mxu0 0
        %2620 = vmatpush1.bf16.xpose.msra.mxu0 0
        %2621 = vmatprep.subr.bf16.mxu0 0
        %2622 = vmatpush1.bf16.xpose.msra.mxu0 0
        %2623 = vmatprep.subr.bf16.mxu0 0
        %2624 = vmatpush1.bf16.xpose.msra.mxu0 0
        %2625 = vmatprep.subr.bf16.mxu0 0
        %2626 = vmatpush1.bf16.xpose.msra.mxu0 0
        %2627 = vmatprep.subr.bf16.mxu0 0
        %2628 = vmatpush1.bf16.xpose.msra.mxu0 0
        %2629 = vmatprep.mubr.bf16.mxu0 0
        %2630 = vmatmul.mubr.bf16.gmra.mrb[0].mxu0 %v2592
        %v2631 = vpop.f32.mrb[0].mxu0
        %v2632 = vadd.f32 %v2080, %v2631
        %v2633 = vpop.f32.mrb[0].mxu0
        %v2634 = vpop.f32.mrb[0].mxu0
        %v2635 = vpop.f32.mrb[0].mxu0
        %2636 = vdwg.mxu0
        %v2637 = vsel %vm1221, %v2632, -inf
        %2638 = vmax.xlane.f32.xlu0 %v2637
        %v2639 = vpop.xlane.xlu0 %2638
        %v2640 = vsub.f32 %v2632, %v2639
        %v2641 = vmul.f32 %v2640, 1.442695
        %v2642 = vpow.pop %v2641
        %v2643 = vsel %vm1221, %v2642, 0.0
        %2644 = vadd.xlane.f32.xlu0 %v2643
        %v2645 = vpop.xlane.xlu0 %2644
        %v2646 = vrcp.pop %v2645
        %v2647 = vmul.f32 %v2642, %v2646
        %v2648 = vpack.c.bf16 %v2647, %v2647
        %2649 = vrot.lane.b32.xlu0 %v2075, 72
        %v2650 = vpop.permute.xlu0 %2649
        %v2652 = vsel %vm1221, %v2648, 0
        %v2655 = vsel %vm1293, %v2650, 0
        %2657 = vmatprep.subr.bf16.mxu0 0
        %2658 = vmatpush1.bf16.msra.mxu0 %v2655
        %2659 = vmatprep.subr.bf16.mxu0 0
        %2660 = vmatpush1.bf16.msra.mxu0 0
        %2661 = vmatprep.subr.bf16.mxu0 0
        %2662 = vmatpush1.bf16.msra.mxu0 0
        %2663 = vmatprep.subr.bf16.mxu0 0
        %2664 = vmatpush1.bf16.msra.mxu0 0
        %2665 = vmatprep.subr.bf16.mxu0 0
        %2666 = vmatpush1.bf16.msra.mxu0 0
        %2667 = vmatprep.subr.bf16.mxu0 0
        %2668 = vmatpush1.bf16.msra.mxu0 0
        %2669 = vmatprep.subr.bf16.mxu0 0
        %2670 = vmatpush1.bf16.msra.mxu0 0
        %2671 = vmatprep.subr.bf16.mxu0 0
        %2672 = vmatpush1.bf16.msra.mxu0 0
        %2673 = vmatprep.subr.bf16.mxu0 0
        %2674 = vmatpush1.bf16.msra.mxu0 0
        %2675 = vmatprep.subr.bf16.mxu0 0
        %2676 = vmatpush1.bf16.msra.mxu0 0
        %2677 = vmatprep.subr.bf16.mxu0 0
        %2678 = vmatpush1.bf16.msra.mxu0 0
        %2679 = vmatprep.subr.bf16.mxu0 0
        %2680 = vmatpush1.bf16.msra.mxu0 0
        %2681 = vmatprep.subr.bf16.mxu0 0
        %2682 = vmatpush1.bf16.msra.mxu0 0
        %2683 = vmatprep.subr.bf16.mxu0 0
        %2684 = vmatpush1.bf16.msra.mxu0 0
        %2685 = vmatprep.subr.bf16.mxu0 0
        %2686 = vmatpush1.bf16.msra.mxu0 0
        %2687 = vmatprep.subr.bf16.mxu0 0
        %2688 = vmatpush1.bf16.msra.mxu0 0
        %2689 = vmatprep.mubr.bf16.mxu0 0
        %2690 = vmatmul.mubr.bf16.gmra.mrb[0].mxu0 %v2652
        %v2691 = vpop.f32.mrb[0].mxu0
        %v2692 = vadd.f32 0.0, %v2691
        %v2693 = vpop.f32.mrb[0].mxu0
        %v2694 = vpop.f32.mrb[0].mxu0
        %v2695 = vpop.f32.mrb[0].mxu0
        %2696 = vdwg.mxu0
        %v2697 = vpack.c.bf16 %v2692, %v2692
        %s2698 = scalar_lea.vmem %s31, 12
        %v2699 = vld [vmem:[%s2698] sm:$0xf]
        %v2701 = vsel %vm1221, %v2697, 0
        %v2704 = vsel %vm1293, %v2699, 0
        %2706 = vmatprep.subr.bf16.mxu0 0
        %2707 = vmatpush1.bf16.msra.mxu0 %v2704
        %2708 = vmatprep.subr.bf16.mxu0 0
        %2709 = vmatpush1.bf16.msra.mxu0 0
        %2710 = vmatprep.subr.bf16.mxu0 0
        %2711 = vmatpush1.bf16.msra.mxu0 0
        %2712 = vmatprep.subr.bf16.mxu0 0
        %2713 = vmatpush1.bf16.msra.mxu0 0
        %2714 = vmatprep.subr.bf16.mxu0 0
        %2715 = vmatpush1.bf16.msra.mxu0 0
        %2716 = vmatprep.subr.bf16.mxu0 0
        %2717 = vmatpush1.bf16.msra.mxu0 0
        %2718 = vmatprep.subr.bf16.mxu0 0
        %2719 = vmatpush1.bf16.msra.mxu0 0
        %2720 = vmatprep.subr.bf16.mxu0 0
        %2721 = vmatpush1.bf16.msra.mxu0 0
        %2722 = vmatprep.subr.bf16.mxu0 0
        %2723 = vmatpush1.bf16.msra.mxu0 0
        %2724 = vmatprep.subr.bf16.mxu0 0
        %2725 = vmatpush1.bf16.msra.mxu0 0
        %2726 = vmatprep.subr.bf16.mxu0 0
        %2727 = vmatpush1.bf16.msra.mxu0 0
        %2728 = vmatprep.subr.bf16.mxu0 0
        %2729 = vmatpush1.bf16.msra.mxu0 0
        %2730 = vmatprep.subr.bf16.mxu0 0
        %2731 = vmatpush1.bf16.msra.mxu0 0
        %2732 = vmatprep.subr.bf16.mxu0 0
        %2733 = vmatpush1.bf16.msra.mxu0 0
        %2734 = vmatprep.subr.bf16.mxu0 0
        %2735 = vmatpush1.bf16.msra.mxu0 0
        %2736 = vmatprep.subr.bf16.mxu0 0
        %2737 = vmatpush1.bf16.msra.mxu0 0
        %2738 = vmatprep.mubr.bf16.mxu0 0
        %2739 = vmatmul.mubr.bf16.gmra.mrb[0].mxu0 %v2701
        %v2740 = vpop.f32.mrb[0].mxu0
        %v2741 = vadd.f32 0.0, %v2740
        %v2742 = vpop.f32.mrb[0].mxu0
        %v2743 = vpop.f32.mrb[0].mxu0
        %v2744 = vpop.f32.mrb[0].mxu0
        %2745 = vdwg.mxu0
        %v2746 = vadd.f32 %v2576, %v2741
        %v2747 = vld [vmem:[%s33] sm:$0x1]
        %v2749 = vlaneseq
        %v2750 = vshrl.u32 %v2749, 7
        %v2751 = vsub.s32 0, %v2750
        %v2752 = vrot.slane %v2747, %v2751
        %v2754 = vadd.f32 %v2746, %v2752
        %v2755 = vadd.f32 %v1932, %v2754
        %v2756 = vld [vmem:[%s35] sm:$0x1]
        %v2757 = vld [vmem:[%s37] sm:$0x1]
        %v2758 = vsel %vm1114, %v2755, 0.0
        %2759 = vadd.xlane.f32.xlu0 %v2758
        %v2760 = vpop.xlane.xlu0 %2759
        %v2761 = vmul.f32 %v2760, %v1118
        %v2762 = vsub.f32 %v2755, %v2761
        %v2763 = vmul.f32 %v2762, %v2762
        %v2764 = vsel %vm1114, %v2763, 0.0
        %2765 = vadd.xlane.f32.xlu0 %v2764
        %v2766 = vpop.xlane.xlu0 %2765
        %v2767 = vmul.f32 %v2766, %v1118
        %v2768 = vadd.f32 %v2767, 1e-05
        %v2769 = vrsqrt.pop %v2768
        %v2770 = vmul.f32 %v2762, %v2769
        %v2772 = vlaneseq
        %v2773 = vshrl.u32 %v2772, 7
        %v2774 = vsub.s32 0, %v2773
        %v2775 = vrot.slane %v2756, %v2774
        %v2777 = vmul.f32 %v2770, %v2775
        %v2779 = vlaneseq
        %v2780 = vshrl.u32 %v2779, 7
        %v2781 = vsub.s32 0, %v2780
        %v2782 = vrot.slane %v2757, %v2781
        %v2784 = vadd.f32 %v2777, %v2782
        %v2785 = vld [vmem:[%s39] sm:$0xf]
        %v2786 = vld [vmem:[%s39 + $0x4] sm:$0xf]
        %v2787 = vld [vmem:[%s39 + $0x8] sm:$0xf]
        %v2788 = vld [vmem:[%s39 + $0xc] sm:$0xf]
        %v2789 = vld [vmem:[%s41] sm:$0x1]
        %v2790 = vpack.c.bf16 %v2784, %v2784
        %v2792 = vlaneseq
        %v2793 = vshrl.u32 %v2792, 7
        %v2794 = vsub.s32 0, %v2793
        %v2795 = vrot.slane %v2789, %v2794
        %v2801 = vunpack.c.l.b16 %v2785
        %v2802 = vunpack.c.l.b16 %v2786
        %v2803 = vunpack.c.l.b16 %v2787
        %v2804 = vunpack.c.l.b16 %v2788
        %v2805 = vpack.c.b16 %v2802, %v2801
        %v2806 = vpack.c.b16 %v2804, %v2803
        %v2810 = vsel %vm1114, %v2790, 0
        %2812 = vmatprep.subr.bf16.mxu0 0
        %2813 = vmatpush1.bf16.msra.mxu0 %v2805
        %2814 = vmatprep.subr.bf16.mxu0 0
        %2815 = vmatpush1.bf16.msra.mxu0 %v2806
        %2816 = vmatprep.subr.bf16.mxu0 0
        %2817 = vmatpush1.bf16.msra.mxu0 0
        %2818 = vmatprep.subr.bf16.mxu0 0
        %2819 = vmatpush1.bf16.msra.mxu0 0
        %2820 = vmatprep.subr.bf16.mxu0 0
        %2821 = vmatpush1.bf16.msra.mxu0 0
        %2822 = vmatprep.subr.bf16.mxu0 0
        %2823 = vmatpush1.bf16.msra.mxu0 0
        %2824 = vmatprep.subr.bf16.mxu0 0
        %2825 = vmatpush1.bf16.msra.mxu0 0
        %2826 = vmatprep.subr.bf16.mxu0 0
        %2827 = vmatpush1.bf16.msra.mxu0 0
        %2828 = vmatprep.subr.bf16.mxu0 0
        %2829 = vmatpush1.bf16.msra.mxu0 0
        %2830 = vmatprep.subr.bf16.mxu0 0
        %2831 = vmatpush1.bf16.msra.mxu0 0
        %2832 = vmatprep.subr.bf16.mxu0 0
        %2833 = vmatpush1.bf16.msra.mxu0 0
        %2834 = vmatprep.subr.bf16.mxu0 0
        %2835 = vmatpush1.bf16.msra.mxu0 0
        %2836 = vmatprep.subr.bf16.mxu0 0
        %2837 = vmatpush1.bf16.msra.mxu0 0
        %2838 = vmatprep.subr.bf16.mxu0 0
        %2839 = vmatpush1.bf16.msra.mxu0 0
        %2840 = vmatprep.subr.bf16.mxu0 0
        %2841 = vmatpush1.bf16.msra.mxu0 0
        %2842 = vmatprep.subr.bf16.mxu0 0
        %2843 = vmatpush1.bf16.msra.mxu0 0
        %2844 = vmatprep.mubr.bf16.mxu0 0
        %2845 = vmatmul.mubr.bf16.gmra.mrb[0].mxu0 %v2810
        %v2846 = vpop.f32.mrb[0].mxu0
        %v2847 = vadd.f32 %v2795, %v2846
        %v2848 = vpop.f32.mrb[0].mxu0
        %v2849 = vpop.f32.mrb[0].mxu0
        %v2850 = vpop.f32.mrb[0].mxu0
        %2851 = vdwg.mxu0
        %v2852 = vmul.f32 %v2847, 0.5
        %v2853 = vmul.f32 %v2847, 0.044715
        %v2854 = vmul.f32 %v2853, %v2847
        %v2855 = vmul.f32 %v2854, %v2847
        %v2856 = vadd.f32 %v2847, %v2855
        %v2857 = vmul.f32 %v2856, 0.7978846
        %v2858 = vtanh.pop %v2857
        %v2859 = vadd.f32 %v2858, 1.0
        %v2860 = vmul.f32 %v2852, %v2859
        %v2861 = vld [vmem:[%s43] sm:$0xf]
        %v2862 = vld [vmem:[%s43 + $0x4] sm:$0xf]
        %v2863 = vld [vmem:[%s43 + $0x8] sm:$0xf]
        %v2864 = vld [vmem:[%s43 + $0xc] sm:$0xf]
        %v2865 = vld [vmem:[%s43 + $0x10] sm:$0xf]
        %v2866 = vld [vmem:[%s43 + $0x14] sm:$0xf]
        %v2867 = vld [vmem:[%s43 + $0x18] sm:$0xf]
        %v2868 = vld [vmem:[%s43 + $0x1c] sm:$0xf]
        %v2869 = vld [vmem:[%s45] sm:$0x1]
        %v2870 = vpack.c.bf16 %v2860, %v2860
        %v2872 = vlaneseq
        %v2873 = vshrl.u32 %v2872, 7
        %v2874 = vsub.s32 0, %v2873
        %v2875 = vrot.slane %v2869, %v2874
        %v2885 = vunpack.c.l.b16 %v2861
        %v2886 = vunpack.c.l.b16 %v2862
        %v2887 = vunpack.c.l.b16 %v2863
        %v2888 = vunpack.c.l.b16 %v2864
        %v2889 = vunpack.c.l.b16 %v2865
        %v2890 = vunpack.c.l.b16 %v2866
        %v2891 = vunpack.c.l.b16 %v2867
        %v2892 = vunpack.c.l.b16 %v2868
        %v2893 = vpack.c.b16 %v2886, %v2885
        %v2894 = vpack.c.b16 %v2888, %v2887
        %v2895 = vpack.c.b16 %v2890, %v2889
        %v2896 = vpack.c.b16 %v2892, %v2891
        %vm2901 = vcmask 523264
        %v2903 = vsel %vm2901, %v2870, 0
        %2905 = vmatprep.subr.bf16.mxu0 0
        %2906 = vmatpush1.bf16.msra.mxu0 %v2893
        %2907 = vmatprep.subr.bf16.mxu0 0
        %2908 = vmatpush1.bf16.msra.mxu0 %v2894
        %2909 = vmatprep.subr.bf16.mxu0 0
        %2910 = vmatpush1.bf16.msra.mxu0 %v2895
        %2911 = vmatprep.subr.bf16.mxu0 0
        %2912 = vmatpush1.bf16.msra.mxu0 %v2896
        %2913 = vmatprep.subr.bf16.mxu0 0
        %2914 = vmatpush1.bf16.msra.mxu0 0
        %2915 = vmatprep.subr.bf16.mxu0 0
        %2916 = vmatpush1.bf16.msra.mxu0 0
        %2917 = vmatprep.subr.bf16.mxu0 0
        %2918 = vmatpush1.bf16.msra.mxu0 0
        %2919 = vmatprep.subr.bf16.mxu0 0
        %2920 = vmatpush1.bf16.msra.mxu0 0
        %2921 = vmatprep.subr.bf16.mxu0 0
        %2922 = vmatpush1.bf16.msra.mxu0 0
        %2923 = vmatprep.subr.bf16.mxu0 0
        %2924 = vmatpush1.bf16.msra.mxu0 0
        %2925 = vmatprep.subr.bf16.mxu0 0
        %2926 = vmatpush1.bf16.msra.mxu0 0
        %2927 = vmatprep.subr.bf16.mxu0 0
        %2928 = vmatpush1.bf16.msra.mxu0 0
        %2929 = vmatprep.subr.bf16.mxu0 0
        %2930 = vmatpush1.bf16.msra.mxu0 0
        %2931 = vmatprep.subr.bf16.mxu0 0
        %2932 = vmatpush1.bf16.msra.mxu0 0
        %2933 = vmatprep.subr.bf16.mxu0 0
        %2934 = vmatpush1.bf16.msra.mxu0 0
        %2935 = vmatprep.subr.bf16.mxu0 0
        %2936 = vmatpush1.bf16.msra.mxu0 0
        %2937 = vmatprep.mubr.bf16.mxu0 0
        %2938 = vmatmul.mubr.bf16.gmra.mrb[0].mxu0 %v2903
        %v2939 = vpop.f32.mrb[0].mxu0
        %v2940 = vadd.f32 %v2875, %v2939
        %v2941 = vpop.f32.mrb[0].mxu0
        %v2942 = vpop.f32.mrb[0].mxu0
        %v2943 = vpop.f32.mrb[0].mxu0
        %2944 = vdwg.mxu0
        %v2945 = vadd.f32 %v2784, %v2940
        %v2946 = vld [vmem:[%s47] sm:$0x1]
        %v2947 = vld [vmem:[%s49] sm:$0x1]
        %v2948 = vsel %vm1114, %v2945, 0.0
        %2949 = vadd.xlane.f32.xlu0 %v2948
        %v2950 = vpop.xlane.xlu0 %2949
        %v2951 = vmul.f32 %v2950, %v1118
        %v2952 = vsub.f32 %v2945, %v2951
        %v2953 = vmul.f32 %v2952, %v2952
        %v2954 = vsel %vm1114, %v2953, 0.0
        %2955 = vadd.xlane.f32.xlu0 %v2954
        %v2956 = vpop.xlane.xlu0 %2955
        %v2957 = vmul.f32 %v2956, %v1118
        %v2958 = vadd.f32 %v2957, 1e-05
        %v2959 = vrsqrt.pop %v2958
        %v2960 = vmul.f32 %v2952, %v2959
        %v2962 = vlaneseq
        %v2963 = vshrl.u32 %v2962, 7
        %v2964 = vsub.s32 0, %v2963
        %v2965 = vrot.slane %v2946, %v2964
        %v2967 = vmul.f32 %v2960, %v2965
        %v2969 = vlaneseq
        %v2970 = vshrl.u32 %v2969, 7
        %v2971 = vsub.s32 0, %v2970
        %v2972 = vrot.slane %v2947, %v2971
        %v2974 = vadd.f32 %v2967, %v2972
        %s2975 = scalar_lea.vmem %s11, 16
        %v2976 = vld [vmem:[%s2975] sm:$0xf]
        %v2977 = vld [vmem:[%s2975 + $0x4] sm:$0xf]
        %v2978 = vld [vmem:[%s2975 + $0x8] sm:$0xf]
        %v2979 = vld [vmem:[%s2975 + $0xc] sm:$0xf]
        %s2980 = scalar_lea.vmem %s13, 1
        %v2981 = vld [vmem:[%s2980] sm:$0x1]
        %v2982 = vpack.c.bf16 %v2974, %v2974
        %v2984 = vlaneseq
        %v2985 = vshrl.u32 %v2984, 7
        %v2986 = vsub.s32 0, %v2985
        %v2987 = vrot.slane %v2981, %v2986
        %v2993 = vunpack.c.l.b16 %v2976
        %v2994 = vunpack.c.l.b16 %v2977
        %v2995 = vunpack.c.l.b16 %v2978
        %v2996 = vunpack.c.l.b16 %v2979
        %v2997 = vpack.c.b16 %v2994, %v2993
        %v2998 = vpack.c.b16 %v2996, %v2995
        %v3002 = vsel %vm1114, %v2982, 0
        %3004 = vmatprep.subr.bf16.mxu0 0
        %3005 = vmatpush1.bf16.msra.mxu0 %v2997
        %3006 = vmatprep.subr.bf16.mxu0 0
        %3007 = vmatpush1.bf16.msra.mxu0 %v2998
        %3008 = vmatprep.subr.bf16.mxu0 0
        %3009 = vmatpush1.bf16.msra.mxu0 0
        %3010 = vmatprep.subr.bf16.mxu0 0
        %3011 = vmatpush1.bf16.msra.mxu0 0
        %3012 = vmatprep.subr.bf16.mxu0 0
        %3013 = vmatpush1.bf16.msra.mxu0 0
        %3014 = vmatprep.subr.bf16.mxu0 0
        %3015 = vmatpush1.bf16.msra.mxu0 0
        %3016 = vmatprep.subr.bf16.mxu0 0
        %3017 = vmatpush1.bf16.msra.mxu0 0
        %3018 = vmatprep.subr.bf16.mxu0 0
        %3019 = vmatpush1.bf16.msra.mxu0 0
        %3020 = vmatprep.subr.bf16.mxu0 0
        %3021 = vmatpush1.bf16.msra.mxu0 0
        %3022 = vmatprep.subr.bf16.mxu0 0
        %3023 = vmatpush1.bf16.msra.mxu0 0
        %3024 = vmatprep.subr.bf16.mxu0 0
        %3025 = vmatpush1.bf16.msra.mxu0 0
        %3026 = vmatprep.subr.bf16.mxu0 0
        %3027 = vmatpush1.bf16.msra.mxu0 0
        %3028 = vmatprep.subr.bf16.mxu0 0
        %3029 = vmatpush1.bf16.msra.mxu0 0
        %3030 = vmatprep.subr.bf16.mxu0 0
        %3031 = vmatpush1.bf16.msra.mxu0 0
        %3032 = vmatprep.subr.bf16.mxu0 0
        %3033 = vmatpush1.bf16.msra.mxu0 0
        %3034 = vmatprep.subr.bf16.mxu0 0
        %3035 = vmatpush1.bf16.msra.mxu0 0
        %3036 = vmatprep.mubr.bf16.mxu0 0
        %3037 = vmatmul.mubr.bf16.gmra.mrb[0].mxu0 %v3002
        %v3038 = vpop.f32.mrb[0].mxu0
        %v3039 = vadd.f32 %v2987, %v3038
        %v3040 = vpop.f32.mrb[0].mxu0
        %v3041 = vpop.f32.mrb[0].mxu0
        %v3042 = vpop.f32.mrb[0].mxu0
        %3043 = vdwg.mxu0
        %3045 = vrot.lane.b32.xlu0 %v3039, 96
        %v3046 = vpop.permute.xlu0 %3045
        %3048 = vst.msk [vmem:[%s1077] sm:$0xff] %vm1221, %v3046
        %3049 = vrot.lane.b32.xlu0 %v3039, 64
        %v3050 = vpop.permute.xlu0 %3049
        %3052 = vst.msk [vmem:[%s1084] sm:$0xff] %vm1221, %v3050
        %v3053 = vld [vmem:[%s1077] sm:$0xff]
        %v3054 = vld [vmem:[%s1084] sm:$0xff]
        %v3055 = vpack.c.bf16 %v3039, %v3039
        %v3056 = vpack.c.bf16 %v3053, %v3053
        %v3058 = vsel %vm1221, %v3055, 0
        %v3061 = vsel %vm1221, %v3056, 0
        %3063 = vmatprep.subr.bf16.mxu0 0
        %3064 = vmatpush1.bf16.xpose.msra.mxu0 %v3061
        %3065 = vmatprep.subr.bf16.mxu0 0
        %3066 = vmatpush1.bf16.xpose.msra.mxu0 0
        %3067 = vmatprep.subr.bf16.mxu0 0
        %3068 = vmatpush1.bf16.xpose.msra.mxu0 0
        %3069 = vmatprep.subr.bf16.mxu0 0
        %3070 = vmatpush1.bf16.xpose.msra.mxu0 0
        %3071 = vmatprep.subr.bf16.mxu0 0
        %3072 = vmatpush1.bf16.xpose.msra.mxu0 0
        %3073 = vmatprep.subr.bf16.mxu0 0
        %3074 = vmatpush1.bf16.xpose.msra.mxu0 0
        %3075 = vmatprep.subr.bf16.mxu0 0
        %3076 = vmatpush1.bf16.xpose.msra.mxu0 0
        %3077 = vmatprep.subr.bf16.mxu0 0
        %3078 = vmatpush1.bf16.xpose.msra.mxu0 0
        %3079 = vmatprep.subr.bf16.mxu0 0
        %3080 = vmatpush1.bf16.xpose.msra.mxu0 0
        %3081 = vmatprep.subr.bf16.mxu0 0
        %3082 = vmatpush1.bf16.xpose.msra.mxu0 0
        %3083 = vmatprep.subr.bf16.mxu0 0
        %3084 = vmatpush1.bf16.xpose.msra.mxu0 0
        %3085 = vmatprep.subr.bf16.mxu0 0
        %3086 = vmatpush1.bf16.xpose.msra.mxu0 0
        %3087 = vmatprep.subr.bf16.mxu0 0
        %3088 = vmatpush1.bf16.xpose.msra.mxu0 0
        %3089 = vmatprep.subr.bf16.mxu0 0
        %3090 = vmatpush1.bf16.xpose.msra.mxu0 0
        %3091 = vmatprep.subr.bf16.mxu0 0
        %3092 = vmatpush1.bf16.xpose.msra.mxu0 0
        %3093 = vmatprep.subr.bf16.mxu0 0
        %3094 = vmatpush1.bf16.xpose.msra.mxu0 0
        %3095 = vmatprep.mubr.bf16.mxu0 0
        %3096 = vmatmul.mubr.bf16.gmra.mrb[0].mxu0 %v3058
        %v3097 = vpop.f32.mrb[0].mxu0
        %v3098 = vadd.f32 %v1149, %v3097
        %v3099 = vpop.f32.mrb[0].mxu0
        %v3100 = vpop.f32.mrb[0].mxu0
        %v3101 = vpop.f32.mrb[0].mxu0
        %3102 = vdwg.mxu0
        %v3103 = vsel %vm1221, %v3098, -inf
        %3104 = vmax.xlane.f32.xlu0 %v3103
        %v3105 = vpop.xlane.xlu0 %3104
        %v3106 = vsub.f32 %v3098, %v3105
        %v3107 = vmul.f32 %v3106, 1.442695
        %v3108 = vpow.pop %v3107
        %v3109 = vsel %vm1221, %v3108, 0.0
        %3110 = vadd.xlane.f32.xlu0 %v3109
        %v3111 = vpop.xlane.xlu0 %3110
        %v3112 = vrcp.pop %v3111
        %v3113 = vmul.f32 %v3108, %v3112
        %v3114 = vpack.c.bf16 %v3113, %v3113
        %v3115 = vpack.c.bf16 %v3054, %v3054
        %v3117 = vsel %vm1221, %v3114, 0
        %v3120 = vsel %vm1293, %v3115, 0
        %3122 = vmatprep.subr.bf16.mxu0 0
        %3123 = vmatpush1.bf16.msra.mxu0 %v3120
        %3124 = vmatprep.subr.bf16.mxu0 0
        %3125 = vmatpush1.bf16.msra.mxu0 0
        %3126 = vmatprep.subr.bf16.mxu0 0
        %3127 = vmatpush1.bf16.msra.mxu0 0
        %3128 = vmatprep.subr.bf16.mxu0 0
        %3129 = vmatpush1.bf16.msra.mxu0 0
        %3130 = vmatprep.subr.bf16.mxu0 0
        %3131 = vmatpush1.bf16.msra.mxu0 0
        %3132 = vmatprep.subr.bf16.mxu0 0
        %3133 = vmatpush1.bf16.msra.mxu0 0
        %3134 = vmatprep.subr.bf16.mxu0 0
        %3135 = vmatpush1.bf16.msra.mxu0 0
        %3136 = vmatprep.subr.bf16.mxu0 0
        %3137 = vmatpush1.bf16.msra.mxu0 0
        %3138 = vmatprep.subr.bf16.mxu0 0
        %3139 = vmatpush1.bf16.msra.mxu0 0
        %3140 = vmatprep.subr.bf16.mxu0 0
        %3141 = vmatpush1.bf16.msra.mxu0 0
        %3142 = vmatprep.subr.bf16.mxu0 0
        %3143 = vmatpush1.bf16.msra.mxu0 0
        %3144 = vmatprep.subr.bf16.mxu0 0
        %3145 = vmatpush1.bf16.msra.mxu0 0
        %3146 = vmatprep.subr.bf16.mxu0 0
        %3147 = vmatpush1.bf16.msra.mxu0 0
        %3148 = vmatprep.subr.bf16.mxu0 0
        %3149 = vmatpush1.bf16.msra.mxu0 0
        %3150 = vmatprep.subr.bf16.mxu0 0
        %3151 = vmatpush1.bf16.msra.mxu0 0
        %3152 = vmatprep.subr.bf16.mxu0 0
        %3153 = vmatpush1.bf16.msra.mxu0 0
        %3154 = vmatprep.mubr.bf16.mxu0 0
        %3155 = vmatmul.mubr.bf16.gmra.mrb[0].mxu0 %v3117
        %v3156 = vpop.f32.mrb[0].mxu0
        %v3157 = vadd.f32 0.0, %v3156
        %v3158 = vpop.f32.mrb[0].mxu0
        %v3159 = vpop.f32.mrb[0].mxu0
        %v3160 = vpop.f32.mrb[0].mxu0
        %3161 = vdwg.mxu0
        %v3162 = vpack.c.bf16 %v3157, %v3157
        %s3163 = scalar_lea.vmem %s15, 16
        %v3164 = vld [vmem:[%s3163] sm:$0xf]
        %3165 = vrot.lane.b32.xlu0 %v3039, 88
        %v3166 = vpop.permute.xlu0 %3165
        %s3168 = scalar_lea.vmem %s1077, 8 [#allocation10]
        %3169 = vst.msk [vmem:[%s3168] sm:$0xff] %vm1221, %v3166
        %3170 = vrot.lane.b32.xlu0 %v3039, 56
        %v3171 = vpop.permute.xlu0 %3170
        %s3173 = scalar_lea.vmem %s1084, 8 [#allocation12]
        %3174 = vst.msk [vmem:[%s3173] sm:$0xff] %vm1221, %v3171
        %v3175 = vld [vmem:[%s3168] sm:$0xff]
        %v3176 = vld [vmem:[%s3173] sm:$0xff]
        %v3177 = vpack.c.bf16 %v3175, %v3175
        %3179 = vrot.lane.b32.xlu0 %v3055, 120
        %v3180 = vpop.permute.xlu0 %3179
        %v3182 = vsel %vm1221, %v3180, 0
        %v3185 = vsel %vm1221, %v3177, 0
        %3187 = vmatprep.subr.bf16.mxu0 0
        %3188 = vmatpush1.bf16.xpose.msra.mxu0 %v3185
        %3189 = vmatprep.subr.bf16.mxu0 0
        %3190 = vmatpush1.bf16.xpose.msra.mxu0 0
        %3191 = vmatprep.subr.bf16.mxu0 0
        %3192 = vmatpush1.bf16.xpose.msra.mxu0 0
        %3193 = vmatprep.subr.bf16.mxu0 0
        %3194 = vmatpush1.bf16.xpose.msra.mxu0 0
        %3195 = vmatprep.subr.bf16.mxu0 0
        %3196 = vmatpush1.bf16.xpose.msra.mxu0 0
        %3197 = vmatprep.subr.bf16.mxu0 0
        %3198 = vmatpush1.bf16.xpose.msra.mxu0 0
        %3199 = vmatprep.subr.bf16.mxu0 0
        %3200 = vmatpush1.bf16.xpose.msra.mxu0 0
        %3201 = vmatprep.subr.bf16.mxu0 0
        %3202 = vmatpush1.bf16.xpose.msra.mxu0 0
        %3203 = vmatprep.subr.bf16.mxu0 0
        %3204 = vmatpush1.bf16.xpose.msra.mxu0 0
        %3205 = vmatprep.subr.bf16.mxu0 0
        %3206 = vmatpush1.bf16.xpose.msra.mxu0 0
        %3207 = vmatprep.subr.bf16.mxu0 0
        %3208 = vmatpush1.bf16.xpose.msra.mxu0 0
        %3209 = vmatprep.subr.bf16.mxu0 0
        %3210 = vmatpush1.bf16.xpose.msra.mxu0 0
        %3211 = vmatprep.subr.bf16.mxu0 0
        %3212 = vmatpush1.bf16.xpose.msra.mxu0 0
        %3213 = vmatprep.subr.bf16.mxu0 0
        %3214 = vmatpush1.bf16.xpose.msra.mxu0 0
        %3215 = vmatprep.subr.bf16.mxu0 0
        %3216 = vmatpush1.bf16.xpose.msra.mxu0 0
        %3217 = vmatprep.subr.bf16.mxu0 0
        %3218 = vmatpush1.bf16.xpose.msra.mxu0 0
        %3219 = vmatprep.mubr.bf16.mxu0 0
        %3220 = vmatmul.mubr.bf16.gmra.mrb[0].mxu0 %v3182
        %v3221 = vpop.f32.mrb[0].mxu0
        %v3222 = vadd.f32 %v1149, %v3221
        %v3223 = vpop.f32.mrb[0].mxu0
        %v3224 = vpop.f32.mrb[0].mxu0
        %v3225 = vpop.f32.mrb[0].mxu0
        %3226 = vdwg.mxu0
        %v3227 = vsel %vm1221, %v3222, -inf
        %3228 = vmax.xlane.f32.xlu0 %v3227
        %v3229 = vpop.xlane.xlu0 %3228
        %v3230 = vsub.f32 %v3222, %v3229
        %v3231 = vmul.f32 %v3230, 1.442695
        %v3232 = vpow.pop %v3231
        %v3233 = vsel %vm1221, %v3232, 0.0
        %3234 = vadd.xlane.f32.xlu0 %v3233
        %v3235 = vpop.xlane.xlu0 %3234
        %v3236 = vrcp.pop %v3235
        %v3237 = vmul.f32 %v3232, %v3236
        %v3238 = vpack.c.bf16 %v3237, %v3237
        %v3239 = vpack.c.bf16 %v3176, %v3176
        %v3241 = vsel %vm1221, %v3238, 0
        %v3244 = vsel %vm1293, %v3239, 0
        %3246 = vmatprep.subr.bf16.mxu0 0
        %3247 = vmatpush1.bf16.msra.mxu0 %v3244
        %3248 = vmatprep.subr.bf16.mxu0 0
        %3249 = vmatpush1.bf16.msra.mxu0 0
        %3250 = vmatprep.subr.bf16.mxu0 0
        %3251 = vmatpush1.bf16.msra.mxu0 0
        %3252 = vmatprep.subr.bf16.mxu0 0
        %3253 = vmatpush1.bf16.msra.mxu0 0
        %3254 = vmatprep.subr.bf16.mxu0 0
        %3255 = vmatpush1.bf16.msra.mxu0 0
        %3256 = vmatprep.subr.bf16.mxu0 0
        %3257 = vmatpush1.bf16.msra.mxu0 0
        %3258 = vmatprep.subr.bf16.mxu0 0
        %3259 = vmatpush1.bf16.msra.mxu0 0
        %3260 = vmatprep.subr.bf16.mxu0 0
        %3261 = vmatpush1.bf16.msra.mxu0 0
        %3262 = vmatprep.subr.bf16.mxu0 0
        %3263 = vmatpush1.bf16.msra.mxu0 0
        %3264 = vmatprep.subr.bf16.mxu0 0
        %3265 = vmatpush1.bf16.msra.mxu0 0
        %3266 = vmatprep.subr.bf16.mxu0 0
        %3267 = vmatpush1.bf16.msra.mxu0 0
        %3268 = vmatprep.subr.bf16.mxu0 0
        %3269 = vmatpush1.bf16.msra.mxu0 0
        %3270 = vmatprep.subr.bf16.mxu0 0
        %3271 = vmatpush1.bf16.msra.mxu0 0
        %3272 = vmatprep.subr.bf16.mxu0 0
        %3273 = vmatpush1.bf16.msra.mxu0 0
        %3274 = vmatprep.subr.bf16.mxu0 0
        %3275 = vmatpush1.bf16.msra.mxu0 0
        %3276 = vmatprep.subr.bf16.mxu0 0
        %3277 = vmatpush1.bf16.msra.mxu0 0
        %3278 = vmatprep.mubr.bf16.mxu0 0
        %3279 = vmatmul.mubr.bf16.gmra.mrb[0].mxu0 %v3241
        %v3280 = vpop.f32.mrb[0].mxu0
        %v3281 = vadd.f32 0.0, %v3280
        %v3282 = vpop.f32.mrb[0].mxu0
        %v3283 = vpop.f32.mrb[0].mxu0
        %v3284 = vpop.f32.mrb[0].mxu0
        %3285 = vdwg.mxu0
        %v3286 = vpack.c.bf16 %v3281, %v3281
        %s3287 = scalar_lea.vmem %s15, 20
        %v3288 = vld [vmem:[%s3287] sm:$0xf]
        %v3290 = vsel %vm1221, %v3286, 0
        %v3293 = vsel %vm1293, %v3288, 0
        %3295 = vmatprep.subr.bf16.mxu0 0
        %3296 = vmatpush1.bf16.msra.mxu0 %v3293
        %3297 = vmatprep.subr.bf16.mxu0 0
        %3298 = vmatpush1.bf16.msra.mxu0 0
        %3299 = vmatprep.subr.bf16.mxu0 0
        %3300 = vmatpush1.bf16.msra.mxu0 0
        %3301 = vmatprep.subr.bf16.mxu0 0
        %3302 = vmatpush1.bf16.msra.mxu0 0
        %3303 = vmatprep.subr.bf16.mxu0 0
        %3304 = vmatpush1.bf16.msra.mxu0 0
        %3305 = vmatprep.subr.bf16.mxu0 0
        %3306 = vmatpush1.bf16.msra.mxu0 0
        %3307 = vmatprep.subr.bf16.mxu0 0
        %3308 = vmatpush1.bf16.msra.mxu0 0
        %3309 = vmatprep.subr.bf16.mxu0 0
        %3310 = vmatpush1.bf16.msra.mxu0 0
        %3311 = vmatprep.subr.bf16.mxu0 0
        %3312 = vmatpush1.bf16.msra.mxu0 0
        %3313 = vmatprep.subr.bf16.mxu0 0
        %3314 = vmatpush1.bf16.msra.mxu0 0
        %3315 = vmatprep.subr.bf16.mxu0 0
        %3316 = vmatpush1.bf16.msra.mxu0 0
        %3317 = vmatprep.subr.bf16.mxu0 0
        %3318 = vmatpush1.bf16.msra.mxu0 0
        %3319 = vmatprep.subr.bf16.mxu0 0
        %3320 = vmatpush1.bf16.msra.mxu0 0
        %3321 = vmatprep.subr.bf16.mxu0 0
        %3322 = vmatpush1.bf16.msra.mxu0 0
        %3323 = vmatprep.subr.bf16.mxu0 0
        %3324 = vmatpush1.bf16.msra.mxu0 0
        %3325 = vmatprep.subr.bf16.mxu0 0
        %3326 = vmatpush1.bf16.msra.mxu0 0
        %3327 = vmatprep.mubr.bf16.mxu0 0
        %3328 = vmatmul.mubr.bf16.gmra.mrb[0].mxu0 %v3290
        %v3329 = vpop.f32.mrb[0].mxu0
        %v3330 = vadd.f32 0.0, %v3329
        %v3331 = vpop.f32.mrb[0].mxu0
        %v3332 = vpop.f32.mrb[0].mxu0
        %v3333 = vpop.f32.mrb[0].mxu0
        %3334 = vdwg.mxu0
        %v3336 = vsel %vm1221, %v3162, 0
        %v3339 = vsel %vm1293, %v3164, 0
        %3341 = vmatprep.subr.bf16.mxu0 0
        %3342 = vmatpush1.bf16.msra.mxu0 %v3339
        %3343 = vmatprep.subr.bf16.mxu0 0
        %3344 = vmatpush1.bf16.msra.mxu0 0
        %3345 = vmatprep.subr.bf16.mxu0 0
        %3346 = vmatpush1.bf16.msra.mxu0 0
        %3347 = vmatprep.subr.bf16.mxu0 0
        %3348 = vmatpush1.bf16.msra.mxu0 0
        %3349 = vmatprep.subr.bf16.mxu0 0
        %3350 = vmatpush1.bf16.msra.mxu0 0
        %3351 = vmatprep.subr.bf16.mxu0 0
        %3352 = vmatpush1.bf16.msra.mxu0 0
        %3353 = vmatprep.subr.bf16.mxu0 0
        %3354 = vmatpush1.bf16.msra.mxu0 0
        %3355 = vmatprep.subr.bf16.mxu0 0
        %3356 = vmatpush1.bf16.msra.mxu0 0
        %3357 = vmatprep.subr.bf16.mxu0 0
        %3358 = vmatpush1.bf16.msra.mxu0 0
        %3359 = vmatprep.subr.bf16.mxu0 0
        %3360 = vmatpush1.bf16.msra.mxu0 0
        %3361 = vmatprep.subr.bf16.mxu0 0
        %3362 = vmatpush1.bf16.msra.mxu0 0
        %3363 = vmatprep.subr.bf16.mxu0 0
        %3364 = vmatpush1.bf16.msra.mxu0 0
        %3365 = vmatprep.subr.bf16.mxu0 0
        %3366 = vmatpush1.bf16.msra.mxu0 0
        %3367 = vmatprep.subr.bf16.mxu0 0
        %3368 = vmatpush1.bf16.msra.mxu0 0
        %3369 = vmatprep.subr.bf16.mxu0 0
        %3370 = vmatpush1.bf16.msra.mxu0 0
        %3371 = vmatprep.subr.bf16.mxu0 0
        %3372 = vmatpush1.bf16.msra.mxu0 0
        %3373 = vmatprep.mubr.bf16.mxu0 0
        %3374 = vmatmul.mubr.bf16.gmra.mrb[0].mxu0 %v3336
        %v3375 = vpop.f32.mrb[0].mxu0
        %v3376 = vadd.f32 %v3330, %v3375
        %v3377 = vpop.f32.mrb[0].mxu0
        %v3378 = vpop.f32.mrb[0].mxu0
        %v3379 = vpop.f32.mrb[0].mxu0
        %3380 = vdwg.mxu0
        %3381 = vrot.lane.b32.xlu0 %v3039, 80
        %v3382 = vpop.permute.xlu0 %3381
        %s3384 = scalar_lea.vmem %s1077, 16 [#allocation10]
        %3385 = vst.msk [vmem:[%s3384] sm:$0xff] %vm1221, %v3382
        %3386 = vrot.lane.b32.xlu0 %v3039, 48
        %v3387 = vpop.permute.xlu0 %3386
        %s3389 = scalar_lea.vmem %s1084, 16 [#allocation12]
        %3390 = vst.msk [vmem:[%s3389] sm:$0xff] %vm1221, %v3387
        %v3391 = vld [vmem:[%s3384] sm:$0xff]
        %v3392 = vld [vmem:[%s3389] sm:$0xff]
        %v3393 = vpack.c.bf16 %v3391, %v3391
        %3394 = vrot.lane.b32.xlu0 %v3055, 112
        %v3395 = vpop.permute.xlu0 %3394
        %v3397 = vsel %vm1221, %v3395, 0
        %v3400 = vsel %vm1221, %v3393, 0
        %3402 = vmatprep.subr.bf16.mxu0 0
        %3403 = vmatpush1.bf16.xpose.msra.mxu0 %v3400
        %3404 = vmatprep.subr.bf16.mxu0 0
        %3405 = vmatpush1.bf16.xpose.msra.mxu0 0
        %3406 = vmatprep.subr.bf16.mxu0 0
        %3407 = vmatpush1.bf16.xpose.msra.mxu0 0
        %3408 = vmatprep.subr.bf16.mxu0 0
        %3409 = vmatpush1.bf16.xpose.msra.mxu0 0
        %3410 = vmatprep.subr.bf16.mxu0 0
        %3411 = vmatpush1.bf16.xpose.msra.mxu0 0
        %3412 = vmatprep.subr.bf16.mxu0 0
        %3413 = vmatpush1.bf16.xpose.msra.mxu0 0
        %3414 = vmatprep.subr.bf16.mxu0 0
        %3415 = vmatpush1.bf16.xpose.msra.mxu0 0
        %3416 = vmatprep.subr.bf16.mxu0 0
        %3417 = vmatpush1.bf16.xpose.msra.mxu0 0
        %3418 = vmatprep.subr.bf16.mxu0 0
        %3419 = vmatpush1.bf16.xpose.msra.mxu0 0
        %3420 = vmatprep.subr.bf16.mxu0 0
        %3421 = vmatpush1.bf16.xpose.msra.mxu0 0
        %3422 = vmatprep.subr.bf16.mxu0 0
        %3423 = vmatpush1.bf16.xpose.msra.mxu0 0
        %3424 = vmatprep.subr.bf16.mxu0 0
        %3425 = vmatpush1.bf16.xpose.msra.mxu0 0
        %3426 = vmatprep.subr.bf16.mxu0 0
        %3427 = vmatpush1.bf16.xpose.msra.mxu0 0
        %3428 = vmatprep.subr.bf16.mxu0 0
        %3429 = vmatpush1.bf16.xpose.msra.mxu0 0
        %3430 = vmatprep.subr.bf16.mxu0 0
        %3431 = vmatpush1.bf16.xpose.msra.mxu0 0
        %3432 = vmatprep.subr.bf16.mxu0 0
        %3433 = vmatpush1.bf16.xpose.msra.mxu0 0
        %3434 = vmatprep.mubr.bf16.mxu0 0
        %3435 = vmatmul.mubr.bf16.gmra.mrb[0].mxu0 %v3397
        %v3436 = vpop.f32.mrb[0].mxu0
        %v3437 = vadd.f32 %v1149, %v3436
        %v3438 = vpop.f32.mrb[0].mxu0
        %v3439 = vpop.f32.mrb[0].mxu0
        %v3440 = vpop.f32.mrb[0].mxu0
        %3441 = vdwg.mxu0
        %v3442 = vsel %vm1221, %v3437, -inf
        %3443 = vmax.xlane.f32.xlu0 %v3442
        %v3444 = vpop.xlane.xlu0 %3443
        %v3445 = vsub.f32 %v3437, %v3444
        %v3446 = vmul.f32 %v3445, 1.442695
        %v3447 = vpow.pop %v3446
        %v3448 = vsel %vm1221, %v3447, 0.0
        %3449 = vadd.xlane.f32.xlu0 %v3448
        %v3450 = vpop.xlane.xlu0 %3449
        %v3451 = vrcp.pop %v3450
        %v3452 = vmul.f32 %v3447, %v3451
        %v3453 = vpack.c.bf16 %v3452, %v3452
        %v3454 = vpack.c.bf16 %v3392, %v3392
        %v3456 = vsel %vm1221, %v3453, 0
        %v3459 = vsel %vm1293, %v3454, 0
        %3461 = vmatprep.subr.bf16.mxu0 0
        %3462 = vmatpush1.bf16.msra.mxu0 %v3459
        %3463 = vmatprep.subr.bf16.mxu0 0
        %3464 = vmatpush1.bf16.msra.mxu0 0
        %3465 = vmatprep.subr.bf16.mxu0 0
        %3466 = vmatpush1.bf16.msra.mxu0 0
        %3467 = vmatprep.subr.bf16.mxu0 0
        %3468 = vmatpush1.bf16.msra.mxu0 0
        %3469 = vmatprep.subr.bf16.mxu0 0
        %3470 = vmatpush1.bf16.msra.mxu0 0
        %3471 = vmatprep.subr.bf16.mxu0 0
        %3472 = vmatpush1.bf16.msra.mxu0 0
        %3473 = vmatprep.subr.bf16.mxu0 0
        %3474 = vmatpush1.bf16.msra.mxu0 0
        %3475 = vmatprep.subr.bf16.mxu0 0
        %3476 = vmatpush1.bf16.msra.mxu0 0
        %3477 = vmatprep.subr.bf16.mxu0 0
        %3478 = vmatpush1.bf16.msra.mxu0 0
        %3479 = vmatprep.subr.bf16.mxu0 0
        %3480 = vmatpush1.bf16.msra.mxu0 0
        %3481 = vmatprep.subr.bf16.mxu0 0
        %3482 = vmatpush1.bf16.msra.mxu0 0
        %3483 = vmatprep.subr.bf16.mxu0 0
        %3484 = vmatpush1.bf16.msra.mxu0 0
        %3485 = vmatprep.subr.bf16.mxu0 0
        %3486 = vmatpush1.bf16.msra.mxu0 0
        %3487 = vmatprep.subr.bf16.mxu0 0
        %3488 = vmatpush1.bf16.msra.mxu0 0
        %3489 = vmatprep.subr.bf16.mxu0 0
        %3490 = vmatpush1.bf16.msra.mxu0 0
        %3491 = vmatprep.subr.bf16.mxu0 0
        %3492 = vmatpush1.bf16.msra.mxu0 0
        %3493 = vmatprep.mubr.bf16.mxu0 0
        %3494 = vmatmul.mubr.bf16.gmra.mrb[0].mxu0 %v3456
        %v3495 = vpop.f32.mrb[0].mxu0
        %v3496 = vadd.f32 0.0, %v3495
        %v3497 = vpop.f32.mrb[0].mxu0
        %v3498 = vpop.f32.mrb[0].mxu0
        %v3499 = vpop.f32.mrb[0].mxu0
        %3500 = vdwg.mxu0
        %v3501 = vpack.c.bf16 %v3496, %v3496
        %s3502 = scalar_lea.vmem %s15, 24
        %v3503 = vld [vmem:[%s3502] sm:$0xf]
        %v3505 = vsel %vm1221, %v3501, 0
        %v3508 = vsel %vm1293, %v3503, 0
        %3510 = vmatprep.subr.bf16.mxu0 0
        %3511 = vmatpush1.bf16.msra.mxu0 %v3508
        %3512 = vmatprep.subr.bf16.mxu0 0
        %3513 = vmatpush1.bf16.msra.mxu0 0
        %3514 = vmatprep.subr.bf16.mxu0 0
        %3515 = vmatpush1.bf16.msra.mxu0 0
        %3516 = vmatprep.subr.bf16.mxu0 0
        %3517 = vmatpush1.bf16.msra.mxu0 0
        %3518 = vmatprep.subr.bf16.mxu0 0
        %3519 = vmatpush1.bf16.msra.mxu0 0
        %3520 = vmatprep.subr.bf16.mxu0 0
        %3521 = vmatpush1.bf16.msra.mxu0 0
        %3522 = vmatprep.subr.bf16.mxu0 0
        %3523 = vmatpush1.bf16.msra.mxu0 0
        %3524 = vmatprep.subr.bf16.mxu0 0
        %3525 = vmatpush1.bf16.msra.mxu0 0
        %3526 = vmatprep.subr.bf16.mxu0 0
        %3527 = vmatpush1.bf16.msra.mxu0 0
        %3528 = vmatprep.subr.bf16.mxu0 0
        %3529 = vmatpush1.bf16.msra.mxu0 0
        %3530 = vmatprep.subr.bf16.mxu0 0
        %3531 = vmatpush1.bf16.msra.mxu0 0
        %3532 = vmatprep.subr.bf16.mxu0 0
        %3533 = vmatpush1.bf16.msra.mxu0 0
        %3534 = vmatprep.subr.bf16.mxu0 0
        %3535 = vmatpush1.bf16.msra.mxu0 0
        %3536 = vmatprep.subr.bf16.mxu0 0
        %3537 = vmatpush1.bf16.msra.mxu0 0
        %3538 = vmatprep.subr.bf16.mxu0 0
        %3539 = vmatpush1.bf16.msra.mxu0 0
        %3540 = vmatprep.subr.bf16.mxu0 0
        %3541 = vmatpush1.bf16.msra.mxu0 0
        %3542 = vmatprep.mubr.bf16.mxu0 0
        %3543 = vmatmul.mubr.bf16.gmra.mrb[0].mxu0 %v3505
        %v3544 = vpop.f32.mrb[0].mxu0
        %v3545 = vadd.f32 0.0, %v3544
        %v3546 = vpop.f32.mrb[0].mxu0
        %v3547 = vpop.f32.mrb[0].mxu0
        %v3548 = vpop.f32.mrb[0].mxu0
        %3549 = vdwg.mxu0
        %v3550 = vadd.f32 %v3376, %v3545
        %3551 = vrot.lane.b32.xlu0 %v3039, 72
        %v3552 = vpop.permute.xlu0 %3551
        %s3554 = scalar_lea.vmem %s1077, 24 [#allocation10]
        %3555 = vst.msk [vmem:[%s3554] sm:$0xff] %vm1221, %v3552
        %3556 = vrot.lane.b32.xlu0 %v3039, 40
        %v3557 = vpop.permute.xlu0 %3556
        %s3559 = scalar_lea.vmem %s1084, 24 [#allocation12]
        %3560 = vst.msk [vmem:[%s3559] sm:$0xff] %vm1221, %v3557
        %v3561 = vld [vmem:[%s3554] sm:$0xff]
        %v3562 = vld [vmem:[%s3559] sm:$0xff]
        %v3563 = vpack.c.bf16 %v3561, %v3561
        %3564 = vrot.lane.b32.xlu0 %v3055, 104
        %v3565 = vpop.permute.xlu0 %3564
        %v3567 = vsel %vm1221, %v3565, 0
        %v3570 = vsel %vm1221, %v3563, 0
        %3572 = vmatprep.subr.bf16.mxu0 0
        %3573 = vmatpush1.bf16.xpose.msra.mxu0 %v3570
        %3574 = vmatprep.subr.bf16.mxu0 0
        %3575 = vmatpush1.bf16.xpose.msra.mxu0 0
        %3576 = vmatprep.subr.bf16.mxu0 0
        %3577 = vmatpush1.bf16.xpose.msra.mxu0 0
        %3578 = vmatprep.subr.bf16.mxu0 0
        %3579 = vmatpush1.bf16.xpose.msra.mxu0 0
        %3580 = vmatprep.subr.bf16.mxu0 0
        %3581 = vmatpush1.bf16.xpose.msra.mxu0 0
        %3582 = vmatprep.subr.bf16.mxu0 0
        %3583 = vmatpush1.bf16.xpose.msra.mxu0 0
        %3584 = vmatprep.subr.bf16.mxu0 0
        %3585 = vmatpush1.bf16.xpose.msra.mxu0 0
        %3586 = vmatprep.subr.bf16.mxu0 0
        %3587 = vmatpush1.bf16.xpose.msra.mxu0 0
        %3588 = vmatprep.subr.bf16.mxu0 0
        %3589 = vmatpush1.bf16.xpose.msra.mxu0 0
        %3590 = vmatprep.subr.bf16.mxu0 0
        %3591 = vmatpush1.bf16.xpose.msra.mxu0 0
        %3592 = vmatprep.subr.bf16.mxu0 0
        %3593 = vmatpush1.bf16.xpose.msra.mxu0 0
        %3594 = vmatprep.subr.bf16.mxu0 0
        %3595 = vmatpush1.bf16.xpose.msra.mxu0 0
        %3596 = vmatprep.subr.bf16.mxu0 0
        %3597 = vmatpush1.bf16.xpose.msra.mxu0 0
        %3598 = vmatprep.subr.bf16.mxu0 0
        %3599 = vmatpush1.bf16.xpose.msra.mxu0 0
        %3600 = vmatprep.subr.bf16.mxu0 0
        %3601 = vmatpush1.bf16.xpose.msra.mxu0 0
        %3602 = vmatprep.subr.bf16.mxu0 0
        %3603 = vmatpush1.bf16.xpose.msra.mxu0 0
        %3604 = vmatprep.mubr.bf16.mxu0 0
        %3605 = vmatmul.mubr.bf16.gmra.mrb[0].mxu0 %v3567
        %v3606 = vpop.f32.mrb[0].mxu0
        %v3607 = vadd.f32 %v1149, %v3606
        %v3608 = vpop.f32.mrb[0].mxu0
        %v3609 = vpop.f32.mrb[0].mxu0
        %v3610 = vpop.f32.mrb[0].mxu0
        %3611 = vdwg.mxu0
        %v3612 = vsel %vm1221, %v3607, -inf
        %3613 = vmax.xlane.f32.xlu0 %v3612
        %v3614 = vpop.xlane.xlu0 %3613
        %v3615 = vsub.f32 %v3607, %v3614
        %v3616 = vmul.f32 %v3615, 1.442695
        %v3617 = vpow.pop %v3616
        %v3618 = vsel %vm1221, %v3617, 0.0
        %3619 = vadd.xlane.f32.xlu0 %v3618
        %v3620 = vpop.xlane.xlu0 %3619
        %v3621 = vrcp.pop %v3620
        %v3622 = vmul.f32 %v3617, %v3621
        %v3623 = vpack.c.bf16 %v3622, %v3622
        %v3624 = vpack.c.bf16 %v3562, %v3562
        %v3626 = vsel %vm1221, %v3623, 0
        %v3629 = vsel %vm1293, %v3624, 0
        %3631 = vmatprep.subr.bf16.mxu0 0
        %3632 = vmatpush1.bf16.msra.mxu0 %v3629
        %3633 = vmatprep.subr.bf16.mxu0 0
        %3634 = vmatpush1.bf16.msra.mxu0 0
        %3635 = vmatprep.subr.bf16.mxu0 0
        %3636 = vmatpush1.bf16.msra.mxu0 0
        %3637 = vmatprep.subr.bf16.mxu0 0
        %3638 = vmatpush1.bf16.msra.mxu0 0
        %3639 = vmatprep.subr.bf16.mxu0 0
        %3640 = vmatpush1.bf16.msra.mxu0 0
        %3641 = vmatprep.subr.bf16.mxu0 0
        %3642 = vmatpush1.bf16.msra.mxu0 0
        %3643 = vmatprep.subr.bf16.mxu0 0
        %3644 = vmatpush1.bf16.msra.mxu0 0
        %3645 = vmatprep.subr.bf16.mxu0 0
        %3646 = vmatpush1.bf16.msra.mxu0 0
        %3647 = vmatprep.subr.bf16.mxu0 0
        %3648 = vmatpush1.bf16.msra.mxu0 0
        %3649 = vmatprep.subr.bf16.mxu0 0
        %3650 = vmatpush1.bf16.msra.mxu0 0
        %3651 = vmatprep.subr.bf16.mxu0 0
        %3652 = vmatpush1.bf16.msra.mxu0 0
        %3653 = vmatprep.subr.bf16.mxu0 0
        %3654 = vmatpush1.bf16.msra.mxu0 0
        %3655 = vmatprep.subr.bf16.mxu0 0
        %3656 = vmatpush1.bf16.msra.mxu0 0
        %3657 = vmatprep.subr.bf16.mxu0 0
        %3658 = vmatpush1.bf16.msra.mxu0 0
        %3659 = vmatprep.subr.bf16.mxu0 0
        %3660 = vmatpush1.bf16.msra.mxu0 0
        %3661 = vmatprep.subr.bf16.mxu0 0
        %3662 = vmatpush1.bf16.msra.mxu0 0
        %3663 = vmatprep.mubr.bf16.mxu0 0
        %3664 = vmatmul.mubr.bf16.gmra.mrb[0].mxu0 %v3626
        %v3665 = vpop.f32.mrb[0].mxu0
        %v3666 = vadd.f32 0.0, %v3665
        %v3667 = vpop.f32.mrb[0].mxu0
        %v3668 = vpop.f32.mrb[0].mxu0
        %v3669 = vpop.f32.mrb[0].mxu0
        %3670 = vdwg.mxu0
        %v3671 = vpack.c.bf16 %v3666, %v3666
        %s3672 = scalar_lea.vmem %s15, 28
        %v3673 = vld [vmem:[%s3672] sm:$0xf]
        %v3675 = vsel %vm1221, %v3671, 0
        %v3678 = vsel %vm1293, %v3673, 0
        %3680 = vmatprep.subr.bf16.mxu0 0
        %3681 = vmatpush1.bf16.msra.mxu0 %v3678
        %3682 = vmatprep.subr.bf16.mxu0 0
        %3683 = vmatpush1.bf16.msra.mxu0 0
        %3684 = vmatprep.subr.bf16.mxu0 0
        %3685 = vmatpush1.bf16.msra.mxu0 0
        %3686 = vmatprep.subr.bf16.mxu0 0
        %3687 = vmatpush1.bf16.msra.mxu0 0
        %3688 = vmatprep.subr.bf16.mxu0 0
        %3689 = vmatpush1.bf16.msra.mxu0 0
        %3690 = vmatprep.subr.bf16.mxu0 0
        %3691 = vmatpush1.bf16.msra.mxu0 0
        %3692 = vmatprep.subr.bf16.mxu0 0
        %3693 = vmatpush1.bf16.msra.mxu0 0
        %3694 = vmatprep.subr.bf16.mxu0 0
        %3695 = vmatpush1.bf16.msra.mxu0 0
        %3696 = vmatprep.subr.bf16.mxu0 0
        %3697 = vmatpush1.bf16.msra.mxu0 0
        %3698 = vmatprep.subr.bf16.mxu0 0
        %3699 = vmatpush1.bf16.msra.mxu0 0
        %3700 = vmatprep.subr.bf16.mxu0 0
        %3701 = vmatpush1.bf16.msra.mxu0 0
        %3702 = vmatprep.subr.bf16.mxu0 0
        %3703 = vmatpush1.bf16.msra.mxu0 0
        %3704 = vmatprep.subr.bf16.mxu0 0
        %3705 = vmatpush1.bf16.msra.mxu0 0
        %3706 = vmatprep.subr.bf16.mxu0 0
        %3707 = vmatpush1.bf16.msra.mxu0 0
        %3708 = vmatprep.subr.bf16.mxu0 0
        %3709 = vmatpush1.bf16.msra.mxu0 0
        %3710 = vmatprep.subr.bf16.mxu0 0
        %3711 = vmatpush1.bf16.msra.mxu0 0
        %3712 = vmatprep.mubr.bf16.mxu0 0
        %3713 = vmatmul.mubr.bf16.gmra.mrb[0].mxu0 %v3675
        %v3714 = vpop.f32.mrb[0].mxu0
        %v3715 = vadd.f32 0.0, %v3714
        %v3716 = vpop.f32.mrb[0].mxu0
        %v3717 = vpop.f32.mrb[0].mxu0
        %v3718 = vpop.f32.mrb[0].mxu0
        %3719 = vdwg.mxu0
        %v3720 = vadd.f32 %v3550, %v3715
        %s3721 = scalar_lea.vmem %s17, 1
        %v3722 = vld [vmem:[%s3721] sm:$0x1]
        %v3724 = vlaneseq
        %v3725 = vshrl.u32 %v3724, 7
        %v3726 = vsub.s32 0, %v3725
        %v3727 = vrot.slane %v3722, %v3726
        %v3729 = vadd.f32 %v3720, %v3727
        %v3730 = vadd.f32 %v2974, %v3729
        %s3731 = scalar_lea.vmem %s19, 1
        %v3732 = vld [vmem:[%s3731] sm:$0x1]
        %s3733 = scalar_lea.vmem %s21, 1
        %v3734 = vld [vmem:[%s3733] sm:$0x1]
        %v3735 = vsel %vm1114, %v3730, 0.0
        %3736 = vadd.xlane.f32.xlu0 %v3735
        %v3737 = vpop.xlane.xlu0 %3736
        %v3738 = vmul.f32 %v3737, %v1118
        %v3739 = vsub.f32 %v3730, %v3738
        %v3740 = vmul.f32 %v3739, %v3739
        %v3741 = vsel %vm1114, %v3740, 0.0
        %3742 = vadd.xlane.f32.xlu0 %v3741
        %v3743 = vpop.xlane.xlu0 %3742
        %v3744 = vmul.f32 %v3743, %v1118
        %v3745 = vadd.f32 %v3744, 1e-05
        %v3746 = vrsqrt.pop %v3745
        %v3747 = vmul.f32 %v3739, %v3746
        %v3749 = vlaneseq
        %v3750 = vshrl.u32 %v3749, 7
        %v3751 = vsub.s32 0, %v3750
        %v3752 = vrot.slane %v3732, %v3751
        %v3754 = vmul.f32 %v3747, %v3752
        %v3756 = vlaneseq
        %v3757 = vshrl.u32 %v3756, 7
        %v3758 = vsub.s32 0, %v3757
        %v3759 = vrot.slane %v3734, %v3758
        %v3761 = vadd.f32 %v3754, %v3759
        %s3762 = scalar_lea.vmem %s23, 16
        %v3763 = vld [vmem:[%s3762] sm:$0xf]
        %v3764 = vld [vmem:[%s3762 + $0x4] sm:$0xf]
        %v3765 = vld [vmem:[%s3762 + $0x8] sm:$0xf]
        %v3766 = vld [vmem:[%s3762 + $0xc] sm:$0xf]
        %s3767 = scalar_lea.vmem %s25, 1
        %v3768 = vld [vmem:[%s3767] sm:$0x1]
        %v3769 = vpack.c.bf16 %v3761, %v3761
        %v3771 = vlaneseq
        %v3772 = vshrl.u32 %v3771, 7
        %v3773 = vsub.s32 0, %v3772
        %v3774 = vrot.slane %v3768, %v3773
        %v3780 = vunpack.c.l.b16 %v3763
        %v3781 = vunpack.c.l.b16 %v3764
        %v3782 = vunpack.c.l.b16 %v3765
        %v3783 = vunpack.c.l.b16 %v3766
        %v3784 = vpack.c.b16 %v3781, %v3780
        %v3785 = vpack.c.b16 %v3783, %v3782
        %v3789 = vsel %vm1114, %v3769, 0
        %3791 = vmatprep.subr.bf16.mxu0 0
        %3792 = vmatpush1.bf16.msra.mxu0 %v3784
        %3793 = vmatprep.subr.bf16.mxu0 0
        %3794 = vmatpush1.bf16.msra.mxu0 %v3785
        %3795 = vmatprep.subr.bf16.mxu0 0
        %3796 = vmatpush1.bf16.msra.mxu0 0
        %3797 = vmatprep.subr.bf16.mxu0 0
        %3798 = vmatpush1.bf16.msra.mxu0 0
        %3799 = vmatprep.subr.bf16.mxu0 0
        %3800 = vmatpush1.bf16.msra.mxu0 0
        %3801 = vmatprep.subr.bf16.mxu0 0
        %3802 = vmatpush1.bf16.msra.mxu0 0
        %3803 = vmatprep.subr.bf16.mxu0 0
        %3804 = vmatpush1.bf16.msra.mxu0 0
        %3805 = vmatprep.subr.bf16.mxu0 0
        %3806 = vmatpush1.bf16.msra.mxu0 0
        %3807 = vmatprep.subr.bf16.mxu0 0
        %3808 = vmatpush1.bf16.msra.mxu0 0
        %3809 = vmatprep.subr.bf16.mxu0 0
        %3810 = vmatpush1.bf16.msra.mxu0 0
        %3811 = vmatprep.subr.bf16.mxu0 0
        %3812 = vmatpush1.bf16.msra.mxu0 0
        %3813 = vmatprep.subr.bf16.mxu0 0
        %3814 = vmatpush1.bf16.msra.mxu0 0
        %3815 = vmatprep.subr.bf16.mxu0 0
        %3816 = vmatpush1.bf16.msra.mxu0 0
        %3817 = vmatprep.subr.bf16.mxu0 0
        %3818 = vmatpush1.bf16.msra.mxu0 0
        %3819 = vmatprep.subr.bf16.mxu0 0
        %3820 = vmatpush1.bf16.msra.mxu0 0
        %3821 = vmatprep.subr.bf16.mxu0 0
        %3822 = vmatpush1.bf16.msra.mxu0 0
        %3823 = vmatprep.mubr.bf16.mxu0 0
        %3824 = vmatmul.mubr.bf16.gmra.mrb[0].mxu0 %v3789
        %v3825 = vpop.f32.mrb[0].mxu0
        %v3826 = vadd.f32 %v3774, %v3825
        %v3827 = vpop.f32.mrb[0].mxu0
        %v3828 = vpop.f32.mrb[0].mxu0
        %v3829 = vpop.f32.mrb[0].mxu0
        %3830 = vdwg.mxu0
        %v3831 = vld [vmem:[%s1106] sm:$0xff]
        %s3832 = scalar_lea.vmem %s27, 16
        %v3833 = vld [vmem:[%s3832] sm:$0xf]
        %v3834 = vld [vmem:[%s3832 + $0x4] sm:$0xf]
        %v3835 = vld [vmem:[%s3832 + $0x8] sm:$0xf]
        %v3836 = vld [vmem:[%s3832 + $0xc] sm:$0xf]
        %s3837 = scalar_lea.vmem %s29, 1
        %v3838 = vld [vmem:[%s3837] sm:$0x1]
        %v3839 = vpack.c.bf16 %v3831, %v3831
        %v3841 = vlaneseq
        %v3842 = vshrl.u32 %v3841, 7
        %v3843 = vsub.s32 0, %v3842
        %v3844 = vrot.slane %v3838, %v3843
        %v3850 = vunpack.c.l.b16 %v3833
        %v3851 = vunpack.c.l.b16 %v3834
        %v3852 = vunpack.c.l.b16 %v3835
        %v3853 = vunpack.c.l.b16 %v3836
        %v3854 = vpack.c.b16 %v3851, %v3850
        %v3855 = vpack.c.b16 %v3853, %v3852
        %v3859 = vsel %vm1114, %v3839, 0
        %3861 = vmatprep.subr.bf16.mxu0 0
        %3862 = vmatpush1.bf16.msra.mxu0 %v3854
        %3863 = vmatprep.subr.bf16.mxu0 0
        %3864 = vmatpush1.bf16.msra.mxu0 %v3855
        %3865 = vmatprep.subr.bf16.mxu0 0
        %3866 = vmatpush1.bf16.msra.mxu0 0
        %3867 = vmatprep.subr.bf16.mxu0 0
        %3868 = vmatpush1.bf16.msra.mxu0 0
        %3869 = vmatprep.subr.bf16.mxu0 0
        %3870 = vmatpush1.bf16.msra.mxu0 0
        %3871 = vmatprep.subr.bf16.mxu0 0
        %3872 = vmatpush1.bf16.msra.mxu0 0
        %3873 = vmatprep.subr.bf16.mxu0 0
        %3874 = vmatpush1.bf16.msra.mxu0 0
        %3875 = vmatprep.subr.bf16.mxu0 0
        %3876 = vmatpush1.bf16.msra.mxu0 0
        %3877 = vmatprep.subr.bf16.mxu0 0
        %3878 = vmatpush1.bf16.msra.mxu0 0
        %3879 = vmatprep.subr.bf16.mxu0 0
        %3880 = vmatpush1.bf16.msra.mxu0 0
        %3881 = vmatprep.subr.bf16.mxu0 0
        %3882 = vmatpush1.bf16.msra.mxu0 0
        %3883 = vmatprep.subr.bf16.mxu0 0
        %3884 = vmatpush1.bf16.msra.mxu0 0
        %3885 = vmatprep.subr.bf16.mxu0 0
        %3886 = vmatpush1.bf16.msra.mxu0 0
        %3887 = vmatprep.subr.bf16.mxu0 0
        %3888 = vmatpush1.bf16.msra.mxu0 0
        %3889 = vmatprep.subr.bf16.mxu0 0
        %3890 = vmatpush1.bf16.msra.mxu0 0
        %3891 = vmatprep.subr.bf16.mxu0 0
        %3892 = vmatpush1.bf16.msra.mxu0 0
        %3893 = vmatprep.mubr.bf16.mxu0 0
        %3894 = vmatmul.mubr.bf16.gmra.mrb[0].mxu0 %v3859
        %v3895 = vpop.f32.mrb[0].mxu0
        %v3896 = vadd.f32 %v3844, %v3895
        %v3897 = vpop.f32.mrb[0].mxu0
        %v3898 = vpop.f32.mrb[0].mxu0
        %v3899 = vpop.f32.mrb[0].mxu0
        %3900 = vdwg.mxu0
        %3901 = vst.msk [vmem:[%s1091] sm:$0xff] %vm1221, %v3896
        %3903 = vrot.lane.b32.xlu0 %v3896, 96
        %v3904 = vpop.permute.xlu0 %3903
        %3906 = vst.msk [vmem:[%s1098] sm:$0xff] %vm1221, %v3904
        %v3907 = vpack.c.bf16 %v3826, %v3826
        %v3908 = vpack.c.bf16 %v3896, %v3896
        %v3910 = vsel %vm1221, %v3907, 0
        %v3913 = vsel %vm1221, %v3908, 0
        %3915 = vmatprep.subr.bf16.mxu0 0
        %3916 = vmatpush1.bf16.xpose.msra.mxu0 %v3913
        %3917 = vmatprep.subr.bf16.mxu0 0
        %3918 = vmatpush1.bf16.xpose.msra.mxu0 0
        %3919 = vmatprep.subr.bf16.mxu0 0
        %3920 = vmatpush1.bf16.xpose.msra.mxu0 0
        %3921 = vmatprep.subr.bf16.mxu0 0
        %3922 = vmatpush1.bf16.xpose.msra.mxu0 0
        %3923 = vmatprep.subr.bf16.mxu0 0
        %3924 = vmatpush1.bf16.xpose.msra.mxu0 0
        %3925 = vmatprep.subr.bf16.mxu0 0
        %3926 = vmatpush1.bf16.xpose.msra.mxu0 0
        %3927 = vmatprep.subr.bf16.mxu0 0
        %3928 = vmatpush1.bf16.xpose.msra.mxu0 0
        %3929 = vmatprep.subr.bf16.mxu0 0
        %3930 = vmatpush1.bf16.xpose.msra.mxu0 0
        %3931 = vmatprep.subr.bf16.mxu0 0
        %3932 = vmatpush1.bf16.xpose.msra.mxu0 0
        %3933 = vmatprep.subr.bf16.mxu0 0
        %3934 = vmatpush1.bf16.xpose.msra.mxu0 0
        %3935 = vmatprep.subr.bf16.mxu0 0
        %3936 = vmatpush1.bf16.xpose.msra.mxu0 0
        %3937 = vmatprep.subr.bf16.mxu0 0
        %3938 = vmatpush1.bf16.xpose.msra.mxu0 0
        %3939 = vmatprep.subr.bf16.mxu0 0
        %3940 = vmatpush1.bf16.xpose.msra.mxu0 0
        %3941 = vmatprep.subr.bf16.mxu0 0
        %3942 = vmatpush1.bf16.xpose.msra.mxu0 0
        %3943 = vmatprep.subr.bf16.mxu0 0
        %3944 = vmatpush1.bf16.xpose.msra.mxu0 0
        %3945 = vmatprep.subr.bf16.mxu0 0
        %3946 = vmatpush1.bf16.xpose.msra.mxu0 0
        %3947 = vmatprep.mubr.bf16.mxu0 0
        %3948 = vmatmul.mubr.bf16.gmra.mrb[0].mxu0 %v3910
        %v3949 = vpop.f32.mrb[0].mxu0
        %v3950 = vadd.f32 %v2080, %v3949
        %v3951 = vpop.f32.mrb[0].mxu0
        %v3952 = vpop.f32.mrb[0].mxu0
        %v3953 = vpop.f32.mrb[0].mxu0
        %3954 = vdwg.mxu0
        %v3955 = vsel %vm1221, %v3950, -inf
        %3956 = vmax.xlane.f32.xlu0 %v3955
        %v3957 = vpop.xlane.xlu0 %3956
        %v3958 = vsub.f32 %v3950, %v3957
        %v3959 = vmul.f32 %v3958, 1.442695
        %v3960 = vpow.pop %v3959
        %v3961 = vsel %vm1221, %v3960, 0.0
        %3962 = vadd.xlane.f32.xlu0 %v3961
        %v3963 = vpop.xlane.xlu0 %3962
        %v3964 = vrcp.pop %v3963
        %v3965 = vmul.f32 %v3960, %v3964
        %v3966 = vpack.c.bf16 %v3965, %v3965
        %3968 = vrot.lane.b32.xlu0 %v3908, 96
        %v3969 = vpop.permute.xlu0 %3968
        %v3971 = vsel %vm1221, %v3966, 0
        %v3974 = vsel %vm1293, %v3969, 0
        %3976 = vmatprep.subr.bf16.mxu0 0
        %3977 = vmatpush1.bf16.msra.mxu0 %v3974
        %3978 = vmatprep.subr.bf16.mxu0 0
        %3979 = vmatpush1.bf16.msra.mxu0 0
        %3980 = vmatprep.subr.bf16.mxu0 0
        %3981 = vmatpush1.bf16.msra.mxu0 0
        %3982 = vmatprep.subr.bf16.mxu0 0
        %3983 = vmatpush1.bf16.msra.mxu0 0
        %3984 = vmatprep.subr.bf16.mxu0 0
        %3985 = vmatpush1.bf16.msra.mxu0 0
        %3986 = vmatprep.subr.bf16.mxu0 0
        %3987 = vmatpush1.bf16.msra.mxu0 0
        %3988 = vmatprep.subr.bf16.mxu0 0
        %3989 = vmatpush1.bf16.msra.mxu0 0
        %3990 = vmatprep.subr.bf16.mxu0 0
        %3991 = vmatpush1.bf16.msra.mxu0 0
        %3992 = vmatprep.subr.bf16.mxu0 0
        %3993 = vmatpush1.bf16.msra.mxu0 0
        %3994 = vmatprep.subr.bf16.mxu0 0
        %3995 = vmatpush1.bf16.msra.mxu0 0
        %3996 = vmatprep.subr.bf16.mxu0 0
        %3997 = vmatpush1.bf16.msra.mxu0 0
        %3998 = vmatprep.subr.bf16.mxu0 0
        %3999 = vmatpush1.bf16.msra.mxu0 0
        %4000 = vmatprep.subr.bf16.mxu0 0
        %4001 = vmatpush1.bf16.msra.mxu0 0
        %4002 = vmatprep.subr.bf16.mxu0 0
        %4003 = vmatpush1.bf16.msra.mxu0 0
        %4004 = vmatprep.subr.bf16.mxu0 0
        %4005 = vmatpush1.bf16.msra.mxu0 0
        %4006 = vmatprep.subr.bf16.mxu0 0
        %4007 = vmatpush1.bf16.msra.mxu0 0
        %4008 = vmatprep.mubr.bf16.mxu0 0
        %4009 = vmatmul.mubr.bf16.gmra.mrb[0].mxu0 %v3971
        %v4010 = vpop.f32.mrb[0].mxu0
        %v4011 = vadd.f32 0.0, %v4010
        %v4012 = vpop.f32.mrb[0].mxu0
        %v4013 = vpop.f32.mrb[0].mxu0
        %v4014 = vpop.f32.mrb[0].mxu0
        %4015 = vdwg.mxu0
        %v4016 = vpack.c.bf16 %v4011, %v4011
        %s4017 = scalar_lea.vmem %s31, 16
        %v4018 = vld [vmem:[%s4017] sm:$0xf]
        %4019 = vrot.lane.b32.xlu0 %v3896, 120
        %v4020 = vpop.permute.xlu0 %4019
        %s4022 = scalar_lea.vmem %s1091, 8 [#allocation13]
        %4023 = vst.msk [vmem:[%s4022] sm:$0xff] %vm1221, %v4020
        %4024 = vrot.lane.b32.xlu0 %v3896, 88
        %v4025 = vpop.permute.xlu0 %4024
        %s4027 = scalar_lea.vmem %s1098, 8 [#allocation15]
        %4028 = vst.msk [vmem:[%s4027] sm:$0xff] %vm1221, %v4025
        %4030 = vrot.lane.b32.xlu0 %v3907, 120
        %v4031 = vpop.permute.xlu0 %4030
        %4032 = vrot.lane.b32.xlu0 %v3908, 120
        %v4033 = vpop.permute.xlu0 %4032
        %v4035 = vsel %vm1221, %v4031, 0
        %v4038 = vsel %vm1221, %v4033, 0
        %4040 = vmatprep.subr.bf16.mxu0 0
        %4041 = vmatpush1.bf16.xpose.msra.mxu0 %v4038
        %4042 = vmatprep.subr.bf16.mxu0 0
        %4043 = vmatpush1.bf16.xpose.msra.mxu0 0
        %4044 = vmatprep.subr.bf16.mxu0 0
        %4045 = vmatpush1.bf16.xpose.msra.mxu0 0
        %4046 = vmatprep.subr.bf16.mxu0 0
        %4047 = vmatpush1.bf16.xpose.msra.mxu0 0
        %4048 = vmatprep.subr.bf16.mxu0 0
        %4049 = vmatpush1.bf16.xpose.msra.mxu0 0
        %4050 = vmatprep.subr.bf16.mxu0 0
        %4051 = vmatpush1.bf16.xpose.msra.mxu0 0
        %4052 = vmatprep.subr.bf16.mxu0 0
        %4053 = vmatpush1.bf16.xpose.msra.mxu0 0
        %4054 = vmatprep.subr.bf16.mxu0 0
        %4055 = vmatpush1.bf16.xpose.msra.mxu0 0
        %4056 = vmatprep.subr.bf16.mxu0 0
        %4057 = vmatpush1.bf16.xpose.msra.mxu0 0
        %4058 = vmatprep.subr.bf16.mxu0 0
        %4059 = vmatpush1.bf16.xpose.msra.mxu0 0
        %4060 = vmatprep.subr.bf16.mxu0 0
        %4061 = vmatpush1.bf16.xpose.msra.mxu0 0
        %4062 = vmatprep.subr.bf16.mxu0 0
        %4063 = vmatpush1.bf16.xpose.msra.mxu0 0
        %4064 = vmatprep.subr.bf16.mxu0 0
        %4065 = vmatpush1.bf16.xpose.msra.mxu0 0
        %4066 = vmatprep.subr.bf16.mxu0 0
        %4067 = vmatpush1.bf16.xpose.msra.mxu0 0
        %4068 = vmatprep.subr.bf16.mxu0 0
        %4069 = vmatpush1.bf16.xpose.msra.mxu0 0
        %4070 = vmatprep.subr.bf16.mxu0 0
        %4071 = vmatpush1.bf16.xpose.msra.mxu0 0
        %4072 = vmatprep.mubr.bf16.mxu0 0
        %4073 = vmatmul.mubr.bf16.gmra.mrb[0].mxu0 %v4035
        %v4074 = vpop.f32.mrb[0].mxu0
        %v4075 = vadd.f32 %v2080, %v4074
        %v4076 = vpop.f32.mrb[0].mxu0
        %v4077 = vpop.f32.mrb[0].mxu0
        %v4078 = vpop.f32.mrb[0].mxu0
        %4079 = vdwg.mxu0
        %v4080 = vsel %vm1221, %v4075, -inf
        %4081 = vmax.xlane.f32.xlu0 %v4080
        %v4082 = vpop.xlane.xlu0 %4081
        %v4083 = vsub.f32 %v4075, %v4082
        %v4084 = vmul.f32 %v4083, 1.442695
        %v4085 = vpow.pop %v4084
        %v4086 = vsel %vm1221, %v4085, 0.0
        %4087 = vadd.xlane.f32.xlu0 %v4086
        %v4088 = vpop.xlane.xlu0 %4087
        %v4089 = vrcp.pop %v4088
        %v4090 = vmul.f32 %v4085, %v4089
        %v4091 = vpack.c.bf16 %v4090, %v4090
        %4092 = vrot.lane.b32.xlu0 %v3908, 88
        %v4093 = vpop.permute.xlu0 %4092
        %v4095 = vsel %vm1221, %v4091, 0
        %v4098 = vsel %vm1293, %v4093, 0
        %4100 = vmatprep.subr.bf16.mxu0 0
        %4101 = vmatpush1.bf16.msra.mxu0 %v4098
        %4102 = vmatprep.subr.bf16.mxu0 0
        %4103 = vmatpush1.bf16.msra.mxu0 0
        %4104 = vmatprep.subr.bf16.mxu0 0
        %4105 = vmatpush1.bf16.msra.mxu0 0
        %4106 = vmatprep.subr.bf16.mxu0 0
        %4107 = vmatpush1.bf16.msra.mxu0 0
        %4108 = vmatprep.subr.bf16.mxu0 0
        %4109 = vmatpush1.bf16.msra.mxu0 0
        %4110 = vmatprep.subr.bf16.mxu0 0
        %4111 = vmatpush1.bf16.msra.mxu0 0
        %4112 = vmatprep.subr.bf16.mxu0 0
        %4113 = vmatpush1.bf16.msra.mxu0 0
        %4114 = vmatprep.subr.bf16.mxu0 0
        %4115 = vmatpush1.bf16.msra.mxu0 0
        %4116 = vmatprep.subr.bf16.mxu0 0
        %4117 = vmatpush1.bf16.msra.mxu0 0
        %4118 = vmatprep.subr.bf16.mxu0 0
        %4119 = vmatpush1.bf16.msra.mxu0 0
        %4120 = vmatprep.subr.bf16.mxu0 0
        %4121 = vmatpush1.bf16.msra.mxu0 0
        %4122 = vmatprep.subr.bf16.mxu0 0
        %4123 = vmatpush1.bf16.msra.mxu0 0
        %4124 = vmatprep.subr.bf16.mxu0 0
        %4125 = vmatpush1.bf16.msra.mxu0 0
        %4126 = vmatprep.subr.bf16.mxu0 0
        %4127 = vmatpush1.bf16.msra.mxu0 0
        %4128 = vmatprep.subr.bf16.mxu0 0
        %4129 = vmatpush1.bf16.msra.mxu0 0
        %4130 = vmatprep.subr.bf16.mxu0 0
        %4131 = vmatpush1.bf16.msra.mxu0 0
        %4132 = vmatprep.mubr.bf16.mxu0 0
        %4133 = vmatmul.mubr.bf16.gmra.mrb[0].mxu0 %v4095
        %v4134 = vpop.f32.mrb[0].mxu0
        %v4135 = vadd.f32 0.0, %v4134
        %v4136 = vpop.f32.mrb[0].mxu0
        %v4137 = vpop.f32.mrb[0].mxu0
        %v4138 = vpop.f32.mrb[0].mxu0
        %4139 = vdwg.mxu0
        %v4140 = vpack.c.bf16 %v4135, %v4135
        %s4141 = scalar_lea.vmem %s31, 20
        %v4142 = vld [vmem:[%s4141] sm:$0xf]
        %v4144 = vsel %vm1221, %v4140, 0
        %v4147 = vsel %vm1293, %v4142, 0
        %4149 = vmatprep.subr.bf16.mxu0 0
        %4150 = vmatpush1.bf16.msra.mxu0 %v4147
        %4151 = vmatprep.subr.bf16.mxu0 0
        %4152 = vmatpush1.bf16.msra.mxu0 0
        %4153 = vmatprep.subr.bf16.mxu0 0
        %4154 = vmatpush1.bf16.msra.mxu0 0
        %4155 = vmatprep.subr.bf16.mxu0 0
        %4156 = vmatpush1.bf16.msra.mxu0 0
        %4157 = vmatprep.subr.bf16.mxu0 0
        %4158 = vmatpush1.bf16.msra.mxu0 0
        %4159 = vmatprep.subr.bf16.mxu0 0
        %4160 = vmatpush1.bf16.msra.mxu0 0
        %4161 = vmatprep.subr.bf16.mxu0 0
        %4162 = vmatpush1.bf16.msra.mxu0 0
        %4163 = vmatprep.subr.bf16.mxu0 0
        %4164 = vmatpush1.bf16.msra.mxu0 0
        %4165 = vmatprep.subr.bf16.mxu0 0
        %4166 = vmatpush1.bf16.msra.mxu0 0
        %4167 = vmatprep.subr.bf16.mxu0 0
        %4168 = vmatpush1.bf16.msra.mxu0 0
        %4169 = vmatprep.subr.bf16.mxu0 0
        %4170 = vmatpush1.bf16.msra.mxu0 0
        %4171 = vmatprep.subr.bf16.mxu0 0
        %4172 = vmatpush1.bf16.msra.mxu0 0
        %4173 = vmatprep.subr.bf16.mxu0 0
        %4174 = vmatpush1.bf16.msra.mxu0 0
        %4175 = vmatprep.subr.bf16.mxu0 0
        %4176 = vmatpush1.bf16.msra.mxu0 0
        %4177 = vmatprep.subr.bf16.mxu0 0
        %4178 = vmatpush1.bf16.msra.mxu0 0
        %4179 = vmatprep.subr.bf16.mxu0 0
        %4180 = vmatpush1.bf16.msra.mxu0 0
        %4181 = vmatprep.mubr.bf16.mxu0 0
        %4182 = vmatmul.mubr.bf16.gmra.mrb[0].mxu0 %v4144
        %v4183 = vpop.f32.mrb[0].mxu0
        %v4184 = vadd.f32 0.0, %v4183
        %v4185 = vpop.f32.mrb[0].mxu0
        %v4186 = vpop.f32.mrb[0].mxu0
        %v4187 = vpop.f32.mrb[0].mxu0
        %4188 = vdwg.mxu0
        %v4190 = vsel %vm1221, %v4016, 0
        %v4193 = vsel %vm1293, %v4018, 0
        %4195 = vmatprep.subr.bf16.mxu0 0
        %4196 = vmatpush1.bf16.msra.mxu0 %v4193
        %4197 = vmatprep.subr.bf16.mxu0 0
        %4198 = vmatpush1.bf16.msra.mxu0 0
        %4199 = vmatprep.subr.bf16.mxu0 0
        %4200 = vmatpush1.bf16.msra.mxu0 0
        %4201 = vmatprep.subr.bf16.mxu0 0
        %4202 = vmatpush1.bf16.msra.mxu0 0
        %4203 = vmatprep.subr.bf16.mxu0 0
        %4204 = vmatpush1.bf16.msra.mxu0 0
        %4205 = vmatprep.subr.bf16.mxu0 0
        %4206 = vmatpush1.bf16.msra.mxu0 0
        %4207 = vmatprep.subr.bf16.mxu0 0
        %4208 = vmatpush1.bf16.msra.mxu0 0
        %4209 = vmatprep.subr.bf16.mxu0 0
        %4210 = vmatpush1.bf16.msra.mxu0 0
        %4211 = vmatprep.subr.bf16.mxu0 0
        %4212 = vmatpush1.bf16.msra.mxu0 0
        %4213 = vmatprep.subr.bf16.mxu0 0
        %4214 = vmatpush1.bf16.msra.mxu0 0
        %4215 = vmatprep.subr.bf16.mxu0 0
        %4216 = vmatpush1.bf16.msra.mxu0 0
        %4217 = vmatprep.subr.bf16.mxu0 0
        %4218 = vmatpush1.bf16.msra.mxu0 0
        %4219 = vmatprep.subr.bf16.mxu0 0
        %4220 = vmatpush1.bf16.msra.mxu0 0
        %4221 = vmatprep.subr.bf16.mxu0 0
        %4222 = vmatpush1.bf16.msra.mxu0 0
        %4223 = vmatprep.subr.bf16.mxu0 0
        %4224 = vmatpush1.bf16.msra.mxu0 0
        %4225 = vmatprep.subr.bf16.mxu0 0
        %4226 = vmatpush1.bf16.msra.mxu0 0
        %4227 = vmatprep.mubr.bf16.mxu0 0
        %4228 = vmatmul.mubr.bf16.gmra.mrb[0].mxu0 %v4190
        %v4229 = vpop.f32.mrb[0].mxu0
        %v4230 = vadd.f32 %v4184, %v4229
        %v4231 = vpop.f32.mrb[0].mxu0
        %v4232 = vpop.f32.mrb[0].mxu0
        %v4233 = vpop.f32.mrb[0].mxu0
        %4234 = vdwg.mxu0
        %4235 = vrot.lane.b32.xlu0 %v3896, 112
        %v4236 = vpop.permute.xlu0 %4235
        %s4238 = scalar_lea.vmem %s1091, 16 [#allocation13]
        %4239 = vst.msk [vmem:[%s4238] sm:$0xff] %vm1221, %v4236
        %4240 = vrot.lane.b32.xlu0 %v3896, 80
        %v4241 = vpop.permute.xlu0 %4240
        %s4243 = scalar_lea.vmem %s1098, 16 [#allocation15]
        %4244 = vst.msk [vmem:[%s4243] sm:$0xff] %vm1221, %v4241
        %4245 = vrot.lane.b32.xlu0 %v3907, 112
        %v4246 = vpop.permute.xlu0 %4245
        %4247 = vrot.lane.b32.xlu0 %v3908, 112
        %v4248 = vpop.permute.xlu0 %4247
        %v4250 = vsel %vm1221, %v4246, 0
        %v4253 = vsel %vm1221, %v4248, 0
        %4255 = vmatprep.subr.bf16.mxu0 0
        %4256 = vmatpush1.bf16.xpose.msra.mxu0 %v4253
        %4257 = vmatprep.subr.bf16.mxu0 0
        %4258 = vmatpush1.bf16.xpose.msra.mxu0 0
        %4259 = vmatprep.subr.bf16.mxu0 0
        %4260 = vmatpush1.bf16.xpose.msra.mxu0 0
        %4261 = vmatprep.subr.bf16.mxu0 0
        %4262 = vmatpush1.bf16.xpose.msra.mxu0 0
        %4263 = vmatprep.subr.bf16.mxu0 0
        %4264 = vmatpush1.bf16.xpose.msra.mxu0 0
        %4265 = vmatprep.subr.bf16.mxu0 0
        %4266 = vmatpush1.bf16.xpose.msra.mxu0 0
        %4267 = vmatprep.subr.bf16.mxu0 0
        %4268 = vmatpush1.bf16.xpose.msra.mxu0 0
        %4269 = vmatprep.subr.bf16.mxu0 0
        %4270 = vmatpush1.bf16.xpose.msra.mxu0 0
        %4271 = vmatprep.subr.bf16.mxu0 0
        %4272 = vmatpush1.bf16.xpose.msra.mxu0 0
        %4273 = vmatprep.subr.bf16.mxu0 0
        %4274 = vmatpush1.bf16.xpose.msra.mxu0 0
        %4275 = vmatprep.subr.bf16.mxu0 0
        %4276 = vmatpush1.bf16.xpose.msra.mxu0 0
        %4277 = vmatprep.subr.bf16.mxu0 0
        %4278 = vmatpush1.bf16.xpose.msra.mxu0 0
        %4279 = vmatprep.subr.bf16.mxu0 0
        %4280 = vmatpush1.bf16.xpose.msra.mxu0 0
        %4281 = vmatprep.subr.bf16.mxu0 0
        %4282 = vmatpush1.bf16.xpose.msra.mxu0 0
        %4283 = vmatprep.subr.bf16.mxu0 0
        %4284 = vmatpush1.bf16.xpose.msra.mxu0 0
        %4285 = vmatprep.subr.bf16.mxu0 0
        %4286 = vmatpush1.bf16.xpose.msra.mxu0 0
        %4287 = vmatprep.mubr.bf16.mxu0 0
        %4288 = vmatmul.mubr.bf16.gmra.mrb[0].mxu0 %v4250
        %v4289 = vpop.f32.mrb[0].mxu0
        %v4290 = vadd.f32 %v2080, %v4289
        %v4291 = vpop.f32.mrb[0].mxu0
        %v4292 = vpop.f32.mrb[0].mxu0
        %v4293 = vpop.f32.mrb[0].mxu0
        %4294 = vdwg.mxu0
        %v4295 = vsel %vm1221, %v4290, -inf
        %4296 = vmax.xlane.f32.xlu0 %v4295
        %v4297 = vpop.xlane.xlu0 %4296
        %v4298 = vsub.f32 %v4290, %v4297
        %v4299 = vmul.f32 %v4298, 1.442695
        %v4300 = vpow.pop %v4299
        %v4301 = vsel %vm1221, %v4300, 0.0
        %4302 = vadd.xlane.f32.xlu0 %v4301
        %v4303 = vpop.xlane.xlu0 %4302
        %v4304 = vrcp.pop %v4303
        %v4305 = vmul.f32 %v4300, %v4304
        %v4306 = vpack.c.bf16 %v4305, %v4305
        %4307 = vrot.lane.b32.xlu0 %v3908, 80
        %v4308 = vpop.permute.xlu0 %4307
        %v4310 = vsel %vm1221, %v4306, 0
        %v4313 = vsel %vm1293, %v4308, 0
        %4315 = vmatprep.subr.bf16.mxu0 0
        %4316 = vmatpush1.bf16.msra.mxu0 %v4313
        %4317 = vmatprep.subr.bf16.mxu0 0
        %4318 = vmatpush1.bf16.msra.mxu0 0
        %4319 = vmatprep.subr.bf16.mxu0 0
        %4320 = vmatpush1.bf16.msra.mxu0 0
        %4321 = vmatprep.subr.bf16.mxu0 0
        %4322 = vmatpush1.bf16.msra.mxu0 0
        %4323 = vmatprep.subr.bf16.mxu0 0
        %4324 = vmatpush1.bf16.msra.mxu0 0
        %4325 = vmatprep.subr.bf16.mxu0 0
        %4326 = vmatpush1.bf16.msra.mxu0 0
        %4327 = vmatprep.subr.bf16.mxu0 0
        %4328 = vmatpush1.bf16.msra.mxu0 0
        %4329 = vmatprep.subr.bf16.mxu0 0
        %4330 = vmatpush1.bf16.msra.mxu0 0
        %4331 = vmatprep.subr.bf16.mxu0 0
        %4332 = vmatpush1.bf16.msra.mxu0 0
        %4333 = vmatprep.subr.bf16.mxu0 0
        %4334 = vmatpush1.bf16.msra.mxu0 0
        %4335 = vmatprep.subr.bf16.mxu0 0
        %4336 = vmatpush1.bf16.msra.mxu0 0
        %4337 = vmatprep.subr.bf16.mxu0 0
        %4338 = vmatpush1.bf16.msra.mxu0 0
        %4339 = vmatprep.subr.bf16.mxu0 0
        %4340 = vmatpush1.bf16.msra.mxu0 0
        %4341 = vmatprep.subr.bf16.mxu0 0
        %4342 = vmatpush1.bf16.msra.mxu0 0
        %4343 = vmatprep.subr.bf16.mxu0 0
        %4344 = vmatpush1.bf16.msra.mxu0 0
        %4345 = vmatprep.subr.bf16.mxu0 0
        %4346 = vmatpush1.bf16.msra.mxu0 0
        %4347 = vmatprep.mubr.bf16.mxu0 0
        %4348 = vmatmul.mubr.bf16.gmra.mrb[0].mxu0 %v4310
        %v4349 = vpop.f32.mrb[0].mxu0
        %v4350 = vadd.f32 0.0, %v4349
        %v4351 = vpop.f32.mrb[0].mxu0
        %v4352 = vpop.f32.mrb[0].mxu0
        %v4353 = vpop.f32.mrb[0].mxu0
        %4354 = vdwg.mxu0
        %v4355 = vpack.c.bf16 %v4350, %v4350
        %s4356 = scalar_lea.vmem %s31, 24
        %v4357 = vld [vmem:[%s4356] sm:$0xf]
        %v4359 = vsel %vm1221, %v4355, 0
        %v4362 = vsel %vm1293, %v4357, 0
        %4364 = vmatprep.subr.bf16.mxu0 0
        %4365 = vmatpush1.bf16.msra.mxu0 %v4362
        %4366 = vmatprep.subr.bf16.mxu0 0
        %4367 = vmatpush1.bf16.msra.mxu0 0
        %4368 = vmatprep.subr.bf16.mxu0 0
        %4369 = vmatpush1.bf16.msra.mxu0 0
        %4370 = vmatprep.subr.bf16.mxu0 0
        %4371 = vmatpush1.bf16.msra.mxu0 0
        %4372 = vmatprep.subr.bf16.mxu0 0
        %4373 = vmatpush1.bf16.msra.mxu0 0
        %4374 = vmatprep.subr.bf16.mxu0 0
        %4375 = vmatpush1.bf16.msra.mxu0 0
        %4376 = vmatprep.subr.bf16.mxu0 0
        %4377 = vmatpush1.bf16.msra.mxu0 0
        %4378 = vmatprep.subr.bf16.mxu0 0
        %4379 = vmatpush1.bf16.msra.mxu0 0
        %4380 = vmatprep.subr.bf16.mxu0 0
        %4381 = vmatpush1.bf16.msra.mxu0 0
        %4382 = vmatprep.subr.bf16.mxu0 0
        %4383 = vmatpush1.bf16.msra.mxu0 0
        %4384 = vmatprep.subr.bf16.mxu0 0
        %4385 = vmatpush1.bf16.msra.mxu0 0
        %4386 = vmatprep.subr.bf16.mxu0 0
        %4387 = vmatpush1.bf16.msra.mxu0 0
        %4388 = vmatprep.subr.bf16.mxu0 0
        %4389 = vmatpush1.bf16.msra.mxu0 0
        %4390 = vmatprep.subr.bf16.mxu0 0
        %4391 = vmatpush1.bf16.msra.mxu0 0
        %4392 = vmatprep.subr.bf16.mxu0 0
        %4393 = vmatpush1.bf16.msra.mxu0 0
        %4394 = vmatprep.subr.bf16.mxu0 0
        %4395 = vmatpush1.bf16.msra.mxu0 0
        %4396 = vmatprep.mubr.bf16.mxu0 0
        %4397 = vmatmul.mubr.bf16.gmra.mrb[0].mxu0 %v4359
        %v4398 = vpop.f32.mrb[0].mxu0
        %v4399 = vadd.f32 0.0, %v4398
        %v4400 = vpop.f32.mrb[0].mxu0
        %v4401 = vpop.f32.mrb[0].mxu0
        %v4402 = vpop.f32.mrb[0].mxu0
        %4403 = vdwg.mxu0
        %v4404 = vadd.f32 %v4230, %v4399
        %4405 = vrot.lane.b32.xlu0 %v3896, 104
        %v4406 = vpop.permute.xlu0 %4405
        %s4408 = scalar_lea.vmem %s1091, 24 [#allocation13]
        %4409 = vst.msk [vmem:[%s4408] sm:$0xff] %vm1221, %v4406
        %4410 = vrot.lane.b32.xlu0 %v3896, 72
        %v4411 = vpop.permute.xlu0 %4410
        %s4413 = scalar_lea.vmem %s1098, 24 [#allocation15]
        %4414 = vst.msk [vmem:[%s4413] sm:$0xff] %vm1221, %v4411
        %4415 = vrot.lane.b32.xlu0 %v3907, 104
        %v4416 = vpop.permute.xlu0 %4415
        %4417 = vrot.lane.b32.xlu0 %v3908, 104
        %v4418 = vpop.permute.xlu0 %4417
        %v4420 = vsel %vm1221, %v4416, 0
        %v4423 = vsel %vm1221, %v4418, 0
        %4425 = vmatprep.subr.bf16.mxu0 0
        %4426 = vmatpush1.bf16.xpose.msra.mxu0 %v4423
        %4427 = vmatprep.subr.bf16.mxu0 0
        %4428 = vmatpush1.bf16.xpose.msra.mxu0 0
        %4429 = vmatprep.subr.bf16.mxu0 0
        %4430 = vmatpush1.bf16.xpose.msra.mxu0 0
        %4431 = vmatprep.subr.bf16.mxu0 0
        %4432 = vmatpush1.bf16.xpose.msra.mxu0 0
        %4433 = vmatprep.subr.bf16.mxu0 0
        %4434 = vmatpush1.bf16.xpose.msra.mxu0 0
        %4435 = vmatprep.subr.bf16.mxu0 0
        %4436 = vmatpush1.bf16.xpose.msra.mxu0 0
        %4437 = vmatprep.subr.bf16.mxu0 0
        %4438 = vmatpush1.bf16.xpose.msra.mxu0 0
        %4439 = vmatprep.subr.bf16.mxu0 0
        %4440 = vmatpush1.bf16.xpose.msra.mxu0 0
        %4441 = vmatprep.subr.bf16.mxu0 0
        %4442 = vmatpush1.bf16.xpose.msra.mxu0 0
        %4443 = vmatprep.subr.bf16.mxu0 0
        %4444 = vmatpush1.bf16.xpose.msra.mxu0 0
        %4445 = vmatprep.subr.bf16.mxu0 0
        %4446 = vmatpush1.bf16.xpose.msra.mxu0 0
        %4447 = vmatprep.subr.bf16.mxu0 0
        %4448 = vmatpush1.bf16.xpose.msra.mxu0 0
        %4449 = vmatprep.subr.bf16.mxu0 0
        %4450 = vmatpush1.bf16.xpose.msra.mxu0 0
        %4451 = vmatprep.subr.bf16.mxu0 0
        %4452 = vmatpush1.bf16.xpose.msra.mxu0 0
        %4453 = vmatprep.subr.bf16.mxu0 0
        %4454 = vmatpush1.bf16.xpose.msra.mxu0 0
        %4455 = vmatprep.subr.bf16.mxu0 0
        %4456 = vmatpush1.bf16.xpose.msra.mxu0 0
        %4457 = vmatprep.mubr.bf16.mxu0 0
        %4458 = vmatmul.mubr.bf16.gmra.mrb[0].mxu0 %v4420
        %v4459 = vpop.f32.mrb[0].mxu0
        %v4460 = vadd.f32 %v2080, %v4459
        %v4461 = vpop.f32.mrb[0].mxu0
        %v4462 = vpop.f32.mrb[0].mxu0
        %v4463 = vpop.f32.mrb[0].mxu0
        %4464 = vdwg.mxu0
        %v4465 = vsel %vm1221, %v4460, -inf
        %4466 = vmax.xlane.f32.xlu0 %v4465
        %v4467 = vpop.xlane.xlu0 %4466
        %v4468 = vsub.f32 %v4460, %v4467
        %v4469 = vmul.f32 %v4468, 1.442695
        %v4470 = vpow.pop %v4469
        %v4471 = vsel %vm1221, %v4470, 0.0
        %4472 = vadd.xlane.f32.xlu0 %v4471
        %v4473 = vpop.xlane.xlu0 %4472
        %v4474 = vrcp.pop %v4473
        %v4475 = vmul.f32 %v4470, %v4474
        %v4476 = vpack.c.bf16 %v4475, %v4475
        %4477 = vrot.lane.b32.xlu0 %v3908, 72
        %v4478 = vpop.permute.xlu0 %4477
        %v4480 = vsel %vm1221, %v4476, 0
        %v4483 = vsel %vm1293, %v4478, 0
        %4485 = vmatprep.subr.bf16.mxu0 0
        %4486 = vmatpush1.bf16.msra.mxu0 %v4483
        %4487 = vmatprep.subr.bf16.mxu0 0
        %4488 = vmatpush1.bf16.msra.mxu0 0
        %4489 = vmatprep.subr.bf16.mxu0 0
        %4490 = vmatpush1.bf16.msra.mxu0 0
        %4491 = vmatprep.subr.bf16.mxu0 0
        %4492 = vmatpush1.bf16.msra.mxu0 0
        %4493 = vmatprep.subr.bf16.mxu0 0
        %4494 = vmatpush1.bf16.msra.mxu0 0
        %4495 = vmatprep.subr.bf16.mxu0 0
        %4496 = vmatpush1.bf16.msra.mxu0 0
        %4497 = vmatprep.subr.bf16.mxu0 0
        %4498 = vmatpush1.bf16.msra.mxu0 0
        %4499 = vmatprep.subr.bf16.mxu0 0
        %4500 = vmatpush1.bf16.msra.mxu0 0
        %4501 = vmatprep.subr.bf16.mxu0 0
        %4502 = vmatpush1.bf16.msra.mxu0 0
        %4503 = vmatprep.subr.bf16.mxu0 0
        %4504 = vmatpush1.bf16.msra.mxu0 0
        %4505 = vmatprep.subr.bf16.mxu0 0
        %4506 = vmatpush1.bf16.msra.mxu0 0
        %4507 = vmatprep.subr.bf16.mxu0 0
        %4508 = vmatpush1.bf16.msra.mxu0 0
        %4509 = vmatprep.subr.bf16.mxu0 0
        %4510 = vmatpush1.bf16.msra.mxu0 0
        %4511 = vmatprep.subr.bf16.mxu0 0
        %4512 = vmatpush1.bf16.msra.mxu0 0
        %4513 = vmatprep.subr.bf16.mxu0 0
        %4514 = vmatpush1.bf16.msra.mxu0 0
        %4515 = vmatprep.subr.bf16.mxu0 0
        %4516 = vmatpush1.bf16.msra.mxu0 0
        %4517 = vmatprep.mubr.bf16.mxu0 0
        %4518 = vmatmul.mubr.bf16.gmra.mrb[0].mxu0 %v4480
        %v4519 = vpop.f32.mrb[0].mxu0
        %v4520 = vadd.f32 0.0, %v4519
        %v4521 = vpop.f32.mrb[0].mxu0
        %v4522 = vpop.f32.mrb[0].mxu0
        %v4523 = vpop.f32.mrb[0].mxu0
        %4524 = vdwg.mxu0
        %v4525 = vpack.c.bf16 %v4520, %v4520
        %s4526 = scalar_lea.vmem %s31, 28
        %v4527 = vld [vmem:[%s4526] sm:$0xf]
        %v4529 = vsel %vm1221, %v4525, 0
        %v4532 = vsel %vm1293, %v4527, 0
        %4534 = vmatprep.subr.bf16.mxu0 0
        %4535 = vmatpush1.bf16.msra.mxu0 %v4532
        %4536 = vmatprep.subr.bf16.mxu0 0
        %4537 = vmatpush1.bf16.msra.mxu0 0
        %4538 = vmatprep.subr.bf16.mxu0 0
        %4539 = vmatpush1.bf16.msra.mxu0 0
        %4540 = vmatprep.subr.bf16.mxu0 0
        %4541 = vmatpush1.bf16.msra.mxu0 0
        %4542 = vmatprep.subr.bf16.mxu0 0
        %4543 = vmatpush1.bf16.msra.mxu0 0
        %4544 = vmatprep.subr.bf16.mxu0 0
        %4545 = vmatpush1.bf16.msra.mxu0 0
        %4546 = vmatprep.subr.bf16.mxu0 0
        %4547 = vmatpush1.bf16.msra.mxu0 0
        %4548 = vmatprep.subr.bf16.mxu0 0
        %4549 = vmatpush1.bf16.msra.mxu0 0
        %4550 = vmatprep.subr.bf16.mxu0 0
        %4551 = vmatpush1.bf16.msra.mxu0 0
        %4552 = vmatprep.subr.bf16.mxu0 0
        %4553 = vmatpush1.bf16.msra.mxu0 0
        %4554 = vmatprep.subr.bf16.mxu0 0
        %4555 = vmatpush1.bf16.msra.mxu0 0
        %4556 = vmatprep.subr.bf16.mxu0 0
        %4557 = vmatpush1.bf16.msra.mxu0 0
        %4558 = vmatprep.subr.bf16.mxu0 0
        %4559 = vmatpush1.bf16.msra.mxu0 0
        %4560 = vmatprep.subr.bf16.mxu0 0
        %4561 = vmatpush1.bf16.msra.mxu0 0
        %4562 = vmatprep.subr.bf16.mxu0 0
        %4563 = vmatpush1.bf16.msra.mxu0 0
        %4564 = vmatprep.subr.bf16.mxu0 0
        %4565 = vmatpush1.bf16.msra.mxu0 0
        %4566 = vmatprep.mubr.bf16.mxu0 0
        %4567 = vmatmul.mubr.bf16.gmra.mrb[0].mxu0 %v4529
        %v4568 = vpop.f32.mrb[0].mxu0
        %v4569 = vadd.f32 0.0, %v4568
        %v4570 = vpop.f32.mrb[0].mxu0
        %v4571 = vpop.f32.mrb[0].mxu0
        %v4572 = vpop.f32.mrb[0].mxu0
        %4573 = vdwg.mxu0
        %v4574 = vadd.f32 %v4404, %v4569
        %s4575 = scalar_lea.vmem %s33, 1
        %v4576 = vld [vmem:[%s4575] sm:$0x1]
        %v4578 = vlaneseq
        %v4579 = vshrl.u32 %v4578, 7
        %v4580 = vsub.s32 0, %v4579
        %v4581 = vrot.slane %v4576, %v4580
        %v4583 = vadd.f32 %v4574, %v4581
        %v4584 = vadd.f32 %v3761, %v4583
        %s4585 = scalar_lea.vmem %s35, 1
        %v4586 = vld [vmem:[%s4585] sm:$0x1]
        %s4587 = scalar_lea.vmem %s37, 1
        %v4588 = vld [vmem:[%s4587] sm:$0x1]
        %v4589 = vsel %vm1114, %v4584, 0.0
        %4590 = vadd.xlane.f32.xlu0 %v4589
        %v4591 = vpop.xlane.xlu0 %4590
        %v4592 = vmul.f32 %v4591, %v1118
        %v4593 = vsub.f32 %v4584, %v4592
        %v4594 = vmul.f32 %v4593, %v4593
        %v4595 = vsel %vm1114, %v4594, 0.0
        %4596 = vadd.xlane.f32.xlu0 %v4595
        %v4597 = vpop.xlane.xlu0 %4596
        %v4598 = vmul.f32 %v4597, %v1118
        %v4599 = vadd.f32 %v4598, 1e-05
        %v4600 = vrsqrt.pop %v4599
        %v4601 = vmul.f32 %v4593, %v4600
        %v4603 = vlaneseq
        %v4604 = vshrl.u32 %v4603, 7
        %v4605 = vsub.s32 0, %v4604
        %v4606 = vrot.slane %v4586, %v4605
        %v4608 = vmul.f32 %v4601, %v4606
        %v4610 = vlaneseq
        %v4611 = vshrl.u32 %v4610, 7
        %v4612 = vsub.s32 0, %v4611
        %v4613 = vrot.slane %v4588, %v4612
        %v4615 = vadd.f32 %v4608, %v4613
        %s4616 = scalar_lea.vmem %s39, 16
        %v4617 = vld [vmem:[%s4616] sm:$0xf]
        %v4618 = vld [vmem:[%s4616 + $0x4] sm:$0xf]
        %v4619 = vld [vmem:[%s4616 + $0x8] sm:$0xf]
        %v4620 = vld [vmem:[%s4616 + $0xc] sm:$0xf]
        %s4621 = scalar_lea.vmem %s41, 1
        %v4622 = vld [vmem:[%s4621] sm:$0x1]
        %v4623 = vpack.c.bf16 %v4615, %v4615
        %v4625 = vlaneseq
        %v4626 = vshrl.u32 %v4625, 7
        %v4627 = vsub.s32 0, %v4626
        %v4628 = vrot.slane %v4622, %v4627
        %v4634 = vunpack.c.l.b16 %v4617
        %v4635 = vunpack.c.l.b16 %v4618
        %v4636 = vunpack.c.l.b16 %v4619
        %v4637 = vunpack.c.l.b16 %v4620
        %v4638 = vpack.c.b16 %v4635, %v4634
        %v4639 = vpack.c.b16 %v4637, %v4636
        %v4643 = vsel %vm1114, %v4623, 0
        %4645 = vmatprep.subr.bf16.mxu0 0
        %4646 = vmatpush1.bf16.msra.mxu0 %v4638
        %4647 = vmatprep.subr.bf16.mxu0 0
        %4648 = vmatpush1.bf16.msra.mxu0 %v4639
        %4649 = vmatprep.subr.bf16.mxu0 0
        %4650 = vmatpush1.bf16.msra.mxu0 0
        %4651 = vmatprep.subr.bf16.mxu0 0
        %4652 = vmatpush1.bf16.msra.mxu0 0
        %4653 = vmatprep.subr.bf16.mxu0 0
        %4654 = vmatpush1.bf16.msra.mxu0 0
        %4655 = vmatprep.subr.bf16.mxu0 0
        %4656 = vmatpush1.bf16.msra.mxu0 0
        %4657 = vmatprep.subr.bf16.mxu0 0
        %4658 = vmatpush1.bf16.msra.mxu0 0
        %4659 = vmatprep.subr.bf16.mxu0 0
        %4660 = vmatpush1.bf16.msra.mxu0 0
        %4661 = vmatprep.subr.bf16.mxu0 0
        %4662 = vmatpush1.bf16.msra.mxu0 0
        %4663 = vmatprep.subr.bf16.mxu0 0
        %4664 = vmatpush1.bf16.msra.mxu0 0
        %4665 = vmatprep.subr.bf16.mxu0 0
        %4666 = vmatpush1.bf16.msra.mxu0 0
        %4667 = vmatprep.subr.bf16.mxu0 0
        %4668 = vmatpush1.bf16.msra.mxu0 0
        %4669 = vmatprep.subr.bf16.mxu0 0
        %4670 = vmatpush1.bf16.msra.mxu0 0
        %4671 = vmatprep.subr.bf16.mxu0 0
        %4672 = vmatpush1.bf16.msra.mxu0 0
        %4673 = vmatprep.subr.bf16.mxu0 0
        %4674 = vmatpush1.bf16.msra.mxu0 0
        %4675 = vmatprep.subr.bf16.mxu0 0
        %4676 = vmatpush1.bf16.msra.mxu0 0
        %4677 = vmatprep.mubr.bf16.mxu0 0
        %4678 = vmatmul.mubr.bf16.gmra.mrb[0].mxu0 %v4643
        %v4679 = vpop.f32.mrb[0].mxu0
        %v4680 = vadd.f32 %v4628, %v4679
        %v4681 = vpop.f32.mrb[0].mxu0
        %v4682 = vpop.f32.mrb[0].mxu0
        %v4683 = vpop.f32.mrb[0].mxu0
        %4684 = vdwg.mxu0
        %v4685 = vmul.f32 %v4680, 0.5
        %v4686 = vmul.f32 %v4680, 0.044715
        %v4687 = vmul.f32 %v4686, %v4680
        %v4688 = vmul.f32 %v4687, %v4680
        %v4689 = vadd.f32 %v4680, %v4688
        %v4690 = vmul.f32 %v4689, 0.7978846
        %v4691 = vtanh.pop %v4690
        %v4692 = vadd.f32 %v4691, 1.0
        %v4693 = vmul.f32 %v4685, %v4692
        %s4694 = scalar_lea.vmem %s43, 32
        %v4695 = vld [vmem:[%s4694] sm:$0xf]
        %v4696 = vld [vmem:[%s4694 + $0x4] sm:$0xf]
        %v4697 = vld [vmem:[%s4694 + $0x8] sm:$0xf]
        %v4698 = vld [vmem:[%s4694 + $0xc] sm:$0xf]
        %v4699 = vld [vmem:[%s4694 + $0x10] sm:$0xf]
        %v4700 = vld [vmem:[%s4694 + $0x14] sm:$0xf]
        %v4701 = vld [vmem:[%s4694 + $0x18] sm:$0xf]
        %v4702 = vld [vmem:[%s4694 + $0x1c] sm:$0xf]
        %s4703 = scalar_lea.vmem %s45, 1
        %v4704 = vld [vmem:[%s4703] sm:$0x1]
        %v4705 = vpack.c.bf16 %v4693, %v4693
        %v4707 = vlaneseq
        %v4708 = vshrl.u32 %v4707, 7
        %v4709 = vsub.s32 0, %v4708
        %v4710 = vrot.slane %v4704, %v4709
        %v4720 = vunpack.c.l.b16 %v4695
        %v4721 = vunpack.c.l.b16 %v4696
        %v4722 = vunpack.c.l.b16 %v4697
        %v4723 = vunpack.c.l.b16 %v4698
        %v4724 = vunpack.c.l.b16 %v4699
        %v4725 = vunpack.c.l.b16 %v4700
        %v4726 = vunpack.c.l.b16 %v4701
        %v4727 = vunpack.c.l.b16 %v4702
        %v4728 = vpack.c.b16 %v4721, %v4720
        %v4729 = vpack.c.b16 %v4723, %v4722
        %v4730 = vpack.c.b16 %v4725, %v4724
        %v4731 = vpack.c.b16 %v4727, %v4726
        %v4737 = vsel %vm2901, %v4705, 0
        %4739 = vmatprep.subr.bf16.mxu0 0
        %4740 = vmatpush1.bf16.msra.mxu0 %v4728
        %4741 = vmatprep.subr.bf16.mxu0 0
        %4742 = vmatpush1.bf16.msra.mxu0 %v4729
        %4743 = vmatprep.subr.bf16.mxu0 0
        %4744 = vmatpush1.bf16.msra.mxu0 %v4730
        %4745 = vmatprep.subr.bf16.mxu0 0
        %4746 = vmatpush1.bf16.msra.mxu0 %v4731
        %4747 = vmatprep.subr.bf16.mxu0 0
        %4748 = vmatpush1.bf16.msra.mxu0 0
        %4749 = vmatprep.subr.bf16.mxu0 0
        %4750 = vmatpush1.bf16.msra.mxu0 0
        %4751 = vmatprep.subr.bf16.mxu0 0
        %4752 = vmatpush1.bf16.msra.mxu0 0
        %4753 = vmatprep.subr.bf16.mxu0 0
        %4754 = vmatpush1.bf16.msra.mxu0 0
        %4755 = vmatprep.subr.bf16.mxu0 0
        %4756 = vmatpush1.bf16.msra.mxu0 0
        %4757 = vmatprep.subr.bf16.mxu0 0
        %4758 = vmatpush1.bf16.msra.mxu0 0
        %4759 = vmatprep.subr.bf16.mxu0 0
        %4760 = vmatpush1.bf16.msra.mxu0 0
        %4761 = vmatprep.subr.bf16.mxu0 0
        %4762 = vmatpush1.bf16.msra.mxu0 0
        %4763 = vmatprep.subr.bf16.mxu0 0
        %4764 = vmatpush1.bf16.msra.mxu0 0
        %4765 = vmatprep.subr.bf16.mxu0 0
        %4766 = vmatpush1.bf16.msra.mxu0 0
        %4767 = vmatprep.subr.bf16.mxu0 0
        %4768 = vmatpush1.bf16.msra.mxu0 0
        %4769 = vmatprep.subr.bf16.mxu0 0
        %4770 = vmatpush1.bf16.msra.mxu0 0
        %4771 = vmatprep.mubr.bf16.mxu0 0
        %4772 = vmatmul.mubr.bf16.gmra.mrb[0].mxu0 %v4737
        %v4773 = vpop.f32.mrb[0].mxu0
        %v4774 = vadd.f32 %v4710, %v4773
        %v4775 = vpop.f32.mrb[0].mxu0
        %v4776 = vpop.f32.mrb[0].mxu0
        %v4777 = vpop.f32.mrb[0].mxu0
        %4778 = vdwg.mxu0
        %v4779 = vadd.f32 %v4615, %v4774
        %s4780 = scalar_lea.vmem %s47, 1
        %v4781 = vld [vmem:[%s4780] sm:$0x1]
        %s4782 = scalar_lea.vmem %s49, 1
        %v4783 = vld [vmem:[%s4782] sm:$0x1]
        %v4784 = vsel %vm1114, %v4779, 0.0
        %4785 = vadd.xlane.f32.xlu0 %v4784
        %v4786 = vpop.xlane.xlu0 %4785
        %v4787 = vmul.f32 %v4786, %v1118
        %v4788 = vsub.f32 %v4779, %v4787
        %v4789 = vmul.f32 %v4788, %v4788
        %v4790 = vsel %vm1114, %v4789, 0.0
        %4791 = vadd.xlane.f32.xlu0 %v4790
        %v4792 = vpop.xlane.xlu0 %4791
        %v4793 = vmul.f32 %v4792, %v1118
        %v4794 = vadd.f32 %v4793, 1e-05
        %v4795 = vrsqrt.pop %v4794
        %v4796 = vmul.f32 %v4788, %v4795
        %v4798 = vlaneseq
        %v4799 = vshrl.u32 %v4798, 7
        %v4800 = vsub.s32 0, %v4799
        %v4801 = vrot.slane %v4781, %v4800
        %v4803 = vmul.f32 %v4796, %v4801
        %v4805 = vlaneseq
        %v4806 = vshrl.u32 %v4805, 7
        %v4807 = vsub.s32 0, %v4806
        %v4808 = vrot.slane %v4783, %v4807
        %v4810 = vadd.f32 %v4803, %v4808
        %4811 = vst.msk [vmem:[%s1042] sm:$0xff] %vm1114, %v4810
        %s4812 = sand.u32 %s642, 1
        %s4813 = scalar_lea.sflag [#allocation3], %s4812
        %s4814 = sand.u32 %s642, 1
        %s4815 = smul.addr %s4814, 8
        %s4816 = scalar_lea.vmem [#allocation2], %s4815
        %s4817 = sand.u32 %s94, 1
        %s4818 = scalar_lea.sflag [#allocation5], %s4817
        %s4819 = sand.u32 %s668, 1
        %s4820 = smul.addr %s4819, 32
        %s4821 = scalar_lea.vmem [#allocation4], %s4820
        %s4822 = sand.u32 %s94, 1
        %s4823 = scalar_lea.sflag [#allocation5], %s4822
        %s4824 = sand.u32 %s694, 1
        %s4825 = smul.addr %s4824, 32
        %s4826 = scalar_lea.vmem [#allocation6], %s4825
        %s4827 = sand.u32 %s94, 1
        %s4828 = scalar_lea.sflag [#allocation8], %s4827
        %s4829 = sand.u32 %s720, 1
        %s4830 = smul.addr %s4829, 32
        %s4831 = scalar_lea.vmem [#allocation7], %s4830
        %s4832 = sand.u32 %s94, 1
        %s4833 = scalar_lea.sflag [#allocation8], %s4832
        %s4834 = sand.u32 %s746, 1
        %s4835 = smul.addr %s4834, 32
        %s4836 = scalar_lea.vmem [#allocation9], %s4835
        %s4837 = sand.u32 %s94, 1
        %s4838 = scalar_lea.sflag [#allocation11], %s4837
        %s4839 = sand.u32 %s772, 1
        %s4840 = smul.addr %s4839, 32
        %s4841 = scalar_lea.vmem [#allocation10], %s4840
        %s4842 = sand.u32 %s94, 1
        %s4843 = scalar_lea.sflag [#allocation11], %s4842
        %s4844 = sand.u32 %s798, 1
        %s4845 = smul.addr %s4844, 32
        %s4846 = scalar_lea.vmem [#allocation12], %s4845
        %s4847 = sand.u32 %s94, 1
        %s4848 = scalar_lea.sflag [#allocation14], %s4847
        %s4849 = sand.u32 %s824, 1
        %s4850 = smul.addr %s4849, 32
        %s4851 = scalar_lea.vmem [#allocation13], %s4850
        %s4852 = sand.u32 %s94, 1
        %s4853 = scalar_lea.sflag [#allocation14], %s4852
        %s4854 = sand.u32 %s850, 1
        %s4855 = smul.addr %s4854, 32
        %s4856 = scalar_lea.vmem [#allocation15], %s4855
        // Predicated region
        $region121: #{decoder_for_onnx_forward.1} parent=119 // pred_check
          %p4857 = pneg %p652
        $region122: #{decoder_for_onnx_forward.1} parent=119 // pred_check_branch
          %4859 = sbr.rel (%p4857) target = $region124
        $region123: #{decoder_for_onnx_forward.1} parent=119 // pred_region
          %s4861 = ssub.s32 128, 128
          %4862 = vsyncadd %s4813, %s4861
          %s4863 = smul.addr %s94, 128
          %s4864 = scalar_lea.hbm %s51, %s4863
          %s4866 = sshll.u32 %s4816, 4
          %s4867 = int_to_ptr.vmem [resolvable:$true] %s4866
          %4869 = dma.vmem_to_hbm [thread:$0]  %s4867, 128, %s4864, %s4813
        $region124: #{decoder_for_onnx_forward.1} parent=119 // pred_fallthru
          _
        // Predicated region
        $region125: #{decoder_for_onnx_forward.1} parent=119 // pred_check
          %p4870 = pneg %p678
        $region126: #{decoder_for_onnx_forward.1} parent=119 // pred_check_branch
          %4872 = sbr.rel (%p4870) target = $region128
        $region127: #{decoder_for_onnx_forward.1} parent=119 // pred_region
          %s4874 = ssub.s32 512, 512
          %4875 = vsyncadd %s4818, %s4874
          %s4876 = smul.addr %s94, 4
          %s4877 = smul.addr %s4876, 128
          %s4878 = scalar_lea.hbm %s53, %s4877
          %s4879 = sshll.u32 %s4821, 4
          %s4880 = int_to_ptr.vmem [resolvable:$true] %s4879
          %4885 = dma.vmem_to_hbm [thread:$0]  %s4880, 512, %s4878, %s4818, 128, 128, 8
        $region128: #{decoder_for_onnx_forward.1} parent=119 // pred_fallthru
          _
        // Predicated region
        $region129: #{decoder_for_onnx_forward.1} parent=119 // pred_check
          %p4886 = pneg %p704
        $region130: #{decoder_for_onnx_forward.1} parent=119 // pred_check_branch
          %4888 = sbr.rel (%p4886) target = $region132
        $region131: #{decoder_for_onnx_forward.1} parent=119 // pred_region
          %s4890 = ssub.s32 512, 512
          %4891 = vsyncadd %s4823, %s4890
          %s4892 = smul.addr %s94, 4
          %s4893 = smul.addr %s4892, 128
          %s4894 = scalar_lea.hbm %s55, %s4893
          %s4895 = sshll.u32 %s4826, 4
          %s4896 = int_to_ptr.vmem [resolvable:$true] %s4895
          %4901 = dma.vmem_to_hbm [thread:$0]  %s4896, 512, %s4894, %s4823, 128, 128, 8
        $region132: #{decoder_for_onnx_forward.1} parent=119 // pred_fallthru
          _
        // Predicated region
        $region133: #{decoder_for_onnx_forward.1} parent=119 // pred_check
          %p4902 = pneg %p730
        $region134: #{decoder_for_onnx_forward.1} parent=119 // pred_check_branch
          %4904 = sbr.rel (%p4902) target = $region136
        $region135: #{decoder_for_onnx_forward.1} parent=119 // pred_region
          %s4906 = ssub.s32 512, 512
          %4907 = vsyncadd %s4828, %s4906
          %s4908 = smul.addr %s94, 4
          %s4909 = smul.addr %s4908, 128
          %s4910 = scalar_lea.hbm %s57, %s4909
          %s4911 = sshll.u32 %s4831, 4
          %s4912 = int_to_ptr.vmem [resolvable:$true] %s4911
          %4917 = dma.vmem_to_hbm [thread:$0]  %s4912, 512, %s4910, %s4828, 128, 128, 8
        $region136: #{decoder_for_onnx_forward.1} parent=119 // pred_fallthru
          _
        // Predicated region
        $region137: #{decoder_for_onnx_forward.1} parent=119 // pred_check
          %p4918 = pneg %p756
        $region138: #{decoder_for_onnx_forward.1} parent=119 // pred_check_branch
          %4920 = sbr.rel (%p4918) target = $region140
        $region139: #{decoder_for_onnx_forward.1} parent=119 // pred_region
          %s4922 = ssub.s32 512, 512
          %4923 = vsyncadd %s4833, %s4922
          %s4924 = smul.addr %s94, 4
          %s4925 = smul.addr %s4924, 128
          %s4926 = scalar_lea.hbm %s59, %s4925
          %s4927 = sshll.u32 %s4836, 4
          %s4928 = int_to_ptr.vmem [resolvable:$true] %s4927
          %4933 = dma.vmem_to_hbm [thread:$0]  %s4928, 512, %s4926, %s4833, 128, 128, 8
        $region140: #{decoder_for_onnx_forward.1} parent=119 // pred_fallthru
          _
        // Predicated region
        $region141: #{decoder_for_onnx_forward.1} parent=119 // pred_check
          %p4934 = pneg %p782
        $region142: #{decoder_for_onnx_forward.1} parent=119 // pred_check_branch
          %4936 = sbr.rel (%p4934) target = $region144
        $region143: #{decoder_for_onnx_forward.1} parent=119 // pred_region
          %s4938 = ssub.s32 512, 512
          %4939 = vsyncadd %s4838, %s4938
          %s4940 = smul.addr %s94, 4
          %s4941 = smul.addr %s4940, 128
          %s4942 = scalar_lea.hbm %s61, %s4941
          %s4943 = sshll.u32 %s4841, 4
          %s4944 = int_to_ptr.vmem [resolvable:$true] %s4943
          %4949 = dma.vmem_to_hbm [thread:$0]  %s4944, 512, %s4942, %s4838, 128, 128, 8
        $region144: #{decoder_for_onnx_forward.1} parent=119 // pred_fallthru
          _
        // Predicated region
        $region145: #{decoder_for_onnx_forward.1} parent=119 // pred_check
          %p4950 = pneg %p808
        $region146: #{decoder_for_onnx_forward.1} parent=119 // pred_check_branch
          %4952 = sbr.rel (%p4950) target = $region148
        $region147: #{decoder_for_onnx_forward.1} parent=119 // pred_region
          %s4954 = ssub.s32 512, 512
          %4955 = vsyncadd %s4843, %s4954
          %s4956 = smul.addr %s94, 4
          %s4957 = smul.addr %s4956, 128
          %s4958 = scalar_lea.hbm %s63, %s4957
          %s4959 = sshll.u32 %s4846, 4
          %s4960 = int_to_ptr.vmem [resolvable:$true] %s4959
          %4965 = dma.vmem_to_hbm [thread:$0]  %s4960, 512, %s4958, %s4843, 128, 128, 8
        $region148: #{decoder_for_onnx_forward.1} parent=119 // pred_fallthru
          _
        // Predicated region
        $region149: #{decoder_for_onnx_forward.1} parent=119 // pred_check
          %p4966 = pneg %p834
        $region150: #{decoder_for_onnx_forward.1} parent=119 // pred_check_branch
          %4968 = sbr.rel (%p4966) target = $region152
        $region151: #{decoder_for_onnx_forward.1} parent=119 // pred_region
          %s4970 = ssub.s32 512, 512
          %4971 = vsyncadd %s4848, %s4970
          %s4972 = smul.addr %s94, 4
          %s4973 = smul.addr %s4972, 128
          %s4974 = scalar_lea.hbm %s65, %s4973
          %s4975 = sshll.u32 %s4851, 4
          %s4976 = int_to_ptr.vmem [resolvable:$true] %s4975
          %4981 = dma.vmem_to_hbm [thread:$0]  %s4976, 512, %s4974, %s4848, 128, 128, 8
        $region152: #{decoder_for_onnx_forward.1} parent=119 // pred_fallthru
          _
        // Predicated region
        $region153: #{decoder_for_onnx_forward.1} parent=119 // pred_check
          %p4982 = pneg %p860
        $region154: #{decoder_for_onnx_forward.1} parent=119 // pred_check_branch
          %4984 = sbr.rel (%p4982) target = $region156
        $region155: #{decoder_for_onnx_forward.1} parent=119 // pred_region
          %s4986 = ssub.s32 512, 512
          %4987 = vsyncadd %s4853, %s4986
          %s4988 = smul.addr %s94, 4
          %s4989 = smul.addr %s4988, 128
          %s4990 = scalar_lea.hbm %s67, %s4989
          %s4991 = sshll.u32 %s4856, 4
          %s4992 = int_to_ptr.vmem [resolvable:$true] %s4991
          %4997 = dma.vmem_to_hbm [thread:$0]  %s4992, 512, %s4990, %s4853, 128, 128, 8
        $region156: #{decoder_for_onnx_forward.1} parent=119 // pred_fallthru
          _
      $region120: #{decoder_for_onnx_forward.1} parent=5 // pred_fallthru
        _
      %p4998 = scmp.le.s32.totalorder 2, %s89
      // Predicated region
      $region157: #{decoder_for_onnx_forward.1} parent=5 // pred_check
        %p4999 = pneg %p4998
      $region158: #{decoder_for_onnx_forward.1} parent=5 // pred_check_branch
        %5001 = sbr.rel (%p4999) target = $region160
      $region159: #{decoder_for_onnx_forward.1} parent=5 // pred_region
        %s5002 = ssub.s32 %s89, 2
        // Predicated region
        $region161: #{decoder_for_onnx_forward.1} parent=159 // pred_check
          %p5003 = pneg %p658
        $region162: #{decoder_for_onnx_forward.1} parent=159 // pred_check_branch
          %5005 = sbr.rel (%p5003) target = $region164
        $region163: #{decoder_for_onnx_forward.1} parent=159 // pred_region
          %s5006 = sand.u32 %s643, 1
          %s5007 = scalar_lea.sflag [#allocation3], %s5006
          %s5008 = sand.u32 %s643, 1
          %s5009 = smul.addr %s5008, 8
          %s5010 = scalar_lea.vmem [#allocation2], %s5009
          %5011 = dma.done %s5007, 128
        $region164: #{decoder_for_onnx_forward.1} parent=159 // pred_fallthru
          _
        // Predicated region
        $region165: #{decoder_for_onnx_forward.1} parent=159 // pred_check
          %p5012 = pneg %p684
        $region166: #{decoder_for_onnx_forward.1} parent=159 // pred_check_branch
          %5014 = sbr.rel (%p5012) target = $region168
        $region167: #{decoder_for_onnx_forward.1} parent=159 // pred_region
          %s5015 = sand.u32 %s95, 1
          %s5016 = scalar_lea.sflag [#allocation5], %s5015
          %s5017 = sand.u32 %s669, 1
          %s5018 = smul.addr %s5017, 32
          %s5019 = scalar_lea.vmem [#allocation4], %s5018
          %5020 = dma.done %s5016, 512
        $region168: #{decoder_for_onnx_forward.1} parent=159 // pred_fallthru
          _
        // Predicated region
        $region169: #{decoder_for_onnx_forward.1} parent=159 // pred_check
          %p5021 = pneg %p710
        $region170: #{decoder_for_onnx_forward.1} parent=159 // pred_check_branch
          %5023 = sbr.rel (%p5021) target = $region172
        $region171: #{decoder_for_onnx_forward.1} parent=159 // pred_region
          %s5024 = sand.u32 %s95, 1
          %s5025 = scalar_lea.sflag [#allocation5], %s5024
          %s5026 = sand.u32 %s695, 1
          %s5027 = smul.addr %s5026, 32
          %s5028 = scalar_lea.vmem [#allocation6], %s5027
          %5029 = dma.done %s5025, 512
        $region172: #{decoder_for_onnx_forward.1} parent=159 // pred_fallthru
          _
        // Predicated region
        $region173: #{decoder_for_onnx_forward.1} parent=159 // pred_check
          %p5030 = pneg %p736
        $region174: #{decoder_for_onnx_forward.1} parent=159 // pred_check_branch
          %5032 = sbr.rel (%p5030) target = $region176
        $region175: #{decoder_for_onnx_forward.1} parent=159 // pred_region
          %s5033 = sand.u32 %s95, 1
          %s5034 = scalar_lea.sflag [#allocation8], %s5033
          %s5035 = sand.u32 %s721, 1
          %s5036 = smul.addr %s5035, 32
          %s5037 = scalar_lea.vmem [#allocation7], %s5036
          %5038 = dma.done %s5034, 512
        $region176: #{decoder_for_onnx_forward.1} parent=159 // pred_fallthru
          _
        // Predicated region
        $region177: #{decoder_for_onnx_forward.1} parent=159 // pred_check
          %p5039 = pneg %p762
        $region178: #{decoder_for_onnx_forward.1} parent=159 // pred_check_branch
          %5041 = sbr.rel (%p5039) target = $region180
        $region179: #{decoder_for_onnx_forward.1} parent=159 // pred_region
          %s5042 = sand.u32 %s95, 1
          %s5043 = scalar_lea.sflag [#allocation8], %s5042
          %s5044 = sand.u32 %s747, 1
          %s5045 = smul.addr %s5044, 32
          %s5046 = scalar_lea.vmem [#allocation9], %s5045
          %5047 = dma.done %s5043, 512
        $region180: #{decoder_for_onnx_forward.1} parent=159 // pred_fallthru
          _
        // Predicated region
        $region181: #{decoder_for_onnx_forward.1} parent=159 // pred_check
          %p5048 = pneg %p788
        $region182: #{decoder_for_onnx_forward.1} parent=159 // pred_check_branch
          %5050 = sbr.rel (%p5048) target = $region184
        $region183: #{decoder_for_onnx_forward.1} parent=159 // pred_region
          %s5051 = sand.u32 %s95, 1
          %s5052 = scalar_lea.sflag [#allocation11], %s5051
          %s5053 = sand.u32 %s773, 1
          %s5054 = smul.addr %s5053, 32
          %s5055 = scalar_lea.vmem [#allocation10], %s5054
          %5056 = dma.done %s5052, 512
        $region184: #{decoder_for_onnx_forward.1} parent=159 // pred_fallthru
          _
        // Predicated region
        $region185: #{decoder_for_onnx_forward.1} parent=159 // pred_check
          %p5057 = pneg %p814
        $region186: #{decoder_for_onnx_forward.1} parent=159 // pred_check_branch
          %5059 = sbr.rel (%p5057) target = $region188
        $region187: #{decoder_for_onnx_forward.1} parent=159 // pred_region
          %s5060 = sand.u32 %s95, 1
          %s5061 = scalar_lea.sflag [#allocation11], %s5060
          %s5062 = sand.u32 %s799, 1
          %s5063 = smul.addr %s5062, 32
          %s5064 = scalar_lea.vmem [#allocation12], %s5063
          %5065 = dma.done %s5061, 512
        $region188: #{decoder_for_onnx_forward.1} parent=159 // pred_fallthru
          _
        // Predicated region
        $region189: #{decoder_for_onnx_forward.1} parent=159 // pred_check
          %p5066 = pneg %p840
        $region190: #{decoder_for_onnx_forward.1} parent=159 // pred_check_branch
          %5068 = sbr.rel (%p5066) target = $region192
        $region191: #{decoder_for_onnx_forward.1} parent=159 // pred_region
          %s5069 = sand.u32 %s95, 1
          %s5070 = scalar_lea.sflag [#allocation14], %s5069
          %s5071 = sand.u32 %s825, 1
          %s5072 = smul.addr %s5071, 32
          %s5073 = scalar_lea.vmem [#allocation13], %s5072
          %5074 = dma.done %s5070, 512
        $region192: #{decoder_for_onnx_forward.1} parent=159 // pred_fallthru
          _
        // Predicated region
        $region193: #{decoder_for_onnx_forward.1} parent=159 // pred_check
          %p5075 = pneg %p866
        $region194: #{decoder_for_onnx_forward.1} parent=159 // pred_check_branch
          %5077 = sbr.rel (%p5075) target = $region196
        $region195: #{decoder_for_onnx_forward.1} parent=159 // pred_region
          %s5078 = sand.u32 %s95, 1
          %s5079 = scalar_lea.sflag [#allocation14], %s5078
          %s5080 = sand.u32 %s851, 1
          %s5081 = smul.addr %s5080, 32
          %s5082 = scalar_lea.vmem [#allocation15], %s5081
          %5083 = dma.done %s5079, 512
        $region196: #{decoder_for_onnx_forward.1} parent=159 // pred_fallthru
          _
      $region160: #{decoder_for_onnx_forward.1} parent=5 // pred_fallthru
        _
    $region6: #{decoder_for_onnx_forward.1} parent=1 // loop_footer
      %s93 = sadd.s32 1, %s89
    $region7: #{decoder_for_onnx_forward.1} parent=1 // loop_footer_branch
      %88 = sbr.rel target = $region3
    $region8: #{decoder_for_onnx_forward.1} parent=1 // loop_exit
      _
    %5084 = vsyncpa [#allocation3], 1
    %s5085 = scalar_lea.sflag [#allocation3], 1
    %5086 = vsyncpa %s5085, 1
    %5087 = vsyncpa [#allocation5], 1
    %s5088 = scalar_lea.sflag [#allocation5], 1
    %5089 = vsyncpa %s5088, 1
    %5090 = vsyncpa [#allocation8], 1
    %s5091 = scalar_lea.sflag [#allocation8], 1
    %5092 = vsyncpa %s5091, 1
    %5093 = vsyncpa [#allocation11], 1
    %s5094 = scalar_lea.sflag [#allocation11], 1
    %5095 = vsyncpa %s5094, 1
    %5096 = vsyncpa [#allocation14], 1
    %s5097 = scalar_lea.sflag [#allocation14], 1
    %5098 = vsyncpa %s5097, 1

</llo_original>
